<compile_context>
chip_gen: v6e
topology: v6e:2x2x1
jax: 0.10.0
libtpu: 0.0.40
codegen_flags: <defaults>
</compile_context>

<pallas_src>
import jax
import jax.numpy as jnp
from jax import lax
from jax.experimental import pallas as pl
from jax.experimental.pallas import tpu as pltpu


def _gru_fc_kernel(x_ref, wih_ref, whh_ref, bi_ref, bhhn_ref, wfc_ref, bfc_ref,
                   y_ref):
    """One batch block of the GRU recurrence + FC head.

    x_ref:    (T, BB, I)  f32   time-major inputs for this batch block (BB multiple of 8)
    wih_ref:  (I, 3H)     f32   input->hidden weight (transposed; tiny for small I)
    whh_ref:  (3H, H)     bf16  hidden->hidden weight in PyTorch layout (no transpose)
    bi_ref:   (1, 3H)     f32   b_ih with the r/z part of b_hh pre-summed in
    bhhn_ref: (1, H)      f32   n-gate part of b_hh (must stay inside r * (...))
    wfc_ref:  (1, H)      f32   fc weight row
    bfc_ref:  (1, 1)      f32   fc bias
    y_ref:    (BB, 1)     f32   output for this batch block
    """
    T, BB, I = x_ref.shape
    H = whh_ref.shape[1]

    # Hoisted once-per-block loads / casts (don't rely on CSE inside the loop).
    w_hh = whh_ref[...]            # (3H, H) recurrent-matmul dtype (bf16 by default)
    bi = bi_ref[...]               # (1, 3H) f32
    b_hh_n = bhhn_ref[...]         # (1, H)  f32
    w_ih = wih_ref[...]            # (I, 3H) f32
    use_mxu_for_input = I >= 128
    w_ih_mxu = w_ih.astype(jnp.bfloat16) if use_mxu_for_input else None

    def input_proj(x_t):
        # Per-step input projection, interleaved with the recurrence so it hides under
        # the MXU/EUP latency of the gate math instead of serializing before step 0.
        if use_mxu_for_input:
            return jnp.dot(x_t.astype(jnp.bfloat16), w_ih_mxu,
                           preferred_element_type=jnp.float32) + bi
        # Tiny I (module has input_size=1): I broadcast FMAs on the VPU, MXU stays free.
        gi = x_t[:, 0:1] * w_ih[0:1, :] + bi          # (BB,1)*(1,3H) -> (BB,3H)
        for i in range(1, I):
            gi = gi + x_t[:, i:i + 1] * w_ih[i:i + 1, :]
        return gi

    def step(t, h):
        gi = input_proj(x_ref[t])                               # (BB, 3H) f32
        # h @ W_hh^T without a materialized transposed weight: contract dim 1 of both
        # operands (same MXU pattern as q @ k^T in attention kernels).
        gh = lax.dot_general(h.astype(w_hh.dtype), w_hh,
                             dimension_numbers=(((1,), (1,)), ((), ())),
                             preferred_element_type=jnp.float32)  # (BB, 3H) f32
        # PyTorch GRU gate order [r | z | n]; biases already folded except the n-gate
        # b_hh, which must stay inside r * (...).
        r = jax.nn.sigmoid(gi[:, 0:H] + gh[:, 0:H])
        z = jax.nn.sigmoid(gi[:, H:2 * H] + gh[:, H:2 * H])
        n = jnp.tanh(gi[:, 2 * H:] + r * (gh[:, 2 * H:] + b_hh_n))
        return (1.0 - z) * n + z * h

    h0 = jnp.zeros((BB, H), jnp.float32)
    # Full unroll only for short sequences; cap at 8 otherwise so instruction count and
    # vreg live ranges stay bounded while the scheduler still gets cross-step overlap.
    unroll = True if T <= 8 else 8
    h_last = lax.fori_loop(0, T, step, h0, unroll=unroll)        # (BB, H)

    # FC head (Linear(H, 1)) as an XLU lane-reduce; an N=1 MXU pass would waste a push.
    y = jnp.sum(h_last * wfc_ref[...], axis=-1, keepdims=True) + bfc_ref[...]
    y_ref[...] = y.astype(y_ref.dtype)


def gru_model_forward(x, w_ih, w_hh, b_ih, b_hh, w_fc, b_fc,
                      recurrent_dtype=jnp.bfloat16):
    """Forward pass of GRUModel.

    x: (B, T, I) f32.  PyTorch-layout params:
      w_ih (3H, I), w_hh (3H, H), b_ih (3H,), b_hh (3H,), w_fc (1, H), b_fc (1,).
    recurrent_dtype: dtype of the h @ W_hh operands.  bf16 (default) uses the fast MXU
      path with f32 accumulation; pass jnp.float32 for very long sequences if bf16
      rounding drift across timesteps becomes a concern.
    """
    B, T, I = x.shape
    H = w_hh.shape[1]
    assert H % 128 == 0, "hidden_size must be a multiple of 128 (lane-aligned gates)"

    # Batch block: pad B to a sublane-aligned block so every per-step tile in the
    # recurrence is a full (BB, ...) sublane group and the gh matmul has >= 8 MXU rows.
    if B <= 64:
        BB = max(8, ((B + 7) // 8) * 8)
    else:
        BB = 64
    B_pad = ((B + BB - 1) // BB) * BB
    num_blocks = B_pad // BB

    # Time-major (T, B_pad, I).  At GRUModel shapes (I == 1) this is a few KiB, so the
    # wrapper transpose/pad is negligible; the big weight (w_hh) is NOT transposed in
    # the wrapper (handled by dot_general inside the kernel).
    x_tm = jnp.transpose(x, (1, 0, 2)).astype(jnp.float32)
    if B_pad != B:
        x_tm = jnp.pad(x_tm, ((0, 0), (0, B_pad - B), (0, 0)))

    w_ih_t = jnp.transpose(w_ih).astype(jnp.float32)      # (I, 3H), tiny for small I
    w_hh_r = w_hh.astype(recurrent_dtype)                 # (3H, H), PyTorch layout

    # Fold b_ih fully, plus the r/z part of b_hh, into one bias row; keep the n-gate
    # part of b_hh separate (it sits inside r * (...)).
    b_all = b_ih.astype(jnp.float32)
    b_all = b_all.at[:2 * H].add(b_hh[:2 * H].astype(jnp.float32))
    bi = b_all.reshape(1, 3 * H)
    bhh_n = b_hh[2 * H:].astype(jnp.float32).reshape(1, H)

    w_fc_row = w_fc.reshape(1, H).astype(jnp.float32)
    b_fc_2d = b_fc.reshape(1, 1).astype(jnp.float32)

    # VMEM budget: inputs are double-buffered by the pipeline; there is no gi scratch
    # anymore, so usage is dominated by W_hh.  Clamp below v7x's 64 MiB physical VMEM.
    operands = (x_tm, w_ih_t, w_hh_r, bi, bhh_n, w_fc_row, b_fc_2d)
    in_bytes = sum(int(a.size) * a.dtype.itemsize for a in operands)
    out_bytes = B_pad * 4
    vmem_limit = int(min(max(2 * (in_bytes + out_bytes) + (2 << 20), 16 << 20), 56 << 20))

    y = pl.pallas_call(
        _gru_fc_kernel,
        out_shape=jax.ShapeDtypeStruct((B_pad, 1), jnp.float32),
        grid_spec=pltpu.PrefetchScalarGridSpec(
            num_scalar_prefetch=0,
            grid=(num_blocks,),
            in_specs=[
                pl.BlockSpec((T, BB, I), lambda b: (0, b, 0)),
                pl.BlockSpec((I, 3 * H), lambda b: (0, 0)),
                pl.BlockSpec((3 * H, H), lambda b: (0, 0)),
                pl.BlockSpec((1, 3 * H), lambda b: (0, 0)),
                pl.BlockSpec((1, H), lambda b: (0, 0)),
                pl.BlockSpec((1, H), lambda b: (0, 0)),
                pl.BlockSpec((1, 1), lambda b: (0, 0)),
            ],
            out_specs=pl.BlockSpec((BB, 1), lambda b: (b, 0)),
        ),
        compiler_params=pltpu.CompilerParams(
            # Batch blocks are fully independent GRU chains -> "parallel" lets v7x
            # shard them across its two TensorCores (no effect on v5e/v6e).
            dimension_semantics=("parallel",),
            vmem_limit_bytes=vmem_limit,
        ),
    )(x_tm, w_ih_t, w_hh_r, bi, bhh_n, w_fc_row, b_fc_2d)
    return y[:B]


def _reference_forward(x, w_ih, w_hh, b_ih, b_hh, w_fc, b_fc):
    """Pure-JAX f32 reference mirroring torch.nn.GRU(batch_first=True) + Linear."""
    B, T, I = x.shape
    H = w_hh.shape[1]
    h = jnp.zeros((B, H), jnp.float32)
    for t in range(T):
        x_t = x[:, t, :]
        gi = x_t @ w_ih.T + b_ih
        gh = h @ w_hh.T + b_hh
        r = jax.nn.sigmoid(gi[:, :H] + gh[:, :H])
        z = jax.nn.sigmoid(gi[:, H:2 * H] + gh[:, H:2 * H])
        n = jnp.tanh(gi[:, 2 * H:] + r * gh[:, 2 * H:])
        h = (1.0 - z) * n + z * h
    return h @ w_fc.T + b_fc


if __name__ == "__main__":
    # Module defaults: input_size=1, hidden_size=512 (multiple of 256 -> native MXU
    # contraction depth on v6e/v7x and lane-aligned gate slices).  Small B, T.
    B, T, I, H = 2, 8, 1, 512

    key = jax.random.PRNGKey(0)
    ks = jax.random.split(key, 7)
    scale = 1.0 / jnp.sqrt(H)

    x = jax.random.normal(ks[0], (B, T, I), jnp.float32)
    w_ih = jax.random.uniform(ks[1], (3 * H, I), jnp.float32, -scale, scale)
    w_hh = jax.random.uniform(ks[2], (3 * H, H), jnp.float32, -scale, scale)
    b_ih = jax.random.uniform(ks[3], (3 * H,), jnp.float32, -scale, scale)
    b_hh = jax.random.uniform(ks[4], (3 * H,), jnp.float32, -scale, scale)
    w_fc = jax.random.uniform(ks[5], (1, H), jnp.float32, -scale, scale)
    b_fc = jax.random.uniform(ks[6], (1,), jnp.float32, -scale, scale)

    out = gru_model_forward(x, w_ih, w_hh, b_ih, b_hh, w_fc, b_fc)
    out = jax.block_until_ready(out)

    ref = _reference_forward(x, w_ih, w_hh, b_ih, b_hh, w_fc, b_fc)
    assert out.shape == (B, 1)
    # bf16 MXU operands with f32 accumulation -> looser tolerance than pure f32.
    assert jnp.allclose(out, ref, atol=2e-2, rtol=2e-2), (out, ref)

    print("KERNEL_OK")
</pallas_src>

<mosaic_0001>
module attributes {stable_mosaic.version = 11 : i64} {
  func.func @_gru_fc_kernel(%arg0: i32, %arg1: memref<8x8x1xf32, #tpu.memory_space<vmem>>, %arg2: memref<1x1536xf32, #tpu.memory_space<vmem>>, %arg3: memref<1536x512xbf16, #tpu.memory_space<vmem>>, %arg4: memref<1x1536xf32, #tpu.memory_space<vmem>>, %arg5: memref<1x512xf32, #tpu.memory_space<vmem>>, %arg6: memref<1x512xf32, #tpu.memory_space<vmem>>, %arg7: memref<1x1xf32, #tpu.memory_space<vmem>>, %arg8: memref<8x1xf32, #tpu.memory_space<vmem>>) attributes {dimension_semantics = [#tpu.dimension_semantics<parallel>], iteration_bounds = array<i64: 1>, scalar_prefetch = 0 : i64, scratch_operands = 0 : i64, tpu.core_type = #tpu.core_type<tc>, window_params = [{transform_indices = @transform_0, window_bounds = array<i64: 8, 8, 1>}, {pipeline_mode = #tpu.pipeline_mode<synchronous>, transform_indices = @transform_1, window_bounds = array<i64: 1, 1536>}, {pipeline_mode = #tpu.pipeline_mode<synchronous>, transform_indices = @transform_2, window_bounds = array<i64: 1536, 512>}, {pipeline_mode = #tpu.pipeline_mode<synchronous>, transform_indices = @transform_3, window_bounds = array<i64: 1, 1536>}, {pipeline_mode = #tpu.pipeline_mode<synchronous>, transform_indices = @transform_4, window_bounds = array<i64: 1, 512>}, {pipeline_mode = #tpu.pipeline_mode<synchronous>, transform_indices = @transform_5, window_bounds = array<i64: 1, 512>}, {pipeline_mode = #tpu.pipeline_mode<synchronous>, transform_indices = @transform_6, window_bounds = array<i64: 1, 1>}, {transform_indices = @transform_7, window_bounds = array<i64: 8, 1>}]} {
    %c0 = arith.constant 0 : index
    %c0_0 = arith.constant 0 : index
    %0 = vector.load %arg3[%c0, %c0_0] : memref<1536x512xbf16, #tpu.memory_space<vmem>>, vector<1536x512xbf16>
    %c0_1 = arith.constant 0 : index
    %c0_2 = arith.constant 0 : index
    %1 = vector.load %arg4[%c0_1, %c0_2] : memref<1x1536xf32, #tpu.memory_space<vmem>>, vector<1x1536xf32>
    %c0_3 = arith.constant 0 : index
    %c0_4 = arith.constant 0 : index
    %2 = vector.load %arg5[%c0_3, %c0_4] : memref<1x512xf32, #tpu.memory_space<vmem>>, vector<1x512xf32>
    %c0_5 = arith.constant 0 : index
    %c0_6 = arith.constant 0 : index
    %3 = vector.load %arg2[%c0_5, %c0_6] : memref<1x1536xf32, #tpu.memory_space<vmem>>, vector<1x1536xf32>
    %cst = arith.constant 0.000000e+00 : f32
    %4 = vector.broadcast %cst : f32 to vector<8x512xf32>
    %c0_i32 = arith.constant 0 : i32
    %5 = arith.index_cast %c0_i32 : i32 to index
    %c0_7 = arith.constant 0 : index
    %c0_8 = arith.constant 0 : index
    %6 = vector.load %arg1[%5, %c0_7, %c0_8] : memref<8x8x1xf32, #tpu.memory_space<vmem>>, vector<1x8x1xf32>
    %7 = vector.shape_cast %6 : vector<1x8x1xf32> to vector<8x1xf32>
    %8 = vector.broadcast %7 : vector<8x1xf32> to vector<8x1536xf32>
    %9 = vector.broadcast %3 : vector<1x1536xf32> to vector<8x1536xf32>
    %10 = arith.mulf %8, %9 : vector<8x1536xf32>
    %11 = vector.broadcast %1 : vector<1x1536xf32> to vector<8x1536xf32>
    %12 = arith.addf %10, %11 : vector<8x1536xf32>
    %13 = arith.truncf %4 : vector<8x512xf32> to vector<8x512xbf16>
    %cst_9 = arith.constant dense<0.000000e+00> : vector<8x1536xf32>
    %14 = tpu.matmul %13, %0, %cst_9 {dimension_numbers = #tpu.dot_dimension_numbers<[1], [1], [0], [0], [0, 0, 1, 0], [], []>} : vector<8x512xbf16>, vector<1536x512xbf16>, vector<8x1536xf32> -> vector<8x1536xf32>
    %15 = vector.extract_strided_slice %12 {offsets = [0, 0], sizes = [8, 512], strides = [1, 1]} : vector<8x1536xf32> to vector<8x512xf32>
    %16 = vector.extract_strided_slice %14 {offsets = [0, 0], sizes = [8, 512], strides = [1, 1]} : vector<8x1536xf32> to vector<8x512xf32>
    %17 = arith.addf %15, %16 : vector<8x512xf32>
    %18 = arith.negf %17 : vector<8x512xf32>
    %19 = math.exp %18 : vector<8x512xf32>
    %cst_10 = arith.constant 1.000000e+00 : f32
    %20 = vector.broadcast %cst_10 : f32 to vector<8x512xf32>
    %21 = arith.addf %20, %19 : vector<8x512xf32>
    %22 = arith.divf %20, %21 : vector<8x512xf32>
    %23 = vector.extract_strided_slice %12 {offsets = [0, 512], sizes = [8, 512], strides = [1, 1]} : vector<8x1536xf32> to vector<8x512xf32>
    %24 = vector.extract_strided_slice %14 {offsets = [0, 512], sizes = [8, 512], strides = [1, 1]} : vector<8x1536xf32> to vector<8x512xf32>
    %25 = arith.addf %23, %24 : vector<8x512xf32>
    %26 = arith.negf %25 : vector<8x512xf32>
    %27 = math.exp %26 : vector<8x512xf32>
    %cst_11 = arith.constant 1.000000e+00 : f32
    %28 = vector.broadcast %cst_11 : f32 to vector<8x512xf32>
    %29 = arith.addf %28, %27 : vector<8x512xf32>
    %30 = arith.divf %28, %29 : vector<8x512xf32>
    %31 = vector.extract_strided_slice %12 {offsets = [0, 1024], sizes = [8, 512], strides = [1, 1]} : vector<8x1536xf32> to vector<8x512xf32>
    %32 = vector.extract_strided_slice %14 {offsets = [0, 1024], sizes = [8, 512], strides = [1, 1]} : vector<8x1536xf32> to vector<8x512xf32>
    %33 = vector.broadcast %2 : vector<1x512xf32> to vector<8x512xf32>
    %34 = arith.addf %32, %33 : vector<8x512xf32>
    %35 = arith.mulf %22, %34 : vector<8x512xf32>
    %36 = arith.addf %31, %35 : vector<8x512xf32>
    %37 = math.tanh %36 : vector<8x512xf32>
    %cst_12 = arith.constant 1.000000e+00 : f32
    %38 = vector.broadcast %cst_12 : f32 to vector<8x512xf32>
    %39 = arith.subf %38, %30 : vector<8x512xf32>
    %40 = arith.mulf %39, %37 : vector<8x512xf32>
    %41 = arith.mulf %30, %4 : vector<8x512xf32>
    %42 = arith.addf %40, %41 : vector<8x512xf32>
    %c1_i32 = arith.constant 1 : i32
    %43 = arith.index_cast %c1_i32 : i32 to index
    %c0_13 = arith.constant 0 : index
    %c0_14 = arith.constant 0 : index
    %44 = vector.load %arg1[%43, %c0_13, %c0_14] : memref<8x8x1xf32, #tpu.memory_space<vmem>>, vector<1x8x1xf32>
    %45 = vector.shape_cast %44 : vector<1x8x1xf32> to vector<8x1xf32>
    %46 = vector.broadcast %45 : vector<8x1xf32> to vector<8x1536xf32>
    %47 = vector.broadcast %3 : vector<1x1536xf32> to vector<8x1536xf32>
    %48 = arith.mulf %46, %47 : vector<8x1536xf32>
    %49 = vector.broadcast %1 : vector<1x1536xf32> to vector<8x1536xf32>
    %50 = arith.addf %48, %49 : vector<8x1536xf32>
    %51 = arith.truncf %42 : vector<8x512xf32> to vector<8x512xbf16>
    %cst_15 = arith.constant dense<0.000000e+00> : vector<8x1536xf32>
    %52 = tpu.matmul %51, %0, %cst_15 {dimension_numbers = #tpu.dot_dimension_numbers<[1], [1], [0], [0], [0, 0, 1, 0], [], []>} : vector<8x512xbf16>, vector<1536x512xbf16>, vector<8x1536xf32> -> vector<8x1536xf32>
    %53 = vector.extract_strided_slice %50 {offsets = [0, 0], sizes = [8, 512], strides = [1, 1]} : vector<8x1536xf32> to vector<8x512xf32>
    %54 = vector.extract_strided_slice %52 {offsets = [0, 0], sizes = [8, 512], strides = [1, 1]} : vector<8x1536xf32> to vector<8x512xf32>
    %55 = arith.addf %53, %54 : vector<8x512xf32>
    %56 = arith.negf %55 : vector<8x512xf32>
    %57 = math.exp %56 : vector<8x512xf32>
    %cst_16 = arith.constant 1.000000e+00 : f32
    %58 = vector.broadcast %cst_16 : f32 to vector<8x512xf32>
    %59 = arith.addf %58, %57 : vector<8x512xf32>
    %60 = arith.divf %58, %59 : vector<8x512xf32>
    %61 = vector.extract_strided_slice %50 {offsets = [0, 512], sizes = [8, 512], strides = [1, 1]} : vector<8x1536xf32> to vector<8x512xf32>
    %62 = vector.extract_strided_slice %52 {offsets = [0, 512], sizes = [8, 512], strides = [1, 1]} : vector<8x1536xf32> to vector<8x512xf32>
    %63 = arith.addf %61, %62 : vector<8x512xf32>
    %64 = arith.negf %63 : vector<8x512xf32>
    %65 = math.exp %64 : vector<8x512xf32>
    %cst_17 = arith.constant 1.000000e+00 : f32
    %66 = vector.broadcast %cst_17 : f32 to vector<8x512xf32>
    %67 = arith.addf %66, %65 : vector<8x512xf32>
    %68 = arith.divf %66, %67 : vector<8x512xf32>
    %69 = vector.extract_strided_slice %50 {offsets = [0, 1024], sizes = [8, 512], strides = [1, 1]} : vector<8x1536xf32> to vector<8x512xf32>
    %70 = vector.extract_strided_slice %52 {offsets = [0, 1024], sizes = [8, 512], strides = [1, 1]} : vector<8x1536xf32> to vector<8x512xf32>
    %71 = vector.broadcast %2 : vector<1x512xf32> to vector<8x512xf32>
    %72 = arith.addf %70, %71 : vector<8x512xf32>
    %73 = arith.mulf %60, %72 : vector<8x512xf32>
    %74 = arith.addf %69, %73 : vector<8x512xf32>
    %75 = math.tanh %74 : vector<8x512xf32>
    %cst_18 = arith.constant 1.000000e+00 : f32
    %76 = vector.broadcast %cst_18 : f32 to vector<8x512xf32>
    %77 = arith.subf %76, %68 : vector<8x512xf32>
    %78 = arith.mulf %77, %75 : vector<8x512xf32>
    %79 = arith.mulf %68, %42 : vector<8x512xf32>
    %80 = arith.addf %78, %79 : vector<8x512xf32>
    %c2_i32 = arith.constant 2 : i32
    %81 = arith.index_cast %c2_i32 : i32 to index
    %c0_19 = arith.constant 0 : index
    %c0_20 = arith.constant 0 : index
    %82 = vector.load %arg1[%81, %c0_19, %c0_20] : memref<8x8x1xf32, #tpu.memory_space<vmem>>, vector<1x8x1xf32>
    %83 = vector.shape_cast %82 : vector<1x8x1xf32> to vector<8x1xf32>
    %84 = vector.broadcast %83 : vector<8x1xf32> to vector<8x1536xf32>
    %85 = vector.broadcast %3 : vector<1x1536xf32> to vector<8x1536xf32>
    %86 = arith.mulf %84, %85 : vector<8x1536xf32>
    %87 = vector.broadcast %1 : vector<1x1536xf32> to vector<8x1536xf32>
    %88 = arith.addf %86, %87 : vector<8x1536xf32>
    %89 = arith.truncf %80 : vector<8x512xf32> to vector<8x512xbf16>
    %cst_21 = arith.constant dense<0.000000e+00> : vector<8x1536xf32>
    %90 = tpu.matmul %89, %0, %cst_21 {dimension_numbers = #tpu.dot_dimension_numbers<[1], [1], [0], [0], [0, 0, 1, 0], [], []>} : vector<8x512xbf16>, vector<1536x512xbf16>, vector<8x1536xf32> -> vector<8x1536xf32>
    %91 = vector.extract_strided_slice %88 {offsets = [0, 0], sizes = [8, 512], strides = [1, 1]} : vector<8x1536xf32> to vector<8x512xf32>
    %92 = vector.extract_strided_slice %90 {offsets = [0, 0], sizes = [8, 512], strides = [1, 1]} : vector<8x1536xf32> to vector<8x512xf32>
    %93 = arith.addf %91, %92 : vector<8x512xf32>
    %94 = arith.negf %93 : vector<8x512xf32>
    %95 = math.exp %94 : vector<8x512xf32>
    %cst_22 = arith.constant 1.000000e+00 : f32
    %96 = vector.broadcast %cst_22 : f32 to vector<8x512xf32>
    %97 = arith.addf %96, %95 : vector<8x512xf32>
    %98 = arith.divf %96, %97 : vector<8x512xf32>
    %99 = vector.extract_strided_slice %88 {offsets = [0, 512], sizes = [8, 512], strides = [1, 1]} : vector<8x1536xf32> to vector<8x512xf32>
    %100 = vector.extract_strided_slice %90 {offsets = [0, 512], sizes = [8, 512], strides = [1, 1]} : vector<8x1536xf32> to vector<8x512xf32>
    %101 = arith.addf %99, %100 : vector<8x512xf32>
    %102 = arith.negf %101 : vector<8x512xf32>
    %103 = math.exp %102 : vector<8x512xf32>
    %cst_23 = arith.constant 1.000000e+00 : f32
    %104 = vector.broadcast %cst_23 : f32 to vector<8x512xf32>
    %105 = arith.addf %104, %103 : vector<8x512xf32>
    %106 = arith.divf %104, %105 : vector<8x512xf32>
    %107 = vector.extract_strided_slice %88 {offsets = [0, 1024], sizes = [8, 512], strides = [1, 1]} : vector<8x1536xf32> to vector<8x512xf32>
    %108 = vector.extract_strided_slice %90 {offsets = [0, 1024], sizes = [8, 512], strides = [1, 1]} : vector<8x1536xf32> to vector<8x512xf32>
    %109 = vector.broadcast %2 : vector<1x512xf32> to vector<8x512xf32>
    %110 = arith.addf %108, %109 : vector<8x512xf32>
    %111 = arith.mulf %98, %110 : vector<8x512xf32>
    %112 = arith.addf %107, %111 : vector<8x512xf32>
    %113 = math.tanh %112 : vector<8x512xf32>
    %cst_24 = arith.constant 1.000000e+00 : f32
    %114 = vector.broadcast %cst_24 : f32 to vector<8x512xf32>
    %115 = arith.subf %114, %106 : vector<8x512xf32>
    %116 = arith.mulf %115, %113 : vector<8x512xf32>
    %117 = arith.mulf %106, %80 : vector<8x512xf32>
    %118 = arith.addf %116, %117 : vector<8x512xf32>
    %c3_i32 = arith.constant 3 : i32
    %119 = arith.index_cast %c3_i32 : i32 to index
    %c0_25 = arith.constant 0 : index
    %c0_26 = arith.constant 0 : index
    %120 = vector.load %arg1[%119, %c0_25, %c0_26] : memref<8x8x1xf32, #tpu.memory_space<vmem>>, vector<1x8x1xf32>
    %121 = vector.shape_cast %120 : vector<1x8x1xf32> to vector<8x1xf32>
    %122 = vector.broadcast %121 : vector<8x1xf32> to vector<8x1536xf32>
    %123 = vector.broadcast %3 : vector<1x1536xf32> to vector<8x1536xf32>
    %124 = arith.mulf %122, %123 : vector<8x1536xf32>
    %125 = vector.broadcast %1 : vector<1x1536xf32> to vector<8x1536xf32>
    %126 = arith.addf %124, %125 : vector<8x1536xf32>
    %127 = arith.truncf %118 : vector<8x512xf32> to vector<8x512xbf16>
    %cst_27 = arith.constant dense<0.000000e+00> : vector<8x1536xf32>
    %128 = tpu.matmul %127, %0, %cst_27 {dimension_numbers = #tpu.dot_dimension_numbers<[1], [1], [0], [0], [0, 0, 1, 0], [], []>} : vector<8x512xbf16>, vector<1536x512xbf16>, vector<8x1536xf32> -> vector<8x1536xf32>
    %129 = vector.extract_strided_slice %126 {offsets = [0, 0], sizes = [8, 512], strides = [1, 1]} : vector<8x1536xf32> to vector<8x512xf32>
    %130 = vector.extract_strided_slice %128 {offsets = [0, 0], sizes = [8, 512], strides = [1, 1]} : vector<8x1536xf32> to vector<8x512xf32>
    %131 = arith.addf %129, %130 : vector<8x512xf32>
    %132 = arith.negf %131 : vector<8x512xf32>
    %133 = math.exp %132 : vector<8x512xf32>
    %cst_28 = arith.constant 1.000000e+00 : f32
    %134 = vector.broadcast %cst_28 : f32 to vector<8x512xf32>
    %135 = arith.addf %134, %133 : vector<8x512xf32>
    %136 = arith.divf %134, %135 : vector<8x512xf32>
    %137 = vector.extract_strided_slice %126 {offsets = [0, 512], sizes = [8, 512], strides = [1, 1]} : vector<8x1536xf32> to vector<8x512xf32>
    %138 = vector.extract_strided_slice %128 {offsets = [0, 512], sizes = [8, 512], strides = [1, 1]} : vector<8x1536xf32> to vector<8x512xf32>
    %139 = arith.addf %137, %138 : vector<8x512xf32>
    %140 = arith.negf %139 : vector<8x512xf32>
    %141 = math.exp %140 : vector<8x512xf32>
    %cst_29 = arith.constant 1.000000e+00 : f32
    %142 = vector.broadcast %cst_29 : f32 to vector<8x512xf32>
    %143 = arith.addf %142, %141 : vector<8x512xf32>
    %144 = arith.divf %142, %143 : vector<8x512xf32>
    %145 = vector.extract_strided_slice %126 {offsets = [0, 1024], sizes = [8, 512], strides = [1, 1]} : vector<8x1536xf32> to vector<8x512xf32>
    %146 = vector.extract_strided_slice %128 {offsets = [0, 1024], sizes = [8, 512], strides = [1, 1]} : vector<8x1536xf32> to vector<8x512xf32>
    %147 = vector.broadcast %2 : vector<1x512xf32> to vector<8x512xf32>
    %148 = arith.addf %146, %147 : vector<8x512xf32>
    %149 = arith.mulf %136, %148 : vector<8x512xf32>
    %150 = arith.addf %145, %149 : vector<8x512xf32>
    %151 = math.tanh %150 : vector<8x512xf32>
    %cst_30 = arith.constant 1.000000e+00 : f32
    %152 = vector.broadcast %cst_30 : f32 to vector<8x512xf32>
    %153 = arith.subf %152, %144 : vector<8x512xf32>
    %154 = arith.mulf %153, %151 : vector<8x512xf32>
    %155 = arith.mulf %144, %118 : vector<8x512xf32>
    %156 = arith.addf %154, %155 : vector<8x512xf32>
    %c4_i32 = arith.constant 4 : i32
    %157 = arith.index_cast %c4_i32 : i32 to index
    %c0_31 = arith.constant 0 : index
    %c0_32 = arith.constant 0 : index
    %158 = vector.load %arg1[%157, %c0_31, %c0_32] : memref<8x8x1xf32, #tpu.memory_space<vmem>>, vector<1x8x1xf32>
    %159 = vector.shape_cast %158 : vector<1x8x1xf32> to vector<8x1xf32>
    %160 = vector.broadcast %159 : vector<8x1xf32> to vector<8x1536xf32>
    %161 = vector.broadcast %3 : vector<1x1536xf32> to vector<8x1536xf32>
    %162 = arith.mulf %160, %161 : vector<8x1536xf32>
    %163 = vector.broadcast %1 : vector<1x1536xf32> to vector<8x1536xf32>
    %164 = arith.addf %162, %163 : vector<8x1536xf32>
    %165 = arith.truncf %156 : vector<8x512xf32> to vector<8x512xbf16>
    %cst_33 = arith.constant dense<0.000000e+00> : vector<8x1536xf32>
    %166 = tpu.matmul %165, %0, %cst_33 {dimension_numbers = #tpu.dot_dimension_numbers<[1], [1], [0], [0], [0, 0, 1, 0], [], []>} : vector<8x512xbf16>, vector<1536x512xbf16>, vector<8x1536xf32> -> vector<8x1536xf32>
    %167 = vector.extract_strided_slice %164 {offsets = [0, 0], sizes = [8, 512], strides = [1, 1]} : vector<8x1536xf32> to vector<8x512xf32>
    %168 = vector.extract_strided_slice %166 {offsets = [0, 0], sizes = [8, 512], strides = [1, 1]} : vector<8x1536xf32> to vector<8x512xf32>
    %169 = arith.addf %167, %168 : vector<8x512xf32>
    %170 = arith.negf %169 : vector<8x512xf32>
    %171 = math.exp %170 : vector<8x512xf32>
    %cst_34 = arith.constant 1.000000e+00 : f32
    %172 = vector.broadcast %cst_34 : f32 to vector<8x512xf32>
    %173 = arith.addf %172, %171 : vector<8x512xf32>
    %174 = arith.divf %172, %173 : vector<8x512xf32>
    %175 = vector.extract_strided_slice %164 {offsets = [0, 512], sizes = [8, 512], strides = [1, 1]} : vector<8x1536xf32> to vector<8x512xf32>
    %176 = vector.extract_strided_slice %166 {offsets = [0, 512], sizes = [8, 512], strides = [1, 1]} : vector<8x1536xf32> to vector<8x512xf32>
    %177 = arith.addf %175, %176 : vector<8x512xf32>
    %178 = arith.negf %177 : vector<8x512xf32>
    %179 = math.exp %178 : vector<8x512xf32>
    %cst_35 = arith.constant 1.000000e+00 : f32
    %180 = vector.broadcast %cst_35 : f32 to vector<8x512xf32>
    %181 = arith.addf %180, %179 : vector<8x512xf32>
    %182 = arith.divf %180, %181 : vector<8x512xf32>
    %183 = vector.extract_strided_slice %164 {offsets = [0, 1024], sizes = [8, 512], strides = [1, 1]} : vector<8x1536xf32> to vector<8x512xf32>
    %184 = vector.extract_strided_slice %166 {offsets = [0, 1024], sizes = [8, 512], strides = [1, 1]} : vector<8x1536xf32> to vector<8x512xf32>
    %185 = vector.broadcast %2 : vector<1x512xf32> to vector<8x512xf32>
    %186 = arith.addf %184, %185 : vector<8x512xf32>
    %187 = arith.mulf %174, %186 : vector<8x512xf32>
    %188 = arith.addf %183, %187 : vector<8x512xf32>
    %189 = math.tanh %188 : vector<8x512xf32>
    %cst_36 = arith.constant 1.000000e+00 : f32
    %190 = vector.broadcast %cst_36 : f32 to vector<8x512xf32>
    %191 = arith.subf %190, %182 : vector<8x512xf32>
    %192 = arith.mulf %191, %189 : vector<8x512xf32>
    %193 = arith.mulf %182, %156 : vector<8x512xf32>
    %194 = arith.addf %192, %193 : vector<8x512xf32>
    %c5_i32 = arith.constant 5 : i32
    %195 = arith.index_cast %c5_i32 : i32 to index
    %c0_37 = arith.constant 0 : index
    %c0_38 = arith.constant 0 : index
    %196 = vector.load %arg1[%195, %c0_37, %c0_38] : memref<8x8x1xf32, #tpu.memory_space<vmem>>, vector<1x8x1xf32>
    %197 = vector.shape_cast %196 : vector<1x8x1xf32> to vector<8x1xf32>
    %198 = vector.broadcast %197 : vector<8x1xf32> to vector<8x1536xf32>
    %199 = vector.broadcast %3 : vector<1x1536xf32> to vector<8x1536xf32>
    %200 = arith.mulf %198, %199 : vector<8x1536xf32>
    %201 = vector.broadcast %1 : vector<1x1536xf32> to vector<8x1536xf32>
    %202 = arith.addf %200, %201 : vector<8x1536xf32>
    %203 = arith.truncf %194 : vector<8x512xf32> to vector<8x512xbf16>
    %cst_39 = arith.constant dense<0.000000e+00> : vector<8x1536xf32>
    %204 = tpu.matmul %203, %0, %cst_39 {dimension_numbers = #tpu.dot_dimension_numbers<[1], [1], [0], [0], [0, 0, 1, 0], [], []>} : vector<8x512xbf16>, vector<1536x512xbf16>, vector<8x1536xf32> -> vector<8x1536xf32>
    %205 = vector.extract_strided_slice %202 {offsets = [0, 0], sizes = [8, 512], strides = [1, 1]} : vector<8x1536xf32> to vector<8x512xf32>
    %206 = vector.extract_strided_slice %204 {offsets = [0, 0], sizes = [8, 512], strides = [1, 1]} : vector<8x1536xf32> to vector<8x512xf32>
    %207 = arith.addf %205, %206 : vector<8x512xf32>
    %208 = arith.negf %207 : vector<8x512xf32>
    %209 = math.exp %208 : vector<8x512xf32>
    %cst_40 = arith.constant 1.000000e+00 : f32
    %210 = vector.broadcast %cst_40 : f32 to vector<8x512xf32>
    %211 = arith.addf %210, %209 : vector<8x512xf32>
    %212 = arith.divf %210, %211 : vector<8x512xf32>
    %213 = vector.extract_strided_slice %202 {offsets = [0, 512], sizes = [8, 512], strides = [1, 1]} : vector<8x1536xf32> to vector<8x512xf32>
    %214 = vector.extract_strided_slice %204 {offsets = [0, 512], sizes = [8, 512], strides = [1, 1]} : vector<8x1536xf32> to vector<8x512xf32>
    %215 = arith.addf %213, %214 : vector<8x512xf32>
    %216 = arith.negf %215 : vector<8x512xf32>
    %217 = math.exp %216 : vector<8x512xf32>
    %cst_41 = arith.constant 1.000000e+00 : f32
    %218 = vector.broadcast %cst_41 : f32 to vector<8x512xf32>
    %219 = arith.addf %218, %217 : vector<8x512xf32>
    %220 = arith.divf %218, %219 : vector<8x512xf32>
    %221 = vector.extract_strided_slice %202 {offsets = [0, 1024], sizes = [8, 512], strides = [1, 1]} : vector<8x1536xf32> to vector<8x512xf32>
    %222 = vector.extract_strided_slice %204 {offsets = [0, 1024], sizes = [8, 512], strides = [1, 1]} : vector<8x1536xf32> to vector<8x512xf32>
    %223 = vector.broadcast %2 : vector<1x512xf32> to vector<8x512xf32>
    %224 = arith.addf %222, %223 : vector<8x512xf32>
    %225 = arith.mulf %212, %224 : vector<8x512xf32>
    %226 = arith.addf %221, %225 : vector<8x512xf32>
    %227 = math.tanh %226 : vector<8x512xf32>
    %cst_42 = arith.constant 1.000000e+00 : f32
    %228 = vector.broadcast %cst_42 : f32 to vector<8x512xf32>
    %229 = arith.subf %228, %220 : vector<8x512xf32>
    %230 = arith.mulf %229, %227 : vector<8x512xf32>
    %231 = arith.mulf %220, %194 : vector<8x512xf32>
    %232 = arith.addf %230, %231 : vector<8x512xf32>
    %c6_i32 = arith.constant 6 : i32
    %233 = arith.index_cast %c6_i32 : i32 to index
    %c0_43 = arith.constant 0 : index
    %c0_44 = arith.constant 0 : index
    %234 = vector.load %arg1[%233, %c0_43, %c0_44] : memref<8x8x1xf32, #tpu.memory_space<vmem>>, vector<1x8x1xf32>
    %235 = vector.shape_cast %234 : vector<1x8x1xf32> to vector<8x1xf32>
    %236 = vector.broadcast %235 : vector<8x1xf32> to vector<8x1536xf32>
    %237 = vector.broadcast %3 : vector<1x1536xf32> to vector<8x1536xf32>
    %238 = arith.mulf %236, %237 : vector<8x1536xf32>
    %239 = vector.broadcast %1 : vector<1x1536xf32> to vector<8x1536xf32>
    %240 = arith.addf %238, %239 : vector<8x1536xf32>
    %241 = arith.truncf %232 : vector<8x512xf32> to vector<8x512xbf16>
    %cst_45 = arith.constant dense<0.000000e+00> : vector<8x1536xf32>
    %242 = tpu.matmul %241, %0, %cst_45 {dimension_numbers = #tpu.dot_dimension_numbers<[1], [1], [0], [0], [0, 0, 1, 0], [], []>} : vector<8x512xbf16>, vector<1536x512xbf16>, vector<8x1536xf32> -> vector<8x1536xf32>
    %243 = vector.extract_strided_slice %240 {offsets = [0, 0], sizes = [8, 512], strides = [1, 1]} : vector<8x1536xf32> to vector<8x512xf32>
    %244 = vector.extract_strided_slice %242 {offsets = [0, 0], sizes = [8, 512], strides = [1, 1]} : vector<8x1536xf32> to vector<8x512xf32>
    %245 = arith.addf %243, %244 : vector<8x512xf32>
    %246 = arith.negf %245 : vector<8x512xf32>
    %247 = math.exp %246 : vector<8x512xf32>
    %cst_46 = arith.constant 1.000000e+00 : f32
    %248 = vector.broadcast %cst_46 : f32 to vector<8x512xf32>
    %249 = arith.addf %248, %247 : vector<8x512xf32>
    %250 = arith.divf %248, %249 : vector<8x512xf32>
    %251 = vector.extract_strided_slice %240 {offsets = [0, 512], sizes = [8, 512], strides = [1, 1]} : vector<8x1536xf32> to vector<8x512xf32>
    %252 = vector.extract_strided_slice %242 {offsets = [0, 512], sizes = [8, 512], strides = [1, 1]} : vector<8x1536xf32> to vector<8x512xf32>
    %253 = arith.addf %251, %252 : vector<8x512xf32>
    %254 = arith.negf %253 : vector<8x512xf32>
    %255 = math.exp %254 : vector<8x512xf32>
    %cst_47 = arith.constant 1.000000e+00 : f32
    %256 = vector.broadcast %cst_47 : f32 to vector<8x512xf32>
    %257 = arith.addf %256, %255 : vector<8x512xf32>
    %258 = arith.divf %256, %257 : vector<8x512xf32>
    %259 = vector.extract_strided_slice %240 {offsets = [0, 1024], sizes = [8, 512], strides = [1, 1]} : vector<8x1536xf32> to vector<8x512xf32>
    %260 = vector.extract_strided_slice %242 {offsets = [0, 1024], sizes = [8, 512], strides = [1, 1]} : vector<8x1536xf32> to vector<8x512xf32>
    %261 = vector.broadcast %2 : vector<1x512xf32> to vector<8x512xf32>
    %262 = arith.addf %260, %261 : vector<8x512xf32>
    %263 = arith.mulf %250, %262 : vector<8x512xf32>
    %264 = arith.addf %259, %263 : vector<8x512xf32>
    %265 = math.tanh %264 : vector<8x512xf32>
    %cst_48 = arith.constant 1.000000e+00 : f32
    %266 = vector.broadcast %cst_48 : f32 to vector<8x512xf32>
    %267 = arith.subf %266, %258 : vector<8x512xf32>
    %268 = arith.mulf %267, %265 : vector<8x512xf32>
    %269 = arith.mulf %258, %232 : vector<8x512xf32>
    %270 = arith.addf %268, %269 : vector<8x512xf32>
    %c7_i32 = arith.constant 7 : i32
    %271 = arith.index_cast %c7_i32 : i32 to index
    %c0_49 = arith.constant 0 : index
    %c0_50 = arith.constant 0 : index
    %272 = vector.load %arg1[%271, %c0_49, %c0_50] : memref<8x8x1xf32, #tpu.memory_space<vmem>>, vector<1x8x1xf32>
    %273 = vector.shape_cast %272 : vector<1x8x1xf32> to vector<8x1xf32>
    %274 = vector.broadcast %273 : vector<8x1xf32> to vector<8x1536xf32>
    %275 = vector.broadcast %3 : vector<1x1536xf32> to vector<8x1536xf32>
    %276 = arith.mulf %274, %275 : vector<8x1536xf32>
    %277 = vector.broadcast %1 : vector<1x1536xf32> to vector<8x1536xf32>
    %278 = arith.addf %276, %277 : vector<8x1536xf32>
    %279 = arith.truncf %270 : vector<8x512xf32> to vector<8x512xbf16>
    %cst_51 = arith.constant dense<0.000000e+00> : vector<8x1536xf32>
    %280 = tpu.matmul %279, %0, %cst_51 {dimension_numbers = #tpu.dot_dimension_numbers<[1], [1], [0], [0], [0, 0, 1, 0], [], []>} : vector<8x512xbf16>, vector<1536x512xbf16>, vector<8x1536xf32> -> vector<8x1536xf32>
    %281 = vector.extract_strided_slice %278 {offsets = [0, 0], sizes = [8, 512], strides = [1, 1]} : vector<8x1536xf32> to vector<8x512xf32>
    %282 = vector.extract_strided_slice %280 {offsets = [0, 0], sizes = [8, 512], strides = [1, 1]} : vector<8x1536xf32> to vector<8x512xf32>
    %283 = arith.addf %281, %282 : vector<8x512xf32>
    %284 = arith.negf %283 : vector<8x512xf32>
    %285 = math.exp %284 : vector<8x512xf32>
    %cst_52 = arith.constant 1.000000e+00 : f32
    %286 = vector.broadcast %cst_52 : f32 to vector<8x512xf32>
    %287 = arith.addf %286, %285 : vector<8x512xf32>
    %288 = arith.divf %286, %287 : vector<8x512xf32>
    %289 = vector.extract_strided_slice %278 {offsets = [0, 512], sizes = [8, 512], strides = [1, 1]} : vector<8x1536xf32> to vector<8x512xf32>
    %290 = vector.extract_strided_slice %280 {offsets = [0, 512], sizes = [8, 512], strides = [1, 1]} : vector<8x1536xf32> to vector<8x512xf32>
    %291 = arith.addf %289, %290 : vector<8x512xf32>
    %292 = arith.negf %291 : vector<8x512xf32>
    %293 = math.exp %292 : vector<8x512xf32>
    %cst_53 = arith.constant 1.000000e+00 : f32
    %294 = vector.broadcast %cst_53 : f32 to vector<8x512xf32>
    %295 = arith.addf %294, %293 : vector<8x512xf32>
    %296 = arith.divf %294, %295 : vector<8x512xf32>
    %297 = vector.extract_strided_slice %278 {offsets = [0, 1024], sizes = [8, 512], strides = [1, 1]} : vector<8x1536xf32> to vector<8x512xf32>
    %298 = vector.extract_strided_slice %280 {offsets = [0, 1024], sizes = [8, 512], strides = [1, 1]} : vector<8x1536xf32> to vector<8x512xf32>
    %299 = vector.broadcast %2 : vector<1x512xf32> to vector<8x512xf32>
    %300 = arith.addf %298, %299 : vector<8x512xf32>
    %301 = arith.mulf %288, %300 : vector<8x512xf32>
    %302 = arith.addf %297, %301 : vector<8x512xf32>
    %303 = math.tanh %302 : vector<8x512xf32>
    %cst_54 = arith.constant 1.000000e+00 : f32
    %304 = vector.broadcast %cst_54 : f32 to vector<8x512xf32>
    %305 = arith.subf %304, %296 : vector<8x512xf32>
    %306 = arith.mulf %305, %303 : vector<8x512xf32>
    %307 = arith.mulf %296, %270 : vector<8x512xf32>
    %308 = arith.addf %306, %307 : vector<8x512xf32>
    %c8_i32 = arith.constant 8 : i32
    %c0_55 = arith.constant 0 : index
    %c0_56 = arith.constant 0 : index
    %309 = vector.load %arg6[%c0_55, %c0_56] : memref<1x512xf32, #tpu.memory_space<vmem>>, vector<1x512xf32>
    %310 = vector.broadcast %309 : vector<1x512xf32> to vector<8x512xf32>
    %311 = arith.mulf %308, %310 : vector<8x512xf32>
    %cst_57 = arith.constant dense<0.000000e+00> : vector<8xf32>
    %312 = vector.multi_reduction <add>, %311, %cst_57 [1] : vector<8x512xf32> to vector<8xf32>
    %313 = vector.shape_cast %312 : vector<8xf32> to vector<8x1xf32>
    %c0_58 = arith.constant 0 : index
    %c0_59 = arith.constant 0 : index
    %314 = vector.load %arg7[%c0_58, %c0_59] : memref<1x1xf32, #tpu.memory_space<vmem>>, vector<1x1xf32>
    %315 = vector.broadcast %314 : vector<1x1xf32> to vector<8x1xf32>
    %316 = arith.addf %313, %315 : vector<8x1xf32>
    %c0_60 = arith.constant 0 : index
    %c0_61 = arith.constant 0 : index
    %317 = vector.load %arg8[%c0_60, %c0_61] : memref<8x1xf32, #tpu.memory_space<vmem>>, vector<8x1xf32>
    tpu.vector_store %arg8[%c0_60, %c0_61], %316 {strides = array<i32>} : memref<8x1xf32, #tpu.memory_space<vmem>>, vector<8x1xf32>,
    return
  }
  func.func @transform_0(%arg0: i32) -> (i32, i32, i32) {
    %c0_i32 = arith.constant 0 : i32
    %c0_i32_0 = arith.constant 0 : i32
    %c0_i32_1 = arith.constant 0 : i32
    return %c0_i32, %arg0, %c0_i32_0 : i32, i32, i32
  }
  func.func @transform_1(%arg0: i32) -> (i32, i32) {
    %c0_i32 = arith.constant 0 : i32
    %c0_i32_0 = arith.constant 0 : i32
    %c0_i32_1 = arith.constant 0 : i32
    return %c0_i32, %c0_i32_0 : i32, i32
  }
  func.func @transform_2(%arg0: i32) -> (i32, i32) {
    %c0_i32 = arith.constant 0 : i32
    %c0_i32_0 = arith.constant 0 : i32
    %c0_i32_1 = arith.constant 0 : i32
    return %c0_i32, %c0_i32_0 : i32, i32
  }
  func.func @transform_3(%arg0: i32) -> (i32, i32) {
    %c0_i32 = arith.constant 0 : i32
    %c0_i32_0 = arith.constant 0 : i32
    %c0_i32_1 = arith.constant 0 : i32
    return %c0_i32, %c0_i32_0 : i32, i32
  }
  func.func @transform_4(%arg0: i32) -> (i32, i32) {
    %c0_i32 = arith.constant 0 : i32
    %c0_i32_0 = arith.constant 0 : i32
    %c0_i32_1 = arith.constant 0 : i32
    return %c0_i32, %c0_i32_0 : i32, i32
  }
  func.func @transform_5(%arg0: i32) -> (i32, i32) {
    %c0_i32 = arith.constant 0 : i32
    %c0_i32_0 = arith.constant 0 : i32
    %c0_i32_1 = arith.constant 0 : i32
    return %c0_i32, %c0_i32_0 : i32, i32
  }
  func.func @transform_6(%arg0: i32) -> (i32, i32) {
    %c0_i32 = arith.constant 0 : i32
    %c0_i32_0 = arith.constant 0 : i32
    %c0_i32_1 = arith.constant 0 : i32
    return %c0_i32, %c0_i32_0 : i32, i32
  }
  func.func @transform_7(%arg0: i32) -> (i32, i32) {
    %c0_i32 = arith.constant 0 : i32
    %c0_i32_0 = arith.constant 0 : i32
    return %arg0, %c0_i32 : i32, i32
  }
}

</mosaic_0001>

<llo_original>
// kernel: tpu_custom_call.1
$region0: #{tpu_custom_call.1}
  #allocation0 [shape = 'u32[]', space=smem, size = 0x4, offset = 0x4, fixed_abs, tag = 'smem constant byte address 0x4 - core index']
  #allocation1 [shape = 'u32[144,128]{1,0:T(1,128)}', space=vmem, size = 0x12000, scoped, tag = 'internal scratch']
  #allocation2 [shape = 'f32[1,1]{1,0:T(1,128)S(1)}', space=vmem, size = 0x200, scoped, tag = 'scoped memory for tpu_custom_call.1']
  %s0 = inlined_call_operand.vmem [shape: f32[8,8,1], index: 0, kind: input, shape index: {}]
  %s1 = inlined_call_operand.hbm [shape: f32[1,1536], index: 1, kind: input, shape index: {}]
  %s2 = inlined_call_operand.hbm [shape: bf16[1536,512], index: 2, kind: input, shape index: {}]
  %s3 = inlined_call_operand.hbm [shape: f32[1,1536], index: 3, kind: input, shape index: {}]
  %s4 = inlined_call_operand.hbm [shape: f32[1,512], index: 4, kind: input, shape index: {}]
  %s5 = inlined_call_operand.hbm [shape: f32[1,512], index: 5, kind: input, shape index: {}]
  %s6 = inlined_call_operand.<no memory space> [shape: f32[1,1], index: 6, kind: input, shape index: {}]
  %s7 = inlined_call_operand.vmem [shape: f32[8,1], index: 7, kind: output, shape index: {}]
  %s8 = sld [smem:[#allocation0]]
  $region58: #{tpu_custom_call.1} parent=0
    _
  %s10 = ssub.s32 1, %s8
  %s11 = scalar_select 0, %s10, %s8
  %v12 = vstv %s6
  %13 = vst [vmem:[#allocation2] sm:$0x1] %v12
  $region1: #{tpu_custom_call.1} parent=0
    #allocation3 [shape = 'u8[6144]{0}', space=vmem, size = 0x1800, scoped, tag = 'input window, operand 1, single buffered']
    #allocation4 [shape = 's32[1]{0}', space=sflag, size = 0x4, scoped, tag = 'scoped memory for tpu_custom_call.1']
    #allocation5 [shape = 'u8[1572864]{0}', space=vmem, size = 0x180000, scoped, tag = 'input window, operand 2, single buffered']
    #allocation6 [shape = 's32[1]{0}', space=sflag, size = 0x4, scoped, tag = 'scoped memory for tpu_custom_call.1']
    #allocation7 [shape = 'u8[6144]{0}', space=vmem, size = 0x1800, scoped, tag = 'input window, operand 3, single buffered']
    #allocation8 [shape = 'u8[2048]{0}', space=vmem, size = 0x800, scoped, tag = 'input window, operand 4, single buffered']
    #allocation9 [shape = 's32[1]{0}', space=sflag, size = 0x4, scoped, tag = 'scoped memory for tpu_custom_call.1']
    #allocation10 [shape = 'u8[2048]{0}', space=vmem, size = 0x800, scoped, tag = 'input window, operand 5, single buffered']
    %14 = vsyncpa [#allocation4], 0
    %15 = vsyncpa [#allocation6], 0
    %16 = vsyncpa [#allocation9], 0
    // Predicated region
    $region2: #{tpu_custom_call.1} parent=1 // pred_check
      _
    $region3: #{tpu_custom_call.1} parent=1 // pred_check_branch
      %18 = sbr.rel (0) target = $region5
    $region4: #{tpu_custom_call.1} parent=1 // pred_region
      _
    $region5: #{tpu_custom_call.1} parent=1 // pred_fallthru
      _
    // Predicated region
    $region6: #{tpu_custom_call.1} parent=1 // pred_check
      _
    $region7: #{tpu_custom_call.1} parent=1 // pred_check_branch
      %20 = sbr.rel (0) target = $region9
    $region8: #{tpu_custom_call.1} parent=1 // pred_region
      %s22 = ssub.s32 192, 192
      %23 = vsyncadd [#allocation4], %s22
      %s25 = sshll.u32 [#allocation3], 4
      %s26 = int_to_ptr.vmem [resolvable:$true] %s25
      %28 = dma.hbm_to_vmem [thread:$0]  %s1, 192, %s26, [#allocation4]
    $region9: #{tpu_custom_call.1} parent=1 // pred_fallthru
      _
    // Predicated region
    $region10: #{tpu_custom_call.1} parent=1 // pred_check
      _
    $region11: #{tpu_custom_call.1} parent=1 // pred_check_branch
      %30 = sbr.rel (0) target = $region13
    $region12: #{tpu_custom_call.1} parent=1 // pred_region
      %s32 = ssub.s32 49152, 49152
      %33 = vsyncadd [#allocation6], %s32
      %s34 = sshll.u32 [#allocation5], 4
      %s35 = int_to_ptr.vmem [resolvable:$true] %s34
      %40 = dma.hbm_to_vmem [thread:$0]  %s2, 49152, %s35, [#allocation6], 256, 256, 16
    $region13: #{tpu_custom_call.1} parent=1 // pred_fallthru
      _
    // Predicated region
    $region14: #{tpu_custom_call.1} parent=1 // pred_check
      _
    $region15: #{tpu_custom_call.1} parent=1 // pred_check_branch
      %42 = sbr.rel (0) target = $region17
    $region16: #{tpu_custom_call.1} parent=1 // pred_region
      %s44 = ssub.s32 192, 192
      %45 = vsyncadd [#allocation6], %s44
      %s47 = sshll.u32 [#allocation7], 4
      %s48 = int_to_ptr.vmem [resolvable:$true] %s47
      %50 = dma.hbm_to_vmem [thread:$0]  %s3, 192, %s48, [#allocation6]
    $region17: #{tpu_custom_call.1} parent=1 // pred_fallthru
      _
    // Predicated region
    $region18: #{tpu_custom_call.1} parent=1 // pred_check
      _
    $region19: #{tpu_custom_call.1} parent=1 // pred_check_branch
      %52 = sbr.rel (0) target = $region21
    $region20: #{tpu_custom_call.1} parent=1 // pred_region
      %s54 = ssub.s32 64, 64
      %55 = vsyncadd [#allocation9], %s54
      %s57 = sshll.u32 [#allocation8], 4
      %s58 = int_to_ptr.vmem [resolvable:$true] %s57
      %60 = dma.hbm_to_vmem [thread:$0]  %s4, 64, %s58, [#allocation9]
    $region21: #{tpu_custom_call.1} parent=1 // pred_fallthru
      _
    // Predicated region
    $region22: #{tpu_custom_call.1} parent=1 // pred_check
      _
    $region23: #{tpu_custom_call.1} parent=1 // pred_check_branch
      %62 = sbr.rel (0) target = $region25
    $region24: #{tpu_custom_call.1} parent=1 // pred_region
      %s64 = ssub.s32 64, 64
      %65 = vsyncadd [#allocation9], %s64
      %s67 = sshll.u32 [#allocation10], 4
      %s68 = int_to_ptr.vmem [resolvable:$true] %s67
      %70 = dma.hbm_to_vmem [thread:$0]  %s5, 64, %s68, [#allocation9]
    $region25: #{tpu_custom_call.1} parent=1 // pred_fallthru
      _
    // Predicated region
    $region26: #{tpu_custom_call.1} parent=1 // pred_check
      _
    $region27: #{tpu_custom_call.1} parent=1 // pred_check_branch
      %72 = sbr.rel (0) target = $region29
    $region28: #{tpu_custom_call.1} parent=1 // pred_region
      _
    $region29: #{tpu_custom_call.1} parent=1 // pred_fallthru
      _
    // Predicated region
    $region30: #{tpu_custom_call.1} parent=1 // pred_check
      _
    $region31: #{tpu_custom_call.1} parent=1 // pred_check_branch
      %74 = sbr.rel (0) target = $region33
    $region32: #{tpu_custom_call.1} parent=1 // pred_region
      %75 = dma.done [#allocation4], 192
    $region33: #{tpu_custom_call.1} parent=1 // pred_fallthru
      _
    // Predicated region
    $region34: #{tpu_custom_call.1} parent=1 // pred_check
      _
    $region35: #{tpu_custom_call.1} parent=1 // pred_check_branch
      %77 = sbr.rel (0) target = $region37
    $region36: #{tpu_custom_call.1} parent=1 // pred_region
      %78 = dma.done [#allocation6], 49152
    $region37: #{tpu_custom_call.1} parent=1 // pred_fallthru
      _
    // Predicated region
    $region38: #{tpu_custom_call.1} parent=1 // pred_check
      _
    $region39: #{tpu_custom_call.1} parent=1 // pred_check_branch
      %80 = sbr.rel (0) target = $region41
    $region40: #{tpu_custom_call.1} parent=1 // pred_region
      %81 = dma.done [#allocation6], 192
    $region41: #{tpu_custom_call.1} parent=1 // pred_fallthru
      _
    // Predicated region
    $region42: #{tpu_custom_call.1} parent=1 // pred_check
      _
    $region43: #{tpu_custom_call.1} parent=1 // pred_check_branch
      %83 = sbr.rel (0) target = $region45
    $region44: #{tpu_custom_call.1} parent=1 // pred_region
      %84 = dma.done [#allocation9], 64
    $region45: #{tpu_custom_call.1} parent=1 // pred_fallthru
      _
    // Predicated region
    $region46: #{tpu_custom_call.1} parent=1 // pred_check
      _
    $region47: #{tpu_custom_call.1} parent=1 // pred_check_branch
      %86 = sbr.rel (0) target = $region49
    $region48: #{tpu_custom_call.1} parent=1 // pred_region
      %87 = dma.done [#allocation9], 64
    $region49: #{tpu_custom_call.1} parent=1 // pred_fallthru
      _
    %v89 = vld [vmem:[#allocation5] sm:$0xff]
    %v90 = vld [vmem:[#allocation5 + $0x8] sm:$0xff]
    %v91 = vld [vmem:[#allocation5 + $0x10] sm:$0xff]
    %v92 = vld [vmem:[#allocation5 + $0x18] sm:$0xff]
    %v93 = vld [vmem:[#allocation5 + $0x20] sm:$0xff]
    %v94 = vld [vmem:[#allocation5 + $0x28] sm:$0xff]
    %v95 = vld [vmem:[#allocation5 + $0x30] sm:$0xff]
    %v96 = vld [vmem:[#allocation5 + $0x38] sm:$0xff]
    %v97 = vld [vmem:[#allocation5 + $0x40] sm:$0xff]
    %v98 = vld [vmem:[#allocation5 + $0x48] sm:$0xff]
    %v99 = vld [vmem:[#allocation5 + $0x50] sm:$0xff]
    %v100 = vld [vmem:[#allocation5 + $0x58] sm:$0xff]
    %v101 = vld [vmem:[#allocation5 + $0x60] sm:$0xff]
    %v102 = vld [vmem:[#allocation5 + $0x68] sm:$0xff]
    %v103 = vld [vmem:[#allocation5 + $0x70] sm:$0xff]
    %v104 = vld [vmem:[#allocation5 + $0x78] sm:$0xff]
    %v105 = vld [vmem:[#allocation5 + $0x80] sm:$0xff]
    %v106 = vld [vmem:[#allocation5 + $0x88] sm:$0xff]
    %v107 = vld [vmem:[#allocation5 + $0x90] sm:$0xff]
    %v108 = vld [vmem:[#allocation5 + $0x98] sm:$0xff]
    %v109 = vld [vmem:[#allocation5 + $0xa0] sm:$0xff]
    %v110 = vld [vmem:[#allocation5 + $0xa8] sm:$0xff]
    %v111 = vld [vmem:[#allocation5 + $0xb0] sm:$0xff]
    %v112 = vld [vmem:[#allocation5 + $0xb8] sm:$0xff]
    %v113 = vld [vmem:[#allocation5 + $0xc0] sm:$0xff]
    %v114 = vld [vmem:[#allocation5 + $0xc8] sm:$0xff]
    %v115 = vld [vmem:[#allocation5 + $0xd0] sm:$0xff]
    %v116 = vld [vmem:[#allocation5 + $0xd8] sm:$0xff]
    %v117 = vld [vmem:[#allocation5 + $0xe0] sm:$0xff]
    %v118 = vld [vmem:[#allocation5 + $0xe8] sm:$0xff]
    %v119 = vld [vmem:[#allocation5 + $0xf0] sm:$0xff]
    %v120 = vld [vmem:[#allocation5 + $0xf8] sm:$0xff]
    %v121 = vld [vmem:[#allocation5 + $0x100] sm:$0xff]
    %v122 = vld [vmem:[#allocation5 + $0x108] sm:$0xff]
    %v123 = vld [vmem:[#allocation5 + $0x110] sm:$0xff]
    %v124 = vld [vmem:[#allocation5 + $0x118] sm:$0xff]
    %v125 = vld [vmem:[#allocation5 + $0x120] sm:$0xff]
    %v126 = vld [vmem:[#allocation5 + $0x128] sm:$0xff]
    %v127 = vld [vmem:[#allocation5 + $0x130] sm:$0xff]
    %v128 = vld [vmem:[#allocation5 + $0x138] sm:$0xff]
    %v129 = vld [vmem:[#allocation5 + $0x140] sm:$0xff]
    %v130 = vld [vmem:[#allocation5 + $0x148] sm:$0xff]
    %v131 = vld [vmem:[#allocation5 + $0x150] sm:$0xff]
    %v132 = vld [vmem:[#allocation5 + $0x158] sm:$0xff]
    %v133 = vld [vmem:[#allocation5 + $0x160] sm:$0xff]
    %v134 = vld [vmem:[#allocation5 + $0x168] sm:$0xff]
    %v135 = vld [vmem:[#allocation5 + $0x170] sm:$0xff]
    %v136 = vld [vmem:[#allocation5 + $0x178] sm:$0xff]
    %v137 = vld [vmem:[#allocation5 + $0x180] sm:$0xff]
    %v138 = vld [vmem:[#allocation5 + $0x188] sm:$0xff]
    %v139 = vld [vmem:[#allocation5 + $0x190] sm:$0xff]
    %v140 = vld [vmem:[#allocation5 + $0x198] sm:$0xff]
    %v141 = vld [vmem:[#allocation5 + $0x1a0] sm:$0xff]
    %v142 = vld [vmem:[#allocation5 + $0x1a8] sm:$0xff]
    %v143 = vld [vmem:[#allocation5 + $0x1b0] sm:$0xff]
    %v144 = vld [vmem:[#allocation5 + $0x1b8] sm:$0xff]
    %v145 = vld [vmem:[#allocation5 + $0x1c0] sm:$0xff]
    %v146 = vld [vmem:[#allocation5 + $0x1c8] sm:$0xff]
    %v147 = vld [vmem:[#allocation5 + $0x1d0] sm:$0xff]
    %v148 = vld [vmem:[#allocation5 + $0x1d8] sm:$0xff]
    %v149 = vld [vmem:[#allocation5 + $0x1e0] sm:$0xff]
    %v150 = vld [vmem:[#allocation5 + $0x1e8] sm:$0xff]
    %v151 = vld [vmem:[#allocation5 + $0x1f0] sm:$0xff]
    %v152 = vld [vmem:[#allocation5 + $0x1f8] sm:$0xff]
    %v153 = vld [vmem:[#allocation5 + $0x200] sm:$0xff]
    %v154 = vld [vmem:[#allocation5 + $0x208] sm:$0xff]
    %v155 = vld [vmem:[#allocation5 + $0x210] sm:$0xff]
    %v156 = vld [vmem:[#allocation5 + $0x218] sm:$0xff]
    %v157 = vld [vmem:[#allocation5 + $0x220] sm:$0xff]
    %v158 = vld [vmem:[#allocation5 + $0x228] sm:$0xff]
    %v159 = vld [vmem:[#allocation5 + $0x230] sm:$0xff]
    %v160 = vld [vmem:[#allocation5 + $0x238] sm:$0xff]
    %v161 = vld [vmem:[#allocation5 + $0x240] sm:$0xff]
    %v162 = vld [vmem:[#allocation5 + $0x248] sm:$0xff]
    %v163 = vld [vmem:[#allocation5 + $0x250] sm:$0xff]
    %v164 = vld [vmem:[#allocation5 + $0x258] sm:$0xff]
    %v165 = vld [vmem:[#allocation5 + $0x260] sm:$0xff]
    %v166 = vld [vmem:[#allocation5 + $0x268] sm:$0xff]
    %v167 = vld [vmem:[#allocation5 + $0x270] sm:$0xff]
    %v168 = vld [vmem:[#allocation5 + $0x278] sm:$0xff]
    %v169 = vld [vmem:[#allocation5 + $0x280] sm:$0xff]
    %v170 = vld [vmem:[#allocation5 + $0x288] sm:$0xff]
    %v171 = vld [vmem:[#allocation5 + $0x290] sm:$0xff]
    %v172 = vld [vmem:[#allocation5 + $0x298] sm:$0xff]
    %v173 = vld [vmem:[#allocation5 + $0x2a0] sm:$0xff]
    %v174 = vld [vmem:[#allocation5 + $0x2a8] sm:$0xff]
    %v175 = vld [vmem:[#allocation5 + $0x2b0] sm:$0xff]
    %v176 = vld [vmem:[#allocation5 + $0x2b8] sm:$0xff]
    %v177 = vld [vmem:[#allocation5 + $0x2c0] sm:$0xff]
    %v178 = vld [vmem:[#allocation5 + $0x2c8] sm:$0xff]
    %v179 = vld [vmem:[#allocation5 + $0x2d0] sm:$0xff]
    %v180 = vld [vmem:[#allocation5 + $0x2d8] sm:$0xff]
    %v181 = vld [vmem:[#allocation5 + $0x2e0] sm:$0xff]
    %v182 = vld [vmem:[#allocation5 + $0x2e8] sm:$0xff]
    %v183 = vld [vmem:[#allocation5 + $0x2f0] sm:$0xff]
    %v184 = vld [vmem:[#allocation5 + $0x2f8] sm:$0xff]
    %v185 = vld [vmem:[#allocation5 + $0x300] sm:$0xff]
    %v186 = vld [vmem:[#allocation5 + $0x308] sm:$0xff]
    %v187 = vld [vmem:[#allocation5 + $0x310] sm:$0xff]
    %v188 = vld [vmem:[#allocation5 + $0x318] sm:$0xff]
    %v189 = vld [vmem:[#allocation5 + $0x320] sm:$0xff]
    %v190 = vld [vmem:[#allocation5 + $0x328] sm:$0xff]
    %v191 = vld [vmem:[#allocation5 + $0x330] sm:$0xff]
    %v192 = vld [vmem:[#allocation5 + $0x338] sm:$0xff]
    %v193 = vld [vmem:[#allocation5 + $0x340] sm:$0xff]
    %v194 = vld [vmem:[#allocation5 + $0x348] sm:$0xff]
    %v195 = vld [vmem:[#allocation5 + $0x350] sm:$0xff]
    %v196 = vld [vmem:[#allocation5 + $0x358] sm:$0xff]
    %v197 = vld [vmem:[#allocation5 + $0x360] sm:$0xff]
    %v198 = vld [vmem:[#allocation5 + $0x368] sm:$0xff]
    %v199 = vld [vmem:[#allocation5 + $0x370] sm:$0xff]
    %v200 = vld [vmem:[#allocation5 + $0x378] sm:$0xff]
    %v201 = vld [vmem:[#allocation5 + $0x380] sm:$0xff]
    %v202 = vld [vmem:[#allocation5 + $0x388] sm:$0xff]
    %v203 = vld [vmem:[#allocation5 + $0x390] sm:$0xff]
    %v204 = vld [vmem:[#allocation5 + $0x398] sm:$0xff]
    %v205 = vld [vmem:[#allocation5 + $0x3a0] sm:$0xff]
    %v206 = vld [vmem:[#allocation5 + $0x3a8] sm:$0xff]
    %v207 = vld [vmem:[#allocation5 + $0x3b0] sm:$0xff]
    %v208 = vld [vmem:[#allocation5 + $0x3b8] sm:$0xff]
    %v209 = vld [vmem:[#allocation5 + $0x3c0] sm:$0xff]
    %v210 = vld [vmem:[#allocation5 + $0x3c8] sm:$0xff]
    %v211 = vld [vmem:[#allocation5 + $0x3d0] sm:$0xff]
    %v212 = vld [vmem:[#allocation5 + $0x3d8] sm:$0xff]
    %v213 = vld [vmem:[#allocation5 + $0x3e0] sm:$0xff]
    %v214 = vld [vmem:[#allocation5 + $0x3e8] sm:$0xff]
    %v215 = vld [vmem:[#allocation5 + $0x3f0] sm:$0xff]
    %v216 = vld [vmem:[#allocation5 + $0x3f8] sm:$0xff]
    %v217 = vld [vmem:[#allocation5 + $0x400] sm:$0xff]
    %v218 = vld [vmem:[#allocation5 + $0x408] sm:$0xff]
    %v219 = vld [vmem:[#allocation5 + $0x410] sm:$0xff]
    %v220 = vld [vmem:[#allocation5 + $0x418] sm:$0xff]
    %v221 = vld [vmem:[#allocation5 + $0x420] sm:$0xff]
    %v222 = vld [vmem:[#allocation5 + $0x428] sm:$0xff]
    %v223 = vld [vmem:[#allocation5 + $0x430] sm:$0xff]
    %v224 = vld [vmem:[#allocation5 + $0x438] sm:$0xff]
    %v225 = vld [vmem:[#allocation5 + $0x440] sm:$0xff]
    %v226 = vld [vmem:[#allocation5 + $0x448] sm:$0xff]
    %v227 = vld [vmem:[#allocation5 + $0x450] sm:$0xff]
    %v228 = vld [vmem:[#allocation5 + $0x458] sm:$0xff]
    %v229 = vld [vmem:[#allocation5 + $0x460] sm:$0xff]
    %v230 = vld [vmem:[#allocation5 + $0x468] sm:$0xff]
    %v231 = vld [vmem:[#allocation5 + $0x470] sm:$0xff]
    %v232 = vld [vmem:[#allocation5 + $0x478] sm:$0xff]
    %v233 = vld [vmem:[#allocation5 + $0x480] sm:$0xff]
    %v234 = vld [vmem:[#allocation5 + $0x488] sm:$0xff]
    %v235 = vld [vmem:[#allocation5 + $0x490] sm:$0xff]
    %v236 = vld [vmem:[#allocation5 + $0x498] sm:$0xff]
    %v237 = vld [vmem:[#allocation5 + $0x4a0] sm:$0xff]
    %v238 = vld [vmem:[#allocation5 + $0x4a8] sm:$0xff]
    %v239 = vld [vmem:[#allocation5 + $0x4b0] sm:$0xff]
    %v240 = vld [vmem:[#allocation5 + $0x4b8] sm:$0xff]
    %v241 = vld [vmem:[#allocation5 + $0x4c0] sm:$0xff]
    %v242 = vld [vmem:[#allocation5 + $0x4c8] sm:$0xff]
    %v243 = vld [vmem:[#allocation5 + $0x4d0] sm:$0xff]
    %v244 = vld [vmem:[#allocation5 + $0x4d8] sm:$0xff]
    %v245 = vld [vmem:[#allocation5 + $0x4e0] sm:$0xff]
    %v246 = vld [vmem:[#allocation5 + $0x4e8] sm:$0xff]
    %v247 = vld [vmem:[#allocation5 + $0x4f0] sm:$0xff]
    %v248 = vld [vmem:[#allocation5 + $0x4f8] sm:$0xff]
    %v249 = vld [vmem:[#allocation5 + $0x500] sm:$0xff]
    %v250 = vld [vmem:[#allocation5 + $0x508] sm:$0xff]
    %v251 = vld [vmem:[#allocation5 + $0x510] sm:$0xff]
    %v252 = vld [vmem:[#allocation5 + $0x518] sm:$0xff]
    %v253 = vld [vmem:[#allocation5 + $0x520] sm:$0xff]
    %v254 = vld [vmem:[#allocation5 + $0x528] sm:$0xff]
    %v255 = vld [vmem:[#allocation5 + $0x530] sm:$0xff]
    %v256 = vld [vmem:[#allocation5 + $0x538] sm:$0xff]
    %v257 = vld [vmem:[#allocation5 + $0x540] sm:$0xff]
    %v258 = vld [vmem:[#allocation5 + $0x548] sm:$0xff]
    %v259 = vld [vmem:[#allocation5 + $0x550] sm:$0xff]
    %v260 = vld [vmem:[#allocation5 + $0x558] sm:$0xff]
    %v261 = vld [vmem:[#allocation5 + $0x560] sm:$0xff]
    %v262 = vld [vmem:[#allocation5 + $0x568] sm:$0xff]
    %v263 = vld [vmem:[#allocation5 + $0x570] sm:$0xff]
    %v264 = vld [vmem:[#allocation5 + $0x578] sm:$0xff]
    %v265 = vld [vmem:[#allocation5 + $0x580] sm:$0xff]
    %v266 = vld [vmem:[#allocation5 + $0x588] sm:$0xff]
    %v267 = vld [vmem:[#allocation5 + $0x590] sm:$0xff]
    %v268 = vld [vmem:[#allocation5 + $0x598] sm:$0xff]
    %v269 = vld [vmem:[#allocation5 + $0x5a0] sm:$0xff]
    %v270 = vld [vmem:[#allocation5 + $0x5a8] sm:$0xff]
    %v271 = vld [vmem:[#allocation5 + $0x5b0] sm:$0xff]
    %v272 = vld [vmem:[#allocation5 + $0x5b8] sm:$0xff]
    %v273 = vld [vmem:[#allocation5 + $0x5c0] sm:$0xff]
    %v274 = vld [vmem:[#allocation5 + $0x5c8] sm:$0xff]
    %v275 = vld [vmem:[#allocation5 + $0x5d0] sm:$0xff]
    %v276 = vld [vmem:[#allocation5 + $0x5d8] sm:$0xff]
    %v277 = vld [vmem:[#allocation5 + $0x5e0] sm:$0xff]
    %v278 = vld [vmem:[#allocation5 + $0x5e8] sm:$0xff]
    %v279 = vld [vmem:[#allocation5 + $0x5f0] sm:$0xff]
    %v280 = vld [vmem:[#allocation5 + $0x5f8] sm:$0xff]
    %v281 = vld [vmem:[#allocation5 + $0x600] sm:$0xff]
    %v282 = vld [vmem:[#allocation5 + $0x608] sm:$0xff]
    %v283 = vld [vmem:[#allocation5 + $0x610] sm:$0xff]
    %v284 = vld [vmem:[#allocation5 + $0x618] sm:$0xff]
    %v285 = vld [vmem:[#allocation5 + $0x620] sm:$0xff]
    %v286 = vld [vmem:[#allocation5 + $0x628] sm:$0xff]
    %v287 = vld [vmem:[#allocation5 + $0x630] sm:$0xff]
    %v288 = vld [vmem:[#allocation5 + $0x638] sm:$0xff]
    %v289 = vld [vmem:[#allocation5 + $0x640] sm:$0xff]
    %v290 = vld [vmem:[#allocation5 + $0x648] sm:$0xff]
    %v291 = vld [vmem:[#allocation5 + $0x650] sm:$0xff]
    %v292 = vld [vmem:[#allocation5 + $0x658] sm:$0xff]
    %v293 = vld [vmem:[#allocation5 + $0x660] sm:$0xff]
    %v294 = vld [vmem:[#allocation5 + $0x668] sm:$0xff]
    %v295 = vld [vmem:[#allocation5 + $0x670] sm:$0xff]
    %v296 = vld [vmem:[#allocation5 + $0x678] sm:$0xff]
    %v297 = vld [vmem:[#allocation5 + $0x680] sm:$0xff]
    %v298 = vld [vmem:[#allocation5 + $0x688] sm:$0xff]
    %v299 = vld [vmem:[#allocation5 + $0x690] sm:$0xff]
    %v300 = vld [vmem:[#allocation5 + $0x698] sm:$0xff]
    %v301 = vld [vmem:[#allocation5 + $0x6a0] sm:$0xff]
    %v302 = vld [vmem:[#allocation5 + $0x6a8] sm:$0xff]
    %v303 = vld [vmem:[#allocation5 + $0x6b0] sm:$0xff]
    %v304 = vld [vmem:[#allocation5 + $0x6b8] sm:$0xff]
    %v305 = vld [vmem:[#allocation5 + $0x6c0] sm:$0xff]
    %v306 = vld [vmem:[#allocation5 + $0x6c8] sm:$0xff]
    %v307 = vld [vmem:[#allocation5 + $0x6d0] sm:$0xff]
    %v308 = vld [vmem:[#allocation5 + $0x6d8] sm:$0xff]
    %v309 = vld [vmem:[#allocation5 + $0x6e0] sm:$0xff]
    %v310 = vld [vmem:[#allocation5 + $0x6e8] sm:$0xff]
    %v311 = vld [vmem:[#allocation5 + $0x6f0] sm:$0xff]
    %v312 = vld [vmem:[#allocation5 + $0x6f8] sm:$0xff]
    %v313 = vld [vmem:[#allocation5 + $0x700] sm:$0xff]
    %v314 = vld [vmem:[#allocation5 + $0x708] sm:$0xff]
    %v315 = vld [vmem:[#allocation5 + $0x710] sm:$0xff]
    %v316 = vld [vmem:[#allocation5 + $0x718] sm:$0xff]
    %v317 = vld [vmem:[#allocation5 + $0x720] sm:$0xff]
    %v318 = vld [vmem:[#allocation5 + $0x728] sm:$0xff]
    %v319 = vld [vmem:[#allocation5 + $0x730] sm:$0xff]
    %v320 = vld [vmem:[#allocation5 + $0x738] sm:$0xff]
    %v321 = vld [vmem:[#allocation5 + $0x740] sm:$0xff]
    %v322 = vld [vmem:[#allocation5 + $0x748] sm:$0xff]
    %v323 = vld [vmem:[#allocation5 + $0x750] sm:$0xff]
    %v324 = vld [vmem:[#allocation5 + $0x758] sm:$0xff]
    %v325 = vld [vmem:[#allocation5 + $0x760] sm:$0xff]
    %v326 = vld [vmem:[#allocation5 + $0x768] sm:$0xff]
    %v327 = vld [vmem:[#allocation5 + $0x770] sm:$0xff]
    %v328 = vld [vmem:[#allocation5 + $0x778] sm:$0xff]
    %v329 = vld [vmem:[#allocation5 + $0x780] sm:$0xff]
    %v330 = vld [vmem:[#allocation5 + $0x788] sm:$0xff]
    %v331 = vld [vmem:[#allocation5 + $0x790] sm:$0xff]
    %v332 = vld [vmem:[#allocation5 + $0x798] sm:$0xff]
    %v333 = vld [vmem:[#allocation5 + $0x7a0] sm:$0xff]
    %v334 = vld [vmem:[#allocation5 + $0x7a8] sm:$0xff]
    %v335 = vld [vmem:[#allocation5 + $0x7b0] sm:$0xff]
    %v336 = vld [vmem:[#allocation5 + $0x7b8] sm:$0xff]
    %v337 = vld [vmem:[#allocation5 + $0x7c0] sm:$0xff]
    %v338 = vld [vmem:[#allocation5 + $0x7c8] sm:$0xff]
    %v339 = vld [vmem:[#allocation5 + $0x7d0] sm:$0xff]
    %v340 = vld [vmem:[#allocation5 + $0x7d8] sm:$0xff]
    %v341 = vld [vmem:[#allocation5 + $0x7e0] sm:$0xff]
    %v342 = vld [vmem:[#allocation5 + $0x7e8] sm:$0xff]
    %v343 = vld [vmem:[#allocation5 + $0x7f0] sm:$0xff]
    %v344 = vld [vmem:[#allocation5 + $0x7f8] sm:$0xff]
    %v345 = vld [vmem:[#allocation5 + $0x800] sm:$0xff]
    %v346 = vld [vmem:[#allocation5 + $0x808] sm:$0xff]
    %v347 = vld [vmem:[#allocation5 + $0x810] sm:$0xff]
    %v348 = vld [vmem:[#allocation5 + $0x818] sm:$0xff]
    %v349 = vld [vmem:[#allocation5 + $0x820] sm:$0xff]
    %v350 = vld [vmem:[#allocation5 + $0x828] sm:$0xff]
    %v351 = vld [vmem:[#allocation5 + $0x830] sm:$0xff]
    %v352 = vld [vmem:[#allocation5 + $0x838] sm:$0xff]
    %v353 = vld [vmem:[#allocation5 + $0x840] sm:$0xff]
    %v354 = vld [vmem:[#allocation5 + $0x848] sm:$0xff]
    %v355 = vld [vmem:[#allocation5 + $0x850] sm:$0xff]
    %v356 = vld [vmem:[#allocation5 + $0x858] sm:$0xff]
    %v357 = vld [vmem:[#allocation5 + $0x860] sm:$0xff]
    %v358 = vld [vmem:[#allocation5 + $0x868] sm:$0xff]
    %v359 = vld [vmem:[#allocation5 + $0x870] sm:$0xff]
    %v360 = vld [vmem:[#allocation5 + $0x878] sm:$0xff]
    %v361 = vld [vmem:[#allocation5 + $0x880] sm:$0xff]
    %v362 = vld [vmem:[#allocation5 + $0x888] sm:$0xff]
    %v363 = vld [vmem:[#allocation5 + $0x890] sm:$0xff]
    %v364 = vld [vmem:[#allocation5 + $0x898] sm:$0xff]
    %v365 = vld [vmem:[#allocation5 + $0x8a0] sm:$0xff]
    %v366 = vld [vmem:[#allocation5 + $0x8a8] sm:$0xff]
    %v367 = vld [vmem:[#allocation5 + $0x8b0] sm:$0xff]
    %v368 = vld [vmem:[#allocation5 + $0x8b8] sm:$0xff]
    %v369 = vld [vmem:[#allocation5 + $0x8c0] sm:$0xff]
    %v370 = vld [vmem:[#allocation5 + $0x8c8] sm:$0xff]
    %v371 = vld [vmem:[#allocation5 + $0x8d0] sm:$0xff]
    %v372 = vld [vmem:[#allocation5 + $0x8d8] sm:$0xff]
    %v373 = vld [vmem:[#allocation5 + $0x8e0] sm:$0xff]
    %v374 = vld [vmem:[#allocation5 + $0x8e8] sm:$0xff]
    %v375 = vld [vmem:[#allocation5 + $0x8f0] sm:$0xff]
    %v376 = vld [vmem:[#allocation5 + $0x8f8] sm:$0xff]
    %v377 = vld [vmem:[#allocation5 + $0x900] sm:$0xff]
    %v378 = vld [vmem:[#allocation5 + $0x908] sm:$0xff]
    %v379 = vld [vmem:[#allocation5 + $0x910] sm:$0xff]
    %v380 = vld [vmem:[#allocation5 + $0x918] sm:$0xff]
    %v381 = vld [vmem:[#allocation5 + $0x920] sm:$0xff]
    %v382 = vld [vmem:[#allocation5 + $0x928] sm:$0xff]
    %v383 = vld [vmem:[#allocation5 + $0x930] sm:$0xff]
    %v384 = vld [vmem:[#allocation5 + $0x938] sm:$0xff]
    %v385 = vld [vmem:[#allocation5 + $0x940] sm:$0xff]
    %v386 = vld [vmem:[#allocation5 + $0x948] sm:$0xff]
    %v387 = vld [vmem:[#allocation5 + $0x950] sm:$0xff]
    %v388 = vld [vmem:[#allocation5 + $0x958] sm:$0xff]
    %v389 = vld [vmem:[#allocation5 + $0x960] sm:$0xff]
    %v390 = vld [vmem:[#allocation5 + $0x968] sm:$0xff]
    %v391 = vld [vmem:[#allocation5 + $0x970] sm:$0xff]
    %v392 = vld [vmem:[#allocation5 + $0x978] sm:$0xff]
    %v393 = vld [vmem:[#allocation5 + $0x980] sm:$0xff]
    %v394 = vld [vmem:[#allocation5 + $0x988] sm:$0xff]
    %v395 = vld [vmem:[#allocation5 + $0x990] sm:$0xff]
    %v396 = vld [vmem:[#allocation5 + $0x998] sm:$0xff]
    %v397 = vld [vmem:[#allocation5 + $0x9a0] sm:$0xff]
    %v398 = vld [vmem:[#allocation5 + $0x9a8] sm:$0xff]
    %v399 = vld [vmem:[#allocation5 + $0x9b0] sm:$0xff]
    %v400 = vld [vmem:[#allocation5 + $0x9b8] sm:$0xff]
    %v401 = vld [vmem:[#allocation5 + $0x9c0] sm:$0xff]
    %v402 = vld [vmem:[#allocation5 + $0x9c8] sm:$0xff]
    %v403 = vld [vmem:[#allocation5 + $0x9d0] sm:$0xff]
    %v404 = vld [vmem:[#allocation5 + $0x9d8] sm:$0xff]
    %v405 = vld [vmem:[#allocation5 + $0x9e0] sm:$0xff]
    %v406 = vld [vmem:[#allocation5 + $0x9e8] sm:$0xff]
    %v407 = vld [vmem:[#allocation5 + $0x9f0] sm:$0xff]
    %v408 = vld [vmem:[#allocation5 + $0x9f8] sm:$0xff]
    %v409 = vld [vmem:[#allocation5 + $0xa00] sm:$0xff]
    %v410 = vld [vmem:[#allocation5 + $0xa08] sm:$0xff]
    %v411 = vld [vmem:[#allocation5 + $0xa10] sm:$0xff]
    %v412 = vld [vmem:[#allocation5 + $0xa18] sm:$0xff]
    %v413 = vld [vmem:[#allocation5 + $0xa20] sm:$0xff]
    %v414 = vld [vmem:[#allocation5 + $0xa28] sm:$0xff]
    %v415 = vld [vmem:[#allocation5 + $0xa30] sm:$0xff]
    %v416 = vld [vmem:[#allocation5 + $0xa38] sm:$0xff]
    %v417 = vld [vmem:[#allocation5 + $0xa40] sm:$0xff]
    %v418 = vld [vmem:[#allocation5 + $0xa48] sm:$0xff]
    %v419 = vld [vmem:[#allocation5 + $0xa50] sm:$0xff]
    %v420 = vld [vmem:[#allocation5 + $0xa58] sm:$0xff]
    %v421 = vld [vmem:[#allocation5 + $0xa60] sm:$0xff]
    %v422 = vld [vmem:[#allocation5 + $0xa68] sm:$0xff]
    %v423 = vld [vmem:[#allocation5 + $0xa70] sm:$0xff]
    %v424 = vld [vmem:[#allocation5 + $0xa78] sm:$0xff]
    %v425 = vld [vmem:[#allocation5 + $0xa80] sm:$0xff]
    %v426 = vld [vmem:[#allocation5 + $0xa88] sm:$0xff]
    %v427 = vld [vmem:[#allocation5 + $0xa90] sm:$0xff]
    %v428 = vld [vmem:[#allocation5 + $0xa98] sm:$0xff]
    %v429 = vld [vmem:[#allocation5 + $0xaa0] sm:$0xff]
    %v430 = vld [vmem:[#allocation5 + $0xaa8] sm:$0xff]
    %v431 = vld [vmem:[#allocation5 + $0xab0] sm:$0xff]
    %v432 = vld [vmem:[#allocation5 + $0xab8] sm:$0xff]
    %v433 = vld [vmem:[#allocation5 + $0xac0] sm:$0xff]
    %v434 = vld [vmem:[#allocation5 + $0xac8] sm:$0xff]
    %v435 = vld [vmem:[#allocation5 + $0xad0] sm:$0xff]
    %v436 = vld [vmem:[#allocation5 + $0xad8] sm:$0xff]
    %v437 = vld [vmem:[#allocation5 + $0xae0] sm:$0xff]
    %v438 = vld [vmem:[#allocation5 + $0xae8] sm:$0xff]
    %v439 = vld [vmem:[#allocation5 + $0xaf0] sm:$0xff]
    %v440 = vld [vmem:[#allocation5 + $0xaf8] sm:$0xff]
    %v441 = vld [vmem:[#allocation5 + $0xb00] sm:$0xff]
    %v442 = vld [vmem:[#allocation5 + $0xb08] sm:$0xff]
    %v443 = vld [vmem:[#allocation5 + $0xb10] sm:$0xff]
    %v444 = vld [vmem:[#allocation5 + $0xb18] sm:$0xff]
    %v445 = vld [vmem:[#allocation5 + $0xb20] sm:$0xff]
    %v446 = vld [vmem:[#allocation5 + $0xb28] sm:$0xff]
    %v447 = vld [vmem:[#allocation5 + $0xb30] sm:$0xff]
    %v448 = vld [vmem:[#allocation5 + $0xb38] sm:$0xff]
    %v449 = vld [vmem:[#allocation5 + $0xb40] sm:$0xff]
    %v450 = vld [vmem:[#allocation5 + $0xb48] sm:$0xff]
    %v451 = vld [vmem:[#allocation5 + $0xb50] sm:$0xff]
    %v452 = vld [vmem:[#allocation5 + $0xb58] sm:$0xff]
    %v453 = vld [vmem:[#allocation5 + $0xb60] sm:$0xff]
    %v454 = vld [vmem:[#allocation5 + $0xb68] sm:$0xff]
    %v455 = vld [vmem:[#allocation5 + $0xb70] sm:$0xff]
    %v456 = vld [vmem:[#allocation5 + $0xb78] sm:$0xff]
    %v457 = vld [vmem:[#allocation5 + $0xb80] sm:$0xff]
    %v458 = vld [vmem:[#allocation5 + $0xb88] sm:$0xff]
    %v459 = vld [vmem:[#allocation5 + $0xb90] sm:$0xff]
    %v460 = vld [vmem:[#allocation5 + $0xb98] sm:$0xff]
    %v461 = vld [vmem:[#allocation5 + $0xba0] sm:$0xff]
    %v462 = vld [vmem:[#allocation5 + $0xba8] sm:$0xff]
    %v463 = vld [vmem:[#allocation5 + $0xbb0] sm:$0xff]
    %v464 = vld [vmem:[#allocation5 + $0xbb8] sm:$0xff]
    %v465 = vld [vmem:[#allocation5 + $0xbc0] sm:$0xff]
    %v466 = vld [vmem:[#allocation5 + $0xbc8] sm:$0xff]
    %v467 = vld [vmem:[#allocation5 + $0xbd0] sm:$0xff]
    %v468 = vld [vmem:[#allocation5 + $0xbd8] sm:$0xff]
    %v469 = vld [vmem:[#allocation5 + $0xbe0] sm:$0xff]
    %v470 = vld [vmem:[#allocation5 + $0xbe8] sm:$0xff]
    %v471 = vld [vmem:[#allocation5 + $0xbf0] sm:$0xff]
    %v472 = vld [vmem:[#allocation5 + $0xbf8] sm:$0xff]
    %v473 = vld [vmem:[#allocation7] sm:$0xff]
    %v474 = vld [vmem:[#allocation7 + $0x8] sm:$0xf]
    %v475 = vld [vmem:[#allocation8] sm:$0xf]
    %v476 = vld [vmem:[#allocation3] sm:$0xff]
    %v477 = vld [vmem:[#allocation3 + $0x8] sm:$0xf]
    %v478 = vld [vmem:[%s0] sm:$0xff]
    %480 = vset.pattern.permute.xlu0 0
    %481 = vperm.xlu0 %480, %v478
    %v482 = vpop.permute.xlu0 %481
    %v486 = vlaneseq
    %v487 = vshrl.u32 %v486, 7
    %v488 = vsub.s32 0, %v487
    %v489 = vrot.slane %v476, %v488
    %v490 = vlaneseq
    %v491 = vshrl.u32 %v490, 7
    %v492 = vsub.s32 1, %v491
    %v493 = vrot.slane %v476, %v492
    %v494 = vlaneseq
    %v495 = vshrl.u32 %v494, 7
    %v496 = vsub.s32 2, %v495
    %v497 = vrot.slane %v476, %v496
    %v498 = vlaneseq
    %v499 = vshrl.u32 %v498, 7
    %v500 = vsub.s32 3, %v499
    %v501 = vrot.slane %v476, %v500
    %v502 = vlaneseq
    %v503 = vshrl.u32 %v502, 7
    %v504 = vsub.s32 4, %v503
    %v505 = vrot.slane %v476, %v504
    %v506 = vlaneseq
    %v507 = vshrl.u32 %v506, 7
    %v508 = vsub.s32 5, %v507
    %v509 = vrot.slane %v476, %v508
    %v510 = vlaneseq
    %v511 = vshrl.u32 %v510, 7
    %v512 = vsub.s32 6, %v511
    %v513 = vrot.slane %v476, %v512
    %v514 = vlaneseq
    %v515 = vshrl.u32 %v514, 7
    %v516 = vsub.s32 7, %v515
    %v517 = vrot.slane %v476, %v516
    %v518 = vlaneseq
    %v519 = vshrl.u32 %v518, 7
    %v520 = vsub.s32 0, %v519
    %v521 = vrot.slane %v477, %v520
    %v522 = vlaneseq
    %v523 = vshrl.u32 %v522, 7
    %v524 = vsub.s32 1, %v523
    %v525 = vrot.slane %v477, %v524
    %v526 = vlaneseq
    %v527 = vshrl.u32 %v526, 7
    %v528 = vsub.s32 2, %v527
    %v529 = vrot.slane %v477, %v528
    %v530 = vlaneseq
    %v531 = vshrl.u32 %v530, 7
    %v532 = vsub.s32 3, %v531
    %v533 = vrot.slane %v477, %v532
    %v546 = vmul.f32 %v482, %v489
    %v547 = vmul.f32 %v482, %v493
    %v548 = vmul.f32 %v482, %v497
    %v549 = vmul.f32 %v482, %v501
    %v550 = vmul.f32 %v482, %v505
    %v551 = vmul.f32 %v482, %v509
    %v552 = vmul.f32 %v482, %v513
    %v553 = vmul.f32 %v482, %v517
    %v554 = vmul.f32 %v482, %v521
    %v555 = vmul.f32 %v482, %v525
    %v556 = vmul.f32 %v482, %v529
    %v557 = vmul.f32 %v482, %v533
    %v560 = vlaneseq
    %v561 = vshrl.u32 %v560, 7
    %v562 = vsub.s32 0, %v561
    %v563 = vrot.slane %v473, %v562
    %v564 = vlaneseq
    %v565 = vshrl.u32 %v564, 7
    %v566 = vsub.s32 1, %v565
    %v567 = vrot.slane %v473, %v566
    %v568 = vlaneseq
    %v569 = vshrl.u32 %v568, 7
    %v570 = vsub.s32 2, %v569
    %v571 = vrot.slane %v473, %v570
    %v572 = vlaneseq
    %v573 = vshrl.u32 %v572, 7
    %v574 = vsub.s32 3, %v573
    %v575 = vrot.slane %v473, %v574
    %v576 = vlaneseq
    %v577 = vshrl.u32 %v576, 7
    %v578 = vsub.s32 4, %v577
    %v579 = vrot.slane %v473, %v578
    %v580 = vlaneseq
    %v581 = vshrl.u32 %v580, 7
    %v582 = vsub.s32 5, %v581
    %v583 = vrot.slane %v473, %v582
    %v584 = vlaneseq
    %v585 = vshrl.u32 %v584, 7
    %v586 = vsub.s32 6, %v585
    %v587 = vrot.slane %v473, %v586
    %v588 = vlaneseq
    %v589 = vshrl.u32 %v588, 7
    %v590 = vsub.s32 7, %v589
    %v591 = vrot.slane %v473, %v590
    %v592 = vlaneseq
    %v593 = vshrl.u32 %v592, 7
    %v594 = vsub.s32 0, %v593
    %v595 = vrot.slane %v474, %v594
    %v596 = vlaneseq
    %v597 = vshrl.u32 %v596, 7
    %v598 = vsub.s32 1, %v597
    %v599 = vrot.slane %v474, %v598
    %v600 = vlaneseq
    %v601 = vshrl.u32 %v600, 7
    %v602 = vsub.s32 2, %v601
    %v603 = vrot.slane %v474, %v602
    %v604 = vlaneseq
    %v605 = vshrl.u32 %v604, 7
    %v606 = vsub.s32 3, %v605
    %v607 = vrot.slane %v474, %v606
    %v620 = vadd.f32 %v546, %v563
    %v621 = vadd.f32 %v547, %v567
    %v622 = vadd.f32 %v548, %v571
    %v623 = vadd.f32 %v549, %v575
    %v624 = vadd.f32 %v550, %v579
    %v625 = vadd.f32 %v551, %v583
    %v626 = vadd.f32 %v552, %v587
    %v627 = vadd.f32 %v553, %v591
    %v628 = vadd.f32 %v554, %v595
    %v629 = vadd.f32 %v555, %v599
    %v630 = vadd.f32 %v556, %v603
    %v631 = vadd.f32 %v557, %v607
    %v1016 = vunpack.c.l.b16 %v89
    %v1017 = vunpack.c.h.b16 %v89
    %v1018 = vunpack.c.l.b16 %v90
    %v1019 = vunpack.c.h.b16 %v90
    %v1020 = vunpack.c.l.b16 %v91
    %v1021 = vunpack.c.h.b16 %v91
    %v1022 = vunpack.c.l.b16 %v92
    %v1023 = vunpack.c.h.b16 %v92
    %v1024 = vunpack.c.l.b16 %v93
    %v1025 = vunpack.c.h.b16 %v93
    %v1026 = vunpack.c.l.b16 %v94
    %v1027 = vunpack.c.h.b16 %v94
    %v1028 = vunpack.c.l.b16 %v95
    %v1029 = vunpack.c.h.b16 %v95
    %v1030 = vunpack.c.l.b16 %v96
    %v1031 = vunpack.c.h.b16 %v96
    %v1032 = vunpack.c.l.b16 %v97
    %v1033 = vunpack.c.h.b16 %v97
    %v1034 = vunpack.c.l.b16 %v98
    %v1035 = vunpack.c.h.b16 %v98
    %v1036 = vunpack.c.l.b16 %v99
    %v1037 = vunpack.c.h.b16 %v99
    %v1038 = vunpack.c.l.b16 %v100
    %v1039 = vunpack.c.h.b16 %v100
    %v1040 = vunpack.c.l.b16 %v101
    %v1041 = vunpack.c.h.b16 %v101
    %v1042 = vunpack.c.l.b16 %v102
    %v1043 = vunpack.c.h.b16 %v102
    %v1044 = vunpack.c.l.b16 %v103
    %v1045 = vunpack.c.h.b16 %v103
    %v1046 = vunpack.c.l.b16 %v104
    %v1047 = vunpack.c.h.b16 %v104
    %v1048 = vunpack.c.l.b16 %v105
    %v1049 = vunpack.c.h.b16 %v105
    %v1050 = vunpack.c.l.b16 %v106
    %v1051 = vunpack.c.h.b16 %v106
    %v1052 = vunpack.c.l.b16 %v107
    %v1053 = vunpack.c.h.b16 %v107
    %v1054 = vunpack.c.l.b16 %v108
    %v1055 = vunpack.c.h.b16 %v108
    %v1056 = vunpack.c.l.b16 %v109
    %v1057 = vunpack.c.h.b16 %v109
    %v1058 = vunpack.c.l.b16 %v110
    %v1059 = vunpack.c.h.b16 %v110
    %v1060 = vunpack.c.l.b16 %v111
    %v1061 = vunpack.c.h.b16 %v111
    %v1062 = vunpack.c.l.b16 %v112
    %v1063 = vunpack.c.h.b16 %v112
    %v1064 = vunpack.c.l.b16 %v113
    %v1065 = vunpack.c.h.b16 %v113
    %v1066 = vunpack.c.l.b16 %v114
    %v1067 = vunpack.c.h.b16 %v114
    %v1068 = vunpack.c.l.b16 %v115
    %v1069 = vunpack.c.h.b16 %v115
    %v1070 = vunpack.c.l.b16 %v116
    %v1071 = vunpack.c.h.b16 %v116
    %v1072 = vunpack.c.l.b16 %v117
    %v1073 = vunpack.c.h.b16 %v117
    %v1074 = vunpack.c.l.b16 %v118
    %v1075 = vunpack.c.h.b16 %v118
    %v1076 = vunpack.c.l.b16 %v119
    %v1077 = vunpack.c.h.b16 %v119
    %v1078 = vunpack.c.l.b16 %v120
    %v1079 = vunpack.c.h.b16 %v120
    %v1080 = vunpack.c.l.b16 %v121
    %v1081 = vunpack.c.h.b16 %v121
    %v1082 = vunpack.c.l.b16 %v122
    %v1083 = vunpack.c.h.b16 %v122
    %v1084 = vunpack.c.l.b16 %v123
    %v1085 = vunpack.c.h.b16 %v123
    %v1086 = vunpack.c.l.b16 %v124
    %v1087 = vunpack.c.h.b16 %v124
    %v1088 = vunpack.c.l.b16 %v125
    %v1089 = vunpack.c.h.b16 %v125
    %v1090 = vunpack.c.l.b16 %v126
    %v1091 = vunpack.c.h.b16 %v126
    %v1092 = vunpack.c.l.b16 %v127
    %v1093 = vunpack.c.h.b16 %v127
    %v1094 = vunpack.c.l.b16 %v128
    %v1095 = vunpack.c.h.b16 %v128
    %v1096 = vunpack.c.l.b16 %v129
    %v1097 = vunpack.c.h.b16 %v129
    %v1098 = vunpack.c.l.b16 %v130
    %v1099 = vunpack.c.h.b16 %v130
    %v1100 = vunpack.c.l.b16 %v131
    %v1101 = vunpack.c.h.b16 %v131
    %v1102 = vunpack.c.l.b16 %v132
    %v1103 = vunpack.c.h.b16 %v132
    %v1104 = vunpack.c.l.b16 %v133
    %v1105 = vunpack.c.h.b16 %v133
    %v1106 = vunpack.c.l.b16 %v134
    %v1107 = vunpack.c.h.b16 %v134
    %v1108 = vunpack.c.l.b16 %v135
    %v1109 = vunpack.c.h.b16 %v135
    %v1110 = vunpack.c.l.b16 %v136
    %v1111 = vunpack.c.h.b16 %v136
    %v1112 = vunpack.c.l.b16 %v137
    %v1113 = vunpack.c.h.b16 %v137
    %v1114 = vunpack.c.l.b16 %v138
    %v1115 = vunpack.c.h.b16 %v138
    %v1116 = vunpack.c.l.b16 %v139
    %v1117 = vunpack.c.h.b16 %v139
    %v1118 = vunpack.c.l.b16 %v140
    %v1119 = vunpack.c.h.b16 %v140
    %v1120 = vunpack.c.l.b16 %v141
    %v1121 = vunpack.c.h.b16 %v141
    %v1122 = vunpack.c.l.b16 %v142
    %v1123 = vunpack.c.h.b16 %v142
    %v1124 = vunpack.c.l.b16 %v143
    %v1125 = vunpack.c.h.b16 %v143
    %v1126 = vunpack.c.l.b16 %v144
    %v1127 = vunpack.c.h.b16 %v144
    %v1128 = vunpack.c.l.b16 %v145
    %v1129 = vunpack.c.h.b16 %v145
    %v1130 = vunpack.c.l.b16 %v146
    %v1131 = vunpack.c.h.b16 %v146
    %v1132 = vunpack.c.l.b16 %v147
    %v1133 = vunpack.c.h.b16 %v147
    %v1134 = vunpack.c.l.b16 %v148
    %v1135 = vunpack.c.h.b16 %v148
    %v1136 = vunpack.c.l.b16 %v149
    %v1137 = vunpack.c.h.b16 %v149
    %v1138 = vunpack.c.l.b16 %v150
    %v1139 = vunpack.c.h.b16 %v150
    %v1140 = vunpack.c.l.b16 %v151
    %v1141 = vunpack.c.h.b16 %v151
    %v1142 = vunpack.c.l.b16 %v152
    %v1143 = vunpack.c.h.b16 %v152
    %v1144 = vunpack.c.l.b16 %v153
    %v1145 = vunpack.c.h.b16 %v153
    %v1146 = vunpack.c.l.b16 %v154
    %v1147 = vunpack.c.h.b16 %v154
    %v1148 = vunpack.c.l.b16 %v155
    %v1149 = vunpack.c.h.b16 %v155
    %v1150 = vunpack.c.l.b16 %v156
    %v1151 = vunpack.c.h.b16 %v156
    %v1152 = vunpack.c.l.b16 %v157
    %v1153 = vunpack.c.h.b16 %v157
    %v1154 = vunpack.c.l.b16 %v158
    %v1155 = vunpack.c.h.b16 %v158
    %v1156 = vunpack.c.l.b16 %v159
    %v1157 = vunpack.c.h.b16 %v159
    %v1158 = vunpack.c.l.b16 %v160
    %v1159 = vunpack.c.h.b16 %v160
    %v1160 = vunpack.c.l.b16 %v161
    %v1161 = vunpack.c.h.b16 %v161
    %v1162 = vunpack.c.l.b16 %v162
    %v1163 = vunpack.c.h.b16 %v162
    %v1164 = vunpack.c.l.b16 %v163
    %v1165 = vunpack.c.h.b16 %v163
    %v1166 = vunpack.c.l.b16 %v164
    %v1167 = vunpack.c.h.b16 %v164
    %v1168 = vunpack.c.l.b16 %v165
    %v1169 = vunpack.c.h.b16 %v165
    %v1170 = vunpack.c.l.b16 %v166
    %v1171 = vunpack.c.h.b16 %v166
    %v1172 = vunpack.c.l.b16 %v167
    %v1173 = vunpack.c.h.b16 %v167
    %v1174 = vunpack.c.l.b16 %v168
    %v1175 = vunpack.c.h.b16 %v168
    %v1176 = vunpack.c.l.b16 %v169
    %v1177 = vunpack.c.h.b16 %v169
    %v1178 = vunpack.c.l.b16 %v170
    %v1179 = vunpack.c.h.b16 %v170
    %v1180 = vunpack.c.l.b16 %v171
    %v1181 = vunpack.c.h.b16 %v171
    %v1182 = vunpack.c.l.b16 %v172
    %v1183 = vunpack.c.h.b16 %v172
    %v1184 = vunpack.c.l.b16 %v173
    %v1185 = vunpack.c.h.b16 %v173
    %v1186 = vunpack.c.l.b16 %v174
    %v1187 = vunpack.c.h.b16 %v174
    %v1188 = vunpack.c.l.b16 %v175
    %v1189 = vunpack.c.h.b16 %v175
    %v1190 = vunpack.c.l.b16 %v176
    %v1191 = vunpack.c.h.b16 %v176
    %v1192 = vunpack.c.l.b16 %v177
    %v1193 = vunpack.c.h.b16 %v177
    %v1194 = vunpack.c.l.b16 %v178
    %v1195 = vunpack.c.h.b16 %v178
    %v1196 = vunpack.c.l.b16 %v179
    %v1197 = vunpack.c.h.b16 %v179
    %v1198 = vunpack.c.l.b16 %v180
    %v1199 = vunpack.c.h.b16 %v180
    %v1200 = vunpack.c.l.b16 %v181
    %v1201 = vunpack.c.h.b16 %v181
    %v1202 = vunpack.c.l.b16 %v182
    %v1203 = vunpack.c.h.b16 %v182
    %v1204 = vunpack.c.l.b16 %v183
    %v1205 = vunpack.c.h.b16 %v183
    %v1206 = vunpack.c.l.b16 %v184
    %v1207 = vunpack.c.h.b16 %v184
    %v1208 = vunpack.c.l.b16 %v185
    %v1209 = vunpack.c.h.b16 %v185
    %v1210 = vunpack.c.l.b16 %v186
    %v1211 = vunpack.c.h.b16 %v186
    %v1212 = vunpack.c.l.b16 %v187
    %v1213 = vunpack.c.h.b16 %v187
    %v1214 = vunpack.c.l.b16 %v188
    %v1215 = vunpack.c.h.b16 %v188
    %v1216 = vunpack.c.l.b16 %v189
    %v1217 = vunpack.c.h.b16 %v189
    %v1218 = vunpack.c.l.b16 %v190
    %v1219 = vunpack.c.h.b16 %v190
    %v1220 = vunpack.c.l.b16 %v191
    %v1221 = vunpack.c.h.b16 %v191
    %v1222 = vunpack.c.l.b16 %v192
    %v1223 = vunpack.c.h.b16 %v192
    %v1224 = vunpack.c.l.b16 %v193
    %v1225 = vunpack.c.h.b16 %v193
    %v1226 = vunpack.c.l.b16 %v194
    %v1227 = vunpack.c.h.b16 %v194
    %v1228 = vunpack.c.l.b16 %v195
    %v1229 = vunpack.c.h.b16 %v195
    %v1230 = vunpack.c.l.b16 %v196
    %v1231 = vunpack.c.h.b16 %v196
    %v1232 = vunpack.c.l.b16 %v197
    %v1233 = vunpack.c.h.b16 %v197
    %v1234 = vunpack.c.l.b16 %v198
    %v1235 = vunpack.c.h.b16 %v198
    %v1236 = vunpack.c.l.b16 %v199
    %v1237 = vunpack.c.h.b16 %v199
    %v1238 = vunpack.c.l.b16 %v200
    %v1239 = vunpack.c.h.b16 %v200
    %v1240 = vunpack.c.l.b16 %v201
    %v1241 = vunpack.c.h.b16 %v201
    %v1242 = vunpack.c.l.b16 %v202
    %v1243 = vunpack.c.h.b16 %v202
    %v1244 = vunpack.c.l.b16 %v203
    %v1245 = vunpack.c.h.b16 %v203
    %v1246 = vunpack.c.l.b16 %v204
    %v1247 = vunpack.c.h.b16 %v204
    %v1248 = vunpack.c.l.b16 %v205
    %v1249 = vunpack.c.h.b16 %v205
    %v1250 = vunpack.c.l.b16 %v206
    %v1251 = vunpack.c.h.b16 %v206
    %v1252 = vunpack.c.l.b16 %v207
    %v1253 = vunpack.c.h.b16 %v207
    %v1254 = vunpack.c.l.b16 %v208
    %v1255 = vunpack.c.h.b16 %v208
    %v1256 = vunpack.c.l.b16 %v209
    %v1257 = vunpack.c.h.b16 %v209
    %v1258 = vunpack.c.l.b16 %v210
    %v1259 = vunpack.c.h.b16 %v210
    %v1260 = vunpack.c.l.b16 %v211
    %v1261 = vunpack.c.h.b16 %v211
    %v1262 = vunpack.c.l.b16 %v212
    %v1263 = vunpack.c.h.b16 %v212
    %v1264 = vunpack.c.l.b16 %v213
    %v1265 = vunpack.c.h.b16 %v213
    %v1266 = vunpack.c.l.b16 %v214
    %v1267 = vunpack.c.h.b16 %v214
    %v1268 = vunpack.c.l.b16 %v215
    %v1269 = vunpack.c.h.b16 %v215
    %v1270 = vunpack.c.l.b16 %v216
    %v1271 = vunpack.c.h.b16 %v216
    %v1272 = vunpack.c.l.b16 %v217
    %v1273 = vunpack.c.h.b16 %v217
    %v1274 = vunpack.c.l.b16 %v218
    %v1275 = vunpack.c.h.b16 %v218
    %v1276 = vunpack.c.l.b16 %v219
    %v1277 = vunpack.c.h.b16 %v219
    %v1278 = vunpack.c.l.b16 %v220
    %v1279 = vunpack.c.h.b16 %v220
    %v1280 = vunpack.c.l.b16 %v221
    %v1281 = vunpack.c.h.b16 %v221
    %v1282 = vunpack.c.l.b16 %v222
    %v1283 = vunpack.c.h.b16 %v222
    %v1284 = vunpack.c.l.b16 %v223
    %v1285 = vunpack.c.h.b16 %v223
    %v1286 = vunpack.c.l.b16 %v224
    %v1287 = vunpack.c.h.b16 %v224
    %v1288 = vunpack.c.l.b16 %v225
    %v1289 = vunpack.c.h.b16 %v225
    %v1290 = vunpack.c.l.b16 %v226
    %v1291 = vunpack.c.h.b16 %v226
    %v1292 = vunpack.c.l.b16 %v227
    %v1293 = vunpack.c.h.b16 %v227
    %v1294 = vunpack.c.l.b16 %v228
    %v1295 = vunpack.c.h.b16 %v228
    %v1296 = vunpack.c.l.b16 %v229
    %v1297 = vunpack.c.h.b16 %v229
    %v1298 = vunpack.c.l.b16 %v230
    %v1299 = vunpack.c.h.b16 %v230
    %v1300 = vunpack.c.l.b16 %v231
    %v1301 = vunpack.c.h.b16 %v231
    %v1302 = vunpack.c.l.b16 %v232
    %v1303 = vunpack.c.h.b16 %v232
    %v1304 = vunpack.c.l.b16 %v233
    %v1305 = vunpack.c.h.b16 %v233
    %v1306 = vunpack.c.l.b16 %v234
    %v1307 = vunpack.c.h.b16 %v234
    %v1308 = vunpack.c.l.b16 %v235
    %v1309 = vunpack.c.h.b16 %v235
    %v1310 = vunpack.c.l.b16 %v236
    %v1311 = vunpack.c.h.b16 %v236
    %v1312 = vunpack.c.l.b16 %v237
    %v1313 = vunpack.c.h.b16 %v237
    %v1314 = vunpack.c.l.b16 %v238
    %v1315 = vunpack.c.h.b16 %v238
    %v1316 = vunpack.c.l.b16 %v239
    %v1317 = vunpack.c.h.b16 %v239
    %v1318 = vunpack.c.l.b16 %v240
    %v1319 = vunpack.c.h.b16 %v240
    %v1320 = vunpack.c.l.b16 %v241
    %v1321 = vunpack.c.h.b16 %v241
    %v1322 = vunpack.c.l.b16 %v242
    %v1323 = vunpack.c.h.b16 %v242
    %v1324 = vunpack.c.l.b16 %v243
    %v1325 = vunpack.c.h.b16 %v243
    %v1326 = vunpack.c.l.b16 %v244
    %v1327 = vunpack.c.h.b16 %v244
    %v1328 = vunpack.c.l.b16 %v245
    %v1329 = vunpack.c.h.b16 %v245
    %v1330 = vunpack.c.l.b16 %v246
    %v1331 = vunpack.c.h.b16 %v246
    %v1332 = vunpack.c.l.b16 %v247
    %v1333 = vunpack.c.h.b16 %v247
    %v1334 = vunpack.c.l.b16 %v248
    %v1335 = vunpack.c.h.b16 %v248
    %v1336 = vunpack.c.l.b16 %v249
    %v1337 = vunpack.c.h.b16 %v249
    %v1338 = vunpack.c.l.b16 %v250
    %v1339 = vunpack.c.h.b16 %v250
    %v1340 = vunpack.c.l.b16 %v251
    %v1341 = vunpack.c.h.b16 %v251
    %v1342 = vunpack.c.l.b16 %v252
    %v1343 = vunpack.c.h.b16 %v252
    %v1344 = vunpack.c.l.b16 %v253
    %v1345 = vunpack.c.h.b16 %v253
    %v1346 = vunpack.c.l.b16 %v254
    %v1347 = vunpack.c.h.b16 %v254
    %v1348 = vunpack.c.l.b16 %v255
    %v1349 = vunpack.c.h.b16 %v255
    %v1350 = vunpack.c.l.b16 %v256
    %v1351 = vunpack.c.h.b16 %v256
    %v1352 = vunpack.c.l.b16 %v257
    %v1353 = vunpack.c.h.b16 %v257
    %v1354 = vunpack.c.l.b16 %v258
    %v1355 = vunpack.c.h.b16 %v258
    %v1356 = vunpack.c.l.b16 %v259
    %v1357 = vunpack.c.h.b16 %v259
    %v1358 = vunpack.c.l.b16 %v260
    %v1359 = vunpack.c.h.b16 %v260
    %v1360 = vunpack.c.l.b16 %v261
    %v1361 = vunpack.c.h.b16 %v261
    %v1362 = vunpack.c.l.b16 %v262
    %v1363 = vunpack.c.h.b16 %v262
    %v1364 = vunpack.c.l.b16 %v263
    %v1365 = vunpack.c.h.b16 %v263
    %v1366 = vunpack.c.l.b16 %v264
    %v1367 = vunpack.c.h.b16 %v264
    %v1368 = vunpack.c.l.b16 %v265
    %v1369 = vunpack.c.h.b16 %v265
    %v1370 = vunpack.c.l.b16 %v266
    %v1371 = vunpack.c.h.b16 %v266
    %v1372 = vunpack.c.l.b16 %v267
    %v1373 = vunpack.c.h.b16 %v267
    %v1374 = vunpack.c.l.b16 %v268
    %v1375 = vunpack.c.h.b16 %v268
    %v1376 = vunpack.c.l.b16 %v269
    %v1377 = vunpack.c.h.b16 %v269
    %v1378 = vunpack.c.l.b16 %v270
    %v1379 = vunpack.c.h.b16 %v270
    %v1380 = vunpack.c.l.b16 %v271
    %v1381 = vunpack.c.h.b16 %v271
    %v1382 = vunpack.c.l.b16 %v272
    %v1383 = vunpack.c.h.b16 %v272
    %v1384 = vunpack.c.l.b16 %v273
    %v1385 = vunpack.c.h.b16 %v273
    %v1386 = vunpack.c.l.b16 %v274
    %v1387 = vunpack.c.h.b16 %v274
    %v1388 = vunpack.c.l.b16 %v275
    %v1389 = vunpack.c.h.b16 %v275
    %v1390 = vunpack.c.l.b16 %v276
    %v1391 = vunpack.c.h.b16 %v276
    %v1392 = vunpack.c.l.b16 %v277
    %v1393 = vunpack.c.h.b16 %v277
    %v1394 = vunpack.c.l.b16 %v278
    %v1395 = vunpack.c.h.b16 %v278
    %v1396 = vunpack.c.l.b16 %v279
    %v1397 = vunpack.c.h.b16 %v279
    %v1398 = vunpack.c.l.b16 %v280
    %v1399 = vunpack.c.h.b16 %v280
    %v1400 = vunpack.c.l.b16 %v281
    %v1401 = vunpack.c.h.b16 %v281
    %v1402 = vunpack.c.l.b16 %v282
    %v1403 = vunpack.c.h.b16 %v282
    %v1404 = vunpack.c.l.b16 %v283
    %v1405 = vunpack.c.h.b16 %v283
    %v1406 = vunpack.c.l.b16 %v284
    %v1407 = vunpack.c.h.b16 %v284
    %v1408 = vunpack.c.l.b16 %v285
    %v1409 = vunpack.c.h.b16 %v285
    %v1410 = vunpack.c.l.b16 %v286
    %v1411 = vunpack.c.h.b16 %v286
    %v1412 = vunpack.c.l.b16 %v287
    %v1413 = vunpack.c.h.b16 %v287
    %v1414 = vunpack.c.l.b16 %v288
    %v1415 = vunpack.c.h.b16 %v288
    %v1416 = vunpack.c.l.b16 %v289
    %v1417 = vunpack.c.h.b16 %v289
    %v1418 = vunpack.c.l.b16 %v290
    %v1419 = vunpack.c.h.b16 %v290
    %v1420 = vunpack.c.l.b16 %v291
    %v1421 = vunpack.c.h.b16 %v291
    %v1422 = vunpack.c.l.b16 %v292
    %v1423 = vunpack.c.h.b16 %v292
    %v1424 = vunpack.c.l.b16 %v293
    %v1425 = vunpack.c.h.b16 %v293
    %v1426 = vunpack.c.l.b16 %v294
    %v1427 = vunpack.c.h.b16 %v294
    %v1428 = vunpack.c.l.b16 %v295
    %v1429 = vunpack.c.h.b16 %v295
    %v1430 = vunpack.c.l.b16 %v296
    %v1431 = vunpack.c.h.b16 %v296
    %v1432 = vunpack.c.l.b16 %v297
    %v1433 = vunpack.c.h.b16 %v297
    %v1434 = vunpack.c.l.b16 %v298
    %v1435 = vunpack.c.h.b16 %v298
    %v1436 = vunpack.c.l.b16 %v299
    %v1437 = vunpack.c.h.b16 %v299
    %v1438 = vunpack.c.l.b16 %v300
    %v1439 = vunpack.c.h.b16 %v300
    %v1440 = vunpack.c.l.b16 %v301
    %v1441 = vunpack.c.h.b16 %v301
    %v1442 = vunpack.c.l.b16 %v302
    %v1443 = vunpack.c.h.b16 %v302
    %v1444 = vunpack.c.l.b16 %v303
    %v1445 = vunpack.c.h.b16 %v303
    %v1446 = vunpack.c.l.b16 %v304
    %v1447 = vunpack.c.h.b16 %v304
    %v1448 = vunpack.c.l.b16 %v305
    %v1449 = vunpack.c.h.b16 %v305
    %v1450 = vunpack.c.l.b16 %v306
    %v1451 = vunpack.c.h.b16 %v306
    %v1452 = vunpack.c.l.b16 %v307
    %v1453 = vunpack.c.h.b16 %v307
    %v1454 = vunpack.c.l.b16 %v308
    %v1455 = vunpack.c.h.b16 %v308
    %v1456 = vunpack.c.l.b16 %v309
    %v1457 = vunpack.c.h.b16 %v309
    %v1458 = vunpack.c.l.b16 %v310
    %v1459 = vunpack.c.h.b16 %v310
    %v1460 = vunpack.c.l.b16 %v311
    %v1461 = vunpack.c.h.b16 %v311
    %v1462 = vunpack.c.l.b16 %v312
    %v1463 = vunpack.c.h.b16 %v312
    %v1464 = vunpack.c.l.b16 %v313
    %v1465 = vunpack.c.h.b16 %v313
    %v1466 = vunpack.c.l.b16 %v314
    %v1467 = vunpack.c.h.b16 %v314
    %v1468 = vunpack.c.l.b16 %v315
    %v1469 = vunpack.c.h.b16 %v315
    %v1470 = vunpack.c.l.b16 %v316
    %v1471 = vunpack.c.h.b16 %v316
    %v1472 = vunpack.c.l.b16 %v317
    %v1473 = vunpack.c.h.b16 %v317
    %v1474 = vunpack.c.l.b16 %v318
    %v1475 = vunpack.c.h.b16 %v318
    %v1476 = vunpack.c.l.b16 %v319
    %v1477 = vunpack.c.h.b16 %v319
    %v1478 = vunpack.c.l.b16 %v320
    %v1479 = vunpack.c.h.b16 %v320
    %v1480 = vunpack.c.l.b16 %v321
    %v1481 = vunpack.c.h.b16 %v321
    %v1482 = vunpack.c.l.b16 %v322
    %v1483 = vunpack.c.h.b16 %v322
    %v1484 = vunpack.c.l.b16 %v323
    %v1485 = vunpack.c.h.b16 %v323
    %v1486 = vunpack.c.l.b16 %v324
    %v1487 = vunpack.c.h.b16 %v324
    %v1488 = vunpack.c.l.b16 %v325
    %v1489 = vunpack.c.h.b16 %v325
    %v1490 = vunpack.c.l.b16 %v326
    %v1491 = vunpack.c.h.b16 %v326
    %v1492 = vunpack.c.l.b16 %v327
    %v1493 = vunpack.c.h.b16 %v327
    %v1494 = vunpack.c.l.b16 %v328
    %v1495 = vunpack.c.h.b16 %v328
    %v1496 = vunpack.c.l.b16 %v329
    %v1497 = vunpack.c.h.b16 %v329
    %v1498 = vunpack.c.l.b16 %v330
    %v1499 = vunpack.c.h.b16 %v330
    %v1500 = vunpack.c.l.b16 %v331
    %v1501 = vunpack.c.h.b16 %v331
    %v1502 = vunpack.c.l.b16 %v332
    %v1503 = vunpack.c.h.b16 %v332
    %v1504 = vunpack.c.l.b16 %v333
    %v1505 = vunpack.c.h.b16 %v333
    %v1506 = vunpack.c.l.b16 %v334
    %v1507 = vunpack.c.h.b16 %v334
    %v1508 = vunpack.c.l.b16 %v335
    %v1509 = vunpack.c.h.b16 %v335
    %v1510 = vunpack.c.l.b16 %v336
    %v1511 = vunpack.c.h.b16 %v336
    %v1512 = vunpack.c.l.b16 %v337
    %v1513 = vunpack.c.h.b16 %v337
    %v1514 = vunpack.c.l.b16 %v338
    %v1515 = vunpack.c.h.b16 %v338
    %v1516 = vunpack.c.l.b16 %v339
    %v1517 = vunpack.c.h.b16 %v339
    %v1518 = vunpack.c.l.b16 %v340
    %v1519 = vunpack.c.h.b16 %v340
    %v1520 = vunpack.c.l.b16 %v341
    %v1521 = vunpack.c.h.b16 %v341
    %v1522 = vunpack.c.l.b16 %v342
    %v1523 = vunpack.c.h.b16 %v342
    %v1524 = vunpack.c.l.b16 %v343
    %v1525 = vunpack.c.h.b16 %v343
    %v1526 = vunpack.c.l.b16 %v344
    %v1527 = vunpack.c.h.b16 %v344
    %v1528 = vunpack.c.l.b16 %v345
    %v1529 = vunpack.c.h.b16 %v345
    %v1530 = vunpack.c.l.b16 %v346
    %v1531 = vunpack.c.h.b16 %v346
    %v1532 = vunpack.c.l.b16 %v347
    %v1533 = vunpack.c.h.b16 %v347
    %v1534 = vunpack.c.l.b16 %v348
    %v1535 = vunpack.c.h.b16 %v348
    %v1536 = vunpack.c.l.b16 %v349
    %v1537 = vunpack.c.h.b16 %v349
    %v1538 = vunpack.c.l.b16 %v350
    %v1539 = vunpack.c.h.b16 %v350
    %v1540 = vunpack.c.l.b16 %v351
    %v1541 = vunpack.c.h.b16 %v351
    %v1542 = vunpack.c.l.b16 %v352
    %v1543 = vunpack.c.h.b16 %v352
    %v1544 = vunpack.c.l.b16 %v353
    %v1545 = vunpack.c.h.b16 %v353
    %v1546 = vunpack.c.l.b16 %v354
    %v1547 = vunpack.c.h.b16 %v354
    %v1548 = vunpack.c.l.b16 %v355
    %v1549 = vunpack.c.h.b16 %v355
    %v1550 = vunpack.c.l.b16 %v356
    %v1551 = vunpack.c.h.b16 %v356
    %v1552 = vunpack.c.l.b16 %v357
    %v1553 = vunpack.c.h.b16 %v357
    %v1554 = vunpack.c.l.b16 %v358
    %v1555 = vunpack.c.h.b16 %v358
    %v1556 = vunpack.c.l.b16 %v359
    %v1557 = vunpack.c.h.b16 %v359
    %v1558 = vunpack.c.l.b16 %v360
    %v1559 = vunpack.c.h.b16 %v360
    %v1560 = vunpack.c.l.b16 %v361
    %v1561 = vunpack.c.h.b16 %v361
    %v1562 = vunpack.c.l.b16 %v362
    %v1563 = vunpack.c.h.b16 %v362
    %v1564 = vunpack.c.l.b16 %v363
    %v1565 = vunpack.c.h.b16 %v363
    %v1566 = vunpack.c.l.b16 %v364
    %v1567 = vunpack.c.h.b16 %v364
    %v1568 = vunpack.c.l.b16 %v365
    %v1569 = vunpack.c.h.b16 %v365
    %v1570 = vunpack.c.l.b16 %v366
    %v1571 = vunpack.c.h.b16 %v366
    %v1572 = vunpack.c.l.b16 %v367
    %v1573 = vunpack.c.h.b16 %v367
    %v1574 = vunpack.c.l.b16 %v368
    %v1575 = vunpack.c.h.b16 %v368
    %v1576 = vunpack.c.l.b16 %v369
    %v1577 = vunpack.c.h.b16 %v369
    %v1578 = vunpack.c.l.b16 %v370
    %v1579 = vunpack.c.h.b16 %v370
    %v1580 = vunpack.c.l.b16 %v371
    %v1581 = vunpack.c.h.b16 %v371
    %v1582 = vunpack.c.l.b16 %v372
    %v1583 = vunpack.c.h.b16 %v372
    %v1584 = vunpack.c.l.b16 %v373
    %v1585 = vunpack.c.h.b16 %v373
    %v1586 = vunpack.c.l.b16 %v374
    %v1587 = vunpack.c.h.b16 %v374
    %v1588 = vunpack.c.l.b16 %v375
    %v1589 = vunpack.c.h.b16 %v375
    %v1590 = vunpack.c.l.b16 %v376
    %v1591 = vunpack.c.h.b16 %v376
    %v1592 = vunpack.c.l.b16 %v377
    %v1593 = vunpack.c.h.b16 %v377
    %v1594 = vunpack.c.l.b16 %v378
    %v1595 = vunpack.c.h.b16 %v378
    %v1596 = vunpack.c.l.b16 %v379
    %v1597 = vunpack.c.h.b16 %v379
    %v1598 = vunpack.c.l.b16 %v380
    %v1599 = vunpack.c.h.b16 %v380
    %v1600 = vunpack.c.l.b16 %v381
    %v1601 = vunpack.c.h.b16 %v381
    %v1602 = vunpack.c.l.b16 %v382
    %v1603 = vunpack.c.h.b16 %v382
    %v1604 = vunpack.c.l.b16 %v383
    %v1605 = vunpack.c.h.b16 %v383
    %v1606 = vunpack.c.l.b16 %v384
    %v1607 = vunpack.c.h.b16 %v384
    %v1608 = vunpack.c.l.b16 %v385
    %v1609 = vunpack.c.h.b16 %v385
    %v1610 = vunpack.c.l.b16 %v386
    %v1611 = vunpack.c.h.b16 %v386
    %v1612 = vunpack.c.l.b16 %v387
    %v1613 = vunpack.c.h.b16 %v387
    %v1614 = vunpack.c.l.b16 %v388
    %v1615 = vunpack.c.h.b16 %v388
    %v1616 = vunpack.c.l.b16 %v389
    %v1617 = vunpack.c.h.b16 %v389
    %v1618 = vunpack.c.l.b16 %v390
    %v1619 = vunpack.c.h.b16 %v390
    %v1620 = vunpack.c.l.b16 %v391
    %v1621 = vunpack.c.h.b16 %v391
    %v1622 = vunpack.c.l.b16 %v392
    %v1623 = vunpack.c.h.b16 %v392
    %v1624 = vunpack.c.l.b16 %v393
    %v1625 = vunpack.c.h.b16 %v393
    %v1626 = vunpack.c.l.b16 %v394
    %v1627 = vunpack.c.h.b16 %v394
    %v1628 = vunpack.c.l.b16 %v395
    %v1629 = vunpack.c.h.b16 %v395
    %v1630 = vunpack.c.l.b16 %v396
    %v1631 = vunpack.c.h.b16 %v396
    %v1632 = vunpack.c.l.b16 %v397
    %v1633 = vunpack.c.h.b16 %v397
    %v1634 = vunpack.c.l.b16 %v398
    %v1635 = vunpack.c.h.b16 %v398
    %v1636 = vunpack.c.l.b16 %v399
    %v1637 = vunpack.c.h.b16 %v399
    %v1638 = vunpack.c.l.b16 %v400
    %v1639 = vunpack.c.h.b16 %v400
    %v1640 = vunpack.c.l.b16 %v401
    %v1641 = vunpack.c.h.b16 %v401
    %v1642 = vunpack.c.l.b16 %v402
    %v1643 = vunpack.c.h.b16 %v402
    %v1644 = vunpack.c.l.b16 %v403
    %v1645 = vunpack.c.h.b16 %v403
    %v1646 = vunpack.c.l.b16 %v404
    %v1647 = vunpack.c.h.b16 %v404
    %v1648 = vunpack.c.l.b16 %v405
    %v1649 = vunpack.c.h.b16 %v405
    %v1650 = vunpack.c.l.b16 %v406
    %v1651 = vunpack.c.h.b16 %v406
    %v1652 = vunpack.c.l.b16 %v407
    %v1653 = vunpack.c.h.b16 %v407
    %v1654 = vunpack.c.l.b16 %v408
    %v1655 = vunpack.c.h.b16 %v408
    %v1656 = vunpack.c.l.b16 %v409
    %v1657 = vunpack.c.h.b16 %v409
    %v1658 = vunpack.c.l.b16 %v410
    %v1659 = vunpack.c.h.b16 %v410
    %v1660 = vunpack.c.l.b16 %v411
    %v1661 = vunpack.c.h.b16 %v411
    %v1662 = vunpack.c.l.b16 %v412
    %v1663 = vunpack.c.h.b16 %v412
    %v1664 = vunpack.c.l.b16 %v413
    %v1665 = vunpack.c.h.b16 %v413
    %v1666 = vunpack.c.l.b16 %v414
    %v1667 = vunpack.c.h.b16 %v414
    %v1668 = vunpack.c.l.b16 %v415
    %v1669 = vunpack.c.h.b16 %v415
    %v1670 = vunpack.c.l.b16 %v416
    %v1671 = vunpack.c.h.b16 %v416
    %v1672 = vunpack.c.l.b16 %v417
    %v1673 = vunpack.c.h.b16 %v417
    %v1674 = vunpack.c.l.b16 %v418
    %v1675 = vunpack.c.h.b16 %v418
    %v1676 = vunpack.c.l.b16 %v419
    %v1677 = vunpack.c.h.b16 %v419
    %v1678 = vunpack.c.l.b16 %v420
    %v1679 = vunpack.c.h.b16 %v420
    %v1680 = vunpack.c.l.b16 %v421
    %v1681 = vunpack.c.h.b16 %v421
    %v1682 = vunpack.c.l.b16 %v422
    %v1683 = vunpack.c.h.b16 %v422
    %v1684 = vunpack.c.l.b16 %v423
    %v1685 = vunpack.c.h.b16 %v423
    %v1686 = vunpack.c.l.b16 %v424
    %v1687 = vunpack.c.h.b16 %v424
    %v1688 = vunpack.c.l.b16 %v425
    %v1689 = vunpack.c.h.b16 %v425
    %v1690 = vunpack.c.l.b16 %v426
    %v1691 = vunpack.c.h.b16 %v426
    %v1692 = vunpack.c.l.b16 %v427
    %v1693 = vunpack.c.h.b16 %v427
    %v1694 = vunpack.c.l.b16 %v428
    %v1695 = vunpack.c.h.b16 %v428
    %v1696 = vunpack.c.l.b16 %v429
    %v1697 = vunpack.c.h.b16 %v429
    %v1698 = vunpack.c.l.b16 %v430
    %v1699 = vunpack.c.h.b16 %v430
    %v1700 = vunpack.c.l.b16 %v431
    %v1701 = vunpack.c.h.b16 %v431
    %v1702 = vunpack.c.l.b16 %v432
    %v1703 = vunpack.c.h.b16 %v432
    %v1704 = vunpack.c.l.b16 %v433
    %v1705 = vunpack.c.h.b16 %v433
    %v1706 = vunpack.c.l.b16 %v434
    %v1707 = vunpack.c.h.b16 %v434
    %v1708 = vunpack.c.l.b16 %v435
    %v1709 = vunpack.c.h.b16 %v435
    %v1710 = vunpack.c.l.b16 %v436
    %v1711 = vunpack.c.h.b16 %v436
    %v1712 = vunpack.c.l.b16 %v437
    %v1713 = vunpack.c.h.b16 %v437
    %v1714 = vunpack.c.l.b16 %v438
    %v1715 = vunpack.c.h.b16 %v438
    %v1716 = vunpack.c.l.b16 %v439
    %v1717 = vunpack.c.h.b16 %v439
    %v1718 = vunpack.c.l.b16 %v440
    %v1719 = vunpack.c.h.b16 %v440
    %v1720 = vunpack.c.l.b16 %v441
    %v1721 = vunpack.c.h.b16 %v441
    %v1722 = vunpack.c.l.b16 %v442
    %v1723 = vunpack.c.h.b16 %v442
    %v1724 = vunpack.c.l.b16 %v443
    %v1725 = vunpack.c.h.b16 %v443
    %v1726 = vunpack.c.l.b16 %v444
    %v1727 = vunpack.c.h.b16 %v444
    %v1728 = vunpack.c.l.b16 %v445
    %v1729 = vunpack.c.h.b16 %v445
    %v1730 = vunpack.c.l.b16 %v446
    %v1731 = vunpack.c.h.b16 %v446
    %v1732 = vunpack.c.l.b16 %v447
    %v1733 = vunpack.c.h.b16 %v447
    %v1734 = vunpack.c.l.b16 %v448
    %v1735 = vunpack.c.h.b16 %v448
    %v1736 = vunpack.c.l.b16 %v449
    %v1737 = vunpack.c.h.b16 %v449
    %v1738 = vunpack.c.l.b16 %v450
    %v1739 = vunpack.c.h.b16 %v450
    %v1740 = vunpack.c.l.b16 %v451
    %v1741 = vunpack.c.h.b16 %v451
    %v1742 = vunpack.c.l.b16 %v452
    %v1743 = vunpack.c.h.b16 %v452
    %v1744 = vunpack.c.l.b16 %v453
    %v1745 = vunpack.c.h.b16 %v453
    %v1746 = vunpack.c.l.b16 %v454
    %v1747 = vunpack.c.h.b16 %v454
    %v1748 = vunpack.c.l.b16 %v455
    %v1749 = vunpack.c.h.b16 %v455
    %v1750 = vunpack.c.l.b16 %v456
    %v1751 = vunpack.c.h.b16 %v456
    %v1752 = vunpack.c.l.b16 %v457
    %v1753 = vunpack.c.h.b16 %v457
    %v1754 = vunpack.c.l.b16 %v458
    %v1755 = vunpack.c.h.b16 %v458
    %v1756 = vunpack.c.l.b16 %v459
    %v1757 = vunpack.c.h.b16 %v459
    %v1758 = vunpack.c.l.b16 %v460
    %v1759 = vunpack.c.h.b16 %v460
    %v1760 = vunpack.c.l.b16 %v461
    %v1761 = vunpack.c.h.b16 %v461
    %v1762 = vunpack.c.l.b16 %v462
    %v1763 = vunpack.c.h.b16 %v462
    %v1764 = vunpack.c.l.b16 %v463
    %v1765 = vunpack.c.h.b16 %v463
    %v1766 = vunpack.c.l.b16 %v464
    %v1767 = vunpack.c.h.b16 %v464
    %v1768 = vunpack.c.l.b16 %v465
    %v1769 = vunpack.c.h.b16 %v465
    %v1770 = vunpack.c.l.b16 %v466
    %v1771 = vunpack.c.h.b16 %v466
    %v1772 = vunpack.c.l.b16 %v467
    %v1773 = vunpack.c.h.b16 %v467
    %v1774 = vunpack.c.l.b16 %v468
    %v1775 = vunpack.c.h.b16 %v468
    %v1776 = vunpack.c.l.b16 %v469
    %v1777 = vunpack.c.h.b16 %v469
    %v1778 = vunpack.c.l.b16 %v470
    %v1779 = vunpack.c.h.b16 %v470
    %v1780 = vunpack.c.l.b16 %v471
    %v1781 = vunpack.c.h.b16 %v471
    %v1782 = vunpack.c.l.b16 %v472
    %v1783 = vunpack.c.h.b16 %v472
    %v1784 = vpack.c.b16 %v1020, %v1016
    %v1785 = vpack.c.b16 %v1021, %v1017
    %v1786 = vpack.c.b16 %v1022, %v1018
    %v1787 = vpack.c.b16 %v1023, %v1019
    %v1788 = vpack.c.b16 %v1028, %v1024
    %v1789 = vpack.c.b16 %v1029, %v1025
    %v1790 = vpack.c.b16 %v1030, %v1026
    %v1791 = vpack.c.b16 %v1031, %v1027
    %v1792 = vpack.c.b16 %v1036, %v1032
    %v1793 = vpack.c.b16 %v1037, %v1033
    %v1794 = vpack.c.b16 %v1038, %v1034
    %v1795 = vpack.c.b16 %v1039, %v1035
    %v1796 = vpack.c.b16 %v1044, %v1040
    %v1797 = vpack.c.b16 %v1045, %v1041
    %v1798 = vpack.c.b16 %v1046, %v1042
    %v1799 = vpack.c.b16 %v1047, %v1043
    %v1800 = vpack.c.b16 %v1052, %v1048
    %v1801 = vpack.c.b16 %v1053, %v1049
    %v1802 = vpack.c.b16 %v1054, %v1050
    %v1803 = vpack.c.b16 %v1055, %v1051
    %v1804 = vpack.c.b16 %v1060, %v1056
    %v1805 = vpack.c.b16 %v1061, %v1057
    %v1806 = vpack.c.b16 %v1062, %v1058
    %v1807 = vpack.c.b16 %v1063, %v1059
    %v1808 = vpack.c.b16 %v1068, %v1064
    %v1809 = vpack.c.b16 %v1069, %v1065
    %v1810 = vpack.c.b16 %v1070, %v1066
    %v1811 = vpack.c.b16 %v1071, %v1067
    %v1812 = vpack.c.b16 %v1076, %v1072
    %v1813 = vpack.c.b16 %v1077, %v1073
    %v1814 = vpack.c.b16 %v1078, %v1074
    %v1815 = vpack.c.b16 %v1079, %v1075
    %v1816 = vpack.c.b16 %v1084, %v1080
    %v1817 = vpack.c.b16 %v1085, %v1081
    %v1818 = vpack.c.b16 %v1086, %v1082
    %v1819 = vpack.c.b16 %v1087, %v1083
    %v1820 = vpack.c.b16 %v1092, %v1088
    %v1821 = vpack.c.b16 %v1093, %v1089
    %v1822 = vpack.c.b16 %v1094, %v1090
    %v1823 = vpack.c.b16 %v1095, %v1091
    %v1824 = vpack.c.b16 %v1100, %v1096
    %v1825 = vpack.c.b16 %v1101, %v1097
    %v1826 = vpack.c.b16 %v1102, %v1098
    %v1827 = vpack.c.b16 %v1103, %v1099
    %v1828 = vpack.c.b16 %v1108, %v1104
    %v1829 = vpack.c.b16 %v1109, %v1105
    %v1830 = vpack.c.b16 %v1110, %v1106
    %v1831 = vpack.c.b16 %v1111, %v1107
    %v1832 = vpack.c.b16 %v1116, %v1112
    %v1833 = vpack.c.b16 %v1117, %v1113
    %v1834 = vpack.c.b16 %v1118, %v1114
    %v1835 = vpack.c.b16 %v1119, %v1115
    %v1836 = vpack.c.b16 %v1124, %v1120
    %v1837 = vpack.c.b16 %v1125, %v1121
    %v1838 = vpack.c.b16 %v1126, %v1122
    %v1839 = vpack.c.b16 %v1127, %v1123
    %v1840 = vpack.c.b16 %v1132, %v1128
    %v1841 = vpack.c.b16 %v1133, %v1129
    %v1842 = vpack.c.b16 %v1134, %v1130
    %v1843 = vpack.c.b16 %v1135, %v1131
    %v1844 = vpack.c.b16 %v1140, %v1136
    %v1845 = vpack.c.b16 %v1141, %v1137
    %v1846 = vpack.c.b16 %v1142, %v1138
    %v1847 = vpack.c.b16 %v1143, %v1139
    %v1848 = vpack.c.b16 %v1148, %v1144
    %v1849 = vpack.c.b16 %v1149, %v1145
    %v1850 = vpack.c.b16 %v1150, %v1146
    %v1851 = vpack.c.b16 %v1151, %v1147
    %v1852 = vpack.c.b16 %v1156, %v1152
    %v1853 = vpack.c.b16 %v1157, %v1153
    %v1854 = vpack.c.b16 %v1158, %v1154
    %v1855 = vpack.c.b16 %v1159, %v1155
    %v1856 = vpack.c.b16 %v1164, %v1160
    %v1857 = vpack.c.b16 %v1165, %v1161
    %v1858 = vpack.c.b16 %v1166, %v1162
    %v1859 = vpack.c.b16 %v1167, %v1163
    %v1860 = vpack.c.b16 %v1172, %v1168
    %v1861 = vpack.c.b16 %v1173, %v1169
    %v1862 = vpack.c.b16 %v1174, %v1170
    %v1863 = vpack.c.b16 %v1175, %v1171
    %v1864 = vpack.c.b16 %v1180, %v1176
    %v1865 = vpack.c.b16 %v1181, %v1177
    %v1866 = vpack.c.b16 %v1182, %v1178
    %v1867 = vpack.c.b16 %v1183, %v1179
    %v1868 = vpack.c.b16 %v1188, %v1184
    %v1869 = vpack.c.b16 %v1189, %v1185
    %v1870 = vpack.c.b16 %v1190, %v1186
    %v1871 = vpack.c.b16 %v1191, %v1187
    %v1872 = vpack.c.b16 %v1196, %v1192
    %v1873 = vpack.c.b16 %v1197, %v1193
    %v1874 = vpack.c.b16 %v1198, %v1194
    %v1875 = vpack.c.b16 %v1199, %v1195
    %v1876 = vpack.c.b16 %v1204, %v1200
    %v1877 = vpack.c.b16 %v1205, %v1201
    %v1878 = vpack.c.b16 %v1206, %v1202
    %v1879 = vpack.c.b16 %v1207, %v1203
    %v1880 = vpack.c.b16 %v1212, %v1208
    %v1881 = vpack.c.b16 %v1213, %v1209
    %v1882 = vpack.c.b16 %v1214, %v1210
    %v1883 = vpack.c.b16 %v1215, %v1211
    %v1884 = vpack.c.b16 %v1220, %v1216
    %v1885 = vpack.c.b16 %v1221, %v1217
    %v1886 = vpack.c.b16 %v1222, %v1218
    %v1887 = vpack.c.b16 %v1223, %v1219
    %v1888 = vpack.c.b16 %v1228, %v1224
    %v1889 = vpack.c.b16 %v1229, %v1225
    %v1890 = vpack.c.b16 %v1230, %v1226
    %v1891 = vpack.c.b16 %v1231, %v1227
    %v1892 = vpack.c.b16 %v1236, %v1232
    %v1893 = vpack.c.b16 %v1237, %v1233
    %v1894 = vpack.c.b16 %v1238, %v1234
    %v1895 = vpack.c.b16 %v1239, %v1235
    %v1896 = vpack.c.b16 %v1244, %v1240
    %v1897 = vpack.c.b16 %v1245, %v1241
    %v1898 = vpack.c.b16 %v1246, %v1242
    %v1899 = vpack.c.b16 %v1247, %v1243
    %v1900 = vpack.c.b16 %v1252, %v1248
    %v1901 = vpack.c.b16 %v1253, %v1249
    %v1902 = vpack.c.b16 %v1254, %v1250
    %v1903 = vpack.c.b16 %v1255, %v1251
    %v1904 = vpack.c.b16 %v1260, %v1256
    %v1905 = vpack.c.b16 %v1261, %v1257
    %v1906 = vpack.c.b16 %v1262, %v1258
    %v1907 = vpack.c.b16 %v1263, %v1259
    %v1908 = vpack.c.b16 %v1268, %v1264
    %v1909 = vpack.c.b16 %v1269, %v1265
    %v1910 = vpack.c.b16 %v1270, %v1266
    %v1911 = vpack.c.b16 %v1271, %v1267
    %v1912 = vpack.c.b16 %v1276, %v1272
    %v1913 = vpack.c.b16 %v1277, %v1273
    %v1914 = vpack.c.b16 %v1278, %v1274
    %v1915 = vpack.c.b16 %v1279, %v1275
    %v1916 = vpack.c.b16 %v1284, %v1280
    %v1917 = vpack.c.b16 %v1285, %v1281
    %v1918 = vpack.c.b16 %v1286, %v1282
    %v1919 = vpack.c.b16 %v1287, %v1283
    %v1920 = vpack.c.b16 %v1292, %v1288
    %v1921 = vpack.c.b16 %v1293, %v1289
    %v1922 = vpack.c.b16 %v1294, %v1290
    %v1923 = vpack.c.b16 %v1295, %v1291
    %v1924 = vpack.c.b16 %v1300, %v1296
    %v1925 = vpack.c.b16 %v1301, %v1297
    %v1926 = vpack.c.b16 %v1302, %v1298
    %v1927 = vpack.c.b16 %v1303, %v1299
    %v1928 = vpack.c.b16 %v1308, %v1304
    %v1929 = vpack.c.b16 %v1309, %v1305
    %v1930 = vpack.c.b16 %v1310, %v1306
    %v1931 = vpack.c.b16 %v1311, %v1307
    %v1932 = vpack.c.b16 %v1316, %v1312
    %v1933 = vpack.c.b16 %v1317, %v1313
    %v1934 = vpack.c.b16 %v1318, %v1314
    %v1935 = vpack.c.b16 %v1319, %v1315
    %v1936 = vpack.c.b16 %v1324, %v1320
    %v1937 = vpack.c.b16 %v1325, %v1321
    %v1938 = vpack.c.b16 %v1326, %v1322
    %v1939 = vpack.c.b16 %v1327, %v1323
    %v1940 = vpack.c.b16 %v1332, %v1328
    %v1941 = vpack.c.b16 %v1333, %v1329
    %v1942 = vpack.c.b16 %v1334, %v1330
    %v1943 = vpack.c.b16 %v1335, %v1331
    %v1944 = vpack.c.b16 %v1340, %v1336
    %v1945 = vpack.c.b16 %v1341, %v1337
    %v1946 = vpack.c.b16 %v1342, %v1338
    %v1947 = vpack.c.b16 %v1343, %v1339
    %v1948 = vpack.c.b16 %v1348, %v1344
    %v1949 = vpack.c.b16 %v1349, %v1345
    %v1950 = vpack.c.b16 %v1350, %v1346
    %v1951 = vpack.c.b16 %v1351, %v1347
    %v1952 = vpack.c.b16 %v1356, %v1352
    %v1953 = vpack.c.b16 %v1357, %v1353
    %v1954 = vpack.c.b16 %v1358, %v1354
    %v1955 = vpack.c.b16 %v1359, %v1355
    %v1956 = vpack.c.b16 %v1364, %v1360
    %v1957 = vpack.c.b16 %v1365, %v1361
    %v1958 = vpack.c.b16 %v1366, %v1362
    %v1959 = vpack.c.b16 %v1367, %v1363
    %v1960 = vpack.c.b16 %v1372, %v1368
    %v1961 = vpack.c.b16 %v1373, %v1369
    %v1962 = vpack.c.b16 %v1374, %v1370
    %v1963 = vpack.c.b16 %v1375, %v1371
    %v1964 = vpack.c.b16 %v1380, %v1376
    %v1965 = vpack.c.b16 %v1381, %v1377
    %v1966 = vpack.c.b16 %v1382, %v1378
    %v1967 = vpack.c.b16 %v1383, %v1379
    %v1968 = vpack.c.b16 %v1388, %v1384
    %v1969 = vpack.c.b16 %v1389, %v1385
    %v1970 = vpack.c.b16 %v1390, %v1386
    %v1971 = vpack.c.b16 %v1391, %v1387
    %v1972 = vpack.c.b16 %v1396, %v1392
    %v1973 = vpack.c.b16 %v1397, %v1393
    %v1974 = vpack.c.b16 %v1398, %v1394
    %v1975 = vpack.c.b16 %v1399, %v1395
    %v1976 = vpack.c.b16 %v1404, %v1400
    %v1977 = vpack.c.b16 %v1405, %v1401
    %v1978 = vpack.c.b16 %v1406, %v1402
    %v1979 = vpack.c.b16 %v1407, %v1403
    %v1980 = vpack.c.b16 %v1412, %v1408
    %v1981 = vpack.c.b16 %v1413, %v1409
    %v1982 = vpack.c.b16 %v1414, %v1410
    %v1983 = vpack.c.b16 %v1415, %v1411
    %v1984 = vpack.c.b16 %v1420, %v1416
    %v1985 = vpack.c.b16 %v1421, %v1417
    %v1986 = vpack.c.b16 %v1422, %v1418
    %v1987 = vpack.c.b16 %v1423, %v1419
    %v1988 = vpack.c.b16 %v1428, %v1424
    %v1989 = vpack.c.b16 %v1429, %v1425
    %v1990 = vpack.c.b16 %v1430, %v1426
    %v1991 = vpack.c.b16 %v1431, %v1427
    %v1992 = vpack.c.b16 %v1436, %v1432
    %v1993 = vpack.c.b16 %v1437, %v1433
    %v1994 = vpack.c.b16 %v1438, %v1434
    %v1995 = vpack.c.b16 %v1439, %v1435
    %v1996 = vpack.c.b16 %v1444, %v1440
    %v1997 = vpack.c.b16 %v1445, %v1441
    %v1998 = vpack.c.b16 %v1446, %v1442
    %v1999 = vpack.c.b16 %v1447, %v1443
    %v2000 = vpack.c.b16 %v1452, %v1448
    %v2001 = vpack.c.b16 %v1453, %v1449
    %v2002 = vpack.c.b16 %v1454, %v1450
    %v2003 = vpack.c.b16 %v1455, %v1451
    %v2004 = vpack.c.b16 %v1460, %v1456
    %v2005 = vpack.c.b16 %v1461, %v1457
    %v2006 = vpack.c.b16 %v1462, %v1458
    %v2007 = vpack.c.b16 %v1463, %v1459
    %v2008 = vpack.c.b16 %v1468, %v1464
    %v2009 = vpack.c.b16 %v1469, %v1465
    %v2010 = vpack.c.b16 %v1470, %v1466
    %v2011 = vpack.c.b16 %v1471, %v1467
    %v2012 = vpack.c.b16 %v1476, %v1472
    %v2013 = vpack.c.b16 %v1477, %v1473
    %v2014 = vpack.c.b16 %v1478, %v1474
    %v2015 = vpack.c.b16 %v1479, %v1475
    %v2016 = vpack.c.b16 %v1484, %v1480
    %v2017 = vpack.c.b16 %v1485, %v1481
    %v2018 = vpack.c.b16 %v1486, %v1482
    %v2019 = vpack.c.b16 %v1487, %v1483
    %v2020 = vpack.c.b16 %v1492, %v1488
    %v2021 = vpack.c.b16 %v1493, %v1489
    %v2022 = vpack.c.b16 %v1494, %v1490
    %v2023 = vpack.c.b16 %v1495, %v1491
    %v2024 = vpack.c.b16 %v1500, %v1496
    %v2025 = vpack.c.b16 %v1501, %v1497
    %v2026 = vpack.c.b16 %v1502, %v1498
    %v2027 = vpack.c.b16 %v1503, %v1499
    %v2028 = vpack.c.b16 %v1508, %v1504
    %v2029 = vpack.c.b16 %v1509, %v1505
    %v2030 = vpack.c.b16 %v1510, %v1506
    %v2031 = vpack.c.b16 %v1511, %v1507
    %v2032 = vpack.c.b16 %v1516, %v1512
    %v2033 = vpack.c.b16 %v1517, %v1513
    %v2034 = vpack.c.b16 %v1518, %v1514
    %v2035 = vpack.c.b16 %v1519, %v1515
    %v2036 = vpack.c.b16 %v1524, %v1520
    %v2037 = vpack.c.b16 %v1525, %v1521
    %v2038 = vpack.c.b16 %v1526, %v1522
    %v2039 = vpack.c.b16 %v1527, %v1523
    %v2040 = vpack.c.b16 %v1532, %v1528
    %v2041 = vpack.c.b16 %v1533, %v1529
    %v2042 = vpack.c.b16 %v1534, %v1530
    %v2043 = vpack.c.b16 %v1535, %v1531
    %v2044 = vpack.c.b16 %v1540, %v1536
    %v2045 = vpack.c.b16 %v1541, %v1537
    %v2046 = vpack.c.b16 %v1542, %v1538
    %v2047 = vpack.c.b16 %v1543, %v1539
    %v2048 = vpack.c.b16 %v1548, %v1544
    %v2049 = vpack.c.b16 %v1549, %v1545
    %v2050 = vpack.c.b16 %v1550, %v1546
    %v2051 = vpack.c.b16 %v1551, %v1547
    %v2052 = vpack.c.b16 %v1556, %v1552
    %v2053 = vpack.c.b16 %v1557, %v1553
    %v2054 = vpack.c.b16 %v1558, %v1554
    %v2055 = vpack.c.b16 %v1559, %v1555
    %v2056 = vpack.c.b16 %v1564, %v1560
    %v2057 = vpack.c.b16 %v1565, %v1561
    %v2058 = vpack.c.b16 %v1566, %v1562
    %v2059 = vpack.c.b16 %v1567, %v1563
    %v2060 = vpack.c.b16 %v1572, %v1568
    %v2061 = vpack.c.b16 %v1573, %v1569
    %v2062 = vpack.c.b16 %v1574, %v1570
    %v2063 = vpack.c.b16 %v1575, %v1571
    %v2064 = vpack.c.b16 %v1580, %v1576
    %v2065 = vpack.c.b16 %v1581, %v1577
    %v2066 = vpack.c.b16 %v1582, %v1578
    %v2067 = vpack.c.b16 %v1583, %v1579
    %v2068 = vpack.c.b16 %v1588, %v1584
    %v2069 = vpack.c.b16 %v1589, %v1585
    %v2070 = vpack.c.b16 %v1590, %v1586
    %v2071 = vpack.c.b16 %v1591, %v1587
    %v2072 = vpack.c.b16 %v1596, %v1592
    %v2073 = vpack.c.b16 %v1597, %v1593
    %v2074 = vpack.c.b16 %v1598, %v1594
    %v2075 = vpack.c.b16 %v1599, %v1595
    %v2076 = vpack.c.b16 %v1604, %v1600
    %v2077 = vpack.c.b16 %v1605, %v1601
    %v2078 = vpack.c.b16 %v1606, %v1602
    %v2079 = vpack.c.b16 %v1607, %v1603
    %v2080 = vpack.c.b16 %v1612, %v1608
    %v2081 = vpack.c.b16 %v1613, %v1609
    %v2082 = vpack.c.b16 %v1614, %v1610
    %v2083 = vpack.c.b16 %v1615, %v1611
    %v2084 = vpack.c.b16 %v1620, %v1616
    %v2085 = vpack.c.b16 %v1621, %v1617
    %v2086 = vpack.c.b16 %v1622, %v1618
    %v2087 = vpack.c.b16 %v1623, %v1619
    %v2088 = vpack.c.b16 %v1628, %v1624
    %v2089 = vpack.c.b16 %v1629, %v1625
    %v2090 = vpack.c.b16 %v1630, %v1626
    %v2091 = vpack.c.b16 %v1631, %v1627
    %v2092 = vpack.c.b16 %v1636, %v1632
    %v2093 = vpack.c.b16 %v1637, %v1633
    %v2094 = vpack.c.b16 %v1638, %v1634
    %v2095 = vpack.c.b16 %v1639, %v1635
    %v2096 = vpack.c.b16 %v1644, %v1640
    %v2097 = vpack.c.b16 %v1645, %v1641
    %v2098 = vpack.c.b16 %v1646, %v1642
    %v2099 = vpack.c.b16 %v1647, %v1643
    %v2100 = vpack.c.b16 %v1652, %v1648
    %v2101 = vpack.c.b16 %v1653, %v1649
    %v2102 = vpack.c.b16 %v1654, %v1650
    %v2103 = vpack.c.b16 %v1655, %v1651
    %v2104 = vpack.c.b16 %v1660, %v1656
    %v2105 = vpack.c.b16 %v1661, %v1657
    %v2106 = vpack.c.b16 %v1662, %v1658
    %v2107 = vpack.c.b16 %v1663, %v1659
    %v2108 = vpack.c.b16 %v1668, %v1664
    %v2109 = vpack.c.b16 %v1669, %v1665
    %v2110 = vpack.c.b16 %v1670, %v1666
    %v2111 = vpack.c.b16 %v1671, %v1667
    %v2112 = vpack.c.b16 %v1676, %v1672
    %v2113 = vpack.c.b16 %v1677, %v1673
    %v2114 = vpack.c.b16 %v1678, %v1674
    %v2115 = vpack.c.b16 %v1679, %v1675
    %v2116 = vpack.c.b16 %v1684, %v1680
    %v2117 = vpack.c.b16 %v1685, %v1681
    %v2118 = vpack.c.b16 %v1686, %v1682
    %v2119 = vpack.c.b16 %v1687, %v1683
    %v2120 = vpack.c.b16 %v1692, %v1688
    %v2121 = vpack.c.b16 %v1693, %v1689
    %v2122 = vpack.c.b16 %v1694, %v1690
    %v2123 = vpack.c.b16 %v1695, %v1691
    %v2124 = vpack.c.b16 %v1700, %v1696
    %v2125 = vpack.c.b16 %v1701, %v1697
    %v2126 = vpack.c.b16 %v1702, %v1698
    %v2127 = vpack.c.b16 %v1703, %v1699
    %v2128 = vpack.c.b16 %v1708, %v1704
    %v2129 = vpack.c.b16 %v1709, %v1705
    %v2130 = vpack.c.b16 %v1710, %v1706
    %v2131 = vpack.c.b16 %v1711, %v1707
    %v2132 = vpack.c.b16 %v1716, %v1712
    %v2133 = vpack.c.b16 %v1717, %v1713
    %v2134 = vpack.c.b16 %v1718, %v1714
    %v2135 = vpack.c.b16 %v1719, %v1715
    %v2136 = vpack.c.b16 %v1724, %v1720
    %v2137 = vpack.c.b16 %v1725, %v1721
    %v2138 = vpack.c.b16 %v1726, %v1722
    %v2139 = vpack.c.b16 %v1727, %v1723
    %v2140 = vpack.c.b16 %v1732, %v1728
    %v2141 = vpack.c.b16 %v1733, %v1729
    %v2142 = vpack.c.b16 %v1734, %v1730
    %v2143 = vpack.c.b16 %v1735, %v1731
    %v2144 = vpack.c.b16 %v1740, %v1736
    %v2145 = vpack.c.b16 %v1741, %v1737
    %v2146 = vpack.c.b16 %v1742, %v1738
    %v2147 = vpack.c.b16 %v1743, %v1739
    %v2148 = vpack.c.b16 %v1748, %v1744
    %v2149 = vpack.c.b16 %v1749, %v1745
    %v2150 = vpack.c.b16 %v1750, %v1746
    %v2151 = vpack.c.b16 %v1751, %v1747
    %v2152 = vpack.c.b16 %v1756, %v1752
    %v2153 = vpack.c.b16 %v1757, %v1753
    %v2154 = vpack.c.b16 %v1758, %v1754
    %v2155 = vpack.c.b16 %v1759, %v1755
    %v2156 = vpack.c.b16 %v1764, %v1760
    %v2157 = vpack.c.b16 %v1765, %v1761
    %v2158 = vpack.c.b16 %v1766, %v1762
    %v2159 = vpack.c.b16 %v1767, %v1763
    %v2160 = vpack.c.b16 %v1772, %v1768
    %v2161 = vpack.c.b16 %v1773, %v1769
    %v2162 = vpack.c.b16 %v1774, %v1770
    %v2163 = vpack.c.b16 %v1775, %v1771
    %v2164 = vpack.c.b16 %v1780, %v1776
    %v2165 = vpack.c.b16 %v1781, %v1777
    %v2166 = vpack.c.b16 %v1782, %v1778
    %v2167 = vpack.c.b16 %v1783, %v1779
    %2552 = vmatprep.subr.bf16.mxu0 %v1813
    %2553 = vmatpush1.bf16.xpose.msra.mxu0 %v1812
    %2554 = vmatprep.subr.bf16.mxu0 %v1809
    %2555 = vmatpush1.bf16.xpose.msra.mxu0 %v1808
    %2556 = vmatprep.subr.bf16.mxu0 %v1805
    %2557 = vmatpush1.bf16.xpose.msra.mxu0 %v1804
    %2558 = vmatprep.subr.bf16.mxu0 %v1801
    %2559 = vmatpush1.bf16.xpose.msra.mxu0 %v1800
    %2560 = vmatprep.subr.bf16.mxu0 %v1797
    %2561 = vmatpush1.bf16.xpose.msra.mxu0 %v1796
    %2562 = vmatprep.subr.bf16.mxu0 %v1793
    %2563 = vmatpush1.bf16.xpose.msra.mxu0 %v1792
    %2564 = vmatprep.subr.bf16.mxu0 %v1789
    %2565 = vmatpush1.bf16.xpose.msra.mxu0 %v1788
    %2566 = vmatprep.subr.bf16.mxu0 %v1785
    %2567 = vmatpush1.bf16.xpose.msra.mxu0 %v1784
    %2568 = vmatprep.subr.bf16.mxu0 %v1845
    %2569 = vmatpush2.bf16.xpose.msra.mxu0 %v1844
    %2570 = vmatprep.subr.bf16.mxu0 %v1841
    %2571 = vmatpush2.bf16.xpose.msra.mxu0 %v1840
    %2572 = vmatprep.subr.bf16.mxu0 %v1837
    %2573 = vmatpush2.bf16.xpose.msra.mxu0 %v1836
    %2574 = vmatprep.subr.bf16.mxu0 %v1833
    %2575 = vmatpush2.bf16.xpose.msra.mxu0 %v1832
    %2576 = vmatprep.subr.bf16.mxu0 %v1829
    %2577 = vmatpush2.bf16.xpose.msra.mxu0 %v1828
    %2578 = vmatprep.subr.bf16.mxu0 %v1825
    %2579 = vmatpush2.bf16.xpose.msra.mxu0 %v1824
    %2580 = vmatprep.subr.bf16.mxu0 %v1821
    %2581 = vmatpush2.bf16.xpose.msra.mxu0 %v1820
    %2582 = vmatprep.subr.bf16.mxu0 %v1817
    %2583 = vmatpush2.bf16.xpose.msra.mxu0 %v1816
    %2584 = vmatprep.mubr.bf16.mxu0 0
    %2585 = vmatmul.mubr.bf16.gmra.mxu0 0
    %v2586 = vpop.f32.mrf.mxu0
    %v2587 = vadd.f32 0.0, %v2586
    %v2588 = vpop.f32.mrf.mxu0
    %v2589 = vadd.f32 0.0, %v2588
    %v2590 = vpop.f32.mrf.mxu0
    %v2591 = vpop.f32.mrf.mxu0
    %2592 = vdwg.mxu0
    %2593 = vmatprep.subr.bf16.mxu0 %v1815
    %2594 = vmatpush1.bf16.xpose.msra.mxu0 %v1814
    %2595 = vmatprep.subr.bf16.mxu0 %v1811
    %2596 = vmatpush1.bf16.xpose.msra.mxu0 %v1810
    %2597 = vmatprep.subr.bf16.mxu0 %v1807
    %2598 = vmatpush1.bf16.xpose.msra.mxu0 %v1806
    %2599 = vmatprep.subr.bf16.mxu0 %v1803
    %2600 = vmatpush1.bf16.xpose.msra.mxu0 %v1802
    %2601 = vmatprep.subr.bf16.mxu0 %v1799
    %2602 = vmatpush1.bf16.xpose.msra.mxu0 %v1798
    %2603 = vmatprep.subr.bf16.mxu0 %v1795
    %2604 = vmatpush1.bf16.xpose.msra.mxu0 %v1794
    %2605 = vmatprep.subr.bf16.mxu0 %v1791
    %2606 = vmatpush1.bf16.xpose.msra.mxu0 %v1790
    %2607 = vmatprep.subr.bf16.mxu0 %v1787
    %2608 = vmatpush1.bf16.xpose.msra.mxu0 %v1786
    %2609 = vmatprep.subr.bf16.mxu0 %v1847
    %2610 = vmatpush2.bf16.xpose.msra.mxu0 %v1846
    %2611 = vmatprep.subr.bf16.mxu0 %v1843
    %2612 = vmatpush2.bf16.xpose.msra.mxu0 %v1842
    %2613 = vmatprep.subr.bf16.mxu0 %v1839
    %2614 = vmatpush2.bf16.xpose.msra.mxu0 %v1838
    %2615 = vmatprep.subr.bf16.mxu0 %v1835
    %2616 = vmatpush2.bf16.xpose.msra.mxu0 %v1834
    %2617 = vmatprep.subr.bf16.mxu0 %v1831
    %2618 = vmatpush2.bf16.xpose.msra.mxu0 %v1830
    %2619 = vmatprep.subr.bf16.mxu0 %v1827
    %2620 = vmatpush2.bf16.xpose.msra.mxu0 %v1826
    %2621 = vmatprep.subr.bf16.mxu0 %v1823
    %2622 = vmatpush2.bf16.xpose.msra.mxu0 %v1822
    %2623 = vmatprep.subr.bf16.mxu0 %v1819
    %2624 = vmatpush2.bf16.xpose.msra.mxu0 %v1818
    %2625 = vmatprep.mubr.bf16.mxu0 0
    %2626 = vmatmul.mubr.bf16.gmra.mxu0 0
    %v2627 = vpop.f32.mrf.mxu0
    %v2628 = vadd.f32 %v2587, %v2627
    %v2629 = vpop.f32.mrf.mxu0
    %v2630 = vadd.f32 %v2589, %v2629
    %v2631 = vpop.f32.mrf.mxu0
    %v2632 = vpop.f32.mrf.mxu0
    %2633 = vdwg.mxu0
    %2634 = vmatprep.subr.bf16.mxu0 %v1877
    %2635 = vmatpush1.bf16.xpose.msra.mxu0 %v1876
    %2636 = vmatprep.subr.bf16.mxu0 %v1873
    %2637 = vmatpush1.bf16.xpose.msra.mxu0 %v1872
    %2638 = vmatprep.subr.bf16.mxu0 %v1869
    %2639 = vmatpush1.bf16.xpose.msra.mxu0 %v1868
    %2640 = vmatprep.subr.bf16.mxu0 %v1865
    %2641 = vmatpush1.bf16.xpose.msra.mxu0 %v1864
    %2642 = vmatprep.subr.bf16.mxu0 %v1861
    %2643 = vmatpush1.bf16.xpose.msra.mxu0 %v1860
    %2644 = vmatprep.subr.bf16.mxu0 %v1857
    %2645 = vmatpush1.bf16.xpose.msra.mxu0 %v1856
    %2646 = vmatprep.subr.bf16.mxu0 %v1853
    %2647 = vmatpush1.bf16.xpose.msra.mxu0 %v1852
    %2648 = vmatprep.subr.bf16.mxu0 %v1849
    %2649 = vmatpush1.bf16.xpose.msra.mxu0 %v1848
    %2650 = vmatprep.subr.bf16.mxu0 %v1909
    %2651 = vmatpush2.bf16.xpose.msra.mxu0 %v1908
    %2652 = vmatprep.subr.bf16.mxu0 %v1905
    %2653 = vmatpush2.bf16.xpose.msra.mxu0 %v1904
    %2654 = vmatprep.subr.bf16.mxu0 %v1901
    %2655 = vmatpush2.bf16.xpose.msra.mxu0 %v1900
    %2656 = vmatprep.subr.bf16.mxu0 %v1897
    %2657 = vmatpush2.bf16.xpose.msra.mxu0 %v1896
    %2658 = vmatprep.subr.bf16.mxu0 %v1893
    %2659 = vmatpush2.bf16.xpose.msra.mxu0 %v1892
    %2660 = vmatprep.subr.bf16.mxu0 %v1889
    %2661 = vmatpush2.bf16.xpose.msra.mxu0 %v1888
    %2662 = vmatprep.subr.bf16.mxu0 %v1885
    %2663 = vmatpush2.bf16.xpose.msra.mxu0 %v1884
    %2664 = vmatprep.subr.bf16.mxu0 %v1881
    %2665 = vmatpush2.bf16.xpose.msra.mxu0 %v1880
    %2666 = vmatprep.mubr.bf16.mxu0 0
    %2667 = vmatmul.mubr.bf16.gmra.mxu0 0
    %v2668 = vpop.f32.mrf.mxu0
    %v2669 = vadd.f32 0.0, %v2668
    %v2670 = vpop.f32.mrf.mxu0
    %v2671 = vadd.f32 0.0, %v2670
    %v2672 = vpop.f32.mrf.mxu0
    %v2673 = vpop.f32.mrf.mxu0
    %2674 = vdwg.mxu0
    %2675 = vmatprep.subr.bf16.mxu0 %v1879
    %2676 = vmatpush1.bf16.xpose.msra.mxu0 %v1878
    %2677 = vmatprep.subr.bf16.mxu0 %v1875
    %2678 = vmatpush1.bf16.xpose.msra.mxu0 %v1874
    %2679 = vmatprep.subr.bf16.mxu0 %v1871
    %2680 = vmatpush1.bf16.xpose.msra.mxu0 %v1870
    %2681 = vmatprep.subr.bf16.mxu0 %v1867
    %2682 = vmatpush1.bf16.xpose.msra.mxu0 %v1866
    %2683 = vmatprep.subr.bf16.mxu0 %v1863
    %2684 = vmatpush1.bf16.xpose.msra.mxu0 %v1862
    %2685 = vmatprep.subr.bf16.mxu0 %v1859
    %2686 = vmatpush1.bf16.xpose.msra.mxu0 %v1858
    %2687 = vmatprep.subr.bf16.mxu0 %v1855
    %2688 = vmatpush1.bf16.xpose.msra.mxu0 %v1854
    %2689 = vmatprep.subr.bf16.mxu0 %v1851
    %2690 = vmatpush1.bf16.xpose.msra.mxu0 %v1850
    %2691 = vmatprep.subr.bf16.mxu0 %v1911
    %2692 = vmatpush2.bf16.xpose.msra.mxu0 %v1910
    %2693 = vmatprep.subr.bf16.mxu0 %v1907
    %2694 = vmatpush2.bf16.xpose.msra.mxu0 %v1906
    %2695 = vmatprep.subr.bf16.mxu0 %v1903
    %2696 = vmatpush2.bf16.xpose.msra.mxu0 %v1902
    %2697 = vmatprep.subr.bf16.mxu0 %v1899
    %2698 = vmatpush2.bf16.xpose.msra.mxu0 %v1898
    %2699 = vmatprep.subr.bf16.mxu0 %v1895
    %2700 = vmatpush2.bf16.xpose.msra.mxu0 %v1894
    %2701 = vmatprep.subr.bf16.mxu0 %v1891
    %2702 = vmatpush2.bf16.xpose.msra.mxu0 %v1890
    %2703 = vmatprep.subr.bf16.mxu0 %v1887
    %2704 = vmatpush2.bf16.xpose.msra.mxu0 %v1886
    %2705 = vmatprep.subr.bf16.mxu0 %v1883
    %2706 = vmatpush2.bf16.xpose.msra.mxu0 %v1882
    %2707 = vmatprep.mubr.bf16.mxu0 0
    %2708 = vmatmul.mubr.bf16.gmra.mxu0 0
    %v2709 = vpop.f32.mrf.mxu0
    %v2710 = vadd.f32 %v2669, %v2709
    %v2711 = vpop.f32.mrf.mxu0
    %v2712 = vadd.f32 %v2671, %v2711
    %v2713 = vpop.f32.mrf.mxu0
    %v2714 = vpop.f32.mrf.mxu0
    %2715 = vdwg.mxu0
    %2716 = vmatprep.subr.bf16.mxu0 %v1941
    %2717 = vmatpush1.bf16.xpose.msra.mxu0 %v1940
    %2718 = vmatprep.subr.bf16.mxu0 %v1937
    %2719 = vmatpush1.bf16.xpose.msra.mxu0 %v1936
    %2720 = vmatprep.subr.bf16.mxu0 %v1933
    %2721 = vmatpush1.bf16.xpose.msra.mxu0 %v1932
    %2722 = vmatprep.subr.bf16.mxu0 %v1929
    %2723 = vmatpush1.bf16.xpose.msra.mxu0 %v1928
    %2724 = vmatprep.subr.bf16.mxu0 %v1925
    %2725 = vmatpush1.bf16.xpose.msra.mxu0 %v1924
    %2726 = vmatprep.subr.bf16.mxu0 %v1921
    %2727 = vmatpush1.bf16.xpose.msra.mxu0 %v1920
    %2728 = vmatprep.subr.bf16.mxu0 %v1917
    %2729 = vmatpush1.bf16.xpose.msra.mxu0 %v1916
    %2730 = vmatprep.subr.bf16.mxu0 %v1913
    %2731 = vmatpush1.bf16.xpose.msra.mxu0 %v1912
    %2732 = vmatprep.subr.bf16.mxu0 %v1973
    %2733 = vmatpush2.bf16.xpose.msra.mxu0 %v1972
    %2734 = vmatprep.subr.bf16.mxu0 %v1969
    %2735 = vmatpush2.bf16.xpose.msra.mxu0 %v1968
    %2736 = vmatprep.subr.bf16.mxu0 %v1965
    %2737 = vmatpush2.bf16.xpose.msra.mxu0 %v1964
    %2738 = vmatprep.subr.bf16.mxu0 %v1961
    %2739 = vmatpush2.bf16.xpose.msra.mxu0 %v1960
    %2740 = vmatprep.subr.bf16.mxu0 %v1957
    %2741 = vmatpush2.bf16.xpose.msra.mxu0 %v1956
    %2742 = vmatprep.subr.bf16.mxu0 %v1953
    %2743 = vmatpush2.bf16.xpose.msra.mxu0 %v1952
    %2744 = vmatprep.subr.bf16.mxu0 %v1949
    %2745 = vmatpush2.bf16.xpose.msra.mxu0 %v1948
    %2746 = vmatprep.subr.bf16.mxu0 %v1945
    %2747 = vmatpush2.bf16.xpose.msra.mxu0 %v1944
    %2748 = vmatprep.mubr.bf16.mxu0 0
    %2749 = vmatmul.mubr.bf16.gmra.mxu0 0
    %v2750 = vpop.f32.mrf.mxu0
    %v2751 = vadd.f32 0.0, %v2750
    %v2752 = vpop.f32.mrf.mxu0
    %v2753 = vadd.f32 0.0, %v2752
    %v2754 = vpop.f32.mrf.mxu0
    %v2755 = vpop.f32.mrf.mxu0
    %2756 = vdwg.mxu0
    %2757 = vmatprep.subr.bf16.mxu0 %v1943
    %2758 = vmatpush1.bf16.xpose.msra.mxu0 %v1942
    %2759 = vmatprep.subr.bf16.mxu0 %v1939
    %2760 = vmatpush1.bf16.xpose.msra.mxu0 %v1938
    %2761 = vmatprep.subr.bf16.mxu0 %v1935
    %2762 = vmatpush1.bf16.xpose.msra.mxu0 %v1934
    %2763 = vmatprep.subr.bf16.mxu0 %v1931
    %2764 = vmatpush1.bf16.xpose.msra.mxu0 %v1930
    %2765 = vmatprep.subr.bf16.mxu0 %v1927
    %2766 = vmatpush1.bf16.xpose.msra.mxu0 %v1926
    %2767 = vmatprep.subr.bf16.mxu0 %v1923
    %2768 = vmatpush1.bf16.xpose.msra.mxu0 %v1922
    %2769 = vmatprep.subr.bf16.mxu0 %v1919
    %2770 = vmatpush1.bf16.xpose.msra.mxu0 %v1918
    %2771 = vmatprep.subr.bf16.mxu0 %v1915
    %2772 = vmatpush1.bf16.xpose.msra.mxu0 %v1914
    %2773 = vmatprep.subr.bf16.mxu0 %v1975
    %2774 = vmatpush2.bf16.xpose.msra.mxu0 %v1974
    %2775 = vmatprep.subr.bf16.mxu0 %v1971
    %2776 = vmatpush2.bf16.xpose.msra.mxu0 %v1970
    %2777 = vmatprep.subr.bf16.mxu0 %v1967
    %2778 = vmatpush2.bf16.xpose.msra.mxu0 %v1966
    %2779 = vmatprep.subr.bf16.mxu0 %v1963
    %2780 = vmatpush2.bf16.xpose.msra.mxu0 %v1962
    %2781 = vmatprep.subr.bf16.mxu0 %v1959
    %2782 = vmatpush2.bf16.xpose.msra.mxu0 %v1958
    %2783 = vmatprep.subr.bf16.mxu0 %v1955
    %2784 = vmatpush2.bf16.xpose.msra.mxu0 %v1954
    %2785 = vmatprep.subr.bf16.mxu0 %v1951
    %2786 = vmatpush2.bf16.xpose.msra.mxu0 %v1950
    %2787 = vmatprep.subr.bf16.mxu0 %v1947
    %2788 = vmatpush2.bf16.xpose.msra.mxu0 %v1946
    %2789 = vmatprep.mubr.bf16.mxu0 0
    %2790 = vmatmul.mubr.bf16.gmra.mxu0 0
    %v2791 = vpop.f32.mrf.mxu0
    %v2792 = vadd.f32 %v2751, %v2791
    %v2793 = vpop.f32.mrf.mxu0
    %v2794 = vadd.f32 %v2753, %v2793
    %v2795 = vpop.f32.mrf.mxu0
    %v2796 = vpop.f32.mrf.mxu0
    %2797 = vdwg.mxu0
    %2798 = vmatprep.subr.bf16.mxu0 %v2005
    %2799 = vmatpush1.bf16.xpose.msra.mxu0 %v2004
    %2800 = vmatprep.subr.bf16.mxu0 %v2001
    %2801 = vmatpush1.bf16.xpose.msra.mxu0 %v2000
    %2802 = vmatprep.subr.bf16.mxu0 %v1997
    %2803 = vmatpush1.bf16.xpose.msra.mxu0 %v1996
    %2804 = vmatprep.subr.bf16.mxu0 %v1993
    %2805 = vmatpush1.bf16.xpose.msra.mxu0 %v1992
    %2806 = vmatprep.subr.bf16.mxu0 %v1989
    %2807 = vmatpush1.bf16.xpose.msra.mxu0 %v1988
    %2808 = vmatprep.subr.bf16.mxu0 %v1985
    %2809 = vmatpush1.bf16.xpose.msra.mxu0 %v1984
    %2810 = vmatprep.subr.bf16.mxu0 %v1981
    %2811 = vmatpush1.bf16.xpose.msra.mxu0 %v1980
    %2812 = vmatprep.subr.bf16.mxu0 %v1977
    %2813 = vmatpush1.bf16.xpose.msra.mxu0 %v1976
    %2814 = vmatprep.subr.bf16.mxu0 %v2037
    %2815 = vmatpush2.bf16.xpose.msra.mxu0 %v2036
    %2816 = vmatprep.subr.bf16.mxu0 %v2033
    %2817 = vmatpush2.bf16.xpose.msra.mxu0 %v2032
    %2818 = vmatprep.subr.bf16.mxu0 %v2029
    %2819 = vmatpush2.bf16.xpose.msra.mxu0 %v2028
    %2820 = vmatprep.subr.bf16.mxu0 %v2025
    %2821 = vmatpush2.bf16.xpose.msra.mxu0 %v2024
    %2822 = vmatprep.subr.bf16.mxu0 %v2021
    %2823 = vmatpush2.bf16.xpose.msra.mxu0 %v2020
    %2824 = vmatprep.subr.bf16.mxu0 %v2017
    %2825 = vmatpush2.bf16.xpose.msra.mxu0 %v2016
    %2826 = vmatprep.subr.bf16.mxu0 %v2013
    %2827 = vmatpush2.bf16.xpose.msra.mxu0 %v2012
    %2828 = vmatprep.subr.bf16.mxu0 %v2009
    %2829 = vmatpush2.bf16.xpose.msra.mxu0 %v2008
    %2830 = vmatprep.mubr.bf16.mxu0 0
    %2831 = vmatmul.mubr.bf16.gmra.mxu0 0
    %v2832 = vpop.f32.mrf.mxu0
    %v2833 = vadd.f32 0.0, %v2832
    %v2834 = vpop.f32.mrf.mxu0
    %v2835 = vadd.f32 0.0, %v2834
    %v2836 = vpop.f32.mrf.mxu0
    %v2837 = vpop.f32.mrf.mxu0
    %2838 = vdwg.mxu0
    %2839 = vmatprep.subr.bf16.mxu0 %v2007
    %2840 = vmatpush1.bf16.xpose.msra.mxu0 %v2006
    %2841 = vmatprep.subr.bf16.mxu0 %v2003
    %2842 = vmatpush1.bf16.xpose.msra.mxu0 %v2002
    %2843 = vmatprep.subr.bf16.mxu0 %v1999
    %2844 = vmatpush1.bf16.xpose.msra.mxu0 %v1998
    %2845 = vmatprep.subr.bf16.mxu0 %v1995
    %2846 = vmatpush1.bf16.xpose.msra.mxu0 %v1994
    %2847 = vmatprep.subr.bf16.mxu0 %v1991
    %2848 = vmatpush1.bf16.xpose.msra.mxu0 %v1990
    %2849 = vmatprep.subr.bf16.mxu0 %v1987
    %2850 = vmatpush1.bf16.xpose.msra.mxu0 %v1986
    %2851 = vmatprep.subr.bf16.mxu0 %v1983
    %2852 = vmatpush1.bf16.xpose.msra.mxu0 %v1982
    %2853 = vmatprep.subr.bf16.mxu0 %v1979
    %2854 = vmatpush1.bf16.xpose.msra.mxu0 %v1978
    %2855 = vmatprep.subr.bf16.mxu0 %v2039
    %2856 = vmatpush2.bf16.xpose.msra.mxu0 %v2038
    %2857 = vmatprep.subr.bf16.mxu0 %v2035
    %2858 = vmatpush2.bf16.xpose.msra.mxu0 %v2034
    %2859 = vmatprep.subr.bf16.mxu0 %v2031
    %2860 = vmatpush2.bf16.xpose.msra.mxu0 %v2030
    %2861 = vmatprep.subr.bf16.mxu0 %v2027
    %2862 = vmatpush2.bf16.xpose.msra.mxu0 %v2026
    %2863 = vmatprep.subr.bf16.mxu0 %v2023
    %2864 = vmatpush2.bf16.xpose.msra.mxu0 %v2022
    %2865 = vmatprep.subr.bf16.mxu0 %v2019
    %2866 = vmatpush2.bf16.xpose.msra.mxu0 %v2018
    %2867 = vmatprep.subr.bf16.mxu0 %v2015
    %2868 = vmatpush2.bf16.xpose.msra.mxu0 %v2014
    %2869 = vmatprep.subr.bf16.mxu0 %v2011
    %2870 = vmatpush2.bf16.xpose.msra.mxu0 %v2010
    %2871 = vmatprep.mubr.bf16.mxu0 0
    %2872 = vmatmul.mubr.bf16.gmra.mxu0 0
    %v2873 = vpop.f32.mrf.mxu0
    %v2874 = vadd.f32 %v2833, %v2873
    %v2875 = vpop.f32.mrf.mxu0
    %v2876 = vadd.f32 %v2835, %v2875
    %v2877 = vpop.f32.mrf.mxu0
    %v2878 = vpop.f32.mrf.mxu0
    %2879 = vdwg.mxu0
    %2880 = vmatprep.subr.bf16.mxu0 %v2069
    %2881 = vmatpush1.bf16.xpose.msra.mxu0 %v2068
    %2882 = vmatprep.subr.bf16.mxu0 %v2065
    %2883 = vmatpush1.bf16.xpose.msra.mxu0 %v2064
    %2884 = vmatprep.subr.bf16.mxu0 %v2061
    %2885 = vmatpush1.bf16.xpose.msra.mxu0 %v2060
    %2886 = vmatprep.subr.bf16.mxu0 %v2057
    %2887 = vmatpush1.bf16.xpose.msra.mxu0 %v2056
    %2888 = vmatprep.subr.bf16.mxu0 %v2053
    %2889 = vmatpush1.bf16.xpose.msra.mxu0 %v2052
    %2890 = vmatprep.subr.bf16.mxu0 %v2049
    %2891 = vmatpush1.bf16.xpose.msra.mxu0 %v2048
    %2892 = vmatprep.subr.bf16.mxu0 %v2045
    %2893 = vmatpush1.bf16.xpose.msra.mxu0 %v2044
    %2894 = vmatprep.subr.bf16.mxu0 %v2041
    %2895 = vmatpush1.bf16.xpose.msra.mxu0 %v2040
    %2896 = vmatprep.subr.bf16.mxu0 %v2101
    %2897 = vmatpush2.bf16.xpose.msra.mxu0 %v2100
    %2898 = vmatprep.subr.bf16.mxu0 %v2097
    %2899 = vmatpush2.bf16.xpose.msra.mxu0 %v2096
    %2900 = vmatprep.subr.bf16.mxu0 %v2093
    %2901 = vmatpush2.bf16.xpose.msra.mxu0 %v2092
    %2902 = vmatprep.subr.bf16.mxu0 %v2089
    %2903 = vmatpush2.bf16.xpose.msra.mxu0 %v2088
    %2904 = vmatprep.subr.bf16.mxu0 %v2085
    %2905 = vmatpush2.bf16.xpose.msra.mxu0 %v2084
    %2906 = vmatprep.subr.bf16.mxu0 %v2081
    %2907 = vmatpush2.bf16.xpose.msra.mxu0 %v2080
    %2908 = vmatprep.subr.bf16.mxu0 %v2077
    %2909 = vmatpush2.bf16.xpose.msra.mxu0 %v2076
    %2910 = vmatprep.subr.bf16.mxu0 %v2073
    %2911 = vmatpush2.bf16.xpose.msra.mxu0 %v2072
    %2912 = vmatprep.mubr.bf16.mxu0 0
    %2913 = vmatmul.mubr.bf16.gmra.mxu0 0
    %v2914 = vpop.f32.mrf.mxu0
    %v2915 = vadd.f32 0.0, %v2914
    %v2916 = vpop.f32.mrf.mxu0
    %v2917 = vadd.f32 0.0, %v2916
    %v2918 = vpop.f32.mrf.mxu0
    %v2919 = vpop.f32.mrf.mxu0
    %2920 = vdwg.mxu0
    %2921 = vmatprep.subr.bf16.mxu0 %v2071
    %2922 = vmatpush1.bf16.xpose.msra.mxu0 %v2070
    %2923 = vmatprep.subr.bf16.mxu0 %v2067
    %2924 = vmatpush1.bf16.xpose.msra.mxu0 %v2066
    %2925 = vmatprep.subr.bf16.mxu0 %v2063
    %2926 = vmatpush1.bf16.xpose.msra.mxu0 %v2062
    %2927 = vmatprep.subr.bf16.mxu0 %v2059
    %2928 = vmatpush1.bf16.xpose.msra.mxu0 %v2058
    %2929 = vmatprep.subr.bf16.mxu0 %v2055
    %2930 = vmatpush1.bf16.xpose.msra.mxu0 %v2054
    %2931 = vmatprep.subr.bf16.mxu0 %v2051
    %2932 = vmatpush1.bf16.xpose.msra.mxu0 %v2050
    %2933 = vmatprep.subr.bf16.mxu0 %v2047
    %2934 = vmatpush1.bf16.xpose.msra.mxu0 %v2046
    %2935 = vmatprep.subr.bf16.mxu0 %v2043
    %2936 = vmatpush1.bf16.xpose.msra.mxu0 %v2042
    %2937 = vmatprep.subr.bf16.mxu0 %v2103
    %2938 = vmatpush2.bf16.xpose.msra.mxu0 %v2102
    %2939 = vmatprep.subr.bf16.mxu0 %v2099
    %2940 = vmatpush2.bf16.xpose.msra.mxu0 %v2098
    %2941 = vmatprep.subr.bf16.mxu0 %v2095
    %2942 = vmatpush2.bf16.xpose.msra.mxu0 %v2094
    %2943 = vmatprep.subr.bf16.mxu0 %v2091
    %2944 = vmatpush2.bf16.xpose.msra.mxu0 %v2090
    %2945 = vmatprep.subr.bf16.mxu0 %v2087
    %2946 = vmatpush2.bf16.xpose.msra.mxu0 %v2086
    %2947 = vmatprep.subr.bf16.mxu0 %v2083
    %2948 = vmatpush2.bf16.xpose.msra.mxu0 %v2082
    %2949 = vmatprep.subr.bf16.mxu0 %v2079
    %2950 = vmatpush2.bf16.xpose.msra.mxu0 %v2078
    %2951 = vmatprep.subr.bf16.mxu0 %v2075
    %2952 = vmatpush2.bf16.xpose.msra.mxu0 %v2074
    %2953 = vmatprep.mubr.bf16.mxu0 0
    %2954 = vmatmul.mubr.bf16.gmra.mxu0 0
    %v2955 = vpop.f32.mrf.mxu0
    %v2956 = vadd.f32 %v2915, %v2955
    %v2957 = vpop.f32.mrf.mxu0
    %v2958 = vadd.f32 %v2917, %v2957
    %v2959 = vpop.f32.mrf.mxu0
    %v2960 = vpop.f32.mrf.mxu0
    %2961 = vdwg.mxu0
    %2962 = vmatprep.subr.bf16.mxu0 %v2133
    %2963 = vmatpush1.bf16.xpose.msra.mxu0 %v2132
    %2964 = vmatprep.subr.bf16.mxu0 %v2129
    %2965 = vmatpush1.bf16.xpose.msra.mxu0 %v2128
    %2966 = vmatprep.subr.bf16.mxu0 %v2125
    %2967 = vmatpush1.bf16.xpose.msra.mxu0 %v2124
    %2968 = vmatprep.subr.bf16.mxu0 %v2121
    %2969 = vmatpush1.bf16.xpose.msra.mxu0 %v2120
    %2970 = vmatprep.subr.bf16.mxu0 %v2117
    %2971 = vmatpush1.bf16.xpose.msra.mxu0 %v2116
    %2972 = vmatprep.subr.bf16.mxu0 %v2113
    %2973 = vmatpush1.bf16.xpose.msra.mxu0 %v2112
    %2974 = vmatprep.subr.bf16.mxu0 %v2109
    %2975 = vmatpush1.bf16.xpose.msra.mxu0 %v2108
    %2976 = vmatprep.subr.bf16.mxu0 %v2105
    %2977 = vmatpush1.bf16.xpose.msra.mxu0 %v2104
    %2978 = vmatprep.subr.bf16.mxu0 %v2165
    %2979 = vmatpush2.bf16.xpose.msra.mxu0 %v2164
    %2980 = vmatprep.subr.bf16.mxu0 %v2161
    %2981 = vmatpush2.bf16.xpose.msra.mxu0 %v2160
    %2982 = vmatprep.subr.bf16.mxu0 %v2157
    %2983 = vmatpush2.bf16.xpose.msra.mxu0 %v2156
    %2984 = vmatprep.subr.bf16.mxu0 %v2153
    %2985 = vmatpush2.bf16.xpose.msra.mxu0 %v2152
    %2986 = vmatprep.subr.bf16.mxu0 %v2149
    %2987 = vmatpush2.bf16.xpose.msra.mxu0 %v2148
    %2988 = vmatprep.subr.bf16.mxu0 %v2145
    %2989 = vmatpush2.bf16.xpose.msra.mxu0 %v2144
    %2990 = vmatprep.subr.bf16.mxu0 %v2141
    %2991 = vmatpush2.bf16.xpose.msra.mxu0 %v2140
    %2992 = vmatprep.subr.bf16.mxu0 %v2137
    %2993 = vmatpush2.bf16.xpose.msra.mxu0 %v2136
    %2994 = vmatprep.mubr.bf16.mxu0 0
    %2995 = vmatmul.mubr.bf16.gmra.mxu0 0
    %v2996 = vpop.f32.mrf.mxu0
    %v2997 = vadd.f32 0.0, %v2996
    %v2998 = vpop.f32.mrf.mxu0
    %v2999 = vadd.f32 0.0, %v2998
    %v3000 = vpop.f32.mrf.mxu0
    %v3001 = vpop.f32.mrf.mxu0
    %3002 = vdwg.mxu0
    %3003 = vmatprep.subr.bf16.mxu0 %v2135
    %3004 = vmatpush1.bf16.xpose.msra.mxu0 %v2134
    %3005 = vmatprep.subr.bf16.mxu0 %v2131
    %3006 = vmatpush1.bf16.xpose.msra.mxu0 %v2130
    %3007 = vmatprep.subr.bf16.mxu0 %v2127
    %3008 = vmatpush1.bf16.xpose.msra.mxu0 %v2126
    %3009 = vmatprep.subr.bf16.mxu0 %v2123
    %3010 = vmatpush1.bf16.xpose.msra.mxu0 %v2122
    %3011 = vmatprep.subr.bf16.mxu0 %v2119
    %3012 = vmatpush1.bf16.xpose.msra.mxu0 %v2118
    %3013 = vmatprep.subr.bf16.mxu0 %v2115
    %3014 = vmatpush1.bf16.xpose.msra.mxu0 %v2114
    %3015 = vmatprep.subr.bf16.mxu0 %v2111
    %3016 = vmatpush1.bf16.xpose.msra.mxu0 %v2110
    %3017 = vmatprep.subr.bf16.mxu0 %v2107
    %3018 = vmatpush1.bf16.xpose.msra.mxu0 %v2106
    %3019 = vmatprep.subr.bf16.mxu0 %v2167
    %3020 = vmatpush2.bf16.xpose.msra.mxu0 %v2166
    %3021 = vmatprep.subr.bf16.mxu0 %v2163
    %3022 = vmatpush2.bf16.xpose.msra.mxu0 %v2162
    %3023 = vmatprep.subr.bf16.mxu0 %v2159
    %3024 = vmatpush2.bf16.xpose.msra.mxu0 %v2158
    %3025 = vmatprep.subr.bf16.mxu0 %v2155
    %3026 = vmatpush2.bf16.xpose.msra.mxu0 %v2154
    %3027 = vmatprep.subr.bf16.mxu0 %v2151
    %3028 = vmatpush2.bf16.xpose.msra.mxu0 %v2150
    %3029 = vmatprep.subr.bf16.mxu0 %v2147
    %3030 = vmatpush2.bf16.xpose.msra.mxu0 %v2146
    %3031 = vmatprep.subr.bf16.mxu0 %v2143
    %3032 = vmatpush2.bf16.xpose.msra.mxu0 %v2142
    %3033 = vmatprep.subr.bf16.mxu0 %v2139
    %3034 = vmatpush2.bf16.xpose.msra.mxu0 %v2138
    %3035 = vmatprep.mubr.bf16.mxu0 0
    %3036 = vmatmul.mubr.bf16.gmra.mxu0 0
    %v3037 = vpop.f32.mrf.mxu0
    %v3038 = vadd.f32 %v2997, %v3037
    %v3039 = vpop.f32.mrf.mxu0
    %v3040 = vadd.f32 %v2999, %v3039
    %v3041 = vpop.f32.mrf.mxu0
    %v3042 = vpop.f32.mrf.mxu0
    %3043 = vdwg.mxu0
    %v3044 = vadd.f32 %v620, %v2628
    %v3045 = vadd.f32 %v621, %v2630
    %v3046 = vadd.f32 %v622, %v2710
    %v3047 = vadd.f32 %v623, %v2712
    %v3048 = vxor.u32 %v3044, 2147483648
    %v3049 = vxor.u32 %v3045, 2147483648
    %v3050 = vxor.u32 %v3046, 2147483648
    %v3051 = vxor.u32 %v3047, 2147483648
    %v3052 = vmul.f32 %v3048, 1.442695
    %v3053 = vpow.pop %v3052
    %v3054 = vmul.f32 %v3049, 1.442695
    %v3055 = vpow.pop %v3054
    %v3056 = vmul.f32 %v3050, 1.442695
    %v3057 = vpow.pop %v3056
    %v3058 = vmul.f32 %v3051, 1.442695
    %v3059 = vpow.pop %v3058
    %v3060 = vadd.f32 %v3053, 1.0
    %v3061 = vadd.f32 %v3055, 1.0
    %v3062 = vadd.f32 %v3057, 1.0
    %v3063 = vadd.f32 %v3059, 1.0
    %v3064 = vrcp.pop %v3060
    %v3065 = vmul.f32 1.0, %v3064
    %v3066 = vrcp.pop %v3061
    %v3067 = vmul.f32 1.0, %v3066
    %v3068 = vrcp.pop %v3062
    %v3069 = vmul.f32 1.0, %v3068
    %v3070 = vrcp.pop %v3063
    %v3071 = vmul.f32 1.0, %v3070
    %v3072 = vadd.f32 %v624, %v2792
    %v3073 = vadd.f32 %v625, %v2794
    %v3074 = vadd.f32 %v626, %v2874
    %v3075 = vadd.f32 %v627, %v2876
    %v3076 = vxor.u32 %v3072, 2147483648
    %v3077 = vxor.u32 %v3073, 2147483648
    %v3078 = vxor.u32 %v3074, 2147483648
    %v3079 = vxor.u32 %v3075, 2147483648
    %v3080 = vmul.f32 %v3076, 1.442695
    %v3081 = vpow.pop %v3080
    %v3082 = vmul.f32 %v3077, 1.442695
    %v3083 = vpow.pop %v3082
    %v3084 = vmul.f32 %v3078, 1.442695
    %v3085 = vpow.pop %v3084
    %v3086 = vmul.f32 %v3079, 1.442695
    %v3087 = vpow.pop %v3086
    %v3088 = vadd.f32 %v3081, 1.0
    %v3089 = vadd.f32 %v3083, 1.0
    %v3090 = vadd.f32 %v3085, 1.0
    %v3091 = vadd.f32 %v3087, 1.0
    %v3092 = vrcp.pop %v3088
    %v3093 = vmul.f32 1.0, %v3092
    %v3094 = vrcp.pop %v3089
    %v3095 = vmul.f32 1.0, %v3094
    %v3096 = vrcp.pop %v3090
    %v3097 = vmul.f32 1.0, %v3096
    %v3098 = vrcp.pop %v3091
    %v3099 = vmul.f32 1.0, %v3098
    %v3101 = vlaneseq
    %v3102 = vshrl.u32 %v3101, 7
    %v3103 = vsub.s32 0, %v3102
    %v3104 = vrot.slane %v475, %v3103
    %v3105 = vlaneseq
    %v3106 = vshrl.u32 %v3105, 7
    %v3107 = vsub.s32 1, %v3106
    %v3108 = vrot.slane %v475, %v3107
    %v3109 = vlaneseq
    %v3110 = vshrl.u32 %v3109, 7
    %v3111 = vsub.s32 2, %v3110
    %v3112 = vrot.slane %v475, %v3111
    %v3113 = vlaneseq
    %v3114 = vshrl.u32 %v3113, 7
    %v3115 = vsub.s32 3, %v3114
    %v3116 = vrot.slane %v475, %v3115
    %v3121 = vadd.f32 %v2956, %v3104
    %v3122 = vadd.f32 %v2958, %v3108
    %v3123 = vadd.f32 %v3038, %v3112
    %v3124 = vadd.f32 %v3040, %v3116
    %v3125 = vmul.f32 %v3065, %v3121
    %v3126 = vmul.f32 %v3067, %v3122
    %v3127 = vmul.f32 %v3069, %v3123
    %v3128 = vmul.f32 %v3071, %v3124
    %v3129 = vadd.f32 %v628, %v3125
    %v3130 = vadd.f32 %v629, %v3126
    %v3131 = vadd.f32 %v630, %v3127
    %v3132 = vadd.f32 %v631, %v3128
    %v3133 = vtanh.pop %v3129
    %v3134 = vtanh.pop %v3130
    %v3135 = vtanh.pop %v3131
    %v3136 = vtanh.pop %v3132
    %v3137 = vsub.f32 1.0, %v3093
    %v3138 = vsub.f32 1.0, %v3095
    %v3139 = vsub.f32 1.0, %v3097
    %v3140 = vsub.f32 1.0, %v3099
    %v3141 = vmul.f32 %v3137, %v3133
    %v3142 = vmul.f32 %v3138, %v3134
    %v3143 = vmul.f32 %v3139, %v3135
    %v3144 = vmul.f32 %v3140, %v3136
    %v3145 = vmul.f32 %v3093, 0.0
    %v3146 = vmul.f32 %v3095, 0.0
    %v3147 = vmul.f32 %v3097, 0.0
    %v3148 = vmul.f32 %v3099, 0.0
    %v3149 = vadd.f32 %v3141, %v3145
    %v3150 = vadd.f32 %v3142, %v3146
    %v3151 = vadd.f32 %v3143, %v3147
    %v3152 = vadd.f32 %v3144, %v3148
    %s3153 = scalar_lea.vmem %s0, 8
    %v3154 = vld [vmem:[%s3153] sm:$0xff]
    %3156 = vset.pattern.permute.xlu0 0
    %3157 = vperm.xlu0 %3156, %v3154
    %v3158 = vpop.permute.xlu0 %3157
    %v3160 = vmul.f32 %v3158, %v489
    %v3161 = vmul.f32 %v3158, %v493
    %v3162 = vmul.f32 %v3158, %v497
    %v3163 = vmul.f32 %v3158, %v501
    %v3164 = vmul.f32 %v3158, %v505
    %v3165 = vmul.f32 %v3158, %v509
    %v3166 = vmul.f32 %v3158, %v513
    %v3167 = vmul.f32 %v3158, %v517
    %v3168 = vmul.f32 %v3158, %v521
    %v3169 = vmul.f32 %v3158, %v525
    %v3170 = vmul.f32 %v3158, %v529
    %v3171 = vmul.f32 %v3158, %v533
    %v3172 = vadd.f32 %v3160, %v563
    %v3173 = vadd.f32 %v3161, %v567
    %v3174 = vadd.f32 %v3162, %v571
    %v3175 = vadd.f32 %v3163, %v575
    %v3176 = vadd.f32 %v3164, %v579
    %v3177 = vadd.f32 %v3165, %v583
    %v3178 = vadd.f32 %v3166, %v587
    %v3179 = vadd.f32 %v3167, %v591
    %v3180 = vadd.f32 %v3168, %v595
    %v3181 = vadd.f32 %v3169, %v599
    %v3182 = vadd.f32 %v3170, %v603
    %v3183 = vadd.f32 %v3171, %v607
    %v3184 = vpack.c.bf16 %v3149, %v3149
    %v3185 = vpack.c.bf16 %v3150, %v3150
    %v3186 = vpack.c.bf16 %v3151, %v3151
    %v3187 = vpack.c.bf16 %v3152, %v3152
    %3188 = vmatprep.subr.bf16.mxu0 %v1813
    %3189 = vmatpush1.bf16.xpose.msra.mxu0 %v1812
    %3190 = vmatprep.subr.bf16.mxu0 %v1809
    %3191 = vmatpush1.bf16.xpose.msra.mxu0 %v1808
    %3192 = vmatprep.subr.bf16.mxu0 %v1805
    %3193 = vmatpush1.bf16.xpose.msra.mxu0 %v1804
    %3194 = vmatprep.subr.bf16.mxu0 %v1801
    %3195 = vmatpush1.bf16.xpose.msra.mxu0 %v1800
    %3196 = vmatprep.subr.bf16.mxu0 %v1797
    %3197 = vmatpush1.bf16.xpose.msra.mxu0 %v1796
    %3198 = vmatprep.subr.bf16.mxu0 %v1793
    %3199 = vmatpush1.bf16.xpose.msra.mxu0 %v1792
    %3200 = vmatprep.subr.bf16.mxu0 %v1789
    %3201 = vmatpush1.bf16.xpose.msra.mxu0 %v1788
    %3202 = vmatprep.subr.bf16.mxu0 %v1785
    %3203 = vmatpush1.bf16.xpose.msra.mxu0 %v1784
    %3204 = vmatprep.subr.bf16.mxu0 %v1845
    %3205 = vmatpush2.bf16.xpose.msra.mxu0 %v1844
    %3206 = vmatprep.subr.bf16.mxu0 %v1841
    %3207 = vmatpush2.bf16.xpose.msra.mxu0 %v1840
    %3208 = vmatprep.subr.bf16.mxu0 %v1837
    %3209 = vmatpush2.bf16.xpose.msra.mxu0 %v1836
    %3210 = vmatprep.subr.bf16.mxu0 %v1833
    %3211 = vmatpush2.bf16.xpose.msra.mxu0 %v1832
    %3212 = vmatprep.subr.bf16.mxu0 %v1829
    %3213 = vmatpush2.bf16.xpose.msra.mxu0 %v1828
    %3214 = vmatprep.subr.bf16.mxu0 %v1825
    %3215 = vmatpush2.bf16.xpose.msra.mxu0 %v1824
    %3216 = vmatprep.subr.bf16.mxu0 %v1821
    %3217 = vmatpush2.bf16.xpose.msra.mxu0 %v1820
    %3218 = vmatprep.subr.bf16.mxu0 %v1817
    %3219 = vmatpush2.bf16.xpose.msra.mxu0 %v1816
    %3220 = vmatprep.mubr.bf16.mxu0 %v3185
    %3221 = vmatmul.mubr.bf16.gmra.mxu0 %v3184
    %v3222 = vpop.f32.mrf.mxu0
    %v3223 = vadd.f32 0.0, %v3222
    %v3224 = vpop.f32.mrf.mxu0
    %v3225 = vadd.f32 0.0, %v3224
    %v3226 = vpop.f32.mrf.mxu0
    %v3227 = vpop.f32.mrf.mxu0
    %3228 = vdwg.mxu0
    %3229 = vmatprep.subr.bf16.mxu0 %v1815
    %3230 = vmatpush1.bf16.xpose.msra.mxu0 %v1814
    %3231 = vmatprep.subr.bf16.mxu0 %v1811
    %3232 = vmatpush1.bf16.xpose.msra.mxu0 %v1810
    %3233 = vmatprep.subr.bf16.mxu0 %v1807
    %3234 = vmatpush1.bf16.xpose.msra.mxu0 %v1806
    %3235 = vmatprep.subr.bf16.mxu0 %v1803
    %3236 = vmatpush1.bf16.xpose.msra.mxu0 %v1802
    %3237 = vmatprep.subr.bf16.mxu0 %v1799
    %3238 = vmatpush1.bf16.xpose.msra.mxu0 %v1798
    %3239 = vmatprep.subr.bf16.mxu0 %v1795
    %3240 = vmatpush1.bf16.xpose.msra.mxu0 %v1794
    %3241 = vmatprep.subr.bf16.mxu0 %v1791
    %3242 = vmatpush1.bf16.xpose.msra.mxu0 %v1790
    %3243 = vmatprep.subr.bf16.mxu0 %v1787
    %3244 = vmatpush1.bf16.xpose.msra.mxu0 %v1786
    %3245 = vmatprep.subr.bf16.mxu0 %v1847
    %3246 = vmatpush2.bf16.xpose.msra.mxu0 %v1846
    %3247 = vmatprep.subr.bf16.mxu0 %v1843
    %3248 = vmatpush2.bf16.xpose.msra.mxu0 %v1842
    %3249 = vmatprep.subr.bf16.mxu0 %v1839
    %3250 = vmatpush2.bf16.xpose.msra.mxu0 %v1838
    %3251 = vmatprep.subr.bf16.mxu0 %v1835
    %3252 = vmatpush2.bf16.xpose.msra.mxu0 %v1834
    %3253 = vmatprep.subr.bf16.mxu0 %v1831
    %3254 = vmatpush2.bf16.xpose.msra.mxu0 %v1830
    %3255 = vmatprep.subr.bf16.mxu0 %v1827
    %3256 = vmatpush2.bf16.xpose.msra.mxu0 %v1826
    %3257 = vmatprep.subr.bf16.mxu0 %v1823
    %3258 = vmatpush2.bf16.xpose.msra.mxu0 %v1822
    %3259 = vmatprep.subr.bf16.mxu0 %v1819
    %3260 = vmatpush2.bf16.xpose.msra.mxu0 %v1818
    %3261 = vmatprep.mubr.bf16.mxu0 %v3187
    %3262 = vmatmul.mubr.bf16.gmra.mxu0 %v3186
    %v3263 = vpop.f32.mrf.mxu0
    %v3264 = vadd.f32 %v3223, %v3263
    %v3265 = vpop.f32.mrf.mxu0
    %v3266 = vadd.f32 %v3225, %v3265
    %v3267 = vpop.f32.mrf.mxu0
    %v3268 = vpop.f32.mrf.mxu0
    %3269 = vdwg.mxu0
    %3270 = vmatprep.subr.bf16.mxu0 %v1877
    %3271 = vmatpush1.bf16.xpose.msra.mxu0 %v1876
    %3272 = vmatprep.subr.bf16.mxu0 %v1873
    %3273 = vmatpush1.bf16.xpose.msra.mxu0 %v1872
    %3274 = vmatprep.subr.bf16.mxu0 %v1869
    %3275 = vmatpush1.bf16.xpose.msra.mxu0 %v1868
    %3276 = vmatprep.subr.bf16.mxu0 %v1865
    %3277 = vmatpush1.bf16.xpose.msra.mxu0 %v1864
    %3278 = vmatprep.subr.bf16.mxu0 %v1861
    %3279 = vmatpush1.bf16.xpose.msra.mxu0 %v1860
    %3280 = vmatprep.subr.bf16.mxu0 %v1857
    %3281 = vmatpush1.bf16.xpose.msra.mxu0 %v1856
    %3282 = vmatprep.subr.bf16.mxu0 %v1853
    %3283 = vmatpush1.bf16.xpose.msra.mxu0 %v1852
    %3284 = vmatprep.subr.bf16.mxu0 %v1849
    %3285 = vmatpush1.bf16.xpose.msra.mxu0 %v1848
    %3286 = vmatprep.subr.bf16.mxu0 %v1909
    %3287 = vmatpush2.bf16.xpose.msra.mxu0 %v1908
    %3288 = vmatprep.subr.bf16.mxu0 %v1905
    %3289 = vmatpush2.bf16.xpose.msra.mxu0 %v1904
    %3290 = vmatprep.subr.bf16.mxu0 %v1901
    %3291 = vmatpush2.bf16.xpose.msra.mxu0 %v1900
    %3292 = vmatprep.subr.bf16.mxu0 %v1897
    %3293 = vmatpush2.bf16.xpose.msra.mxu0 %v1896
    %3294 = vmatprep.subr.bf16.mxu0 %v1893
    %3295 = vmatpush2.bf16.xpose.msra.mxu0 %v1892
    %3296 = vmatprep.subr.bf16.mxu0 %v1889
    %3297 = vmatpush2.bf16.xpose.msra.mxu0 %v1888
    %3298 = vmatprep.subr.bf16.mxu0 %v1885
    %3299 = vmatpush2.bf16.xpose.msra.mxu0 %v1884
    %3300 = vmatprep.subr.bf16.mxu0 %v1881
    %3301 = vmatpush2.bf16.xpose.msra.mxu0 %v1880
    %3302 = vmatprep.mubr.bf16.mxu0 %v3185
    %3303 = vmatmul.mubr.bf16.gmra.mxu0 %v3184
    %v3304 = vpop.f32.mrf.mxu0
    %v3305 = vadd.f32 0.0, %v3304
    %v3306 = vpop.f32.mrf.mxu0
    %v3307 = vadd.f32 0.0, %v3306
    %v3308 = vpop.f32.mrf.mxu0
    %v3309 = vpop.f32.mrf.mxu0
    %3310 = vdwg.mxu0
    %3311 = vmatprep.subr.bf16.mxu0 %v1879
    %3312 = vmatpush1.bf16.xpose.msra.mxu0 %v1878
    %3313 = vmatprep.subr.bf16.mxu0 %v1875
    %3314 = vmatpush1.bf16.xpose.msra.mxu0 %v1874
    %3315 = vmatprep.subr.bf16.mxu0 %v1871
    %3316 = vmatpush1.bf16.xpose.msra.mxu0 %v1870
    %3317 = vmatprep.subr.bf16.mxu0 %v1867
    %3318 = vmatpush1.bf16.xpose.msra.mxu0 %v1866
    %3319 = vmatprep.subr.bf16.mxu0 %v1863
    %3320 = vmatpush1.bf16.xpose.msra.mxu0 %v1862
    %3321 = vmatprep.subr.bf16.mxu0 %v1859
    %3322 = vmatpush1.bf16.xpose.msra.mxu0 %v1858
    %3323 = vmatprep.subr.bf16.mxu0 %v1855
    %3324 = vmatpush1.bf16.xpose.msra.mxu0 %v1854
    %3325 = vmatprep.subr.bf16.mxu0 %v1851
    %3326 = vmatpush1.bf16.xpose.msra.mxu0 %v1850
    %3327 = vmatprep.subr.bf16.mxu0 %v1911
    %3328 = vmatpush2.bf16.xpose.msra.mxu0 %v1910
    %3329 = vmatprep.subr.bf16.mxu0 %v1907
    %3330 = vmatpush2.bf16.xpose.msra.mxu0 %v1906
    %3331 = vmatprep.subr.bf16.mxu0 %v1903
    %3332 = vmatpush2.bf16.xpose.msra.mxu0 %v1902
    %3333 = vmatprep.subr.bf16.mxu0 %v1899
    %3334 = vmatpush2.bf16.xpose.msra.mxu0 %v1898
    %3335 = vmatprep.subr.bf16.mxu0 %v1895
    %3336 = vmatpush2.bf16.xpose.msra.mxu0 %v1894
    %3337 = vmatprep.subr.bf16.mxu0 %v1891
    %3338 = vmatpush2.bf16.xpose.msra.mxu0 %v1890
    %3339 = vmatprep.subr.bf16.mxu0 %v1887
    %3340 = vmatpush2.bf16.xpose.msra.mxu0 %v1886
    %3341 = vmatprep.subr.bf16.mxu0 %v1883
    %3342 = vmatpush2.bf16.xpose.msra.mxu0 %v1882
    %3343 = vmatprep.mubr.bf16.mxu0 %v3187
    %3344 = vmatmul.mubr.bf16.gmra.mxu0 %v3186
    %v3345 = vpop.f32.mrf.mxu0
    %v3346 = vadd.f32 %v3305, %v3345
    %v3347 = vpop.f32.mrf.mxu0
    %v3348 = vadd.f32 %v3307, %v3347
    %v3349 = vpop.f32.mrf.mxu0
    %v3350 = vpop.f32.mrf.mxu0
    %3351 = vdwg.mxu0
    %3352 = vmatprep.subr.bf16.mxu0 %v1941
    %3353 = vmatpush1.bf16.xpose.msra.mxu0 %v1940
    %3354 = vmatprep.subr.bf16.mxu0 %v1937
    %3355 = vmatpush1.bf16.xpose.msra.mxu0 %v1936
    %3356 = vmatprep.subr.bf16.mxu0 %v1933
    %3357 = vmatpush1.bf16.xpose.msra.mxu0 %v1932
    %3358 = vmatprep.subr.bf16.mxu0 %v1929
    %3359 = vmatpush1.bf16.xpose.msra.mxu0 %v1928
    %3360 = vmatprep.subr.bf16.mxu0 %v1925
    %3361 = vmatpush1.bf16.xpose.msra.mxu0 %v1924
    %3362 = vmatprep.subr.bf16.mxu0 %v1921
    %3363 = vmatpush1.bf16.xpose.msra.mxu0 %v1920
    %3364 = vmatprep.subr.bf16.mxu0 %v1917
    %3365 = vmatpush1.bf16.xpose.msra.mxu0 %v1916
    %3366 = vmatprep.subr.bf16.mxu0 %v1913
    %3367 = vmatpush1.bf16.xpose.msra.mxu0 %v1912
    %3368 = vmatprep.subr.bf16.mxu0 %v1973
    %3369 = vmatpush2.bf16.xpose.msra.mxu0 %v1972
    %3370 = vmatprep.subr.bf16.mxu0 %v1969
    %3371 = vmatpush2.bf16.xpose.msra.mxu0 %v1968
    %3372 = vmatprep.subr.bf16.mxu0 %v1965
    %3373 = vmatpush2.bf16.xpose.msra.mxu0 %v1964
    %3374 = vmatprep.subr.bf16.mxu0 %v1961
    %3375 = vmatpush2.bf16.xpose.msra.mxu0 %v1960
    %3376 = vmatprep.subr.bf16.mxu0 %v1957
    %3377 = vmatpush2.bf16.xpose.msra.mxu0 %v1956
    %3378 = vmatprep.subr.bf16.mxu0 %v1953
    %3379 = vmatpush2.bf16.xpose.msra.mxu0 %v1952
    %3380 = vmatprep.subr.bf16.mxu0 %v1949
    %3381 = vmatpush2.bf16.xpose.msra.mxu0 %v1948
    %3382 = vmatprep.subr.bf16.mxu0 %v1945
    %3383 = vmatpush2.bf16.xpose.msra.mxu0 %v1944
    %3384 = vmatprep.mubr.bf16.mxu0 %v3185
    %3385 = vmatmul.mubr.bf16.gmra.mxu0 %v3184
    %v3386 = vpop.f32.mrf.mxu0
    %v3387 = vadd.f32 0.0, %v3386
    %v3388 = vpop.f32.mrf.mxu0
    %v3389 = vadd.f32 0.0, %v3388
    %v3390 = vpop.f32.mrf.mxu0
    %v3391 = vpop.f32.mrf.mxu0
    %3392 = vdwg.mxu0
    %3393 = vmatprep.subr.bf16.mxu0 %v1943
    %3394 = vmatpush1.bf16.xpose.msra.mxu0 %v1942
    %3395 = vmatprep.subr.bf16.mxu0 %v1939
    %3396 = vmatpush1.bf16.xpose.msra.mxu0 %v1938
    %3397 = vmatprep.subr.bf16.mxu0 %v1935
    %3398 = vmatpush1.bf16.xpose.msra.mxu0 %v1934
    %3399 = vmatprep.subr.bf16.mxu0 %v1931
    %3400 = vmatpush1.bf16.xpose.msra.mxu0 %v1930
    %3401 = vmatprep.subr.bf16.mxu0 %v1927
    %3402 = vmatpush1.bf16.xpose.msra.mxu0 %v1926
    %3403 = vmatprep.subr.bf16.mxu0 %v1923
    %3404 = vmatpush1.bf16.xpose.msra.mxu0 %v1922
    %3405 = vmatprep.subr.bf16.mxu0 %v1919
    %3406 = vmatpush1.bf16.xpose.msra.mxu0 %v1918
    %3407 = vmatprep.subr.bf16.mxu0 %v1915
    %3408 = vmatpush1.bf16.xpose.msra.mxu0 %v1914
    %3409 = vmatprep.subr.bf16.mxu0 %v1975
    %3410 = vmatpush2.bf16.xpose.msra.mxu0 %v1974
    %3411 = vmatprep.subr.bf16.mxu0 %v1971
    %3412 = vmatpush2.bf16.xpose.msra.mxu0 %v1970
    %3413 = vmatprep.subr.bf16.mxu0 %v1967
    %3414 = vmatpush2.bf16.xpose.msra.mxu0 %v1966
    %3415 = vmatprep.subr.bf16.mxu0 %v1963
    %3416 = vmatpush2.bf16.xpose.msra.mxu0 %v1962
    %3417 = vmatprep.subr.bf16.mxu0 %v1959
    %3418 = vmatpush2.bf16.xpose.msra.mxu0 %v1958
    %3419 = vmatprep.subr.bf16.mxu0 %v1955
    %3420 = vmatpush2.bf16.xpose.msra.mxu0 %v1954
    %3421 = vmatprep.subr.bf16.mxu0 %v1951
    %3422 = vmatpush2.bf16.xpose.msra.mxu0 %v1950
    %3423 = vmatprep.subr.bf16.mxu0 %v1947
    %3424 = vmatpush2.bf16.xpose.msra.mxu0 %v1946
    %3425 = vmatprep.mubr.bf16.mxu0 %v3187
    %3426 = vmatmul.mubr.bf16.gmra.mxu0 %v3186
    %v3427 = vpop.f32.mrf.mxu0
    %v3428 = vadd.f32 %v3387, %v3427
    %v3429 = vpop.f32.mrf.mxu0
    %v3430 = vadd.f32 %v3389, %v3429
    %v3431 = vpop.f32.mrf.mxu0
    %v3432 = vpop.f32.mrf.mxu0
    %3433 = vdwg.mxu0
    %3434 = vmatprep.subr.bf16.mxu0 %v2005
    %3435 = vmatpush1.bf16.xpose.msra.mxu0 %v2004
    %3436 = vmatprep.subr.bf16.mxu0 %v2001
    %3437 = vmatpush1.bf16.xpose.msra.mxu0 %v2000
    %3438 = vmatprep.subr.bf16.mxu0 %v1997
    %3439 = vmatpush1.bf16.xpose.msra.mxu0 %v1996
    %3440 = vmatprep.subr.bf16.mxu0 %v1993
    %3441 = vmatpush1.bf16.xpose.msra.mxu0 %v1992
    %3442 = vmatprep.subr.bf16.mxu0 %v1989
    %3443 = vmatpush1.bf16.xpose.msra.mxu0 %v1988
    %3444 = vmatprep.subr.bf16.mxu0 %v1985
    %3445 = vmatpush1.bf16.xpose.msra.mxu0 %v1984
    %3446 = vmatprep.subr.bf16.mxu0 %v1981
    %3447 = vmatpush1.bf16.xpose.msra.mxu0 %v1980
    %3448 = vmatprep.subr.bf16.mxu0 %v1977
    %3449 = vmatpush1.bf16.xpose.msra.mxu0 %v1976
    %3450 = vmatprep.subr.bf16.mxu0 %v2037
    %3451 = vmatpush2.bf16.xpose.msra.mxu0 %v2036
    %3452 = vmatprep.subr.bf16.mxu0 %v2033
    %3453 = vmatpush2.bf16.xpose.msra.mxu0 %v2032
    %3454 = vmatprep.subr.bf16.mxu0 %v2029
    %3455 = vmatpush2.bf16.xpose.msra.mxu0 %v2028
    %3456 = vmatprep.subr.bf16.mxu0 %v2025
    %3457 = vmatpush2.bf16.xpose.msra.mxu0 %v2024
    %3458 = vmatprep.subr.bf16.mxu0 %v2021
    %3459 = vmatpush2.bf16.xpose.msra.mxu0 %v2020
    %3460 = vmatprep.subr.bf16.mxu0 %v2017
    %3461 = vmatpush2.bf16.xpose.msra.mxu0 %v2016
    %3462 = vmatprep.subr.bf16.mxu0 %v2013
    %3463 = vmatpush2.bf16.xpose.msra.mxu0 %v2012
    %3464 = vmatprep.subr.bf16.mxu0 %v2009
    %3465 = vmatpush2.bf16.xpose.msra.mxu0 %v2008
    %3466 = vmatprep.mubr.bf16.mxu0 %v3185
    %3467 = vmatmul.mubr.bf16.gmra.mxu0 %v3184
    %v3468 = vpop.f32.mrf.mxu0
    %v3469 = vadd.f32 0.0, %v3468
    %v3470 = vpop.f32.mrf.mxu0
    %v3471 = vadd.f32 0.0, %v3470
    %v3472 = vpop.f32.mrf.mxu0
    %v3473 = vpop.f32.mrf.mxu0
    %3474 = vdwg.mxu0
    %3475 = vmatprep.subr.bf16.mxu0 %v2007
    %3476 = vmatpush1.bf16.xpose.msra.mxu0 %v2006
    %3477 = vmatprep.subr.bf16.mxu0 %v2003
    %3478 = vmatpush1.bf16.xpose.msra.mxu0 %v2002
    %3479 = vmatprep.subr.bf16.mxu0 %v1999
    %3480 = vmatpush1.bf16.xpose.msra.mxu0 %v1998
    %3481 = vmatprep.subr.bf16.mxu0 %v1995
    %3482 = vmatpush1.bf16.xpose.msra.mxu0 %v1994
    %3483 = vmatprep.subr.bf16.mxu0 %v1991
    %3484 = vmatpush1.bf16.xpose.msra.mxu0 %v1990
    %3485 = vmatprep.subr.bf16.mxu0 %v1987
    %3486 = vmatpush1.bf16.xpose.msra.mxu0 %v1986
    %3487 = vmatprep.subr.bf16.mxu0 %v1983
    %3488 = vmatpush1.bf16.xpose.msra.mxu0 %v1982
    %3489 = vmatprep.subr.bf16.mxu0 %v1979
    %3490 = vmatpush1.bf16.xpose.msra.mxu0 %v1978
    %3491 = vmatprep.subr.bf16.mxu0 %v2039
    %3492 = vmatpush2.bf16.xpose.msra.mxu0 %v2038
    %3493 = vmatprep.subr.bf16.mxu0 %v2035
    %3494 = vmatpush2.bf16.xpose.msra.mxu0 %v2034
    %3495 = vmatprep.subr.bf16.mxu0 %v2031
    %3496 = vmatpush2.bf16.xpose.msra.mxu0 %v2030
    %3497 = vmatprep.subr.bf16.mxu0 %v2027
    %3498 = vmatpush2.bf16.xpose.msra.mxu0 %v2026
    %3499 = vmatprep.subr.bf16.mxu0 %v2023
    %3500 = vmatpush2.bf16.xpose.msra.mxu0 %v2022
    %3501 = vmatprep.subr.bf16.mxu0 %v2019
    %3502 = vmatpush2.bf16.xpose.msra.mxu0 %v2018
    %3503 = vmatprep.subr.bf16.mxu0 %v2015
    %3504 = vmatpush2.bf16.xpose.msra.mxu0 %v2014
    %3505 = vmatprep.subr.bf16.mxu0 %v2011
    %3506 = vmatpush2.bf16.xpose.msra.mxu0 %v2010
    %3507 = vmatprep.mubr.bf16.mxu0 %v3187
    %3508 = vmatmul.mubr.bf16.gmra.mxu0 %v3186
    %v3509 = vpop.f32.mrf.mxu0
    %v3510 = vadd.f32 %v3469, %v3509
    %v3511 = vpop.f32.mrf.mxu0
    %v3512 = vadd.f32 %v3471, %v3511
    %v3513 = vpop.f32.mrf.mxu0
    %v3514 = vpop.f32.mrf.mxu0
    %3515 = vdwg.mxu0
    %3516 = vmatprep.subr.bf16.mxu0 %v2069
    %3517 = vmatpush1.bf16.xpose.msra.mxu0 %v2068
    %3518 = vmatprep.subr.bf16.mxu0 %v2065
    %3519 = vmatpush1.bf16.xpose.msra.mxu0 %v2064
    %3520 = vmatprep.subr.bf16.mxu0 %v2061
    %3521 = vmatpush1.bf16.xpose.msra.mxu0 %v2060
    %3522 = vmatprep.subr.bf16.mxu0 %v2057
    %3523 = vmatpush1.bf16.xpose.msra.mxu0 %v2056
    %3524 = vmatprep.subr.bf16.mxu0 %v2053
    %3525 = vmatpush1.bf16.xpose.msra.mxu0 %v2052
    %3526 = vmatprep.subr.bf16.mxu0 %v2049
    %3527 = vmatpush1.bf16.xpose.msra.mxu0 %v2048
    %3528 = vmatprep.subr.bf16.mxu0 %v2045
    %3529 = vmatpush1.bf16.xpose.msra.mxu0 %v2044
    %3530 = vmatprep.subr.bf16.mxu0 %v2041
    %3531 = vmatpush1.bf16.xpose.msra.mxu0 %v2040
    %3532 = vmatprep.subr.bf16.mxu0 %v2101
    %3533 = vmatpush2.bf16.xpose.msra.mxu0 %v2100
    %3534 = vmatprep.subr.bf16.mxu0 %v2097
    %3535 = vmatpush2.bf16.xpose.msra.mxu0 %v2096
    %3536 = vmatprep.subr.bf16.mxu0 %v2093
    %3537 = vmatpush2.bf16.xpose.msra.mxu0 %v2092
    %3538 = vmatprep.subr.bf16.mxu0 %v2089
    %3539 = vmatpush2.bf16.xpose.msra.mxu0 %v2088
    %3540 = vmatprep.subr.bf16.mxu0 %v2085
    %3541 = vmatpush2.bf16.xpose.msra.mxu0 %v2084
    %3542 = vmatprep.subr.bf16.mxu0 %v2081
    %3543 = vmatpush2.bf16.xpose.msra.mxu0 %v2080
    %3544 = vmatprep.subr.bf16.mxu0 %v2077
    %3545 = vmatpush2.bf16.xpose.msra.mxu0 %v2076
    %3546 = vmatprep.subr.bf16.mxu0 %v2073
    %3547 = vmatpush2.bf16.xpose.msra.mxu0 %v2072
    %3548 = vmatprep.mubr.bf16.mxu0 %v3185
    %3549 = vmatmul.mubr.bf16.gmra.mxu0 %v3184
    %v3550 = vpop.f32.mrf.mxu0
    %v3551 = vadd.f32 0.0, %v3550
    %v3552 = vpop.f32.mrf.mxu0
    %v3553 = vadd.f32 0.0, %v3552
    %v3554 = vpop.f32.mrf.mxu0
    %v3555 = vpop.f32.mrf.mxu0
    %3556 = vdwg.mxu0
    %3557 = vmatprep.subr.bf16.mxu0 %v2071
    %3558 = vmatpush1.bf16.xpose.msra.mxu0 %v2070
    %3559 = vmatprep.subr.bf16.mxu0 %v2067
    %3560 = vmatpush1.bf16.xpose.msra.mxu0 %v2066
    %3561 = vmatprep.subr.bf16.mxu0 %v2063
    %3562 = vmatpush1.bf16.xpose.msra.mxu0 %v2062
    %3563 = vmatprep.subr.bf16.mxu0 %v2059
    %3564 = vmatpush1.bf16.xpose.msra.mxu0 %v2058
    %3565 = vmatprep.subr.bf16.mxu0 %v2055
    %3566 = vmatpush1.bf16.xpose.msra.mxu0 %v2054
    %3567 = vmatprep.subr.bf16.mxu0 %v2051
    %3568 = vmatpush1.bf16.xpose.msra.mxu0 %v2050
    %3569 = vmatprep.subr.bf16.mxu0 %v2047
    %3570 = vmatpush1.bf16.xpose.msra.mxu0 %v2046
    %3571 = vmatprep.subr.bf16.mxu0 %v2043
    %3572 = vmatpush1.bf16.xpose.msra.mxu0 %v2042
    %3573 = vmatprep.subr.bf16.mxu0 %v2103
    %3574 = vmatpush2.bf16.xpose.msra.mxu0 %v2102
    %3575 = vmatprep.subr.bf16.mxu0 %v2099
    %3576 = vmatpush2.bf16.xpose.msra.mxu0 %v2098
    %3577 = vmatprep.subr.bf16.mxu0 %v2095
    %3578 = vmatpush2.bf16.xpose.msra.mxu0 %v2094
    %3579 = vmatprep.subr.bf16.mxu0 %v2091
    %3580 = vmatpush2.bf16.xpose.msra.mxu0 %v2090
    %3581 = vmatprep.subr.bf16.mxu0 %v2087
    %3582 = vmatpush2.bf16.xpose.msra.mxu0 %v2086
    %3583 = vmatprep.subr.bf16.mxu0 %v2083
    %3584 = vmatpush2.bf16.xpose.msra.mxu0 %v2082
    %3585 = vmatprep.subr.bf16.mxu0 %v2079
    %3586 = vmatpush2.bf16.xpose.msra.mxu0 %v2078
    %3587 = vmatprep.subr.bf16.mxu0 %v2075
    %3588 = vmatpush2.bf16.xpose.msra.mxu0 %v2074
    %3589 = vmatprep.mubr.bf16.mxu0 %v3187
    %3590 = vmatmul.mubr.bf16.gmra.mxu0 %v3186
    %v3591 = vpop.f32.mrf.mxu0
    %v3592 = vadd.f32 %v3551, %v3591
    %v3593 = vpop.f32.mrf.mxu0
    %v3594 = vadd.f32 %v3553, %v3593
    %v3595 = vpop.f32.mrf.mxu0
    %v3596 = vpop.f32.mrf.mxu0
    %3597 = vdwg.mxu0
    %3598 = vmatprep.subr.bf16.mxu0 %v2133
    %3599 = vmatpush1.bf16.xpose.msra.mxu0 %v2132
    %3600 = vmatprep.subr.bf16.mxu0 %v2129
    %3601 = vmatpush1.bf16.xpose.msra.mxu0 %v2128
    %3602 = vmatprep.subr.bf16.mxu0 %v2125
    %3603 = vmatpush1.bf16.xpose.msra.mxu0 %v2124
    %3604 = vmatprep.subr.bf16.mxu0 %v2121
    %3605 = vmatpush1.bf16.xpose.msra.mxu0 %v2120
    %3606 = vmatprep.subr.bf16.mxu0 %v2117
    %3607 = vmatpush1.bf16.xpose.msra.mxu0 %v2116
    %3608 = vmatprep.subr.bf16.mxu0 %v2113
    %3609 = vmatpush1.bf16.xpose.msra.mxu0 %v2112
    %3610 = vmatprep.subr.bf16.mxu0 %v2109
    %3611 = vmatpush1.bf16.xpose.msra.mxu0 %v2108
    %3612 = vmatprep.subr.bf16.mxu0 %v2105
    %3613 = vmatpush1.bf16.xpose.msra.mxu0 %v2104
    %3614 = vmatprep.subr.bf16.mxu0 %v2165
    %3615 = vmatpush2.bf16.xpose.msra.mxu0 %v2164
    %3616 = vmatprep.subr.bf16.mxu0 %v2161
    %3617 = vmatpush2.bf16.xpose.msra.mxu0 %v2160
    %3618 = vmatprep.subr.bf16.mxu0 %v2157
    %3619 = vmatpush2.bf16.xpose.msra.mxu0 %v2156
    %3620 = vmatprep.subr.bf16.mxu0 %v2153
    %3621 = vmatpush2.bf16.xpose.msra.mxu0 %v2152
    %3622 = vmatprep.subr.bf16.mxu0 %v2149
    %3623 = vmatpush2.bf16.xpose.msra.mxu0 %v2148
    %3624 = vmatprep.subr.bf16.mxu0 %v2145
    %3625 = vmatpush2.bf16.xpose.msra.mxu0 %v2144
    %3626 = vmatprep.subr.bf16.mxu0 %v2141
    %3627 = vmatpush2.bf16.xpose.msra.mxu0 %v2140
    %3628 = vmatprep.subr.bf16.mxu0 %v2137
    %3629 = vmatpush2.bf16.xpose.msra.mxu0 %v2136
    %3630 = vmatprep.mubr.bf16.mxu0 %v3185
    %3631 = vmatmul.mubr.bf16.gmra.mxu0 %v3184
    %v3632 = vpop.f32.mrf.mxu0
    %v3633 = vadd.f32 0.0, %v3632
    %v3634 = vpop.f32.mrf.mxu0
    %v3635 = vadd.f32 0.0, %v3634
    %v3636 = vpop.f32.mrf.mxu0
    %v3637 = vpop.f32.mrf.mxu0
    %3638 = vdwg.mxu0
    %3639 = vmatprep.subr.bf16.mxu0 %v2135
    %3640 = vmatpush1.bf16.xpose.msra.mxu0 %v2134
    %3641 = vmatprep.subr.bf16.mxu0 %v2131
    %3642 = vmatpush1.bf16.xpose.msra.mxu0 %v2130
    %3643 = vmatprep.subr.bf16.mxu0 %v2127
    %3644 = vmatpush1.bf16.xpose.msra.mxu0 %v2126
    %3645 = vmatprep.subr.bf16.mxu0 %v2123
    %3646 = vmatpush1.bf16.xpose.msra.mxu0 %v2122
    %3647 = vmatprep.subr.bf16.mxu0 %v2119
    %3648 = vmatpush1.bf16.xpose.msra.mxu0 %v2118
    %3649 = vmatprep.subr.bf16.mxu0 %v2115
    %3650 = vmatpush1.bf16.xpose.msra.mxu0 %v2114
    %3651 = vmatprep.subr.bf16.mxu0 %v2111
    %3652 = vmatpush1.bf16.xpose.msra.mxu0 %v2110
    %3653 = vmatprep.subr.bf16.mxu0 %v2107
    %3654 = vmatpush1.bf16.xpose.msra.mxu0 %v2106
    %3655 = vmatprep.subr.bf16.mxu0 %v2167
    %3656 = vmatpush2.bf16.xpose.msra.mxu0 %v2166
    %3657 = vmatprep.subr.bf16.mxu0 %v2163
    %3658 = vmatpush2.bf16.xpose.msra.mxu0 %v2162
    %3659 = vmatprep.subr.bf16.mxu0 %v2159
    %3660 = vmatpush2.bf16.xpose.msra.mxu0 %v2158
    %3661 = vmatprep.subr.bf16.mxu0 %v2155
    %3662 = vmatpush2.bf16.xpose.msra.mxu0 %v2154
    %3663 = vmatprep.subr.bf16.mxu0 %v2151
    %3664 = vmatpush2.bf16.xpose.msra.mxu0 %v2150
    %3665 = vmatprep.subr.bf16.mxu0 %v2147
    %3666 = vmatpush2.bf16.xpose.msra.mxu0 %v2146
    %3667 = vmatprep.subr.bf16.mxu0 %v2143
    %3668 = vmatpush2.bf16.xpose.msra.mxu0 %v2142
    %3669 = vmatprep.subr.bf16.mxu0 %v2139
    %3670 = vmatpush2.bf16.xpose.msra.mxu0 %v2138
    %3671 = vmatprep.mubr.bf16.mxu0 %v3187
    %3672 = vmatmul.mubr.bf16.gmra.mxu0 %v3186
    %v3673 = vpop.f32.mrf.mxu0
    %v3674 = vadd.f32 %v3633, %v3673
    %v3675 = vpop.f32.mrf.mxu0
    %v3676 = vadd.f32 %v3635, %v3675
    %v3677 = vpop.f32.mrf.mxu0
    %v3678 = vpop.f32.mrf.mxu0
    %3679 = vdwg.mxu0
    %v3680 = vadd.f32 %v3172, %v3264
    %v3681 = vadd.f32 %v3173, %v3266
    %v3682 = vadd.f32 %v3174, %v3346
    %v3683 = vadd.f32 %v3175, %v3348
    %v3684 = vxor.u32 %v3680, 2147483648
    %v3685 = vxor.u32 %v3681, 2147483648
    %v3686 = vxor.u32 %v3682, 2147483648
    %v3687 = vxor.u32 %v3683, 2147483648
    %v3688 = vmul.f32 %v3684, 1.442695
    %v3689 = vpow.pop %v3688
    %v3690 = vmul.f32 %v3685, 1.442695
    %v3691 = vpow.pop %v3690
    %v3692 = vmul.f32 %v3686, 1.442695
    %v3693 = vpow.pop %v3692
    %v3694 = vmul.f32 %v3687, 1.442695
    %v3695 = vpow.pop %v3694
    %v3696 = vadd.f32 %v3689, 1.0
    %v3697 = vadd.f32 %v3691, 1.0
    %v3698 = vadd.f32 %v3693, 1.0
    %v3699 = vadd.f32 %v3695, 1.0
    %v3700 = vrcp.pop %v3696
    %v3701 = vmul.f32 1.0, %v3700
    %v3702 = vrcp.pop %v3697
    %v3703 = vmul.f32 1.0, %v3702
    %v3704 = vrcp.pop %v3698
    %v3705 = vmul.f32 1.0, %v3704
    %v3706 = vrcp.pop %v3699
    %v3707 = vmul.f32 1.0, %v3706
    %v3708 = vadd.f32 %v3176, %v3428
    %v3709 = vadd.f32 %v3177, %v3430
    %v3710 = vadd.f32 %v3178, %v3510
    %v3711 = vadd.f32 %v3179, %v3512
    %v3712 = vxor.u32 %v3708, 2147483648
    %v3713 = vxor.u32 %v3709, 2147483648
    %v3714 = vxor.u32 %v3710, 2147483648
    %v3715 = vxor.u32 %v3711, 2147483648
    %v3716 = vmul.f32 %v3712, 1.442695
    %v3717 = vpow.pop %v3716
    %v3718 = vmul.f32 %v3713, 1.442695
    %v3719 = vpow.pop %v3718
    %v3720 = vmul.f32 %v3714, 1.442695
    %v3721 = vpow.pop %v3720
    %v3722 = vmul.f32 %v3715, 1.442695
    %v3723 = vpow.pop %v3722
    %v3724 = vadd.f32 %v3717, 1.0
    %v3725 = vadd.f32 %v3719, 1.0
    %v3726 = vadd.f32 %v3721, 1.0
    %v3727 = vadd.f32 %v3723, 1.0
    %v3728 = vrcp.pop %v3724
    %v3729 = vmul.f32 1.0, %v3728
    %v3730 = vrcp.pop %v3725
    %v3731 = vmul.f32 1.0, %v3730
    %v3732 = vrcp.pop %v3726
    %v3733 = vmul.f32 1.0, %v3732
    %v3734 = vrcp.pop %v3727
    %v3735 = vmul.f32 1.0, %v3734
    %v3736 = vadd.f32 %v3592, %v3104
    %v3737 = vadd.f32 %v3594, %v3108
    %v3738 = vadd.f32 %v3674, %v3112
    %v3739 = vadd.f32 %v3676, %v3116
    %v3740 = vmul.f32 %v3701, %v3736
    %v3741 = vmul.f32 %v3703, %v3737
    %v3742 = vmul.f32 %v3705, %v3738
    %v3743 = vmul.f32 %v3707, %v3739
    %v3744 = vadd.f32 %v3180, %v3740
    %v3745 = vadd.f32 %v3181, %v3741
    %v3746 = vadd.f32 %v3182, %v3742
    %v3747 = vadd.f32 %v3183, %v3743
    %v3748 = vtanh.pop %v3744
    %v3749 = vtanh.pop %v3745
    %v3750 = vtanh.pop %v3746
    %v3751 = vtanh.pop %v3747
    %v3752 = vsub.f32 1.0, %v3729
    %v3753 = vsub.f32 1.0, %v3731
    %v3754 = vsub.f32 1.0, %v3733
    %v3755 = vsub.f32 1.0, %v3735
    %v3756 = vmul.f32 %v3752, %v3748
    %v3757 = vmul.f32 %v3753, %v3749
    %v3758 = vmul.f32 %v3754, %v3750
    %v3759 = vmul.f32 %v3755, %v3751
    %v3760 = vmul.f32 %v3729, %v3149
    %v3761 = vmul.f32 %v3731, %v3150
    %v3762 = vmul.f32 %v3733, %v3151
    %v3763 = vmul.f32 %v3735, %v3152
    %v3764 = vadd.f32 %v3756, %v3760
    %v3765 = vadd.f32 %v3757, %v3761
    %v3766 = vadd.f32 %v3758, %v3762
    %v3767 = vadd.f32 %v3759, %v3763
    %s3768 = scalar_lea.vmem %s0, 16
    %v3769 = vld [vmem:[%s3768] sm:$0xff]
    %3771 = vset.pattern.permute.xlu0 0
    %3772 = vperm.xlu0 %3771, %v3769
    %v3773 = vpop.permute.xlu0 %3772
    %v3775 = vmul.f32 %v3773, %v489
    %v3776 = vmul.f32 %v3773, %v493
    %v3777 = vmul.f32 %v3773, %v497
    %v3778 = vmul.f32 %v3773, %v501
    %v3779 = vmul.f32 %v3773, %v505
    %v3780 = vmul.f32 %v3773, %v509
    %v3781 = vmul.f32 %v3773, %v513
    %v3782 = vmul.f32 %v3773, %v517
    %v3783 = vmul.f32 %v3773, %v521
    %v3784 = vmul.f32 %v3773, %v525
    %v3785 = vmul.f32 %v3773, %v529
    %v3786 = vmul.f32 %v3773, %v533
    %v3787 = vadd.f32 %v3775, %v563
    %v3788 = vadd.f32 %v3776, %v567
    %v3789 = vadd.f32 %v3777, %v571
    %v3790 = vadd.f32 %v3778, %v575
    %v3791 = vadd.f32 %v3779, %v579
    %v3792 = vadd.f32 %v3780, %v583
    %v3793 = vadd.f32 %v3781, %v587
    %v3794 = vadd.f32 %v3782, %v591
    %v3795 = vadd.f32 %v3783, %v595
    %v3796 = vadd.f32 %v3784, %v599
    %v3797 = vadd.f32 %v3785, %v603
    %v3798 = vadd.f32 %v3786, %v607
    %v3799 = vpack.c.bf16 %v3764, %v3764
    %v3800 = vpack.c.bf16 %v3765, %v3765
    %v3801 = vpack.c.bf16 %v3766, %v3766
    %v3802 = vpack.c.bf16 %v3767, %v3767
    %3803 = vmatprep.subr.bf16.mxu0 %v1813
    %3804 = vmatpush1.bf16.xpose.msra.mxu0 %v1812
    %3805 = vmatprep.subr.bf16.mxu0 %v1809
    %3806 = vmatpush1.bf16.xpose.msra.mxu0 %v1808
    %3807 = vmatprep.subr.bf16.mxu0 %v1805
    %3808 = vmatpush1.bf16.xpose.msra.mxu0 %v1804
    %3809 = vmatprep.subr.bf16.mxu0 %v1801
    %3810 = vmatpush1.bf16.xpose.msra.mxu0 %v1800
    %3811 = vmatprep.subr.bf16.mxu0 %v1797
    %3812 = vmatpush1.bf16.xpose.msra.mxu0 %v1796
    %3813 = vmatprep.subr.bf16.mxu0 %v1793
    %3814 = vmatpush1.bf16.xpose.msra.mxu0 %v1792
    %3815 = vmatprep.subr.bf16.mxu0 %v1789
    %3816 = vmatpush1.bf16.xpose.msra.mxu0 %v1788
    %3817 = vmatprep.subr.bf16.mxu0 %v1785
    %3818 = vmatpush1.bf16.xpose.msra.mxu0 %v1784
    %3819 = vmatprep.subr.bf16.mxu0 %v1845
    %3820 = vmatpush2.bf16.xpose.msra.mxu0 %v1844
    %3821 = vmatprep.subr.bf16.mxu0 %v1841
    %3822 = vmatpush2.bf16.xpose.msra.mxu0 %v1840
    %3823 = vmatprep.subr.bf16.mxu0 %v1837
    %3824 = vmatpush2.bf16.xpose.msra.mxu0 %v1836
    %3825 = vmatprep.subr.bf16.mxu0 %v1833
    %3826 = vmatpush2.bf16.xpose.msra.mxu0 %v1832
    %3827 = vmatprep.subr.bf16.mxu0 %v1829
    %3828 = vmatpush2.bf16.xpose.msra.mxu0 %v1828
    %3829 = vmatprep.subr.bf16.mxu0 %v1825
    %3830 = vmatpush2.bf16.xpose.msra.mxu0 %v1824
    %3831 = vmatprep.subr.bf16.mxu0 %v1821
    %3832 = vmatpush2.bf16.xpose.msra.mxu0 %v1820
    %3833 = vmatprep.subr.bf16.mxu0 %v1817
    %3834 = vmatpush2.bf16.xpose.msra.mxu0 %v1816
    %3835 = vmatprep.mubr.bf16.mxu0 %v3800
    %3836 = vmatmul.mubr.bf16.gmra.mxu0 %v3799
    %v3837 = vpop.f32.mrf.mxu0
    %v3838 = vadd.f32 0.0, %v3837
    %v3839 = vpop.f32.mrf.mxu0
    %v3840 = vadd.f32 0.0, %v3839
    %v3841 = vpop.f32.mrf.mxu0
    %v3842 = vpop.f32.mrf.mxu0
    %3843 = vdwg.mxu0
    %3844 = vmatprep.subr.bf16.mxu0 %v1815
    %3845 = vmatpush1.bf16.xpose.msra.mxu0 %v1814
    %3846 = vmatprep.subr.bf16.mxu0 %v1811
    %3847 = vmatpush1.bf16.xpose.msra.mxu0 %v1810
    %3848 = vmatprep.subr.bf16.mxu0 %v1807
    %3849 = vmatpush1.bf16.xpose.msra.mxu0 %v1806
    %3850 = vmatprep.subr.bf16.mxu0 %v1803
    %3851 = vmatpush1.bf16.xpose.msra.mxu0 %v1802
    %3852 = vmatprep.subr.bf16.mxu0 %v1799
    %3853 = vmatpush1.bf16.xpose.msra.mxu0 %v1798
    %3854 = vmatprep.subr.bf16.mxu0 %v1795
    %3855 = vmatpush1.bf16.xpose.msra.mxu0 %v1794
    %3856 = vmatprep.subr.bf16.mxu0 %v1791
    %3857 = vmatpush1.bf16.xpose.msra.mxu0 %v1790
    %3858 = vmatprep.subr.bf16.mxu0 %v1787
    %3859 = vmatpush1.bf16.xpose.msra.mxu0 %v1786
    %3860 = vmatprep.subr.bf16.mxu0 %v1847
    %3861 = vmatpush2.bf16.xpose.msra.mxu0 %v1846
    %3862 = vmatprep.subr.bf16.mxu0 %v1843
    %3863 = vmatpush2.bf16.xpose.msra.mxu0 %v1842
    %3864 = vmatprep.subr.bf16.mxu0 %v1839
    %3865 = vmatpush2.bf16.xpose.msra.mxu0 %v1838
    %3866 = vmatprep.subr.bf16.mxu0 %v1835
    %3867 = vmatpush2.bf16.xpose.msra.mxu0 %v1834
    %3868 = vmatprep.subr.bf16.mxu0 %v1831
    %3869 = vmatpush2.bf16.xpose.msra.mxu0 %v1830
    %3870 = vmatprep.subr.bf16.mxu0 %v1827
    %3871 = vmatpush2.bf16.xpose.msra.mxu0 %v1826
    %3872 = vmatprep.subr.bf16.mxu0 %v1823
    %3873 = vmatpush2.bf16.xpose.msra.mxu0 %v1822
    %3874 = vmatprep.subr.bf16.mxu0 %v1819
    %3875 = vmatpush2.bf16.xpose.msra.mxu0 %v1818
    %3876 = vmatprep.mubr.bf16.mxu0 %v3802
    %3877 = vmatmul.mubr.bf16.gmra.mxu0 %v3801
    %v3878 = vpop.f32.mrf.mxu0
    %v3879 = vadd.f32 %v3838, %v3878
    %v3880 = vpop.f32.mrf.mxu0
    %v3881 = vadd.f32 %v3840, %v3880
    %v3882 = vpop.f32.mrf.mxu0
    %v3883 = vpop.f32.mrf.mxu0
    %3884 = vdwg.mxu0
    %3885 = vmatprep.subr.bf16.mxu0 %v1877
    %3886 = vmatpush1.bf16.xpose.msra.mxu0 %v1876
    %3887 = vmatprep.subr.bf16.mxu0 %v1873
    %3888 = vmatpush1.bf16.xpose.msra.mxu0 %v1872
    %3889 = vmatprep.subr.bf16.mxu0 %v1869
    %3890 = vmatpush1.bf16.xpose.msra.mxu0 %v1868
    %3891 = vmatprep.subr.bf16.mxu0 %v1865
    %3892 = vmatpush1.bf16.xpose.msra.mxu0 %v1864
    %3893 = vmatprep.subr.bf16.mxu0 %v1861
    %3894 = vmatpush1.bf16.xpose.msra.mxu0 %v1860
    %3895 = vmatprep.subr.bf16.mxu0 %v1857
    %3896 = vmatpush1.bf16.xpose.msra.mxu0 %v1856
    %3897 = vmatprep.subr.bf16.mxu0 %v1853
    %3898 = vmatpush1.bf16.xpose.msra.mxu0 %v1852
    %3899 = vmatprep.subr.bf16.mxu0 %v1849
    %3900 = vmatpush1.bf16.xpose.msra.mxu0 %v1848
    %3901 = vmatprep.subr.bf16.mxu0 %v1909
    %3902 = vmatpush2.bf16.xpose.msra.mxu0 %v1908
    %3903 = vmatprep.subr.bf16.mxu0 %v1905
    %3904 = vmatpush2.bf16.xpose.msra.mxu0 %v1904
    %3905 = vmatprep.subr.bf16.mxu0 %v1901
    %3906 = vmatpush2.bf16.xpose.msra.mxu0 %v1900
    %3907 = vmatprep.subr.bf16.mxu0 %v1897
    %3908 = vmatpush2.bf16.xpose.msra.mxu0 %v1896
    %3909 = vmatprep.subr.bf16.mxu0 %v1893
    %3910 = vmatpush2.bf16.xpose.msra.mxu0 %v1892
    %3911 = vmatprep.subr.bf16.mxu0 %v1889
    %3912 = vmatpush2.bf16.xpose.msra.mxu0 %v1888
    %3913 = vmatprep.subr.bf16.mxu0 %v1885
    %3914 = vmatpush2.bf16.xpose.msra.mxu0 %v1884
    %3915 = vmatprep.subr.bf16.mxu0 %v1881
    %3916 = vmatpush2.bf16.xpose.msra.mxu0 %v1880
    %3917 = vmatprep.mubr.bf16.mxu0 %v3800
    %3918 = vmatmul.mubr.bf16.gmra.mxu0 %v3799
    %v3919 = vpop.f32.mrf.mxu0
    %v3920 = vadd.f32 0.0, %v3919
    %v3921 = vpop.f32.mrf.mxu0
    %v3922 = vadd.f32 0.0, %v3921
    %v3923 = vpop.f32.mrf.mxu0
    %v3924 = vpop.f32.mrf.mxu0
    %3925 = vdwg.mxu0
    %3926 = vmatprep.subr.bf16.mxu0 %v1879
    %3927 = vmatpush1.bf16.xpose.msra.mxu0 %v1878
    %3928 = vmatprep.subr.bf16.mxu0 %v1875
    %3929 = vmatpush1.bf16.xpose.msra.mxu0 %v1874
    %3930 = vmatprep.subr.bf16.mxu0 %v1871
    %3931 = vmatpush1.bf16.xpose.msra.mxu0 %v1870
    %3932 = vmatprep.subr.bf16.mxu0 %v1867
    %3933 = vmatpush1.bf16.xpose.msra.mxu0 %v1866
    %3934 = vmatprep.subr.bf16.mxu0 %v1863
    %3935 = vmatpush1.bf16.xpose.msra.mxu0 %v1862
    %3936 = vmatprep.subr.bf16.mxu0 %v1859
    %3937 = vmatpush1.bf16.xpose.msra.mxu0 %v1858
    %3938 = vmatprep.subr.bf16.mxu0 %v1855
    %3939 = vmatpush1.bf16.xpose.msra.mxu0 %v1854
    %3940 = vmatprep.subr.bf16.mxu0 %v1851
    %3941 = vmatpush1.bf16.xpose.msra.mxu0 %v1850
    %3942 = vmatprep.subr.bf16.mxu0 %v1911
    %3943 = vmatpush2.bf16.xpose.msra.mxu0 %v1910
    %3944 = vmatprep.subr.bf16.mxu0 %v1907
    %3945 = vmatpush2.bf16.xpose.msra.mxu0 %v1906
    %3946 = vmatprep.subr.bf16.mxu0 %v1903
    %3947 = vmatpush2.bf16.xpose.msra.mxu0 %v1902
    %3948 = vmatprep.subr.bf16.mxu0 %v1899
    %3949 = vmatpush2.bf16.xpose.msra.mxu0 %v1898
    %3950 = vmatprep.subr.bf16.mxu0 %v1895
    %3951 = vmatpush2.bf16.xpose.msra.mxu0 %v1894
    %3952 = vmatprep.subr.bf16.mxu0 %v1891
    %3953 = vmatpush2.bf16.xpose.msra.mxu0 %v1890
    %3954 = vmatprep.subr.bf16.mxu0 %v1887
    %3955 = vmatpush2.bf16.xpose.msra.mxu0 %v1886
    %3956 = vmatprep.subr.bf16.mxu0 %v1883
    %3957 = vmatpush2.bf16.xpose.msra.mxu0 %v1882
    %3958 = vmatprep.mubr.bf16.mxu0 %v3802
    %3959 = vmatmul.mubr.bf16.gmra.mxu0 %v3801
    %v3960 = vpop.f32.mrf.mxu0
    %v3961 = vadd.f32 %v3920, %v3960
    %v3962 = vpop.f32.mrf.mxu0
    %v3963 = vadd.f32 %v3922, %v3962
    %v3964 = vpop.f32.mrf.mxu0
    %v3965 = vpop.f32.mrf.mxu0
    %3966 = vdwg.mxu0
    %3967 = vmatprep.subr.bf16.mxu0 %v1941
    %3968 = vmatpush1.bf16.xpose.msra.mxu0 %v1940
    %3969 = vmatprep.subr.bf16.mxu0 %v1937
    %3970 = vmatpush1.bf16.xpose.msra.mxu0 %v1936
    %3971 = vmatprep.subr.bf16.mxu0 %v1933
    %3972 = vmatpush1.bf16.xpose.msra.mxu0 %v1932
    %3973 = vmatprep.subr.bf16.mxu0 %v1929
    %3974 = vmatpush1.bf16.xpose.msra.mxu0 %v1928
    %3975 = vmatprep.subr.bf16.mxu0 %v1925
    %3976 = vmatpush1.bf16.xpose.msra.mxu0 %v1924
    %3977 = vmatprep.subr.bf16.mxu0 %v1921
    %3978 = vmatpush1.bf16.xpose.msra.mxu0 %v1920
    %3979 = vmatprep.subr.bf16.mxu0 %v1917
    %3980 = vmatpush1.bf16.xpose.msra.mxu0 %v1916
    %3981 = vmatprep.subr.bf16.mxu0 %v1913
    %3982 = vmatpush1.bf16.xpose.msra.mxu0 %v1912
    %3983 = vmatprep.subr.bf16.mxu0 %v1973
    %3984 = vmatpush2.bf16.xpose.msra.mxu0 %v1972
    %3985 = vmatprep.subr.bf16.mxu0 %v1969
    %3986 = vmatpush2.bf16.xpose.msra.mxu0 %v1968
    %3987 = vmatprep.subr.bf16.mxu0 %v1965
    %3988 = vmatpush2.bf16.xpose.msra.mxu0 %v1964
    %3989 = vmatprep.subr.bf16.mxu0 %v1961
    %3990 = vmatpush2.bf16.xpose.msra.mxu0 %v1960
    %3991 = vmatprep.subr.bf16.mxu0 %v1957
    %3992 = vmatpush2.bf16.xpose.msra.mxu0 %v1956
    %3993 = vmatprep.subr.bf16.mxu0 %v1953
    %3994 = vmatpush2.bf16.xpose.msra.mxu0 %v1952
    %3995 = vmatprep.subr.bf16.mxu0 %v1949
    %3996 = vmatpush2.bf16.xpose.msra.mxu0 %v1948
    %3997 = vmatprep.subr.bf16.mxu0 %v1945
    %3998 = vmatpush2.bf16.xpose.msra.mxu0 %v1944
    %3999 = vmatprep.mubr.bf16.mxu0 %v3800
    %4000 = vmatmul.mubr.bf16.gmra.mxu0 %v3799
    %v4001 = vpop.f32.mrf.mxu0
    %v4002 = vadd.f32 0.0, %v4001
    %v4003 = vpop.f32.mrf.mxu0
    %v4004 = vadd.f32 0.0, %v4003
    %v4005 = vpop.f32.mrf.mxu0
    %v4006 = vpop.f32.mrf.mxu0
    %4007 = vdwg.mxu0
    %4008 = vmatprep.subr.bf16.mxu0 %v1943
    %4009 = vmatpush1.bf16.xpose.msra.mxu0 %v1942
    %4010 = vmatprep.subr.bf16.mxu0 %v1939
    %4011 = vmatpush1.bf16.xpose.msra.mxu0 %v1938
    %4012 = vmatprep.subr.bf16.mxu0 %v1935
    %4013 = vmatpush1.bf16.xpose.msra.mxu0 %v1934
    %4014 = vmatprep.subr.bf16.mxu0 %v1931
    %4015 = vmatpush1.bf16.xpose.msra.mxu0 %v1930
    %4016 = vmatprep.subr.bf16.mxu0 %v1927
    %4017 = vmatpush1.bf16.xpose.msra.mxu0 %v1926
    %4018 = vmatprep.subr.bf16.mxu0 %v1923
    %4019 = vmatpush1.bf16.xpose.msra.mxu0 %v1922
    %4020 = vmatprep.subr.bf16.mxu0 %v1919
    %4021 = vmatpush1.bf16.xpose.msra.mxu0 %v1918
    %4022 = vmatprep.subr.bf16.mxu0 %v1915
    %4023 = vmatpush1.bf16.xpose.msra.mxu0 %v1914
    %4024 = vmatprep.subr.bf16.mxu0 %v1975
    %4025 = vmatpush2.bf16.xpose.msra.mxu0 %v1974
    %4026 = vmatprep.subr.bf16.mxu0 %v1971
    %4027 = vmatpush2.bf16.xpose.msra.mxu0 %v1970
    %4028 = vmatprep.subr.bf16.mxu0 %v1967
    %4029 = vmatpush2.bf16.xpose.msra.mxu0 %v1966
    %4030 = vmatprep.subr.bf16.mxu0 %v1963
    %4031 = vmatpush2.bf16.xpose.msra.mxu0 %v1962
    %4032 = vmatprep.subr.bf16.mxu0 %v1959
    %4033 = vmatpush2.bf16.xpose.msra.mxu0 %v1958
    %4034 = vmatprep.subr.bf16.mxu0 %v1955
    %4035 = vmatpush2.bf16.xpose.msra.mxu0 %v1954
    %4036 = vmatprep.subr.bf16.mxu0 %v1951
    %4037 = vmatpush2.bf16.xpose.msra.mxu0 %v1950
    %4038 = vmatprep.subr.bf16.mxu0 %v1947
    %4039 = vmatpush2.bf16.xpose.msra.mxu0 %v1946
    %4040 = vmatprep.mubr.bf16.mxu0 %v3802
    %4041 = vmatmul.mubr.bf16.gmra.mxu0 %v3801
    %v4042 = vpop.f32.mrf.mxu0
    %v4043 = vadd.f32 %v4002, %v4042
    %v4044 = vpop.f32.mrf.mxu0
    %v4045 = vadd.f32 %v4004, %v4044
    %v4046 = vpop.f32.mrf.mxu0
    %v4047 = vpop.f32.mrf.mxu0
    %4048 = vdwg.mxu0
    %4049 = vmatprep.subr.bf16.mxu0 %v2005
    %4050 = vmatpush1.bf16.xpose.msra.mxu0 %v2004
    %4051 = vmatprep.subr.bf16.mxu0 %v2001
    %4052 = vmatpush1.bf16.xpose.msra.mxu0 %v2000
    %4053 = vmatprep.subr.bf16.mxu0 %v1997
    %4054 = vmatpush1.bf16.xpose.msra.mxu0 %v1996
    %4055 = vmatprep.subr.bf16.mxu0 %v1993
    %4056 = vmatpush1.bf16.xpose.msra.mxu0 %v1992
    %4057 = vmatprep.subr.bf16.mxu0 %v1989
    %4058 = vmatpush1.bf16.xpose.msra.mxu0 %v1988
    %4059 = vmatprep.subr.bf16.mxu0 %v1985
    %4060 = vmatpush1.bf16.xpose.msra.mxu0 %v1984
    %4061 = vmatprep.subr.bf16.mxu0 %v1981
    %4062 = vmatpush1.bf16.xpose.msra.mxu0 %v1980
    %4063 = vmatprep.subr.bf16.mxu0 %v1977
    %4064 = vmatpush1.bf16.xpose.msra.mxu0 %v1976
    %4065 = vmatprep.subr.bf16.mxu0 %v2037
    %4066 = vmatpush2.bf16.xpose.msra.mxu0 %v2036
    %4067 = vmatprep.subr.bf16.mxu0 %v2033
    %4068 = vmatpush2.bf16.xpose.msra.mxu0 %v2032
    %4069 = vmatprep.subr.bf16.mxu0 %v2029
    %4070 = vmatpush2.bf16.xpose.msra.mxu0 %v2028
    %4071 = vmatprep.subr.bf16.mxu0 %v2025
    %4072 = vmatpush2.bf16.xpose.msra.mxu0 %v2024
    %4073 = vmatprep.subr.bf16.mxu0 %v2021
    %4074 = vmatpush2.bf16.xpose.msra.mxu0 %v2020
    %4075 = vmatprep.subr.bf16.mxu0 %v2017
    %4076 = vmatpush2.bf16.xpose.msra.mxu0 %v2016
    %4077 = vmatprep.subr.bf16.mxu0 %v2013
    %4078 = vmatpush2.bf16.xpose.msra.mxu0 %v2012
    %4079 = vmatprep.subr.bf16.mxu0 %v2009
    %4080 = vmatpush2.bf16.xpose.msra.mxu0 %v2008
    %4081 = vmatprep.mubr.bf16.mxu0 %v3800
    %4082 = vmatmul.mubr.bf16.gmra.mxu0 %v3799
    %v4083 = vpop.f32.mrf.mxu0
    %v4084 = vadd.f32 0.0, %v4083
    %v4085 = vpop.f32.mrf.mxu0
    %v4086 = vadd.f32 0.0, %v4085
    %v4087 = vpop.f32.mrf.mxu0
    %v4088 = vpop.f32.mrf.mxu0
    %4089 = vdwg.mxu0
    %4090 = vmatprep.subr.bf16.mxu0 %v2007
    %4091 = vmatpush1.bf16.xpose.msra.mxu0 %v2006
    %4092 = vmatprep.subr.bf16.mxu0 %v2003
    %4093 = vmatpush1.bf16.xpose.msra.mxu0 %v2002
    %4094 = vmatprep.subr.bf16.mxu0 %v1999
    %4095 = vmatpush1.bf16.xpose.msra.mxu0 %v1998
    %4096 = vmatprep.subr.bf16.mxu0 %v1995
    %4097 = vmatpush1.bf16.xpose.msra.mxu0 %v1994
    %4098 = vmatprep.subr.bf16.mxu0 %v1991
    %4099 = vmatpush1.bf16.xpose.msra.mxu0 %v1990
    %4100 = vmatprep.subr.bf16.mxu0 %v1987
    %4101 = vmatpush1.bf16.xpose.msra.mxu0 %v1986
    %4102 = vmatprep.subr.bf16.mxu0 %v1983
    %4103 = vmatpush1.bf16.xpose.msra.mxu0 %v1982
    %4104 = vmatprep.subr.bf16.mxu0 %v1979
    %4105 = vmatpush1.bf16.xpose.msra.mxu0 %v1978
    %4106 = vmatprep.subr.bf16.mxu0 %v2039
    %4107 = vmatpush2.bf16.xpose.msra.mxu0 %v2038
    %4108 = vmatprep.subr.bf16.mxu0 %v2035
    %4109 = vmatpush2.bf16.xpose.msra.mxu0 %v2034
    %4110 = vmatprep.subr.bf16.mxu0 %v2031
    %4111 = vmatpush2.bf16.xpose.msra.mxu0 %v2030
    %4112 = vmatprep.subr.bf16.mxu0 %v2027
    %4113 = vmatpush2.bf16.xpose.msra.mxu0 %v2026
    %4114 = vmatprep.subr.bf16.mxu0 %v2023
    %4115 = vmatpush2.bf16.xpose.msra.mxu0 %v2022
    %4116 = vmatprep.subr.bf16.mxu0 %v2019
    %4117 = vmatpush2.bf16.xpose.msra.mxu0 %v2018
    %4118 = vmatprep.subr.bf16.mxu0 %v2015
    %4119 = vmatpush2.bf16.xpose.msra.mxu0 %v2014
    %4120 = vmatprep.subr.bf16.mxu0 %v2011
    %4121 = vmatpush2.bf16.xpose.msra.mxu0 %v2010
    %4122 = vmatprep.mubr.bf16.mxu0 %v3802
    %4123 = vmatmul.mubr.bf16.gmra.mxu0 %v3801
    %v4124 = vpop.f32.mrf.mxu0
    %v4125 = vadd.f32 %v4084, %v4124
    %v4126 = vpop.f32.mrf.mxu0
    %v4127 = vadd.f32 %v4086, %v4126
    %v4128 = vpop.f32.mrf.mxu0
    %v4129 = vpop.f32.mrf.mxu0
    %4130 = vdwg.mxu0
    %4131 = vmatprep.subr.bf16.mxu0 %v2069
    %4132 = vmatpush1.bf16.xpose.msra.mxu0 %v2068
    %4133 = vmatprep.subr.bf16.mxu0 %v2065
    %4134 = vmatpush1.bf16.xpose.msra.mxu0 %v2064
    %4135 = vmatprep.subr.bf16.mxu0 %v2061
    %4136 = vmatpush1.bf16.xpose.msra.mxu0 %v2060
    %4137 = vmatprep.subr.bf16.mxu0 %v2057
    %4138 = vmatpush1.bf16.xpose.msra.mxu0 %v2056
    %4139 = vmatprep.subr.bf16.mxu0 %v2053
    %4140 = vmatpush1.bf16.xpose.msra.mxu0 %v2052
    %4141 = vmatprep.subr.bf16.mxu0 %v2049
    %4142 = vmatpush1.bf16.xpose.msra.mxu0 %v2048
    %4143 = vmatprep.subr.bf16.mxu0 %v2045
    %4144 = vmatpush1.bf16.xpose.msra.mxu0 %v2044
    %4145 = vmatprep.subr.bf16.mxu0 %v2041
    %4146 = vmatpush1.bf16.xpose.msra.mxu0 %v2040
    %4147 = vmatprep.subr.bf16.mxu0 %v2101
    %4148 = vmatpush2.bf16.xpose.msra.mxu0 %v2100
    %4149 = vmatprep.subr.bf16.mxu0 %v2097
    %4150 = vmatpush2.bf16.xpose.msra.mxu0 %v2096
    %4151 = vmatprep.subr.bf16.mxu0 %v2093
    %4152 = vmatpush2.bf16.xpose.msra.mxu0 %v2092
    %4153 = vmatprep.subr.bf16.mxu0 %v2089
    %4154 = vmatpush2.bf16.xpose.msra.mxu0 %v2088
    %4155 = vmatprep.subr.bf16.mxu0 %v2085
    %4156 = vmatpush2.bf16.xpose.msra.mxu0 %v2084
    %4157 = vmatprep.subr.bf16.mxu0 %v2081
    %4158 = vmatpush2.bf16.xpose.msra.mxu0 %v2080
    %4159 = vmatprep.subr.bf16.mxu0 %v2077
    %4160 = vmatpush2.bf16.xpose.msra.mxu0 %v2076
    %4161 = vmatprep.subr.bf16.mxu0 %v2073
    %4162 = vmatpush2.bf16.xpose.msra.mxu0 %v2072
    %4163 = vmatprep.mubr.bf16.mxu0 %v3800
    %4164 = vmatmul.mubr.bf16.gmra.mxu0 %v3799
    %v4165 = vpop.f32.mrf.mxu0
    %v4166 = vadd.f32 0.0, %v4165
    %v4167 = vpop.f32.mrf.mxu0
    %v4168 = vadd.f32 0.0, %v4167
    %v4169 = vpop.f32.mrf.mxu0
    %v4170 = vpop.f32.mrf.mxu0
    %4171 = vdwg.mxu0
    %4172 = vmatprep.subr.bf16.mxu0 %v2071
    %4173 = vmatpush1.bf16.xpose.msra.mxu0 %v2070
    %4174 = vmatprep.subr.bf16.mxu0 %v2067
    %4175 = vmatpush1.bf16.xpose.msra.mxu0 %v2066
    %4176 = vmatprep.subr.bf16.mxu0 %v2063
    %4177 = vmatpush1.bf16.xpose.msra.mxu0 %v2062
    %4178 = vmatprep.subr.bf16.mxu0 %v2059
    %4179 = vmatpush1.bf16.xpose.msra.mxu0 %v2058
    %4180 = vmatprep.subr.bf16.mxu0 %v2055
    %4181 = vmatpush1.bf16.xpose.msra.mxu0 %v2054
    %4182 = vmatprep.subr.bf16.mxu0 %v2051
    %4183 = vmatpush1.bf16.xpose.msra.mxu0 %v2050
    %4184 = vmatprep.subr.bf16.mxu0 %v2047
    %4185 = vmatpush1.bf16.xpose.msra.mxu0 %v2046
    %4186 = vmatprep.subr.bf16.mxu0 %v2043
    %4187 = vmatpush1.bf16.xpose.msra.mxu0 %v2042
    %4188 = vmatprep.subr.bf16.mxu0 %v2103
    %4189 = vmatpush2.bf16.xpose.msra.mxu0 %v2102
    %4190 = vmatprep.subr.bf16.mxu0 %v2099
    %4191 = vmatpush2.bf16.xpose.msra.mxu0 %v2098
    %4192 = vmatprep.subr.bf16.mxu0 %v2095
    %4193 = vmatpush2.bf16.xpose.msra.mxu0 %v2094
    %4194 = vmatprep.subr.bf16.mxu0 %v2091
    %4195 = vmatpush2.bf16.xpose.msra.mxu0 %v2090
    %4196 = vmatprep.subr.bf16.mxu0 %v2087
    %4197 = vmatpush2.bf16.xpose.msra.mxu0 %v2086
    %4198 = vmatprep.subr.bf16.mxu0 %v2083
    %4199 = vmatpush2.bf16.xpose.msra.mxu0 %v2082
    %4200 = vmatprep.subr.bf16.mxu0 %v2079
    %4201 = vmatpush2.bf16.xpose.msra.mxu0 %v2078
    %4202 = vmatprep.subr.bf16.mxu0 %v2075
    %4203 = vmatpush2.bf16.xpose.msra.mxu0 %v2074
    %4204 = vmatprep.mubr.bf16.mxu0 %v3802
    %4205 = vmatmul.mubr.bf16.gmra.mxu0 %v3801
    %v4206 = vpop.f32.mrf.mxu0
    %v4207 = vadd.f32 %v4166, %v4206
    %v4208 = vpop.f32.mrf.mxu0
    %v4209 = vadd.f32 %v4168, %v4208
    %v4210 = vpop.f32.mrf.mxu0
    %v4211 = vpop.f32.mrf.mxu0
    %4212 = vdwg.mxu0
    %4213 = vmatprep.subr.bf16.mxu0 %v2133
    %4214 = vmatpush1.bf16.xpose.msra.mxu0 %v2132
    %4215 = vmatprep.subr.bf16.mxu0 %v2129
    %4216 = vmatpush1.bf16.xpose.msra.mxu0 %v2128
    %4217 = vmatprep.subr.bf16.mxu0 %v2125
    %4218 = vmatpush1.bf16.xpose.msra.mxu0 %v2124
    %4219 = vmatprep.subr.bf16.mxu0 %v2121
    %4220 = vmatpush1.bf16.xpose.msra.mxu0 %v2120
    %4221 = vmatprep.subr.bf16.mxu0 %v2117
    %4222 = vmatpush1.bf16.xpose.msra.mxu0 %v2116
    %4223 = vmatprep.subr.bf16.mxu0 %v2113
    %4224 = vmatpush1.bf16.xpose.msra.mxu0 %v2112
    %4225 = vmatprep.subr.bf16.mxu0 %v2109
    %4226 = vmatpush1.bf16.xpose.msra.mxu0 %v2108
    %4227 = vmatprep.subr.bf16.mxu0 %v2105
    %4228 = vmatpush1.bf16.xpose.msra.mxu0 %v2104
    %4229 = vmatprep.subr.bf16.mxu0 %v2165
    %4230 = vmatpush2.bf16.xpose.msra.mxu0 %v2164
    %4231 = vmatprep.subr.bf16.mxu0 %v2161
    %4232 = vmatpush2.bf16.xpose.msra.mxu0 %v2160
    %4233 = vmatprep.subr.bf16.mxu0 %v2157
    %4234 = vmatpush2.bf16.xpose.msra.mxu0 %v2156
    %4235 = vmatprep.subr.bf16.mxu0 %v2153
    %4236 = vmatpush2.bf16.xpose.msra.mxu0 %v2152
    %4237 = vmatprep.subr.bf16.mxu0 %v2149
    %4238 = vmatpush2.bf16.xpose.msra.mxu0 %v2148
    %4239 = vmatprep.subr.bf16.mxu0 %v2145
    %4240 = vmatpush2.bf16.xpose.msra.mxu0 %v2144
    %4241 = vmatprep.subr.bf16.mxu0 %v2141
    %4242 = vmatpush2.bf16.xpose.msra.mxu0 %v2140
    %4243 = vmatprep.subr.bf16.mxu0 %v2137
    %4244 = vmatpush2.bf16.xpose.msra.mxu0 %v2136
    %4245 = vmatprep.mubr.bf16.mxu0 %v3800
    %4246 = vmatmul.mubr.bf16.gmra.mxu0 %v3799
    %v4247 = vpop.f32.mrf.mxu0
    %v4248 = vadd.f32 0.0, %v4247
    %v4249 = vpop.f32.mrf.mxu0
    %v4250 = vadd.f32 0.0, %v4249
    %v4251 = vpop.f32.mrf.mxu0
    %v4252 = vpop.f32.mrf.mxu0
    %4253 = vdwg.mxu0
    %4254 = vmatprep.subr.bf16.mxu0 %v2135
    %4255 = vmatpush1.bf16.xpose.msra.mxu0 %v2134
    %4256 = vmatprep.subr.bf16.mxu0 %v2131
    %4257 = vmatpush1.bf16.xpose.msra.mxu0 %v2130
    %4258 = vmatprep.subr.bf16.mxu0 %v2127
    %4259 = vmatpush1.bf16.xpose.msra.mxu0 %v2126
    %4260 = vmatprep.subr.bf16.mxu0 %v2123
    %4261 = vmatpush1.bf16.xpose.msra.mxu0 %v2122
    %4262 = vmatprep.subr.bf16.mxu0 %v2119
    %4263 = vmatpush1.bf16.xpose.msra.mxu0 %v2118
    %4264 = vmatprep.subr.bf16.mxu0 %v2115
    %4265 = vmatpush1.bf16.xpose.msra.mxu0 %v2114
    %4266 = vmatprep.subr.bf16.mxu0 %v2111
    %4267 = vmatpush1.bf16.xpose.msra.mxu0 %v2110
    %4268 = vmatprep.subr.bf16.mxu0 %v2107
    %4269 = vmatpush1.bf16.xpose.msra.mxu0 %v2106
    %4270 = vmatprep.subr.bf16.mxu0 %v2167
    %4271 = vmatpush2.bf16.xpose.msra.mxu0 %v2166
    %4272 = vmatprep.subr.bf16.mxu0 %v2163
    %4273 = vmatpush2.bf16.xpose.msra.mxu0 %v2162
    %4274 = vmatprep.subr.bf16.mxu0 %v2159
    %4275 = vmatpush2.bf16.xpose.msra.mxu0 %v2158
    %4276 = vmatprep.subr.bf16.mxu0 %v2155
    %4277 = vmatpush2.bf16.xpose.msra.mxu0 %v2154
    %4278 = vmatprep.subr.bf16.mxu0 %v2151
    %4279 = vmatpush2.bf16.xpose.msra.mxu0 %v2150
    %4280 = vmatprep.subr.bf16.mxu0 %v2147
    %4281 = vmatpush2.bf16.xpose.msra.mxu0 %v2146
    %4282 = vmatprep.subr.bf16.mxu0 %v2143
    %4283 = vmatpush2.bf16.xpose.msra.mxu0 %v2142
    %4284 = vmatprep.subr.bf16.mxu0 %v2139
    %4285 = vmatpush2.bf16.xpose.msra.mxu0 %v2138
    %4286 = vmatprep.mubr.bf16.mxu0 %v3802
    %4287 = vmatmul.mubr.bf16.gmra.mxu0 %v3801
    %v4288 = vpop.f32.mrf.mxu0
    %v4289 = vadd.f32 %v4248, %v4288
    %v4290 = vpop.f32.mrf.mxu0
    %v4291 = vadd.f32 %v4250, %v4290
    %v4292 = vpop.f32.mrf.mxu0
    %v4293 = vpop.f32.mrf.mxu0
    %4294 = vdwg.mxu0
    %v4295 = vadd.f32 %v3787, %v3879
    %v4296 = vadd.f32 %v3788, %v3881
    %v4297 = vadd.f32 %v3789, %v3961
    %v4298 = vadd.f32 %v3790, %v3963
    %v4299 = vxor.u32 %v4295, 2147483648
    %v4300 = vxor.u32 %v4296, 2147483648
    %v4301 = vxor.u32 %v4297, 2147483648
    %v4302 = vxor.u32 %v4298, 2147483648
    %v4303 = vmul.f32 %v4299, 1.442695
    %v4304 = vpow.pop %v4303
    %v4305 = vmul.f32 %v4300, 1.442695
    %v4306 = vpow.pop %v4305
    %v4307 = vmul.f32 %v4301, 1.442695
    %v4308 = vpow.pop %v4307
    %v4309 = vmul.f32 %v4302, 1.442695
    %v4310 = vpow.pop %v4309
    %v4311 = vadd.f32 %v4304, 1.0
    %v4312 = vadd.f32 %v4306, 1.0
    %v4313 = vadd.f32 %v4308, 1.0
    %v4314 = vadd.f32 %v4310, 1.0
    %v4315 = vrcp.pop %v4311
    %v4316 = vmul.f32 1.0, %v4315
    %v4317 = vrcp.pop %v4312
    %v4318 = vmul.f32 1.0, %v4317
    %v4319 = vrcp.pop %v4313
    %v4320 = vmul.f32 1.0, %v4319
    %v4321 = vrcp.pop %v4314
    %v4322 = vmul.f32 1.0, %v4321
    %v4323 = vadd.f32 %v3791, %v4043
    %v4324 = vadd.f32 %v3792, %v4045
    %v4325 = vadd.f32 %v3793, %v4125
    %v4326 = vadd.f32 %v3794, %v4127
    %v4327 = vxor.u32 %v4323, 2147483648
    %v4328 = vxor.u32 %v4324, 2147483648
    %v4329 = vxor.u32 %v4325, 2147483648
    %v4330 = vxor.u32 %v4326, 2147483648
    %v4331 = vmul.f32 %v4327, 1.442695
    %v4332 = vpow.pop %v4331
    %v4333 = vmul.f32 %v4328, 1.442695
    %v4334 = vpow.pop %v4333
    %v4335 = vmul.f32 %v4329, 1.442695
    %v4336 = vpow.pop %v4335
    %v4337 = vmul.f32 %v4330, 1.442695
    %v4338 = vpow.pop %v4337
    %v4339 = vadd.f32 %v4332, 1.0
    %v4340 = vadd.f32 %v4334, 1.0
    %v4341 = vadd.f32 %v4336, 1.0
    %v4342 = vadd.f32 %v4338, 1.0
    %v4343 = vrcp.pop %v4339
    %v4344 = vmul.f32 1.0, %v4343
    %v4345 = vrcp.pop %v4340
    %v4346 = vmul.f32 1.0, %v4345
    %v4347 = vrcp.pop %v4341
    %v4348 = vmul.f32 1.0, %v4347
    %v4349 = vrcp.pop %v4342
    %v4350 = vmul.f32 1.0, %v4349
    %v4351 = vadd.f32 %v4207, %v3104
    %v4352 = vadd.f32 %v4209, %v3108
    %v4353 = vadd.f32 %v4289, %v3112
    %v4354 = vadd.f32 %v4291, %v3116
    %v4355 = vmul.f32 %v4316, %v4351
    %v4356 = vmul.f32 %v4318, %v4352
    %v4357 = vmul.f32 %v4320, %v4353
    %v4358 = vmul.f32 %v4322, %v4354
    %v4359 = vadd.f32 %v3795, %v4355
    %v4360 = vadd.f32 %v3796, %v4356
    %v4361 = vadd.f32 %v3797, %v4357
    %v4362 = vadd.f32 %v3798, %v4358
    %v4363 = vtanh.pop %v4359
    %v4364 = vtanh.pop %v4360
    %v4365 = vtanh.pop %v4361
    %v4366 = vtanh.pop %v4362
    %v4367 = vsub.f32 1.0, %v4344
    %v4368 = vsub.f32 1.0, %v4346
    %v4369 = vsub.f32 1.0, %v4348
    %v4370 = vsub.f32 1.0, %v4350
    %v4371 = vmul.f32 %v4367, %v4363
    %v4372 = vmul.f32 %v4368, %v4364
    %v4373 = vmul.f32 %v4369, %v4365
    %v4374 = vmul.f32 %v4370, %v4366
    %v4375 = vmul.f32 %v4344, %v3764
    %v4376 = vmul.f32 %v4346, %v3765
    %v4377 = vmul.f32 %v4348, %v3766
    %v4378 = vmul.f32 %v4350, %v3767
    %v4379 = vadd.f32 %v4371, %v4375
    %v4380 = vadd.f32 %v4372, %v4376
    %v4381 = vadd.f32 %v4373, %v4377
    %v4382 = vadd.f32 %v4374, %v4378
    %s4383 = scalar_lea.vmem %s0, 24
    %v4384 = vld [vmem:[%s4383] sm:$0xff]
    %4386 = vset.pattern.permute.xlu0 0
    %4387 = vperm.xlu0 %4386, %v4384
    %v4388 = vpop.permute.xlu0 %4387
    %v4390 = vmul.f32 %v4388, %v489
    %v4391 = vmul.f32 %v4388, %v493
    %v4392 = vmul.f32 %v4388, %v497
    %v4393 = vmul.f32 %v4388, %v501
    %v4394 = vmul.f32 %v4388, %v505
    %v4395 = vmul.f32 %v4388, %v509
    %v4396 = vmul.f32 %v4388, %v513
    %v4397 = vmul.f32 %v4388, %v517
    %v4398 = vmul.f32 %v4388, %v521
    %v4399 = vmul.f32 %v4388, %v525
    %v4400 = vmul.f32 %v4388, %v529
    %v4401 = vmul.f32 %v4388, %v533
    %v4402 = vadd.f32 %v4390, %v563
    %v4403 = vadd.f32 %v4391, %v567
    %v4404 = vadd.f32 %v4392, %v571
    %v4405 = vadd.f32 %v4393, %v575
    %v4406 = vadd.f32 %v4394, %v579
    %v4407 = vadd.f32 %v4395, %v583
    %v4408 = vadd.f32 %v4396, %v587
    %v4409 = vadd.f32 %v4397, %v591
    %v4410 = vadd.f32 %v4398, %v595
    %v4411 = vadd.f32 %v4399, %v599
    %v4412 = vadd.f32 %v4400, %v603
    %v4413 = vadd.f32 %v4401, %v607
    %v4414 = vpack.c.bf16 %v4379, %v4379
    %v4415 = vpack.c.bf16 %v4380, %v4380
    %v4416 = vpack.c.bf16 %v4381, %v4381
    %v4417 = vpack.c.bf16 %v4382, %v4382
    %4418 = vmatprep.subr.bf16.mxu0 %v1813
    %4419 = vmatpush1.bf16.xpose.msra.mxu0 %v1812
    %4420 = vmatprep.subr.bf16.mxu0 %v1809
    %4421 = vmatpush1.bf16.xpose.msra.mxu0 %v1808
    %4422 = vmatprep.subr.bf16.mxu0 %v1805
    %4423 = vmatpush1.bf16.xpose.msra.mxu0 %v1804
    %4424 = vmatprep.subr.bf16.mxu0 %v1801
    %4425 = vmatpush1.bf16.xpose.msra.mxu0 %v1800
    %4426 = vmatprep.subr.bf16.mxu0 %v1797
    %4427 = vmatpush1.bf16.xpose.msra.mxu0 %v1796
    %4428 = vmatprep.subr.bf16.mxu0 %v1793
    %4429 = vmatpush1.bf16.xpose.msra.mxu0 %v1792
    %4430 = vmatprep.subr.bf16.mxu0 %v1789
    %4431 = vmatpush1.bf16.xpose.msra.mxu0 %v1788
    %4432 = vmatprep.subr.bf16.mxu0 %v1785
    %4433 = vmatpush1.bf16.xpose.msra.mxu0 %v1784
    %4434 = vmatprep.subr.bf16.mxu0 %v1845
    %4435 = vmatpush2.bf16.xpose.msra.mxu0 %v1844
    %4436 = vmatprep.subr.bf16.mxu0 %v1841
    %4437 = vmatpush2.bf16.xpose.msra.mxu0 %v1840
    %4438 = vmatprep.subr.bf16.mxu0 %v1837
    %4439 = vmatpush2.bf16.xpose.msra.mxu0 %v1836
    %4440 = vmatprep.subr.bf16.mxu0 %v1833
    %4441 = vmatpush2.bf16.xpose.msra.mxu0 %v1832
    %4442 = vmatprep.subr.bf16.mxu0 %v1829
    %4443 = vmatpush2.bf16.xpose.msra.mxu0 %v1828
    %4444 = vmatprep.subr.bf16.mxu0 %v1825
    %4445 = vmatpush2.bf16.xpose.msra.mxu0 %v1824
    %4446 = vmatprep.subr.bf16.mxu0 %v1821
    %4447 = vmatpush2.bf16.xpose.msra.mxu0 %v1820
    %4448 = vmatprep.subr.bf16.mxu0 %v1817
    %4449 = vmatpush2.bf16.xpose.msra.mxu0 %v1816
    %4450 = vmatprep.mubr.bf16.mxu0 %v4415
    %4451 = vmatmul.mubr.bf16.gmra.mxu0 %v4414
    %v4452 = vpop.f32.mrf.mxu0
    %v4453 = vadd.f32 0.0, %v4452
    %v4454 = vpop.f32.mrf.mxu0
    %v4455 = vadd.f32 0.0, %v4454
    %v4456 = vpop.f32.mrf.mxu0
    %v4457 = vpop.f32.mrf.mxu0
    %4458 = vdwg.mxu0
    %4459 = vmatprep.subr.bf16.mxu0 %v1815
    %4460 = vmatpush1.bf16.xpose.msra.mxu0 %v1814
    %4461 = vmatprep.subr.bf16.mxu0 %v1811
    %4462 = vmatpush1.bf16.xpose.msra.mxu0 %v1810
    %4463 = vmatprep.subr.bf16.mxu0 %v1807
    %4464 = vmatpush1.bf16.xpose.msra.mxu0 %v1806
    %4465 = vmatprep.subr.bf16.mxu0 %v1803
    %4466 = vmatpush1.bf16.xpose.msra.mxu0 %v1802
    %4467 = vmatprep.subr.bf16.mxu0 %v1799
    %4468 = vmatpush1.bf16.xpose.msra.mxu0 %v1798
    %4469 = vmatprep.subr.bf16.mxu0 %v1795
    %4470 = vmatpush1.bf16.xpose.msra.mxu0 %v1794
    %4471 = vmatprep.subr.bf16.mxu0 %v1791
    %4472 = vmatpush1.bf16.xpose.msra.mxu0 %v1790
    %4473 = vmatprep.subr.bf16.mxu0 %v1787
    %4474 = vmatpush1.bf16.xpose.msra.mxu0 %v1786
    %4475 = vmatprep.subr.bf16.mxu0 %v1847
    %4476 = vmatpush2.bf16.xpose.msra.mxu0 %v1846
    %4477 = vmatprep.subr.bf16.mxu0 %v1843
    %4478 = vmatpush2.bf16.xpose.msra.mxu0 %v1842
    %4479 = vmatprep.subr.bf16.mxu0 %v1839
    %4480 = vmatpush2.bf16.xpose.msra.mxu0 %v1838
    %4481 = vmatprep.subr.bf16.mxu0 %v1835
    %4482 = vmatpush2.bf16.xpose.msra.mxu0 %v1834
    %4483 = vmatprep.subr.bf16.mxu0 %v1831
    %4484 = vmatpush2.bf16.xpose.msra.mxu0 %v1830
    %4485 = vmatprep.subr.bf16.mxu0 %v1827
    %4486 = vmatpush2.bf16.xpose.msra.mxu0 %v1826
    %4487 = vmatprep.subr.bf16.mxu0 %v1823
    %4488 = vmatpush2.bf16.xpose.msra.mxu0 %v1822
    %4489 = vmatprep.subr.bf16.mxu0 %v1819
    %4490 = vmatpush2.bf16.xpose.msra.mxu0 %v1818
    %4491 = vmatprep.mubr.bf16.mxu0 %v4417
    %4492 = vmatmul.mubr.bf16.gmra.mxu0 %v4416
    %v4493 = vpop.f32.mrf.mxu0
    %v4494 = vadd.f32 %v4453, %v4493
    %v4495 = vpop.f32.mrf.mxu0
    %v4496 = vadd.f32 %v4455, %v4495
    %v4497 = vpop.f32.mrf.mxu0
    %v4498 = vpop.f32.mrf.mxu0
    %4499 = vdwg.mxu0
    %4500 = vmatprep.subr.bf16.mxu0 %v1877
    %4501 = vmatpush1.bf16.xpose.msra.mxu0 %v1876
    %4502 = vmatprep.subr.bf16.mxu0 %v1873
    %4503 = vmatpush1.bf16.xpose.msra.mxu0 %v1872
    %4504 = vmatprep.subr.bf16.mxu0 %v1869
    %4505 = vmatpush1.bf16.xpose.msra.mxu0 %v1868
    %4506 = vmatprep.subr.bf16.mxu0 %v1865
    %4507 = vmatpush1.bf16.xpose.msra.mxu0 %v1864
    %4508 = vmatprep.subr.bf16.mxu0 %v1861
    %4509 = vmatpush1.bf16.xpose.msra.mxu0 %v1860
    %4510 = vmatprep.subr.bf16.mxu0 %v1857
    %4511 = vmatpush1.bf16.xpose.msra.mxu0 %v1856
    %4512 = vmatprep.subr.bf16.mxu0 %v1853
    %4513 = vmatpush1.bf16.xpose.msra.mxu0 %v1852
    %4514 = vmatprep.subr.bf16.mxu0 %v1849
    %4515 = vmatpush1.bf16.xpose.msra.mxu0 %v1848
    %4516 = vmatprep.subr.bf16.mxu0 %v1909
    %4517 = vmatpush2.bf16.xpose.msra.mxu0 %v1908
    %4518 = vmatprep.subr.bf16.mxu0 %v1905
    %4519 = vmatpush2.bf16.xpose.msra.mxu0 %v1904
    %4520 = vmatprep.subr.bf16.mxu0 %v1901
    %4521 = vmatpush2.bf16.xpose.msra.mxu0 %v1900
    %4522 = vmatprep.subr.bf16.mxu0 %v1897
    %4523 = vmatpush2.bf16.xpose.msra.mxu0 %v1896
    %4524 = vmatprep.subr.bf16.mxu0 %v1893
    %4525 = vmatpush2.bf16.xpose.msra.mxu0 %v1892
    %4526 = vmatprep.subr.bf16.mxu0 %v1889
    %4527 = vmatpush2.bf16.xpose.msra.mxu0 %v1888
    %4528 = vmatprep.subr.bf16.mxu0 %v1885
    %4529 = vmatpush2.bf16.xpose.msra.mxu0 %v1884
    %4530 = vmatprep.subr.bf16.mxu0 %v1881
    %4531 = vmatpush2.bf16.xpose.msra.mxu0 %v1880
    %4532 = vmatprep.mubr.bf16.mxu0 %v4415
    %4533 = vmatmul.mubr.bf16.gmra.mxu0 %v4414
    %v4534 = vpop.f32.mrf.mxu0
    %v4535 = vadd.f32 0.0, %v4534
    %v4536 = vpop.f32.mrf.mxu0
    %v4537 = vadd.f32 0.0, %v4536
    %v4538 = vpop.f32.mrf.mxu0
    %v4539 = vpop.f32.mrf.mxu0
    %4540 = vdwg.mxu0
    %4541 = vmatprep.subr.bf16.mxu0 %v1879
    %4542 = vmatpush1.bf16.xpose.msra.mxu0 %v1878
    %4543 = vmatprep.subr.bf16.mxu0 %v1875
    %4544 = vmatpush1.bf16.xpose.msra.mxu0 %v1874
    %4545 = vmatprep.subr.bf16.mxu0 %v1871
    %4546 = vmatpush1.bf16.xpose.msra.mxu0 %v1870
    %4547 = vmatprep.subr.bf16.mxu0 %v1867
    %4548 = vmatpush1.bf16.xpose.msra.mxu0 %v1866
    %4549 = vmatprep.subr.bf16.mxu0 %v1863
    %4550 = vmatpush1.bf16.xpose.msra.mxu0 %v1862
    %4551 = vmatprep.subr.bf16.mxu0 %v1859
    %4552 = vmatpush1.bf16.xpose.msra.mxu0 %v1858
    %4553 = vmatprep.subr.bf16.mxu0 %v1855
    %4554 = vmatpush1.bf16.xpose.msra.mxu0 %v1854
    %4555 = vmatprep.subr.bf16.mxu0 %v1851
    %4556 = vmatpush1.bf16.xpose.msra.mxu0 %v1850
    %4557 = vmatprep.subr.bf16.mxu0 %v1911
    %4558 = vmatpush2.bf16.xpose.msra.mxu0 %v1910
    %4559 = vmatprep.subr.bf16.mxu0 %v1907
    %4560 = vmatpush2.bf16.xpose.msra.mxu0 %v1906
    %4561 = vmatprep.subr.bf16.mxu0 %v1903
    %4562 = vmatpush2.bf16.xpose.msra.mxu0 %v1902
    %4563 = vmatprep.subr.bf16.mxu0 %v1899
    %4564 = vmatpush2.bf16.xpose.msra.mxu0 %v1898
    %4565 = vmatprep.subr.bf16.mxu0 %v1895
    %4566 = vmatpush2.bf16.xpose.msra.mxu0 %v1894
    %4567 = vmatprep.subr.bf16.mxu0 %v1891
    %4568 = vmatpush2.bf16.xpose.msra.mxu0 %v1890
    %4569 = vmatprep.subr.bf16.mxu0 %v1887
    %4570 = vmatpush2.bf16.xpose.msra.mxu0 %v1886
    %4571 = vmatprep.subr.bf16.mxu0 %v1883
    %4572 = vmatpush2.bf16.xpose.msra.mxu0 %v1882
    %4573 = vmatprep.mubr.bf16.mxu0 %v4417
    %4574 = vmatmul.mubr.bf16.gmra.mxu0 %v4416
    %v4575 = vpop.f32.mrf.mxu0
    %v4576 = vadd.f32 %v4535, %v4575
    %v4577 = vpop.f32.mrf.mxu0
    %v4578 = vadd.f32 %v4537, %v4577
    %v4579 = vpop.f32.mrf.mxu0
    %v4580 = vpop.f32.mrf.mxu0
    %4581 = vdwg.mxu0
    %4582 = vmatprep.subr.bf16.mxu0 %v1941
    %4583 = vmatpush1.bf16.xpose.msra.mxu0 %v1940
    %4584 = vmatprep.subr.bf16.mxu0 %v1937
    %4585 = vmatpush1.bf16.xpose.msra.mxu0 %v1936
    %4586 = vmatprep.subr.bf16.mxu0 %v1933
    %4587 = vmatpush1.bf16.xpose.msra.mxu0 %v1932
    %4588 = vmatprep.subr.bf16.mxu0 %v1929
    %4589 = vmatpush1.bf16.xpose.msra.mxu0 %v1928
    %4590 = vmatprep.subr.bf16.mxu0 %v1925
    %4591 = vmatpush1.bf16.xpose.msra.mxu0 %v1924
    %4592 = vmatprep.subr.bf16.mxu0 %v1921
    %4593 = vmatpush1.bf16.xpose.msra.mxu0 %v1920
    %4594 = vmatprep.subr.bf16.mxu0 %v1917
    %4595 = vmatpush1.bf16.xpose.msra.mxu0 %v1916
    %4596 = vmatprep.subr.bf16.mxu0 %v1913
    %4597 = vmatpush1.bf16.xpose.msra.mxu0 %v1912
    %4598 = vmatprep.subr.bf16.mxu0 %v1973
    %4599 = vmatpush2.bf16.xpose.msra.mxu0 %v1972
    %4600 = vmatprep.subr.bf16.mxu0 %v1969
    %4601 = vmatpush2.bf16.xpose.msra.mxu0 %v1968
    %4602 = vmatprep.subr.bf16.mxu0 %v1965
    %4603 = vmatpush2.bf16.xpose.msra.mxu0 %v1964
    %4604 = vmatprep.subr.bf16.mxu0 %v1961
    %4605 = vmatpush2.bf16.xpose.msra.mxu0 %v1960
    %4606 = vmatprep.subr.bf16.mxu0 %v1957
    %4607 = vmatpush2.bf16.xpose.msra.mxu0 %v1956
    %4608 = vmatprep.subr.bf16.mxu0 %v1953
    %4609 = vmatpush2.bf16.xpose.msra.mxu0 %v1952
    %4610 = vmatprep.subr.bf16.mxu0 %v1949
    %4611 = vmatpush2.bf16.xpose.msra.mxu0 %v1948
    %4612 = vmatprep.subr.bf16.mxu0 %v1945
    %4613 = vmatpush2.bf16.xpose.msra.mxu0 %v1944
    %4614 = vmatprep.mubr.bf16.mxu0 %v4415
    %4615 = vmatmul.mubr.bf16.gmra.mxu0 %v4414
    %v4616 = vpop.f32.mrf.mxu0
    %v4617 = vadd.f32 0.0, %v4616
    %v4618 = vpop.f32.mrf.mxu0
    %v4619 = vadd.f32 0.0, %v4618
    %v4620 = vpop.f32.mrf.mxu0
    %v4621 = vpop.f32.mrf.mxu0
    %4622 = vdwg.mxu0
    %4623 = vmatprep.subr.bf16.mxu0 %v1943
    %4624 = vmatpush1.bf16.xpose.msra.mxu0 %v1942
    %4625 = vmatprep.subr.bf16.mxu0 %v1939
    %4626 = vmatpush1.bf16.xpose.msra.mxu0 %v1938
    %4627 = vmatprep.subr.bf16.mxu0 %v1935
    %4628 = vmatpush1.bf16.xpose.msra.mxu0 %v1934
    %4629 = vmatprep.subr.bf16.mxu0 %v1931
    %4630 = vmatpush1.bf16.xpose.msra.mxu0 %v1930
    %4631 = vmatprep.subr.bf16.mxu0 %v1927
    %4632 = vmatpush1.bf16.xpose.msra.mxu0 %v1926
    %4633 = vmatprep.subr.bf16.mxu0 %v1923
    %4634 = vmatpush1.bf16.xpose.msra.mxu0 %v1922
    %4635 = vmatprep.subr.bf16.mxu0 %v1919
    %4636 = vmatpush1.bf16.xpose.msra.mxu0 %v1918
    %4637 = vmatprep.subr.bf16.mxu0 %v1915
    %4638 = vmatpush1.bf16.xpose.msra.mxu0 %v1914
    %4639 = vmatprep.subr.bf16.mxu0 %v1975
    %4640 = vmatpush2.bf16.xpose.msra.mxu0 %v1974
    %4641 = vmatprep.subr.bf16.mxu0 %v1971
    %4642 = vmatpush2.bf16.xpose.msra.mxu0 %v1970
    %4643 = vmatprep.subr.bf16.mxu0 %v1967
    %4644 = vmatpush2.bf16.xpose.msra.mxu0 %v1966
    %4645 = vmatprep.subr.bf16.mxu0 %v1963
    %4646 = vmatpush2.bf16.xpose.msra.mxu0 %v1962
    %4647 = vmatprep.subr.bf16.mxu0 %v1959
    %4648 = vmatpush2.bf16.xpose.msra.mxu0 %v1958
    %4649 = vmatprep.subr.bf16.mxu0 %v1955
    %4650 = vmatpush2.bf16.xpose.msra.mxu0 %v1954
    %4651 = vmatprep.subr.bf16.mxu0 %v1951
    %4652 = vmatpush2.bf16.xpose.msra.mxu0 %v1950
    %4653 = vmatprep.subr.bf16.mxu0 %v1947
    %4654 = vmatpush2.bf16.xpose.msra.mxu0 %v1946
    %4655 = vmatprep.mubr.bf16.mxu0 %v4417
    %4656 = vmatmul.mubr.bf16.gmra.mxu0 %v4416
    %v4657 = vpop.f32.mrf.mxu0
    %v4658 = vadd.f32 %v4617, %v4657
    %v4659 = vpop.f32.mrf.mxu0
    %v4660 = vadd.f32 %v4619, %v4659
    %v4661 = vpop.f32.mrf.mxu0
    %v4662 = vpop.f32.mrf.mxu0
    %4663 = vdwg.mxu0
    %4664 = vmatprep.subr.bf16.mxu0 %v2005
    %4665 = vmatpush1.bf16.xpose.msra.mxu0 %v2004
    %4666 = vmatprep.subr.bf16.mxu0 %v2001
    %4667 = vmatpush1.bf16.xpose.msra.mxu0 %v2000
    %4668 = vmatprep.subr.bf16.mxu0 %v1997
    %4669 = vmatpush1.bf16.xpose.msra.mxu0 %v1996
    %4670 = vmatprep.subr.bf16.mxu0 %v1993
    %4671 = vmatpush1.bf16.xpose.msra.mxu0 %v1992
    %4672 = vmatprep.subr.bf16.mxu0 %v1989
    %4673 = vmatpush1.bf16.xpose.msra.mxu0 %v1988
    %4674 = vmatprep.subr.bf16.mxu0 %v1985
    %4675 = vmatpush1.bf16.xpose.msra.mxu0 %v1984
    %4676 = vmatprep.subr.bf16.mxu0 %v1981
    %4677 = vmatpush1.bf16.xpose.msra.mxu0 %v1980
    %4678 = vmatprep.subr.bf16.mxu0 %v1977
    %4679 = vmatpush1.bf16.xpose.msra.mxu0 %v1976
    %4680 = vmatprep.subr.bf16.mxu0 %v2037
    %4681 = vmatpush2.bf16.xpose.msra.mxu0 %v2036
    %4682 = vmatprep.subr.bf16.mxu0 %v2033
    %4683 = vmatpush2.bf16.xpose.msra.mxu0 %v2032
    %4684 = vmatprep.subr.bf16.mxu0 %v2029
    %4685 = vmatpush2.bf16.xpose.msra.mxu0 %v2028
    %4686 = vmatprep.subr.bf16.mxu0 %v2025
    %4687 = vmatpush2.bf16.xpose.msra.mxu0 %v2024
    %4688 = vmatprep.subr.bf16.mxu0 %v2021
    %4689 = vmatpush2.bf16.xpose.msra.mxu0 %v2020
    %4690 = vmatprep.subr.bf16.mxu0 %v2017
    %4691 = vmatpush2.bf16.xpose.msra.mxu0 %v2016
    %4692 = vmatprep.subr.bf16.mxu0 %v2013
    %4693 = vmatpush2.bf16.xpose.msra.mxu0 %v2012
    %4694 = vmatprep.subr.bf16.mxu0 %v2009
    %4695 = vmatpush2.bf16.xpose.msra.mxu0 %v2008
    %4696 = vmatprep.mubr.bf16.mxu0 %v4415
    %4697 = vmatmul.mubr.bf16.gmra.mxu0 %v4414
    %v4698 = vpop.f32.mrf.mxu0
    %v4699 = vadd.f32 0.0, %v4698
    %v4700 = vpop.f32.mrf.mxu0
    %v4701 = vadd.f32 0.0, %v4700
    %v4702 = vpop.f32.mrf.mxu0
    %v4703 = vpop.f32.mrf.mxu0
    %4704 = vdwg.mxu0
    %4705 = vmatprep.subr.bf16.mxu0 %v2007
    %4706 = vmatpush1.bf16.xpose.msra.mxu0 %v2006
    %4707 = vmatprep.subr.bf16.mxu0 %v2003
    %4708 = vmatpush1.bf16.xpose.msra.mxu0 %v2002
    %4709 = vmatprep.subr.bf16.mxu0 %v1999
    %4710 = vmatpush1.bf16.xpose.msra.mxu0 %v1998
    %4711 = vmatprep.subr.bf16.mxu0 %v1995
    %4712 = vmatpush1.bf16.xpose.msra.mxu0 %v1994
    %4713 = vmatprep.subr.bf16.mxu0 %v1991
    %4714 = vmatpush1.bf16.xpose.msra.mxu0 %v1990
    %4715 = vmatprep.subr.bf16.mxu0 %v1987
    %4716 = vmatpush1.bf16.xpose.msra.mxu0 %v1986
    %4717 = vmatprep.subr.bf16.mxu0 %v1983
    %4718 = vmatpush1.bf16.xpose.msra.mxu0 %v1982
    %4719 = vmatprep.subr.bf16.mxu0 %v1979
    %4720 = vmatpush1.bf16.xpose.msra.mxu0 %v1978
    %4721 = vmatprep.subr.bf16.mxu0 %v2039
    %4722 = vmatpush2.bf16.xpose.msra.mxu0 %v2038
    %4723 = vmatprep.subr.bf16.mxu0 %v2035
    %4724 = vmatpush2.bf16.xpose.msra.mxu0 %v2034
    %4725 = vmatprep.subr.bf16.mxu0 %v2031
    %4726 = vmatpush2.bf16.xpose.msra.mxu0 %v2030
    %4727 = vmatprep.subr.bf16.mxu0 %v2027
    %4728 = vmatpush2.bf16.xpose.msra.mxu0 %v2026
    %4729 = vmatprep.subr.bf16.mxu0 %v2023
    %4730 = vmatpush2.bf16.xpose.msra.mxu0 %v2022
    %4731 = vmatprep.subr.bf16.mxu0 %v2019
    %4732 = vmatpush2.bf16.xpose.msra.mxu0 %v2018
    %4733 = vmatprep.subr.bf16.mxu0 %v2015
    %4734 = vmatpush2.bf16.xpose.msra.mxu0 %v2014
    %4735 = vmatprep.subr.bf16.mxu0 %v2011
    %4736 = vmatpush2.bf16.xpose.msra.mxu0 %v2010
    %4737 = vmatprep.mubr.bf16.mxu0 %v4417
    %4738 = vmatmul.mubr.bf16.gmra.mxu0 %v4416
    %v4739 = vpop.f32.mrf.mxu0
    %v4740 = vadd.f32 %v4699, %v4739
    %v4741 = vpop.f32.mrf.mxu0
    %v4742 = vadd.f32 %v4701, %v4741
    %v4743 = vpop.f32.mrf.mxu0
    %v4744 = vpop.f32.mrf.mxu0
    %4745 = vdwg.mxu0
    %4746 = vmatprep.subr.bf16.mxu0 %v2069
    %4747 = vmatpush1.bf16.xpose.msra.mxu0 %v2068
    %4748 = vmatprep.subr.bf16.mxu0 %v2065
    %4749 = vmatpush1.bf16.xpose.msra.mxu0 %v2064
    %4750 = vmatprep.subr.bf16.mxu0 %v2061
    %4751 = vmatpush1.bf16.xpose.msra.mxu0 %v2060
    %4752 = vmatprep.subr.bf16.mxu0 %v2057
    %4753 = vmatpush1.bf16.xpose.msra.mxu0 %v2056
    %4754 = vmatprep.subr.bf16.mxu0 %v2053
    %4755 = vmatpush1.bf16.xpose.msra.mxu0 %v2052
    %4756 = vmatprep.subr.bf16.mxu0 %v2049
    %4757 = vmatpush1.bf16.xpose.msra.mxu0 %v2048
    %4758 = vmatprep.subr.bf16.mxu0 %v2045
    %4759 = vmatpush1.bf16.xpose.msra.mxu0 %v2044
    %4760 = vmatprep.subr.bf16.mxu0 %v2041
    %4761 = vmatpush1.bf16.xpose.msra.mxu0 %v2040
    %4762 = vmatprep.subr.bf16.mxu0 %v2101
    %4763 = vmatpush2.bf16.xpose.msra.mxu0 %v2100
    %4764 = vmatprep.subr.bf16.mxu0 %v2097
    %4765 = vmatpush2.bf16.xpose.msra.mxu0 %v2096
    %4766 = vmatprep.subr.bf16.mxu0 %v2093
    %4767 = vmatpush2.bf16.xpose.msra.mxu0 %v2092
    %4768 = vmatprep.subr.bf16.mxu0 %v2089
    %4769 = vmatpush2.bf16.xpose.msra.mxu0 %v2088
    %4770 = vmatprep.subr.bf16.mxu0 %v2085
    %4771 = vmatpush2.bf16.xpose.msra.mxu0 %v2084
    %4772 = vmatprep.subr.bf16.mxu0 %v2081
    %4773 = vmatpush2.bf16.xpose.msra.mxu0 %v2080
    %4774 = vmatprep.subr.bf16.mxu0 %v2077
    %4775 = vmatpush2.bf16.xpose.msra.mxu0 %v2076
    %4776 = vmatprep.subr.bf16.mxu0 %v2073
    %4777 = vmatpush2.bf16.xpose.msra.mxu0 %v2072
    %4778 = vmatprep.mubr.bf16.mxu0 %v4415
    %4779 = vmatmul.mubr.bf16.gmra.mxu0 %v4414
    %v4780 = vpop.f32.mrf.mxu0
    %v4781 = vadd.f32 0.0, %v4780
    %v4782 = vpop.f32.mrf.mxu0
    %v4783 = vadd.f32 0.0, %v4782
    %v4784 = vpop.f32.mrf.mxu0
    %v4785 = vpop.f32.mrf.mxu0
    %4786 = vdwg.mxu0
    %4787 = vmatprep.subr.bf16.mxu0 %v2071
    %4788 = vmatpush1.bf16.xpose.msra.mxu0 %v2070
    %4789 = vmatprep.subr.bf16.mxu0 %v2067
    %4790 = vmatpush1.bf16.xpose.msra.mxu0 %v2066
    %4791 = vmatprep.subr.bf16.mxu0 %v2063
    %4792 = vmatpush1.bf16.xpose.msra.mxu0 %v2062
    %4793 = vmatprep.subr.bf16.mxu0 %v2059
    %4794 = vmatpush1.bf16.xpose.msra.mxu0 %v2058
    %4795 = vmatprep.subr.bf16.mxu0 %v2055
    %4796 = vmatpush1.bf16.xpose.msra.mxu0 %v2054
    %4797 = vmatprep.subr.bf16.mxu0 %v2051
    %4798 = vmatpush1.bf16.xpose.msra.mxu0 %v2050
    %4799 = vmatprep.subr.bf16.mxu0 %v2047
    %4800 = vmatpush1.bf16.xpose.msra.mxu0 %v2046
    %4801 = vmatprep.subr.bf16.mxu0 %v2043
    %4802 = vmatpush1.bf16.xpose.msra.mxu0 %v2042
    %4803 = vmatprep.subr.bf16.mxu0 %v2103
    %4804 = vmatpush2.bf16.xpose.msra.mxu0 %v2102
    %4805 = vmatprep.subr.bf16.mxu0 %v2099
    %4806 = vmatpush2.bf16.xpose.msra.mxu0 %v2098
    %4807 = vmatprep.subr.bf16.mxu0 %v2095
    %4808 = vmatpush2.bf16.xpose.msra.mxu0 %v2094
    %4809 = vmatprep.subr.bf16.mxu0 %v2091
    %4810 = vmatpush2.bf16.xpose.msra.mxu0 %v2090
    %4811 = vmatprep.subr.bf16.mxu0 %v2087
    %4812 = vmatpush2.bf16.xpose.msra.mxu0 %v2086
    %4813 = vmatprep.subr.bf16.mxu0 %v2083
    %4814 = vmatpush2.bf16.xpose.msra.mxu0 %v2082
    %4815 = vmatprep.subr.bf16.mxu0 %v2079
    %4816 = vmatpush2.bf16.xpose.msra.mxu0 %v2078
    %4817 = vmatprep.subr.bf16.mxu0 %v2075
    %4818 = vmatpush2.bf16.xpose.msra.mxu0 %v2074
    %4819 = vmatprep.mubr.bf16.mxu0 %v4417
    %4820 = vmatmul.mubr.bf16.gmra.mxu0 %v4416
    %v4821 = vpop.f32.mrf.mxu0
    %v4822 = vadd.f32 %v4781, %v4821
    %v4823 = vpop.f32.mrf.mxu0
    %v4824 = vadd.f32 %v4783, %v4823
    %v4825 = vpop.f32.mrf.mxu0
    %v4826 = vpop.f32.mrf.mxu0
    %4827 = vdwg.mxu0
    %4828 = vmatprep.subr.bf16.mxu0 %v2133
    %4829 = vmatpush1.bf16.xpose.msra.mxu0 %v2132
    %4830 = vmatprep.subr.bf16.mxu0 %v2129
    %4831 = vmatpush1.bf16.xpose.msra.mxu0 %v2128
    %4832 = vmatprep.subr.bf16.mxu0 %v2125
    %4833 = vmatpush1.bf16.xpose.msra.mxu0 %v2124
    %4834 = vmatprep.subr.bf16.mxu0 %v2121
    %4835 = vmatpush1.bf16.xpose.msra.mxu0 %v2120
    %4836 = vmatprep.subr.bf16.mxu0 %v2117
    %4837 = vmatpush1.bf16.xpose.msra.mxu0 %v2116
    %4838 = vmatprep.subr.bf16.mxu0 %v2113
    %4839 = vmatpush1.bf16.xpose.msra.mxu0 %v2112
    %4840 = vmatprep.subr.bf16.mxu0 %v2109
    %4841 = vmatpush1.bf16.xpose.msra.mxu0 %v2108
    %4842 = vmatprep.subr.bf16.mxu0 %v2105
    %4843 = vmatpush1.bf16.xpose.msra.mxu0 %v2104
    %4844 = vmatprep.subr.bf16.mxu0 %v2165
    %4845 = vmatpush2.bf16.xpose.msra.mxu0 %v2164
    %4846 = vmatprep.subr.bf16.mxu0 %v2161
    %4847 = vmatpush2.bf16.xpose.msra.mxu0 %v2160
    %4848 = vmatprep.subr.bf16.mxu0 %v2157
    %4849 = vmatpush2.bf16.xpose.msra.mxu0 %v2156
    %4850 = vmatprep.subr.bf16.mxu0 %v2153
    %4851 = vmatpush2.bf16.xpose.msra.mxu0 %v2152
    %4852 = vmatprep.subr.bf16.mxu0 %v2149
    %4853 = vmatpush2.bf16.xpose.msra.mxu0 %v2148
    %4854 = vmatprep.subr.bf16.mxu0 %v2145
    %4855 = vmatpush2.bf16.xpose.msra.mxu0 %v2144
    %4856 = vmatprep.subr.bf16.mxu0 %v2141
    %4857 = vmatpush2.bf16.xpose.msra.mxu0 %v2140
    %4858 = vmatprep.subr.bf16.mxu0 %v2137
    %4859 = vmatpush2.bf16.xpose.msra.mxu0 %v2136
    %4860 = vmatprep.mubr.bf16.mxu0 %v4415
    %4861 = vmatmul.mubr.bf16.gmra.mxu0 %v4414
    %v4862 = vpop.f32.mrf.mxu0
    %v4863 = vadd.f32 0.0, %v4862
    %v4864 = vpop.f32.mrf.mxu0
    %v4865 = vadd.f32 0.0, %v4864
    %v4866 = vpop.f32.mrf.mxu0
    %v4867 = vpop.f32.mrf.mxu0
    %4868 = vdwg.mxu0
    %4869 = vmatprep.subr.bf16.mxu0 %v2135
    %4870 = vmatpush1.bf16.xpose.msra.mxu0 %v2134
    %4871 = vmatprep.subr.bf16.mxu0 %v2131
    %4872 = vmatpush1.bf16.xpose.msra.mxu0 %v2130
    %4873 = vmatprep.subr.bf16.mxu0 %v2127
    %4874 = vmatpush1.bf16.xpose.msra.mxu0 %v2126
    %4875 = vmatprep.subr.bf16.mxu0 %v2123
    %4876 = vmatpush1.bf16.xpose.msra.mxu0 %v2122
    %4877 = vmatprep.subr.bf16.mxu0 %v2119
    %4878 = vmatpush1.bf16.xpose.msra.mxu0 %v2118
    %4879 = vmatprep.subr.bf16.mxu0 %v2115
    %4880 = vmatpush1.bf16.xpose.msra.mxu0 %v2114
    %4881 = vmatprep.subr.bf16.mxu0 %v2111
    %4882 = vmatpush1.bf16.xpose.msra.mxu0 %v2110
    %4883 = vmatprep.subr.bf16.mxu0 %v2107
    %4884 = vmatpush1.bf16.xpose.msra.mxu0 %v2106
    %4885 = vmatprep.subr.bf16.mxu0 %v2167
    %4886 = vmatpush2.bf16.xpose.msra.mxu0 %v2166
    %4887 = vmatprep.subr.bf16.mxu0 %v2163
    %4888 = vmatpush2.bf16.xpose.msra.mxu0 %v2162
    %4889 = vmatprep.subr.bf16.mxu0 %v2159
    %4890 = vmatpush2.bf16.xpose.msra.mxu0 %v2158
    %4891 = vmatprep.subr.bf16.mxu0 %v2155
    %4892 = vmatpush2.bf16.xpose.msra.mxu0 %v2154
    %4893 = vmatprep.subr.bf16.mxu0 %v2151
    %4894 = vmatpush2.bf16.xpose.msra.mxu0 %v2150
    %4895 = vmatprep.subr.bf16.mxu0 %v2147
    %4896 = vmatpush2.bf16.xpose.msra.mxu0 %v2146
    %4897 = vmatprep.subr.bf16.mxu0 %v2143
    %4898 = vmatpush2.bf16.xpose.msra.mxu0 %v2142
    %4899 = vmatprep.subr.bf16.mxu0 %v2139
    %4900 = vmatpush2.bf16.xpose.msra.mxu0 %v2138
    %4901 = vmatprep.mubr.bf16.mxu0 %v4417
    %4902 = vmatmul.mubr.bf16.gmra.mxu0 %v4416
    %v4903 = vpop.f32.mrf.mxu0
    %v4904 = vadd.f32 %v4863, %v4903
    %v4905 = vpop.f32.mrf.mxu0
    %v4906 = vadd.f32 %v4865, %v4905
    %v4907 = vpop.f32.mrf.mxu0
    %v4908 = vpop.f32.mrf.mxu0
    %4909 = vdwg.mxu0
    %v4910 = vadd.f32 %v4402, %v4494
    %v4911 = vadd.f32 %v4403, %v4496
    %v4912 = vadd.f32 %v4404, %v4576
    %v4913 = vadd.f32 %v4405, %v4578
    %v4914 = vxor.u32 %v4910, 2147483648
    %v4915 = vxor.u32 %v4911, 2147483648
    %v4916 = vxor.u32 %v4912, 2147483648
    %v4917 = vxor.u32 %v4913, 2147483648
    %v4918 = vmul.f32 %v4914, 1.442695
    %v4919 = vpow.pop %v4918
    %v4920 = vmul.f32 %v4915, 1.442695
    %v4921 = vpow.pop %v4920
    %v4922 = vmul.f32 %v4916, 1.442695
    %v4923 = vpow.pop %v4922
    %v4924 = vmul.f32 %v4917, 1.442695
    %v4925 = vpow.pop %v4924
    %v4926 = vadd.f32 %v4919, 1.0
    %v4927 = vadd.f32 %v4921, 1.0
    %v4928 = vadd.f32 %v4923, 1.0
    %v4929 = vadd.f32 %v4925, 1.0
    %v4930 = vrcp.pop %v4926
    %v4931 = vmul.f32 1.0, %v4930
    %v4932 = vrcp.pop %v4927
    %v4933 = vmul.f32 1.0, %v4932
    %v4934 = vrcp.pop %v4928
    %v4935 = vmul.f32 1.0, %v4934
    %v4936 = vrcp.pop %v4929
    %v4937 = vmul.f32 1.0, %v4936
    %v4938 = vadd.f32 %v4406, %v4658
    %v4939 = vadd.f32 %v4407, %v4660
    %v4940 = vadd.f32 %v4408, %v4740
    %v4941 = vadd.f32 %v4409, %v4742
    %v4942 = vxor.u32 %v4938, 2147483648
    %v4943 = vxor.u32 %v4939, 2147483648
    %v4944 = vxor.u32 %v4940, 2147483648
    %v4945 = vxor.u32 %v4941, 2147483648
    %v4946 = vmul.f32 %v4942, 1.442695
    %v4947 = vpow.pop %v4946
    %v4948 = vmul.f32 %v4943, 1.442695
    %v4949 = vpow.pop %v4948
    %v4950 = vmul.f32 %v4944, 1.442695
    %v4951 = vpow.pop %v4950
    %v4952 = vmul.f32 %v4945, 1.442695
    %v4953 = vpow.pop %v4952
    %v4954 = vadd.f32 %v4947, 1.0
    %v4955 = vadd.f32 %v4949, 1.0
    %v4956 = vadd.f32 %v4951, 1.0
    %v4957 = vadd.f32 %v4953, 1.0
    %v4958 = vrcp.pop %v4954
    %v4959 = vmul.f32 1.0, %v4958
    %v4960 = vrcp.pop %v4955
    %v4961 = vmul.f32 1.0, %v4960
    %v4962 = vrcp.pop %v4956
    %v4963 = vmul.f32 1.0, %v4962
    %v4964 = vrcp.pop %v4957
    %v4965 = vmul.f32 1.0, %v4964
    %v4966 = vadd.f32 %v4822, %v3104
    %v4967 = vadd.f32 %v4824, %v3108
    %v4968 = vadd.f32 %v4904, %v3112
    %v4969 = vadd.f32 %v4906, %v3116
    %v4970 = vmul.f32 %v4931, %v4966
    %v4971 = vmul.f32 %v4933, %v4967
    %v4972 = vmul.f32 %v4935, %v4968
    %v4973 = vmul.f32 %v4937, %v4969
    %v4974 = vadd.f32 %v4410, %v4970
    %v4975 = vadd.f32 %v4411, %v4971
    %v4976 = vadd.f32 %v4412, %v4972
    %v4977 = vadd.f32 %v4413, %v4973
    %v4978 = vtanh.pop %v4974
    %v4979 = vtanh.pop %v4975
    %v4980 = vtanh.pop %v4976
    %v4981 = vtanh.pop %v4977
    %v4982 = vsub.f32 1.0, %v4959
    %v4983 = vsub.f32 1.0, %v4961
    %v4984 = vsub.f32 1.0, %v4963
    %v4985 = vsub.f32 1.0, %v4965
    %v4986 = vmul.f32 %v4982, %v4978
    %v4987 = vmul.f32 %v4983, %v4979
    %v4988 = vmul.f32 %v4984, %v4980
    %v4989 = vmul.f32 %v4985, %v4981
    %v4990 = vmul.f32 %v4959, %v4379
    %v4991 = vmul.f32 %v4961, %v4380
    %v4992 = vmul.f32 %v4963, %v4381
    %v4993 = vmul.f32 %v4965, %v4382
    %v4994 = vadd.f32 %v4986, %v4990
    %v4995 = vadd.f32 %v4987, %v4991
    %v4996 = vadd.f32 %v4988, %v4992
    %v4997 = vadd.f32 %v4989, %v4993
    %s4998 = scalar_lea.vmem %s0, 32
    %v4999 = vld [vmem:[%s4998] sm:$0xff]
    %5001 = vset.pattern.permute.xlu0 0
    %5002 = vperm.xlu0 %5001, %v4999
    %v5003 = vpop.permute.xlu0 %5002
    %v5005 = vmul.f32 %v5003, %v489
    %v5006 = vmul.f32 %v5003, %v493
    %v5007 = vmul.f32 %v5003, %v497
    %v5008 = vmul.f32 %v5003, %v501
    %v5009 = vmul.f32 %v5003, %v505
    %v5010 = vmul.f32 %v5003, %v509
    %v5011 = vmul.f32 %v5003, %v513
    %v5012 = vmul.f32 %v5003, %v517
    %v5013 = vmul.f32 %v5003, %v521
    %v5014 = vmul.f32 %v5003, %v525
    %v5015 = vmul.f32 %v5003, %v529
    %v5016 = vmul.f32 %v5003, %v533
    %v5017 = vadd.f32 %v5005, %v563
    %v5018 = vadd.f32 %v5006, %v567
    %v5019 = vadd.f32 %v5007, %v571
    %v5020 = vadd.f32 %v5008, %v575
    %v5021 = vadd.f32 %v5009, %v579
    %v5022 = vadd.f32 %v5010, %v583
    %v5023 = vadd.f32 %v5011, %v587
    %v5024 = vadd.f32 %v5012, %v591
    %v5025 = vadd.f32 %v5013, %v595
    %v5026 = vadd.f32 %v5014, %v599
    %v5027 = vadd.f32 %v5015, %v603
    %v5028 = vadd.f32 %v5016, %v607
    %v5029 = vpack.c.bf16 %v4994, %v4994
    %v5030 = vpack.c.bf16 %v4995, %v4995
    %v5031 = vpack.c.bf16 %v4996, %v4996
    %v5032 = vpack.c.bf16 %v4997, %v4997
    %5033 = vmatprep.subr.bf16.mxu0 %v1813
    %5034 = vmatpush1.bf16.xpose.msra.mxu0 %v1812
    %5035 = vmatprep.subr.bf16.mxu0 %v1809
    %5036 = vmatpush1.bf16.xpose.msra.mxu0 %v1808
    %5037 = vmatprep.subr.bf16.mxu0 %v1805
    %5038 = vmatpush1.bf16.xpose.msra.mxu0 %v1804
    %5039 = vmatprep.subr.bf16.mxu0 %v1801
    %5040 = vmatpush1.bf16.xpose.msra.mxu0 %v1800
    %5041 = vmatprep.subr.bf16.mxu0 %v1797
    %5042 = vmatpush1.bf16.xpose.msra.mxu0 %v1796
    %5043 = vmatprep.subr.bf16.mxu0 %v1793
    %5044 = vmatpush1.bf16.xpose.msra.mxu0 %v1792
    %5045 = vmatprep.subr.bf16.mxu0 %v1789
    %5046 = vmatpush1.bf16.xpose.msra.mxu0 %v1788
    %5047 = vmatprep.subr.bf16.mxu0 %v1785
    %5048 = vmatpush1.bf16.xpose.msra.mxu0 %v1784
    %5049 = vmatprep.subr.bf16.mxu0 %v1845
    %5050 = vmatpush2.bf16.xpose.msra.mxu0 %v1844
    %5051 = vmatprep.subr.bf16.mxu0 %v1841
    %5052 = vmatpush2.bf16.xpose.msra.mxu0 %v1840
    %5053 = vmatprep.subr.bf16.mxu0 %v1837
    %5054 = vmatpush2.bf16.xpose.msra.mxu0 %v1836
    %5055 = vmatprep.subr.bf16.mxu0 %v1833
    %5056 = vmatpush2.bf16.xpose.msra.mxu0 %v1832
    %5057 = vmatprep.subr.bf16.mxu0 %v1829
    %5058 = vmatpush2.bf16.xpose.msra.mxu0 %v1828
    %5059 = vmatprep.subr.bf16.mxu0 %v1825
    %5060 = vmatpush2.bf16.xpose.msra.mxu0 %v1824
    %5061 = vmatprep.subr.bf16.mxu0 %v1821
    %5062 = vmatpush2.bf16.xpose.msra.mxu0 %v1820
    %5063 = vmatprep.subr.bf16.mxu0 %v1817
    %5064 = vmatpush2.bf16.xpose.msra.mxu0 %v1816
    %5065 = vmatprep.mubr.bf16.mxu0 %v5030
    %5066 = vmatmul.mubr.bf16.gmra.mxu0 %v5029
    %v5067 = vpop.f32.mrf.mxu0
    %v5068 = vadd.f32 0.0, %v5067
    %v5069 = vpop.f32.mrf.mxu0
    %v5070 = vadd.f32 0.0, %v5069
    %v5071 = vpop.f32.mrf.mxu0
    %v5072 = vpop.f32.mrf.mxu0
    %5073 = vdwg.mxu0
    %5074 = vmatprep.subr.bf16.mxu0 %v1815
    %5075 = vmatpush1.bf16.xpose.msra.mxu0 %v1814
    %5076 = vmatprep.subr.bf16.mxu0 %v1811
    %5077 = vmatpush1.bf16.xpose.msra.mxu0 %v1810
    %5078 = vmatprep.subr.bf16.mxu0 %v1807
    %5079 = vmatpush1.bf16.xpose.msra.mxu0 %v1806
    %5080 = vmatprep.subr.bf16.mxu0 %v1803
    %5081 = vmatpush1.bf16.xpose.msra.mxu0 %v1802
    %5082 = vmatprep.subr.bf16.mxu0 %v1799
    %5083 = vmatpush1.bf16.xpose.msra.mxu0 %v1798
    %5084 = vmatprep.subr.bf16.mxu0 %v1795
    %5085 = vmatpush1.bf16.xpose.msra.mxu0 %v1794
    %5086 = vmatprep.subr.bf16.mxu0 %v1791
    %5087 = vmatpush1.bf16.xpose.msra.mxu0 %v1790
    %5088 = vmatprep.subr.bf16.mxu0 %v1787
    %5089 = vmatpush1.bf16.xpose.msra.mxu0 %v1786
    %5090 = vmatprep.subr.bf16.mxu0 %v1847
    %5091 = vmatpush2.bf16.xpose.msra.mxu0 %v1846
    %5092 = vmatprep.subr.bf16.mxu0 %v1843
    %5093 = vmatpush2.bf16.xpose.msra.mxu0 %v1842
    %5094 = vmatprep.subr.bf16.mxu0 %v1839
    %5095 = vmatpush2.bf16.xpose.msra.mxu0 %v1838
    %5096 = vmatprep.subr.bf16.mxu0 %v1835
    %5097 = vmatpush2.bf16.xpose.msra.mxu0 %v1834
    %5098 = vmatprep.subr.bf16.mxu0 %v1831
    %5099 = vmatpush2.bf16.xpose.msra.mxu0 %v1830
    %5100 = vmatprep.subr.bf16.mxu0 %v1827
    %5101 = vmatpush2.bf16.xpose.msra.mxu0 %v1826
    %5102 = vmatprep.subr.bf16.mxu0 %v1823
    %5103 = vmatpush2.bf16.xpose.msra.mxu0 %v1822
    %5104 = vmatprep.subr.bf16.mxu0 %v1819
    %5105 = vmatpush2.bf16.xpose.msra.mxu0 %v1818
    %5106 = vmatprep.mubr.bf16.mxu0 %v5032
    %5107 = vmatmul.mubr.bf16.gmra.mxu0 %v5031
    %v5108 = vpop.f32.mrf.mxu0
    %v5109 = vadd.f32 %v5068, %v5108
    %v5110 = vpop.f32.mrf.mxu0
    %v5111 = vadd.f32 %v5070, %v5110
    %v5112 = vpop.f32.mrf.mxu0
    %v5113 = vpop.f32.mrf.mxu0
    %5114 = vdwg.mxu0
    %5115 = vmatprep.subr.bf16.mxu0 %v1877
    %5116 = vmatpush1.bf16.xpose.msra.mxu0 %v1876
    %5117 = vmatprep.subr.bf16.mxu0 %v1873
    %5118 = vmatpush1.bf16.xpose.msra.mxu0 %v1872
    %5119 = vmatprep.subr.bf16.mxu0 %v1869
    %5120 = vmatpush1.bf16.xpose.msra.mxu0 %v1868
    %5121 = vmatprep.subr.bf16.mxu0 %v1865
    %5122 = vmatpush1.bf16.xpose.msra.mxu0 %v1864
    %5123 = vmatprep.subr.bf16.mxu0 %v1861
    %5124 = vmatpush1.bf16.xpose.msra.mxu0 %v1860
    %5125 = vmatprep.subr.bf16.mxu0 %v1857
    %5126 = vmatpush1.bf16.xpose.msra.mxu0 %v1856
    %5127 = vmatprep.subr.bf16.mxu0 %v1853
    %5128 = vmatpush1.bf16.xpose.msra.mxu0 %v1852
    %5129 = vmatprep.subr.bf16.mxu0 %v1849
    %5130 = vmatpush1.bf16.xpose.msra.mxu0 %v1848
    %5131 = vmatprep.subr.bf16.mxu0 %v1909
    %5132 = vmatpush2.bf16.xpose.msra.mxu0 %v1908
    %5133 = vmatprep.subr.bf16.mxu0 %v1905
    %5134 = vmatpush2.bf16.xpose.msra.mxu0 %v1904
    %5135 = vmatprep.subr.bf16.mxu0 %v1901
    %5136 = vmatpush2.bf16.xpose.msra.mxu0 %v1900
    %5137 = vmatprep.subr.bf16.mxu0 %v1897
    %5138 = vmatpush2.bf16.xpose.msra.mxu0 %v1896
    %5139 = vmatprep.subr.bf16.mxu0 %v1893
    %5140 = vmatpush2.bf16.xpose.msra.mxu0 %v1892
    %5141 = vmatprep.subr.bf16.mxu0 %v1889
    %5142 = vmatpush2.bf16.xpose.msra.mxu0 %v1888
    %5143 = vmatprep.subr.bf16.mxu0 %v1885
    %5144 = vmatpush2.bf16.xpose.msra.mxu0 %v1884
    %5145 = vmatprep.subr.bf16.mxu0 %v1881
    %5146 = vmatpush2.bf16.xpose.msra.mxu0 %v1880
    %5147 = vmatprep.mubr.bf16.mxu0 %v5030
    %5148 = vmatmul.mubr.bf16.gmra.mxu0 %v5029
    %v5149 = vpop.f32.mrf.mxu0
    %v5150 = vadd.f32 0.0, %v5149
    %v5151 = vpop.f32.mrf.mxu0
    %v5152 = vadd.f32 0.0, %v5151
    %v5153 = vpop.f32.mrf.mxu0
    %v5154 = vpop.f32.mrf.mxu0
    %5155 = vdwg.mxu0
    %5156 = vmatprep.subr.bf16.mxu0 %v1879
    %5157 = vmatpush1.bf16.xpose.msra.mxu0 %v1878
    %5158 = vmatprep.subr.bf16.mxu0 %v1875
    %5159 = vmatpush1.bf16.xpose.msra.mxu0 %v1874
    %5160 = vmatprep.subr.bf16.mxu0 %v1871
    %5161 = vmatpush1.bf16.xpose.msra.mxu0 %v1870
    %5162 = vmatprep.subr.bf16.mxu0 %v1867
    %5163 = vmatpush1.bf16.xpose.msra.mxu0 %v1866
    %5164 = vmatprep.subr.bf16.mxu0 %v1863
    %5165 = vmatpush1.bf16.xpose.msra.mxu0 %v1862
    %5166 = vmatprep.subr.bf16.mxu0 %v1859
    %5167 = vmatpush1.bf16.xpose.msra.mxu0 %v1858
    %5168 = vmatprep.subr.bf16.mxu0 %v1855
    %5169 = vmatpush1.bf16.xpose.msra.mxu0 %v1854
    %5170 = vmatprep.subr.bf16.mxu0 %v1851
    %5171 = vmatpush1.bf16.xpose.msra.mxu0 %v1850
    %5172 = vmatprep.subr.bf16.mxu0 %v1911
    %5173 = vmatpush2.bf16.xpose.msra.mxu0 %v1910
    %5174 = vmatprep.subr.bf16.mxu0 %v1907
    %5175 = vmatpush2.bf16.xpose.msra.mxu0 %v1906
    %5176 = vmatprep.subr.bf16.mxu0 %v1903
    %5177 = vmatpush2.bf16.xpose.msra.mxu0 %v1902
    %5178 = vmatprep.subr.bf16.mxu0 %v1899
    %5179 = vmatpush2.bf16.xpose.msra.mxu0 %v1898
    %5180 = vmatprep.subr.bf16.mxu0 %v1895
    %5181 = vmatpush2.bf16.xpose.msra.mxu0 %v1894
    %5182 = vmatprep.subr.bf16.mxu0 %v1891
    %5183 = vmatpush2.bf16.xpose.msra.mxu0 %v1890
    %5184 = vmatprep.subr.bf16.mxu0 %v1887
    %5185 = vmatpush2.bf16.xpose.msra.mxu0 %v1886
    %5186 = vmatprep.subr.bf16.mxu0 %v1883
    %5187 = vmatpush2.bf16.xpose.msra.mxu0 %v1882
    %5188 = vmatprep.mubr.bf16.mxu0 %v5032
    %5189 = vmatmul.mubr.bf16.gmra.mxu0 %v5031
    %v5190 = vpop.f32.mrf.mxu0
    %v5191 = vadd.f32 %v5150, %v5190
    %v5192 = vpop.f32.mrf.mxu0
    %v5193 = vadd.f32 %v5152, %v5192
    %v5194 = vpop.f32.mrf.mxu0
    %v5195 = vpop.f32.mrf.mxu0
    %5196 = vdwg.mxu0
    %5197 = vmatprep.subr.bf16.mxu0 %v1941
    %5198 = vmatpush1.bf16.xpose.msra.mxu0 %v1940
    %5199 = vmatprep.subr.bf16.mxu0 %v1937
    %5200 = vmatpush1.bf16.xpose.msra.mxu0 %v1936
    %5201 = vmatprep.subr.bf16.mxu0 %v1933
    %5202 = vmatpush1.bf16.xpose.msra.mxu0 %v1932
    %5203 = vmatprep.subr.bf16.mxu0 %v1929
    %5204 = vmatpush1.bf16.xpose.msra.mxu0 %v1928
    %5205 = vmatprep.subr.bf16.mxu0 %v1925
    %5206 = vmatpush1.bf16.xpose.msra.mxu0 %v1924
    %5207 = vmatprep.subr.bf16.mxu0 %v1921
    %5208 = vmatpush1.bf16.xpose.msra.mxu0 %v1920
    %5209 = vmatprep.subr.bf16.mxu0 %v1917
    %5210 = vmatpush1.bf16.xpose.msra.mxu0 %v1916
    %5211 = vmatprep.subr.bf16.mxu0 %v1913
    %5212 = vmatpush1.bf16.xpose.msra.mxu0 %v1912
    %5213 = vmatprep.subr.bf16.mxu0 %v1973
    %5214 = vmatpush2.bf16.xpose.msra.mxu0 %v1972
    %5215 = vmatprep.subr.bf16.mxu0 %v1969
    %5216 = vmatpush2.bf16.xpose.msra.mxu0 %v1968
    %5217 = vmatprep.subr.bf16.mxu0 %v1965
    %5218 = vmatpush2.bf16.xpose.msra.mxu0 %v1964
    %5219 = vmatprep.subr.bf16.mxu0 %v1961
    %5220 = vmatpush2.bf16.xpose.msra.mxu0 %v1960
    %5221 = vmatprep.subr.bf16.mxu0 %v1957
    %5222 = vmatpush2.bf16.xpose.msra.mxu0 %v1956
    %5223 = vmatprep.subr.bf16.mxu0 %v1953
    %5224 = vmatpush2.bf16.xpose.msra.mxu0 %v1952
    %5225 = vmatprep.subr.bf16.mxu0 %v1949
    %5226 = vmatpush2.bf16.xpose.msra.mxu0 %v1948
    %5227 = vmatprep.subr.bf16.mxu0 %v1945
    %5228 = vmatpush2.bf16.xpose.msra.mxu0 %v1944
    %5229 = vmatprep.mubr.bf16.mxu0 %v5030
    %5230 = vmatmul.mubr.bf16.gmra.mxu0 %v5029
    %v5231 = vpop.f32.mrf.mxu0
    %v5232 = vadd.f32 0.0, %v5231
    %v5233 = vpop.f32.mrf.mxu0
    %v5234 = vadd.f32 0.0, %v5233
    %v5235 = vpop.f32.mrf.mxu0
    %v5236 = vpop.f32.mrf.mxu0
    %5237 = vdwg.mxu0
    %5238 = vmatprep.subr.bf16.mxu0 %v1943
    %5239 = vmatpush1.bf16.xpose.msra.mxu0 %v1942
    %5240 = vmatprep.subr.bf16.mxu0 %v1939
    %5241 = vmatpush1.bf16.xpose.msra.mxu0 %v1938
    %5242 = vmatprep.subr.bf16.mxu0 %v1935
    %5243 = vmatpush1.bf16.xpose.msra.mxu0 %v1934
    %5244 = vmatprep.subr.bf16.mxu0 %v1931
    %5245 = vmatpush1.bf16.xpose.msra.mxu0 %v1930
    %5246 = vmatprep.subr.bf16.mxu0 %v1927
    %5247 = vmatpush1.bf16.xpose.msra.mxu0 %v1926
    %5248 = vmatprep.subr.bf16.mxu0 %v1923
    %5249 = vmatpush1.bf16.xpose.msra.mxu0 %v1922
    %5250 = vmatprep.subr.bf16.mxu0 %v1919
    %5251 = vmatpush1.bf16.xpose.msra.mxu0 %v1918
    %5252 = vmatprep.subr.bf16.mxu0 %v1915
    %5253 = vmatpush1.bf16.xpose.msra.mxu0 %v1914
    %5254 = vmatprep.subr.bf16.mxu0 %v1975
    %5255 = vmatpush2.bf16.xpose.msra.mxu0 %v1974
    %5256 = vmatprep.subr.bf16.mxu0 %v1971
    %5257 = vmatpush2.bf16.xpose.msra.mxu0 %v1970
    %5258 = vmatprep.subr.bf16.mxu0 %v1967
    %5259 = vmatpush2.bf16.xpose.msra.mxu0 %v1966
    %5260 = vmatprep.subr.bf16.mxu0 %v1963
    %5261 = vmatpush2.bf16.xpose.msra.mxu0 %v1962
    %5262 = vmatprep.subr.bf16.mxu0 %v1959
    %5263 = vmatpush2.bf16.xpose.msra.mxu0 %v1958
    %5264 = vmatprep.subr.bf16.mxu0 %v1955
    %5265 = vmatpush2.bf16.xpose.msra.mxu0 %v1954
    %5266 = vmatprep.subr.bf16.mxu0 %v1951
    %5267 = vmatpush2.bf16.xpose.msra.mxu0 %v1950
    %5268 = vmatprep.subr.bf16.mxu0 %v1947
    %5269 = vmatpush2.bf16.xpose.msra.mxu0 %v1946
    %5270 = vmatprep.mubr.bf16.mxu0 %v5032
    %5271 = vmatmul.mubr.bf16.gmra.mxu0 %v5031
    %v5272 = vpop.f32.mrf.mxu0
    %v5273 = vadd.f32 %v5232, %v5272
    %v5274 = vpop.f32.mrf.mxu0
    %v5275 = vadd.f32 %v5234, %v5274
    %v5276 = vpop.f32.mrf.mxu0
    %v5277 = vpop.f32.mrf.mxu0
    %5278 = vdwg.mxu0
    %5279 = vmatprep.subr.bf16.mxu0 %v2005
    %5280 = vmatpush1.bf16.xpose.msra.mxu0 %v2004
    %5281 = vmatprep.subr.bf16.mxu0 %v2001
    %5282 = vmatpush1.bf16.xpose.msra.mxu0 %v2000
    %5283 = vmatprep.subr.bf16.mxu0 %v1997
    %5284 = vmatpush1.bf16.xpose.msra.mxu0 %v1996
    %5285 = vmatprep.subr.bf16.mxu0 %v1993
    %5286 = vmatpush1.bf16.xpose.msra.mxu0 %v1992
    %5287 = vmatprep.subr.bf16.mxu0 %v1989
    %5288 = vmatpush1.bf16.xpose.msra.mxu0 %v1988
    %5289 = vmatprep.subr.bf16.mxu0 %v1985
    %5290 = vmatpush1.bf16.xpose.msra.mxu0 %v1984
    %5291 = vmatprep.subr.bf16.mxu0 %v1981
    %5292 = vmatpush1.bf16.xpose.msra.mxu0 %v1980
    %5293 = vmatprep.subr.bf16.mxu0 %v1977
    %5294 = vmatpush1.bf16.xpose.msra.mxu0 %v1976
    %5295 = vmatprep.subr.bf16.mxu0 %v2037
    %5296 = vmatpush2.bf16.xpose.msra.mxu0 %v2036
    %5297 = vmatprep.subr.bf16.mxu0 %v2033
    %5298 = vmatpush2.bf16.xpose.msra.mxu0 %v2032
    %5299 = vmatprep.subr.bf16.mxu0 %v2029
    %5300 = vmatpush2.bf16.xpose.msra.mxu0 %v2028
    %5301 = vmatprep.subr.bf16.mxu0 %v2025
    %5302 = vmatpush2.bf16.xpose.msra.mxu0 %v2024
    %5303 = vmatprep.subr.bf16.mxu0 %v2021
    %5304 = vmatpush2.bf16.xpose.msra.mxu0 %v2020
    %5305 = vmatprep.subr.bf16.mxu0 %v2017
    %5306 = vmatpush2.bf16.xpose.msra.mxu0 %v2016
    %5307 = vmatprep.subr.bf16.mxu0 %v2013
    %5308 = vmatpush2.bf16.xpose.msra.mxu0 %v2012
    %5309 = vmatprep.subr.bf16.mxu0 %v2009
    %5310 = vmatpush2.bf16.xpose.msra.mxu0 %v2008
    %5311 = vmatprep.mubr.bf16.mxu0 %v5030
    %5312 = vmatmul.mubr.bf16.gmra.mxu0 %v5029
    %v5313 = vpop.f32.mrf.mxu0
    %v5314 = vadd.f32 0.0, %v5313
    %v5315 = vpop.f32.mrf.mxu0
    %v5316 = vadd.f32 0.0, %v5315
    %v5317 = vpop.f32.mrf.mxu0
    %v5318 = vpop.f32.mrf.mxu0
    %5319 = vdwg.mxu0
    %5320 = vmatprep.subr.bf16.mxu0 %v2007
    %5321 = vmatpush1.bf16.xpose.msra.mxu0 %v2006
    %5322 = vmatprep.subr.bf16.mxu0 %v2003
    %5323 = vmatpush1.bf16.xpose.msra.mxu0 %v2002
    %5324 = vmatprep.subr.bf16.mxu0 %v1999
    %5325 = vmatpush1.bf16.xpose.msra.mxu0 %v1998
    %5326 = vmatprep.subr.bf16.mxu0 %v1995
    %5327 = vmatpush1.bf16.xpose.msra.mxu0 %v1994
    %5328 = vmatprep.subr.bf16.mxu0 %v1991
    %5329 = vmatpush1.bf16.xpose.msra.mxu0 %v1990
    %5330 = vmatprep.subr.bf16.mxu0 %v1987
    %5331 = vmatpush1.bf16.xpose.msra.mxu0 %v1986
    %5332 = vmatprep.subr.bf16.mxu0 %v1983
    %5333 = vmatpush1.bf16.xpose.msra.mxu0 %v1982
    %5334 = vmatprep.subr.bf16.mxu0 %v1979
    %5335 = vmatpush1.bf16.xpose.msra.mxu0 %v1978
    %5336 = vmatprep.subr.bf16.mxu0 %v2039
    %5337 = vmatpush2.bf16.xpose.msra.mxu0 %v2038
    %5338 = vmatprep.subr.bf16.mxu0 %v2035
    %5339 = vmatpush2.bf16.xpose.msra.mxu0 %v2034
    %5340 = vmatprep.subr.bf16.mxu0 %v2031
    %5341 = vmatpush2.bf16.xpose.msra.mxu0 %v2030
    %5342 = vmatprep.subr.bf16.mxu0 %v2027
    %5343 = vmatpush2.bf16.xpose.msra.mxu0 %v2026
    %5344 = vmatprep.subr.bf16.mxu0 %v2023
    %5345 = vmatpush2.bf16.xpose.msra.mxu0 %v2022
    %5346 = vmatprep.subr.bf16.mxu0 %v2019
    %5347 = vmatpush2.bf16.xpose.msra.mxu0 %v2018
    %5348 = vmatprep.subr.bf16.mxu0 %v2015
    %5349 = vmatpush2.bf16.xpose.msra.mxu0 %v2014
    %5350 = vmatprep.subr.bf16.mxu0 %v2011
    %5351 = vmatpush2.bf16.xpose.msra.mxu0 %v2010
    %5352 = vmatprep.mubr.bf16.mxu0 %v5032
    %5353 = vmatmul.mubr.bf16.gmra.mxu0 %v5031
    %v5354 = vpop.f32.mrf.mxu0
    %v5355 = vadd.f32 %v5314, %v5354
    %v5356 = vpop.f32.mrf.mxu0
    %v5357 = vadd.f32 %v5316, %v5356
    %v5358 = vpop.f32.mrf.mxu0
    %v5359 = vpop.f32.mrf.mxu0
    %5360 = vdwg.mxu0
    %5361 = vmatprep.subr.bf16.mxu0 %v2069
    %5362 = vmatpush1.bf16.xpose.msra.mxu0 %v2068
    %5363 = vmatprep.subr.bf16.mxu0 %v2065
    %5364 = vmatpush1.bf16.xpose.msra.mxu0 %v2064
    %5365 = vmatprep.subr.bf16.mxu0 %v2061
    %5366 = vmatpush1.bf16.xpose.msra.mxu0 %v2060
    %5367 = vmatprep.subr.bf16.mxu0 %v2057
    %5368 = vmatpush1.bf16.xpose.msra.mxu0 %v2056
    %5369 = vmatprep.subr.bf16.mxu0 %v2053
    %5370 = vmatpush1.bf16.xpose.msra.mxu0 %v2052
    %5371 = vmatprep.subr.bf16.mxu0 %v2049
    %5372 = vmatpush1.bf16.xpose.msra.mxu0 %v2048
    %5373 = vmatprep.subr.bf16.mxu0 %v2045
    %5374 = vmatpush1.bf16.xpose.msra.mxu0 %v2044
    %5375 = vmatprep.subr.bf16.mxu0 %v2041
    %5376 = vmatpush1.bf16.xpose.msra.mxu0 %v2040
    %5377 = vmatprep.subr.bf16.mxu0 %v2101
    %5378 = vmatpush2.bf16.xpose.msra.mxu0 %v2100
    %5379 = vmatprep.subr.bf16.mxu0 %v2097
    %5380 = vmatpush2.bf16.xpose.msra.mxu0 %v2096
    %5381 = vmatprep.subr.bf16.mxu0 %v2093
    %5382 = vmatpush2.bf16.xpose.msra.mxu0 %v2092
    %5383 = vmatprep.subr.bf16.mxu0 %v2089
    %5384 = vmatpush2.bf16.xpose.msra.mxu0 %v2088
    %5385 = vmatprep.subr.bf16.mxu0 %v2085
    %5386 = vmatpush2.bf16.xpose.msra.mxu0 %v2084
    %5387 = vmatprep.subr.bf16.mxu0 %v2081
    %5388 = vmatpush2.bf16.xpose.msra.mxu0 %v2080
    %5389 = vmatprep.subr.bf16.mxu0 %v2077
    %5390 = vmatpush2.bf16.xpose.msra.mxu0 %v2076
    %5391 = vmatprep.subr.bf16.mxu0 %v2073
    %5392 = vmatpush2.bf16.xpose.msra.mxu0 %v2072
    %5393 = vmatprep.mubr.bf16.mxu0 %v5030
    %5394 = vmatmul.mubr.bf16.gmra.mxu0 %v5029
    %v5395 = vpop.f32.mrf.mxu0
    %v5396 = vadd.f32 0.0, %v5395
    %v5397 = vpop.f32.mrf.mxu0
    %v5398 = vadd.f32 0.0, %v5397
    %v5399 = vpop.f32.mrf.mxu0
    %v5400 = vpop.f32.mrf.mxu0
    %5401 = vdwg.mxu0
    %5402 = vmatprep.subr.bf16.mxu0 %v2071
    %5403 = vmatpush1.bf16.xpose.msra.mxu0 %v2070
    %5404 = vmatprep.subr.bf16.mxu0 %v2067
    %5405 = vmatpush1.bf16.xpose.msra.mxu0 %v2066
    %5406 = vmatprep.subr.bf16.mxu0 %v2063
    %5407 = vmatpush1.bf16.xpose.msra.mxu0 %v2062
    %5408 = vmatprep.subr.bf16.mxu0 %v2059
    %5409 = vmatpush1.bf16.xpose.msra.mxu0 %v2058
    %5410 = vmatprep.subr.bf16.mxu0 %v2055
    %5411 = vmatpush1.bf16.xpose.msra.mxu0 %v2054
    %5412 = vmatprep.subr.bf16.mxu0 %v2051
    %5413 = vmatpush1.bf16.xpose.msra.mxu0 %v2050
    %5414 = vmatprep.subr.bf16.mxu0 %v2047
    %5415 = vmatpush1.bf16.xpose.msra.mxu0 %v2046
    %5416 = vmatprep.subr.bf16.mxu0 %v2043
    %5417 = vmatpush1.bf16.xpose.msra.mxu0 %v2042
    %5418 = vmatprep.subr.bf16.mxu0 %v2103
    %5419 = vmatpush2.bf16.xpose.msra.mxu0 %v2102
    %5420 = vmatprep.subr.bf16.mxu0 %v2099
    %5421 = vmatpush2.bf16.xpose.msra.mxu0 %v2098
    %5422 = vmatprep.subr.bf16.mxu0 %v2095
    %5423 = vmatpush2.bf16.xpose.msra.mxu0 %v2094
    %5424 = vmatprep.subr.bf16.mxu0 %v2091
    %5425 = vmatpush2.bf16.xpose.msra.mxu0 %v2090
    %5426 = vmatprep.subr.bf16.mxu0 %v2087
    %5427 = vmatpush2.bf16.xpose.msra.mxu0 %v2086
    %5428 = vmatprep.subr.bf16.mxu0 %v2083
    %5429 = vmatpush2.bf16.xpose.msra.mxu0 %v2082
    %5430 = vmatprep.subr.bf16.mxu0 %v2079
    %5431 = vmatpush2.bf16.xpose.msra.mxu0 %v2078
    %5432 = vmatprep.subr.bf16.mxu0 %v2075
    %5433 = vmatpush2.bf16.xpose.msra.mxu0 %v2074
    %5434 = vmatprep.mubr.bf16.mxu0 %v5032
    %5435 = vmatmul.mubr.bf16.gmra.mxu0 %v5031
    %v5436 = vpop.f32.mrf.mxu0
    %v5437 = vadd.f32 %v5396, %v5436
    %v5438 = vpop.f32.mrf.mxu0
    %v5439 = vadd.f32 %v5398, %v5438
    %v5440 = vpop.f32.mrf.mxu0
    %v5441 = vpop.f32.mrf.mxu0
    %5442 = vdwg.mxu0
    %5443 = vmatprep.subr.bf16.mxu0 %v2133
    %5444 = vmatpush1.bf16.xpose.msra.mxu0 %v2132
    %5445 = vmatprep.subr.bf16.mxu0 %v2129
    %5446 = vmatpush1.bf16.xpose.msra.mxu0 %v2128
    %5447 = vmatprep.subr.bf16.mxu0 %v2125
    %5448 = vmatpush1.bf16.xpose.msra.mxu0 %v2124
    %5449 = vmatprep.subr.bf16.mxu0 %v2121
    %5450 = vmatpush1.bf16.xpose.msra.mxu0 %v2120
    %5451 = vmatprep.subr.bf16.mxu0 %v2117
    %5452 = vmatpush1.bf16.xpose.msra.mxu0 %v2116
    %5453 = vmatprep.subr.bf16.mxu0 %v2113
    %5454 = vmatpush1.bf16.xpose.msra.mxu0 %v2112
    %5455 = vmatprep.subr.bf16.mxu0 %v2109
    %5456 = vmatpush1.bf16.xpose.msra.mxu0 %v2108
    %5457 = vmatprep.subr.bf16.mxu0 %v2105
    %5458 = vmatpush1.bf16.xpose.msra.mxu0 %v2104
    %5459 = vmatprep.subr.bf16.mxu0 %v2165
    %5460 = vmatpush2.bf16.xpose.msra.mxu0 %v2164
    %5461 = vmatprep.subr.bf16.mxu0 %v2161
    %5462 = vmatpush2.bf16.xpose.msra.mxu0 %v2160
    %5463 = vmatprep.subr.bf16.mxu0 %v2157
    %5464 = vmatpush2.bf16.xpose.msra.mxu0 %v2156
    %5465 = vmatprep.subr.bf16.mxu0 %v2153
    %5466 = vmatpush2.bf16.xpose.msra.mxu0 %v2152
    %5467 = vmatprep.subr.bf16.mxu0 %v2149
    %5468 = vmatpush2.bf16.xpose.msra.mxu0 %v2148
    %5469 = vmatprep.subr.bf16.mxu0 %v2145
    %5470 = vmatpush2.bf16.xpose.msra.mxu0 %v2144
    %5471 = vmatprep.subr.bf16.mxu0 %v2141
    %5472 = vmatpush2.bf16.xpose.msra.mxu0 %v2140
    %5473 = vmatprep.subr.bf16.mxu0 %v2137
    %5474 = vmatpush2.bf16.xpose.msra.mxu0 %v2136
    %5475 = vmatprep.mubr.bf16.mxu0 %v5030
    %5476 = vmatmul.mubr.bf16.gmra.mxu0 %v5029
    %v5477 = vpop.f32.mrf.mxu0
    %v5478 = vadd.f32 0.0, %v5477
    %v5479 = vpop.f32.mrf.mxu0
    %v5480 = vadd.f32 0.0, %v5479
    %v5481 = vpop.f32.mrf.mxu0
    %v5482 = vpop.f32.mrf.mxu0
    %5483 = vdwg.mxu0
    %5484 = vmatprep.subr.bf16.mxu0 %v2135
    %5485 = vmatpush1.bf16.xpose.msra.mxu0 %v2134
    %5486 = vmatprep.subr.bf16.mxu0 %v2131
    %5487 = vmatpush1.bf16.xpose.msra.mxu0 %v2130
    %5488 = vmatprep.subr.bf16.mxu0 %v2127
    %5489 = vmatpush1.bf16.xpose.msra.mxu0 %v2126
    %5490 = vmatprep.subr.bf16.mxu0 %v2123
    %5491 = vmatpush1.bf16.xpose.msra.mxu0 %v2122
    %5492 = vmatprep.subr.bf16.mxu0 %v2119
    %5493 = vmatpush1.bf16.xpose.msra.mxu0 %v2118
    %5494 = vmatprep.subr.bf16.mxu0 %v2115
    %5495 = vmatpush1.bf16.xpose.msra.mxu0 %v2114
    %5496 = vmatprep.subr.bf16.mxu0 %v2111
    %5497 = vmatpush1.bf16.xpose.msra.mxu0 %v2110
    %5498 = vmatprep.subr.bf16.mxu0 %v2107
    %5499 = vmatpush1.bf16.xpose.msra.mxu0 %v2106
    %5500 = vmatprep.subr.bf16.mxu0 %v2167
    %5501 = vmatpush2.bf16.xpose.msra.mxu0 %v2166
    %5502 = vmatprep.subr.bf16.mxu0 %v2163
    %5503 = vmatpush2.bf16.xpose.msra.mxu0 %v2162
    %5504 = vmatprep.subr.bf16.mxu0 %v2159
    %5505 = vmatpush2.bf16.xpose.msra.mxu0 %v2158
    %5506 = vmatprep.subr.bf16.mxu0 %v2155
    %5507 = vmatpush2.bf16.xpose.msra.mxu0 %v2154
    %5508 = vmatprep.subr.bf16.mxu0 %v2151
    %5509 = vmatpush2.bf16.xpose.msra.mxu0 %v2150
    %5510 = vmatprep.subr.bf16.mxu0 %v2147
    %5511 = vmatpush2.bf16.xpose.msra.mxu0 %v2146
    %5512 = vmatprep.subr.bf16.mxu0 %v2143
    %5513 = vmatpush2.bf16.xpose.msra.mxu0 %v2142
    %5514 = vmatprep.subr.bf16.mxu0 %v2139
    %5515 = vmatpush2.bf16.xpose.msra.mxu0 %v2138
    %5516 = vmatprep.mubr.bf16.mxu0 %v5032
    %5517 = vmatmul.mubr.bf16.gmra.mxu0 %v5031
    %v5518 = vpop.f32.mrf.mxu0
    %v5519 = vadd.f32 %v5478, %v5518
    %v5520 = vpop.f32.mrf.mxu0
    %v5521 = vadd.f32 %v5480, %v5520
    %v5522 = vpop.f32.mrf.mxu0
    %v5523 = vpop.f32.mrf.mxu0
    %5524 = vdwg.mxu0
    %v5525 = vadd.f32 %v5017, %v5109
    %v5526 = vadd.f32 %v5018, %v5111
    %v5527 = vadd.f32 %v5019, %v5191
    %v5528 = vadd.f32 %v5020, %v5193
    %v5529 = vxor.u32 %v5525, 2147483648
    %v5530 = vxor.u32 %v5526, 2147483648
    %v5531 = vxor.u32 %v5527, 2147483648
    %v5532 = vxor.u32 %v5528, 2147483648
    %v5533 = vmul.f32 %v5529, 1.442695
    %v5534 = vpow.pop %v5533
    %v5535 = vmul.f32 %v5530, 1.442695
    %v5536 = vpow.pop %v5535
    %v5537 = vmul.f32 %v5531, 1.442695
    %v5538 = vpow.pop %v5537
    %v5539 = vmul.f32 %v5532, 1.442695
    %v5540 = vpow.pop %v5539
    %v5541 = vadd.f32 %v5534, 1.0
    %v5542 = vadd.f32 %v5536, 1.0
    %v5543 = vadd.f32 %v5538, 1.0
    %v5544 = vadd.f32 %v5540, 1.0
    %v5545 = vrcp.pop %v5541
    %v5546 = vmul.f32 1.0, %v5545
    %v5547 = vrcp.pop %v5542
    %v5548 = vmul.f32 1.0, %v5547
    %v5549 = vrcp.pop %v5543
    %v5550 = vmul.f32 1.0, %v5549
    %v5551 = vrcp.pop %v5544
    %v5552 = vmul.f32 1.0, %v5551
    %v5553 = vadd.f32 %v5021, %v5273
    %v5554 = vadd.f32 %v5022, %v5275
    %v5555 = vadd.f32 %v5023, %v5355
    %v5556 = vadd.f32 %v5024, %v5357
    %v5557 = vxor.u32 %v5553, 2147483648
    %v5558 = vxor.u32 %v5554, 2147483648
    %v5559 = vxor.u32 %v5555, 2147483648
    %v5560 = vxor.u32 %v5556, 2147483648
    %v5561 = vmul.f32 %v5557, 1.442695
    %v5562 = vpow.pop %v5561
    %v5563 = vmul.f32 %v5558, 1.442695
    %v5564 = vpow.pop %v5563
    %v5565 = vmul.f32 %v5559, 1.442695
    %v5566 = vpow.pop %v5565
    %v5567 = vmul.f32 %v5560, 1.442695
    %v5568 = vpow.pop %v5567
    %v5569 = vadd.f32 %v5562, 1.0
    %v5570 = vadd.f32 %v5564, 1.0
    %v5571 = vadd.f32 %v5566, 1.0
    %v5572 = vadd.f32 %v5568, 1.0
    %v5573 = vrcp.pop %v5569
    %v5574 = vmul.f32 1.0, %v5573
    %v5575 = vrcp.pop %v5570
    %v5576 = vmul.f32 1.0, %v5575
    %v5577 = vrcp.pop %v5571
    %v5578 = vmul.f32 1.0, %v5577
    %v5579 = vrcp.pop %v5572
    %v5580 = vmul.f32 1.0, %v5579
    %v5581 = vadd.f32 %v5437, %v3104
    %v5582 = vadd.f32 %v5439, %v3108
    %v5583 = vadd.f32 %v5519, %v3112
    %v5584 = vadd.f32 %v5521, %v3116
    %v5585 = vmul.f32 %v5546, %v5581
    %v5586 = vmul.f32 %v5548, %v5582
    %v5587 = vmul.f32 %v5550, %v5583
    %v5588 = vmul.f32 %v5552, %v5584
    %v5589 = vadd.f32 %v5025, %v5585
    %v5590 = vadd.f32 %v5026, %v5586
    %v5591 = vadd.f32 %v5027, %v5587
    %v5592 = vadd.f32 %v5028, %v5588
    %v5593 = vtanh.pop %v5589
    %v5594 = vtanh.pop %v5590
    %v5595 = vtanh.pop %v5591
    %v5596 = vtanh.pop %v5592
    %v5597 = vsub.f32 1.0, %v5574
    %v5598 = vsub.f32 1.0, %v5576
    %v5599 = vsub.f32 1.0, %v5578
    %v5600 = vsub.f32 1.0, %v5580
    %v5601 = vmul.f32 %v5597, %v5593
    %v5602 = vmul.f32 %v5598, %v5594
    %v5603 = vmul.f32 %v5599, %v5595
    %v5604 = vmul.f32 %v5600, %v5596
    %v5605 = vmul.f32 %v5574, %v4994
    %v5606 = vmul.f32 %v5576, %v4995
    %v5607 = vmul.f32 %v5578, %v4996
    %v5608 = vmul.f32 %v5580, %v4997
    %v5609 = vadd.f32 %v5601, %v5605
    %v5610 = vadd.f32 %v5602, %v5606
    %v5611 = vadd.f32 %v5603, %v5607
    %v5612 = vadd.f32 %v5604, %v5608
    %s5613 = scalar_lea.vmem %s0, 40
    %v5614 = vld [vmem:[%s5613] sm:$0xff]
    %5616 = vset.pattern.permute.xlu0 0
    %5617 = vperm.xlu0 %5616, %v5614
    %v5618 = vpop.permute.xlu0 %5617
    %v5620 = vmul.f32 %v5618, %v489
    %v5621 = vmul.f32 %v5618, %v493
    %v5622 = vmul.f32 %v5618, %v497
    %v5623 = vmul.f32 %v5618, %v501
    %v5624 = vmul.f32 %v5618, %v505
    %v5625 = vmul.f32 %v5618, %v509
    %v5626 = vmul.f32 %v5618, %v513
    %v5627 = vmul.f32 %v5618, %v517
    %v5628 = vmul.f32 %v5618, %v521
    %v5629 = vmul.f32 %v5618, %v525
    %v5630 = vmul.f32 %v5618, %v529
    %v5631 = vmul.f32 %v5618, %v533
    %v5632 = vadd.f32 %v5620, %v563
    %v5633 = vadd.f32 %v5621, %v567
    %v5634 = vadd.f32 %v5622, %v571
    %v5635 = vadd.f32 %v5623, %v575
    %v5636 = vadd.f32 %v5624, %v579
    %v5637 = vadd.f32 %v5625, %v583
    %v5638 = vadd.f32 %v5626, %v587
    %v5639 = vadd.f32 %v5627, %v591
    %v5640 = vadd.f32 %v5628, %v595
    %v5641 = vadd.f32 %v5629, %v599
    %v5642 = vadd.f32 %v5630, %v603
    %v5643 = vadd.f32 %v5631, %v607
    %v5644 = vpack.c.bf16 %v5609, %v5609
    %v5645 = vpack.c.bf16 %v5610, %v5610
    %v5646 = vpack.c.bf16 %v5611, %v5611
    %v5647 = vpack.c.bf16 %v5612, %v5612
    %5648 = vmatprep.subr.bf16.mxu0 %v1813
    %5649 = vmatpush1.bf16.xpose.msra.mxu0 %v1812
    %5650 = vmatprep.subr.bf16.mxu0 %v1809
    %5651 = vmatpush1.bf16.xpose.msra.mxu0 %v1808
    %5652 = vmatprep.subr.bf16.mxu0 %v1805
    %5653 = vmatpush1.bf16.xpose.msra.mxu0 %v1804
    %5654 = vmatprep.subr.bf16.mxu0 %v1801
    %5655 = vmatpush1.bf16.xpose.msra.mxu0 %v1800
    %5656 = vmatprep.subr.bf16.mxu0 %v1797
    %5657 = vmatpush1.bf16.xpose.msra.mxu0 %v1796
    %5658 = vmatprep.subr.bf16.mxu0 %v1793
    %5659 = vmatpush1.bf16.xpose.msra.mxu0 %v1792
    %5660 = vmatprep.subr.bf16.mxu0 %v1789
    %5661 = vmatpush1.bf16.xpose.msra.mxu0 %v1788
    %5662 = vmatprep.subr.bf16.mxu0 %v1785
    %5663 = vmatpush1.bf16.xpose.msra.mxu0 %v1784
    %5664 = vmatprep.subr.bf16.mxu0 %v1845
    %5665 = vmatpush2.bf16.xpose.msra.mxu0 %v1844
    %5666 = vmatprep.subr.bf16.mxu0 %v1841
    %5667 = vmatpush2.bf16.xpose.msra.mxu0 %v1840
    %5668 = vmatprep.subr.bf16.mxu0 %v1837
    %5669 = vmatpush2.bf16.xpose.msra.mxu0 %v1836
    %5670 = vmatprep.subr.bf16.mxu0 %v1833
    %5671 = vmatpush2.bf16.xpose.msra.mxu0 %v1832
    %5672 = vmatprep.subr.bf16.mxu0 %v1829
    %5673 = vmatpush2.bf16.xpose.msra.mxu0 %v1828
    %5674 = vmatprep.subr.bf16.mxu0 %v1825
    %5675 = vmatpush2.bf16.xpose.msra.mxu0 %v1824
    %5676 = vmatprep.subr.bf16.mxu0 %v1821
    %5677 = vmatpush2.bf16.xpose.msra.mxu0 %v1820
    %5678 = vmatprep.subr.bf16.mxu0 %v1817
    %5679 = vmatpush2.bf16.xpose.msra.mxu0 %v1816
    %5680 = vmatprep.mubr.bf16.mxu0 %v5645
    %5681 = vmatmul.mubr.bf16.gmra.mxu0 %v5644
    %v5682 = vpop.f32.mrf.mxu0
    %v5683 = vadd.f32 0.0, %v5682
    %v5684 = vpop.f32.mrf.mxu0
    %v5685 = vadd.f32 0.0, %v5684
    %v5686 = vpop.f32.mrf.mxu0
    %v5687 = vpop.f32.mrf.mxu0
    %5688 = vdwg.mxu0
    %5689 = vmatprep.subr.bf16.mxu0 %v1815
    %5690 = vmatpush1.bf16.xpose.msra.mxu0 %v1814
    %5691 = vmatprep.subr.bf16.mxu0 %v1811
    %5692 = vmatpush1.bf16.xpose.msra.mxu0 %v1810
    %5693 = vmatprep.subr.bf16.mxu0 %v1807
    %5694 = vmatpush1.bf16.xpose.msra.mxu0 %v1806
    %5695 = vmatprep.subr.bf16.mxu0 %v1803
    %5696 = vmatpush1.bf16.xpose.msra.mxu0 %v1802
    %5697 = vmatprep.subr.bf16.mxu0 %v1799
    %5698 = vmatpush1.bf16.xpose.msra.mxu0 %v1798
    %5699 = vmatprep.subr.bf16.mxu0 %v1795
    %5700 = vmatpush1.bf16.xpose.msra.mxu0 %v1794
    %5701 = vmatprep.subr.bf16.mxu0 %v1791
    %5702 = vmatpush1.bf16.xpose.msra.mxu0 %v1790
    %5703 = vmatprep.subr.bf16.mxu0 %v1787
    %5704 = vmatpush1.bf16.xpose.msra.mxu0 %v1786
    %5705 = vmatprep.subr.bf16.mxu0 %v1847
    %5706 = vmatpush2.bf16.xpose.msra.mxu0 %v1846
    %5707 = vmatprep.subr.bf16.mxu0 %v1843
    %5708 = vmatpush2.bf16.xpose.msra.mxu0 %v1842
    %5709 = vmatprep.subr.bf16.mxu0 %v1839
    %5710 = vmatpush2.bf16.xpose.msra.mxu0 %v1838
    %5711 = vmatprep.subr.bf16.mxu0 %v1835
    %5712 = vmatpush2.bf16.xpose.msra.mxu0 %v1834
    %5713 = vmatprep.subr.bf16.mxu0 %v1831
    %5714 = vmatpush2.bf16.xpose.msra.mxu0 %v1830
    %5715 = vmatprep.subr.bf16.mxu0 %v1827
    %5716 = vmatpush2.bf16.xpose.msra.mxu0 %v1826
    %5717 = vmatprep.subr.bf16.mxu0 %v1823
    %5718 = vmatpush2.bf16.xpose.msra.mxu0 %v1822
    %5719 = vmatprep.subr.bf16.mxu0 %v1819
    %5720 = vmatpush2.bf16.xpose.msra.mxu0 %v1818
    %5721 = vmatprep.mubr.bf16.mxu0 %v5647
    %5722 = vmatmul.mubr.bf16.gmra.mxu0 %v5646
    %v5723 = vpop.f32.mrf.mxu0
    %v5724 = vadd.f32 %v5683, %v5723
    %v5725 = vpop.f32.mrf.mxu0
    %v5726 = vadd.f32 %v5685, %v5725
    %v5727 = vpop.f32.mrf.mxu0
    %v5728 = vpop.f32.mrf.mxu0
    %5729 = vdwg.mxu0
    %5730 = vmatprep.subr.bf16.mxu0 %v1877
    %5731 = vmatpush1.bf16.xpose.msra.mxu0 %v1876
    %5732 = vmatprep.subr.bf16.mxu0 %v1873
    %5733 = vmatpush1.bf16.xpose.msra.mxu0 %v1872
    %5734 = vmatprep.subr.bf16.mxu0 %v1869
    %5735 = vmatpush1.bf16.xpose.msra.mxu0 %v1868
    %5736 = vmatprep.subr.bf16.mxu0 %v1865
    %5737 = vmatpush1.bf16.xpose.msra.mxu0 %v1864
    %5738 = vmatprep.subr.bf16.mxu0 %v1861
    %5739 = vmatpush1.bf16.xpose.msra.mxu0 %v1860
    %5740 = vmatprep.subr.bf16.mxu0 %v1857
    %5741 = vmatpush1.bf16.xpose.msra.mxu0 %v1856
    %5742 = vmatprep.subr.bf16.mxu0 %v1853
    %5743 = vmatpush1.bf16.xpose.msra.mxu0 %v1852
    %5744 = vmatprep.subr.bf16.mxu0 %v1849
    %5745 = vmatpush1.bf16.xpose.msra.mxu0 %v1848
    %5746 = vmatprep.subr.bf16.mxu0 %v1909
    %5747 = vmatpush2.bf16.xpose.msra.mxu0 %v1908
    %5748 = vmatprep.subr.bf16.mxu0 %v1905
    %5749 = vmatpush2.bf16.xpose.msra.mxu0 %v1904
    %5750 = vmatprep.subr.bf16.mxu0 %v1901
    %5751 = vmatpush2.bf16.xpose.msra.mxu0 %v1900
    %5752 = vmatprep.subr.bf16.mxu0 %v1897
    %5753 = vmatpush2.bf16.xpose.msra.mxu0 %v1896
    %5754 = vmatprep.subr.bf16.mxu0 %v1893
    %5755 = vmatpush2.bf16.xpose.msra.mxu0 %v1892
    %5756 = vmatprep.subr.bf16.mxu0 %v1889
    %5757 = vmatpush2.bf16.xpose.msra.mxu0 %v1888
    %5758 = vmatprep.subr.bf16.mxu0 %v1885
    %5759 = vmatpush2.bf16.xpose.msra.mxu0 %v1884
    %5760 = vmatprep.subr.bf16.mxu0 %v1881
    %5761 = vmatpush2.bf16.xpose.msra.mxu0 %v1880
    %5762 = vmatprep.mubr.bf16.mxu0 %v5645
    %5763 = vmatmul.mubr.bf16.gmra.mxu0 %v5644
    %v5764 = vpop.f32.mrf.mxu0
    %v5765 = vadd.f32 0.0, %v5764
    %v5766 = vpop.f32.mrf.mxu0
    %v5767 = vadd.f32 0.0, %v5766
    %v5768 = vpop.f32.mrf.mxu0
    %v5769 = vpop.f32.mrf.mxu0
    %5770 = vdwg.mxu0
    %5771 = vmatprep.subr.bf16.mxu0 %v1879
    %5772 = vmatpush1.bf16.xpose.msra.mxu0 %v1878
    %5773 = vmatprep.subr.bf16.mxu0 %v1875
    %5774 = vmatpush1.bf16.xpose.msra.mxu0 %v1874
    %5775 = vmatprep.subr.bf16.mxu0 %v1871
    %5776 = vmatpush1.bf16.xpose.msra.mxu0 %v1870
    %5777 = vmatprep.subr.bf16.mxu0 %v1867
    %5778 = vmatpush1.bf16.xpose.msra.mxu0 %v1866
    %5779 = vmatprep.subr.bf16.mxu0 %v1863
    %5780 = vmatpush1.bf16.xpose.msra.mxu0 %v1862
    %5781 = vmatprep.subr.bf16.mxu0 %v1859
    %5782 = vmatpush1.bf16.xpose.msra.mxu0 %v1858
    %5783 = vmatprep.subr.bf16.mxu0 %v1855
    %5784 = vmatpush1.bf16.xpose.msra.mxu0 %v1854
    %5785 = vmatprep.subr.bf16.mxu0 %v1851
    %5786 = vmatpush1.bf16.xpose.msra.mxu0 %v1850
    %5787 = vmatprep.subr.bf16.mxu0 %v1911
    %5788 = vmatpush2.bf16.xpose.msra.mxu0 %v1910
    %5789 = vmatprep.subr.bf16.mxu0 %v1907
    %5790 = vmatpush2.bf16.xpose.msra.mxu0 %v1906
    %5791 = vmatprep.subr.bf16.mxu0 %v1903
    %5792 = vmatpush2.bf16.xpose.msra.mxu0 %v1902
    %5793 = vmatprep.subr.bf16.mxu0 %v1899
    %5794 = vmatpush2.bf16.xpose.msra.mxu0 %v1898
    %5795 = vmatprep.subr.bf16.mxu0 %v1895
    %5796 = vmatpush2.bf16.xpose.msra.mxu0 %v1894
    %5797 = vmatprep.subr.bf16.mxu0 %v1891
    %5798 = vmatpush2.bf16.xpose.msra.mxu0 %v1890
    %5799 = vmatprep.subr.bf16.mxu0 %v1887
    %5800 = vmatpush2.bf16.xpose.msra.mxu0 %v1886
    %5801 = vmatprep.subr.bf16.mxu0 %v1883
    %5802 = vmatpush2.bf16.xpose.msra.mxu0 %v1882
    %5803 = vmatprep.mubr.bf16.mxu0 %v5647
    %5804 = vmatmul.mubr.bf16.gmra.mxu0 %v5646
    %v5805 = vpop.f32.mrf.mxu0
    %v5806 = vadd.f32 %v5765, %v5805
    %v5807 = vpop.f32.mrf.mxu0
    %v5808 = vadd.f32 %v5767, %v5807
    %v5809 = vpop.f32.mrf.mxu0
    %v5810 = vpop.f32.mrf.mxu0
    %5811 = vdwg.mxu0
    %5812 = vmatprep.subr.bf16.mxu0 %v1941
    %5813 = vmatpush1.bf16.xpose.msra.mxu0 %v1940
    %5814 = vmatprep.subr.bf16.mxu0 %v1937
    %5815 = vmatpush1.bf16.xpose.msra.mxu0 %v1936
    %5816 = vmatprep.subr.bf16.mxu0 %v1933
    %5817 = vmatpush1.bf16.xpose.msra.mxu0 %v1932
    %5818 = vmatprep.subr.bf16.mxu0 %v1929
    %5819 = vmatpush1.bf16.xpose.msra.mxu0 %v1928
    %5820 = vmatprep.subr.bf16.mxu0 %v1925
    %5821 = vmatpush1.bf16.xpose.msra.mxu0 %v1924
    %5822 = vmatprep.subr.bf16.mxu0 %v1921
    %5823 = vmatpush1.bf16.xpose.msra.mxu0 %v1920
    %5824 = vmatprep.subr.bf16.mxu0 %v1917
    %5825 = vmatpush1.bf16.xpose.msra.mxu0 %v1916
    %5826 = vmatprep.subr.bf16.mxu0 %v1913
    %5827 = vmatpush1.bf16.xpose.msra.mxu0 %v1912
    %5828 = vmatprep.subr.bf16.mxu0 %v1973
    %5829 = vmatpush2.bf16.xpose.msra.mxu0 %v1972
    %5830 = vmatprep.subr.bf16.mxu0 %v1969
    %5831 = vmatpush2.bf16.xpose.msra.mxu0 %v1968
    %5832 = vmatprep.subr.bf16.mxu0 %v1965
    %5833 = vmatpush2.bf16.xpose.msra.mxu0 %v1964
    %5834 = vmatprep.subr.bf16.mxu0 %v1961
    %5835 = vmatpush2.bf16.xpose.msra.mxu0 %v1960
    %5836 = vmatprep.subr.bf16.mxu0 %v1957
    %5837 = vmatpush2.bf16.xpose.msra.mxu0 %v1956
    %5838 = vmatprep.subr.bf16.mxu0 %v1953
    %5839 = vmatpush2.bf16.xpose.msra.mxu0 %v1952
    %5840 = vmatprep.subr.bf16.mxu0 %v1949
    %5841 = vmatpush2.bf16.xpose.msra.mxu0 %v1948
    %5842 = vmatprep.subr.bf16.mxu0 %v1945
    %5843 = vmatpush2.bf16.xpose.msra.mxu0 %v1944
    %5844 = vmatprep.mubr.bf16.mxu0 %v5645
    %5845 = vmatmul.mubr.bf16.gmra.mxu0 %v5644
    %v5846 = vpop.f32.mrf.mxu0
    %v5847 = vadd.f32 0.0, %v5846
    %v5848 = vpop.f32.mrf.mxu0
    %v5849 = vadd.f32 0.0, %v5848
    %v5850 = vpop.f32.mrf.mxu0
    %v5851 = vpop.f32.mrf.mxu0
    %5852 = vdwg.mxu0
    %5853 = vmatprep.subr.bf16.mxu0 %v1943
    %5854 = vmatpush1.bf16.xpose.msra.mxu0 %v1942
    %5855 = vmatprep.subr.bf16.mxu0 %v1939
    %5856 = vmatpush1.bf16.xpose.msra.mxu0 %v1938
    %5857 = vmatprep.subr.bf16.mxu0 %v1935
    %5858 = vmatpush1.bf16.xpose.msra.mxu0 %v1934
    %5859 = vmatprep.subr.bf16.mxu0 %v1931
    %5860 = vmatpush1.bf16.xpose.msra.mxu0 %v1930
    %5861 = vmatprep.subr.bf16.mxu0 %v1927
    %5862 = vmatpush1.bf16.xpose.msra.mxu0 %v1926
    %5863 = vmatprep.subr.bf16.mxu0 %v1923
    %5864 = vmatpush1.bf16.xpose.msra.mxu0 %v1922
    %5865 = vmatprep.subr.bf16.mxu0 %v1919
    %5866 = vmatpush1.bf16.xpose.msra.mxu0 %v1918
    %5867 = vmatprep.subr.bf16.mxu0 %v1915
    %5868 = vmatpush1.bf16.xpose.msra.mxu0 %v1914
    %5869 = vmatprep.subr.bf16.mxu0 %v1975
    %5870 = vmatpush2.bf16.xpose.msra.mxu0 %v1974
    %5871 = vmatprep.subr.bf16.mxu0 %v1971
    %5872 = vmatpush2.bf16.xpose.msra.mxu0 %v1970
    %5873 = vmatprep.subr.bf16.mxu0 %v1967
    %5874 = vmatpush2.bf16.xpose.msra.mxu0 %v1966
    %5875 = vmatprep.subr.bf16.mxu0 %v1963
    %5876 = vmatpush2.bf16.xpose.msra.mxu0 %v1962
    %5877 = vmatprep.subr.bf16.mxu0 %v1959
    %5878 = vmatpush2.bf16.xpose.msra.mxu0 %v1958
    %5879 = vmatprep.subr.bf16.mxu0 %v1955
    %5880 = vmatpush2.bf16.xpose.msra.mxu0 %v1954
    %5881 = vmatprep.subr.bf16.mxu0 %v1951
    %5882 = vmatpush2.bf16.xpose.msra.mxu0 %v1950
    %5883 = vmatprep.subr.bf16.mxu0 %v1947
    %5884 = vmatpush2.bf16.xpose.msra.mxu0 %v1946
    %5885 = vmatprep.mubr.bf16.mxu0 %v5647
    %5886 = vmatmul.mubr.bf16.gmra.mxu0 %v5646
    %v5887 = vpop.f32.mrf.mxu0
    %v5888 = vadd.f32 %v5847, %v5887
    %v5889 = vpop.f32.mrf.mxu0
    %v5890 = vadd.f32 %v5849, %v5889
    %v5891 = vpop.f32.mrf.mxu0
    %v5892 = vpop.f32.mrf.mxu0
    %5893 = vdwg.mxu0
    %5894 = vmatprep.subr.bf16.mxu0 %v2005
    %5895 = vmatpush1.bf16.xpose.msra.mxu0 %v2004
    %5896 = vmatprep.subr.bf16.mxu0 %v2001
    %5897 = vmatpush1.bf16.xpose.msra.mxu0 %v2000
    %5898 = vmatprep.subr.bf16.mxu0 %v1997
    %5899 = vmatpush1.bf16.xpose.msra.mxu0 %v1996
    %5900 = vmatprep.subr.bf16.mxu0 %v1993
    %5901 = vmatpush1.bf16.xpose.msra.mxu0 %v1992
    %5902 = vmatprep.subr.bf16.mxu0 %v1989
    %5903 = vmatpush1.bf16.xpose.msra.mxu0 %v1988
    %5904 = vmatprep.subr.bf16.mxu0 %v1985
    %5905 = vmatpush1.bf16.xpose.msra.mxu0 %v1984
    %5906 = vmatprep.subr.bf16.mxu0 %v1981
    %5907 = vmatpush1.bf16.xpose.msra.mxu0 %v1980
    %5908 = vmatprep.subr.bf16.mxu0 %v1977
    %5909 = vmatpush1.bf16.xpose.msra.mxu0 %v1976
    %5910 = vmatprep.subr.bf16.mxu0 %v2037
    %5911 = vmatpush2.bf16.xpose.msra.mxu0 %v2036
    %5912 = vmatprep.subr.bf16.mxu0 %v2033
    %5913 = vmatpush2.bf16.xpose.msra.mxu0 %v2032
    %5914 = vmatprep.subr.bf16.mxu0 %v2029
    %5915 = vmatpush2.bf16.xpose.msra.mxu0 %v2028
    %5916 = vmatprep.subr.bf16.mxu0 %v2025
    %5917 = vmatpush2.bf16.xpose.msra.mxu0 %v2024
    %5918 = vmatprep.subr.bf16.mxu0 %v2021
    %5919 = vmatpush2.bf16.xpose.msra.mxu0 %v2020
    %5920 = vmatprep.subr.bf16.mxu0 %v2017
    %5921 = vmatpush2.bf16.xpose.msra.mxu0 %v2016
    %5922 = vmatprep.subr.bf16.mxu0 %v2013
    %5923 = vmatpush2.bf16.xpose.msra.mxu0 %v2012
    %5924 = vmatprep.subr.bf16.mxu0 %v2009
    %5925 = vmatpush2.bf16.xpose.msra.mxu0 %v2008
    %5926 = vmatprep.mubr.bf16.mxu0 %v5645
    %5927 = vmatmul.mubr.bf16.gmra.mxu0 %v5644
    %v5928 = vpop.f32.mrf.mxu0
    %v5929 = vadd.f32 0.0, %v5928
    %v5930 = vpop.f32.mrf.mxu0
    %v5931 = vadd.f32 0.0, %v5930
    %v5932 = vpop.f32.mrf.mxu0
    %v5933 = vpop.f32.mrf.mxu0
    %5934 = vdwg.mxu0
    %5935 = vmatprep.subr.bf16.mxu0 %v2007
    %5936 = vmatpush1.bf16.xpose.msra.mxu0 %v2006
    %5937 = vmatprep.subr.bf16.mxu0 %v2003
    %5938 = vmatpush1.bf16.xpose.msra.mxu0 %v2002
    %5939 = vmatprep.subr.bf16.mxu0 %v1999
    %5940 = vmatpush1.bf16.xpose.msra.mxu0 %v1998
    %5941 = vmatprep.subr.bf16.mxu0 %v1995
    %5942 = vmatpush1.bf16.xpose.msra.mxu0 %v1994
    %5943 = vmatprep.subr.bf16.mxu0 %v1991
    %5944 = vmatpush1.bf16.xpose.msra.mxu0 %v1990
    %5945 = vmatprep.subr.bf16.mxu0 %v1987
    %5946 = vmatpush1.bf16.xpose.msra.mxu0 %v1986
    %5947 = vmatprep.subr.bf16.mxu0 %v1983
    %5948 = vmatpush1.bf16.xpose.msra.mxu0 %v1982
    %5949 = vmatprep.subr.bf16.mxu0 %v1979
    %5950 = vmatpush1.bf16.xpose.msra.mxu0 %v1978
    %5951 = vmatprep.subr.bf16.mxu0 %v2039
    %5952 = vmatpush2.bf16.xpose.msra.mxu0 %v2038
    %5953 = vmatprep.subr.bf16.mxu0 %v2035
    %5954 = vmatpush2.bf16.xpose.msra.mxu0 %v2034
    %5955 = vmatprep.subr.bf16.mxu0 %v2031
    %5956 = vmatpush2.bf16.xpose.msra.mxu0 %v2030
    %5957 = vmatprep.subr.bf16.mxu0 %v2027
    %5958 = vmatpush2.bf16.xpose.msra.mxu0 %v2026
    %5959 = vmatprep.subr.bf16.mxu0 %v2023
    %5960 = vmatpush2.bf16.xpose.msra.mxu0 %v2022
    %5961 = vmatprep.subr.bf16.mxu0 %v2019
    %5962 = vmatpush2.bf16.xpose.msra.mxu0 %v2018
    %5963 = vmatprep.subr.bf16.mxu0 %v2015
    %5964 = vmatpush2.bf16.xpose.msra.mxu0 %v2014
    %5965 = vmatprep.subr.bf16.mxu0 %v2011
    %5966 = vmatpush2.bf16.xpose.msra.mxu0 %v2010
    %5967 = vmatprep.mubr.bf16.mxu0 %v5647
    %5968 = vmatmul.mubr.bf16.gmra.mxu0 %v5646
    %v5969 = vpop.f32.mrf.mxu0
    %v5970 = vadd.f32 %v5929, %v5969
    %v5971 = vpop.f32.mrf.mxu0
    %v5972 = vadd.f32 %v5931, %v5971
    %v5973 = vpop.f32.mrf.mxu0
    %v5974 = vpop.f32.mrf.mxu0
    %5975 = vdwg.mxu0
    %5976 = vmatprep.subr.bf16.mxu0 %v2069
    %5977 = vmatpush1.bf16.xpose.msra.mxu0 %v2068
    %5978 = vmatprep.subr.bf16.mxu0 %v2065
    %5979 = vmatpush1.bf16.xpose.msra.mxu0 %v2064
    %5980 = vmatprep.subr.bf16.mxu0 %v2061
    %5981 = vmatpush1.bf16.xpose.msra.mxu0 %v2060
    %5982 = vmatprep.subr.bf16.mxu0 %v2057
    %5983 = vmatpush1.bf16.xpose.msra.mxu0 %v2056
    %5984 = vmatprep.subr.bf16.mxu0 %v2053
    %5985 = vmatpush1.bf16.xpose.msra.mxu0 %v2052
    %5986 = vmatprep.subr.bf16.mxu0 %v2049
    %5987 = vmatpush1.bf16.xpose.msra.mxu0 %v2048
    %5988 = vmatprep.subr.bf16.mxu0 %v2045
    %5989 = vmatpush1.bf16.xpose.msra.mxu0 %v2044
    %5990 = vmatprep.subr.bf16.mxu0 %v2041
    %5991 = vmatpush1.bf16.xpose.msra.mxu0 %v2040
    %5992 = vmatprep.subr.bf16.mxu0 %v2101
    %5993 = vmatpush2.bf16.xpose.msra.mxu0 %v2100
    %5994 = vmatprep.subr.bf16.mxu0 %v2097
    %5995 = vmatpush2.bf16.xpose.msra.mxu0 %v2096
    %5996 = vmatprep.subr.bf16.mxu0 %v2093
    %5997 = vmatpush2.bf16.xpose.msra.mxu0 %v2092
    %5998 = vmatprep.subr.bf16.mxu0 %v2089
    %5999 = vmatpush2.bf16.xpose.msra.mxu0 %v2088
    %6000 = vmatprep.subr.bf16.mxu0 %v2085
    %6001 = vmatpush2.bf16.xpose.msra.mxu0 %v2084
    %6002 = vmatprep.subr.bf16.mxu0 %v2081
    %6003 = vmatpush2.bf16.xpose.msra.mxu0 %v2080
    %6004 = vmatprep.subr.bf16.mxu0 %v2077
    %6005 = vmatpush2.bf16.xpose.msra.mxu0 %v2076
    %6006 = vmatprep.subr.bf16.mxu0 %v2073
    %6007 = vmatpush2.bf16.xpose.msra.mxu0 %v2072
    %6008 = vmatprep.mubr.bf16.mxu0 %v5645
    %6009 = vmatmul.mubr.bf16.gmra.mxu0 %v5644
    %v6010 = vpop.f32.mrf.mxu0
    %v6011 = vadd.f32 0.0, %v6010
    %v6012 = vpop.f32.mrf.mxu0
    %v6013 = vadd.f32 0.0, %v6012
    %v6014 = vpop.f32.mrf.mxu0
    %v6015 = vpop.f32.mrf.mxu0
    %6016 = vdwg.mxu0
    %6017 = vmatprep.subr.bf16.mxu0 %v2071
    %6018 = vmatpush1.bf16.xpose.msra.mxu0 %v2070
    %6019 = vmatprep.subr.bf16.mxu0 %v2067
    %6020 = vmatpush1.bf16.xpose.msra.mxu0 %v2066
    %6021 = vmatprep.subr.bf16.mxu0 %v2063
    %6022 = vmatpush1.bf16.xpose.msra.mxu0 %v2062
    %6023 = vmatprep.subr.bf16.mxu0 %v2059
    %6024 = vmatpush1.bf16.xpose.msra.mxu0 %v2058
    %6025 = vmatprep.subr.bf16.mxu0 %v2055
    %6026 = vmatpush1.bf16.xpose.msra.mxu0 %v2054
    %6027 = vmatprep.subr.bf16.mxu0 %v2051
    %6028 = vmatpush1.bf16.xpose.msra.mxu0 %v2050
    %6029 = vmatprep.subr.bf16.mxu0 %v2047
    %6030 = vmatpush1.bf16.xpose.msra.mxu0 %v2046
    %6031 = vmatprep.subr.bf16.mxu0 %v2043
    %6032 = vmatpush1.bf16.xpose.msra.mxu0 %v2042
    %6033 = vmatprep.subr.bf16.mxu0 %v2103
    %6034 = vmatpush2.bf16.xpose.msra.mxu0 %v2102
    %6035 = vmatprep.subr.bf16.mxu0 %v2099
    %6036 = vmatpush2.bf16.xpose.msra.mxu0 %v2098
    %6037 = vmatprep.subr.bf16.mxu0 %v2095
    %6038 = vmatpush2.bf16.xpose.msra.mxu0 %v2094
    %6039 = vmatprep.subr.bf16.mxu0 %v2091
    %6040 = vmatpush2.bf16.xpose.msra.mxu0 %v2090
    %6041 = vmatprep.subr.bf16.mxu0 %v2087
    %6042 = vmatpush2.bf16.xpose.msra.mxu0 %v2086
    %6043 = vmatprep.subr.bf16.mxu0 %v2083
    %6044 = vmatpush2.bf16.xpose.msra.mxu0 %v2082
    %6045 = vmatprep.subr.bf16.mxu0 %v2079
    %6046 = vmatpush2.bf16.xpose.msra.mxu0 %v2078
    %6047 = vmatprep.subr.bf16.mxu0 %v2075
    %6048 = vmatpush2.bf16.xpose.msra.mxu0 %v2074
    %6049 = vmatprep.mubr.bf16.mxu0 %v5647
    %6050 = vmatmul.mubr.bf16.gmra.mxu0 %v5646
    %v6051 = vpop.f32.mrf.mxu0
    %v6052 = vadd.f32 %v6011, %v6051
    %v6053 = vpop.f32.mrf.mxu0
    %v6054 = vadd.f32 %v6013, %v6053
    %v6055 = vpop.f32.mrf.mxu0
    %v6056 = vpop.f32.mrf.mxu0
    %6057 = vdwg.mxu0
    %6058 = vmatprep.subr.bf16.mxu0 %v2133
    %6059 = vmatpush1.bf16.xpose.msra.mxu0 %v2132
    %6060 = vmatprep.subr.bf16.mxu0 %v2129
    %6061 = vmatpush1.bf16.xpose.msra.mxu0 %v2128
    %6062 = vmatprep.subr.bf16.mxu0 %v2125
    %6063 = vmatpush1.bf16.xpose.msra.mxu0 %v2124
    %6064 = vmatprep.subr.bf16.mxu0 %v2121
    %6065 = vmatpush1.bf16.xpose.msra.mxu0 %v2120
    %6066 = vmatprep.subr.bf16.mxu0 %v2117
    %6067 = vmatpush1.bf16.xpose.msra.mxu0 %v2116
    %6068 = vmatprep.subr.bf16.mxu0 %v2113
    %6069 = vmatpush1.bf16.xpose.msra.mxu0 %v2112
    %6070 = vmatprep.subr.bf16.mxu0 %v2109
    %6071 = vmatpush1.bf16.xpose.msra.mxu0 %v2108
    %6072 = vmatprep.subr.bf16.mxu0 %v2105
    %6073 = vmatpush1.bf16.xpose.msra.mxu0 %v2104
    %6074 = vmatprep.subr.bf16.mxu0 %v2165
    %6075 = vmatpush2.bf16.xpose.msra.mxu0 %v2164
    %6076 = vmatprep.subr.bf16.mxu0 %v2161
    %6077 = vmatpush2.bf16.xpose.msra.mxu0 %v2160
    %6078 = vmatprep.subr.bf16.mxu0 %v2157
    %6079 = vmatpush2.bf16.xpose.msra.mxu0 %v2156
    %6080 = vmatprep.subr.bf16.mxu0 %v2153
    %6081 = vmatpush2.bf16.xpose.msra.mxu0 %v2152
    %6082 = vmatprep.subr.bf16.mxu0 %v2149
    %6083 = vmatpush2.bf16.xpose.msra.mxu0 %v2148
    %6084 = vmatprep.subr.bf16.mxu0 %v2145
    %6085 = vmatpush2.bf16.xpose.msra.mxu0 %v2144
    %6086 = vmatprep.subr.bf16.mxu0 %v2141
    %6087 = vmatpush2.bf16.xpose.msra.mxu0 %v2140
    %6088 = vmatprep.subr.bf16.mxu0 %v2137
    %6089 = vmatpush2.bf16.xpose.msra.mxu0 %v2136
    %6090 = vmatprep.mubr.bf16.mxu0 %v5645
    %6091 = vmatmul.mubr.bf16.gmra.mxu0 %v5644
    %v6092 = vpop.f32.mrf.mxu0
    %v6093 = vadd.f32 0.0, %v6092
    %v6094 = vpop.f32.mrf.mxu0
    %v6095 = vadd.f32 0.0, %v6094
    %v6096 = vpop.f32.mrf.mxu0
    %v6097 = vpop.f32.mrf.mxu0
    %6098 = vdwg.mxu0
    %6099 = vmatprep.subr.bf16.mxu0 %v2135
    %6100 = vmatpush1.bf16.xpose.msra.mxu0 %v2134
    %6101 = vmatprep.subr.bf16.mxu0 %v2131
    %6102 = vmatpush1.bf16.xpose.msra.mxu0 %v2130
    %6103 = vmatprep.subr.bf16.mxu0 %v2127
    %6104 = vmatpush1.bf16.xpose.msra.mxu0 %v2126
    %6105 = vmatprep.subr.bf16.mxu0 %v2123
    %6106 = vmatpush1.bf16.xpose.msra.mxu0 %v2122
    %6107 = vmatprep.subr.bf16.mxu0 %v2119
    %6108 = vmatpush1.bf16.xpose.msra.mxu0 %v2118
    %6109 = vmatprep.subr.bf16.mxu0 %v2115
    %6110 = vmatpush1.bf16.xpose.msra.mxu0 %v2114
    %6111 = vmatprep.subr.bf16.mxu0 %v2111
    %6112 = vmatpush1.bf16.xpose.msra.mxu0 %v2110
    %6113 = vmatprep.subr.bf16.mxu0 %v2107
    %6114 = vmatpush1.bf16.xpose.msra.mxu0 %v2106
    %6115 = vmatprep.subr.bf16.mxu0 %v2167
    %6116 = vmatpush2.bf16.xpose.msra.mxu0 %v2166
    %6117 = vmatprep.subr.bf16.mxu0 %v2163
    %6118 = vmatpush2.bf16.xpose.msra.mxu0 %v2162
    %6119 = vmatprep.subr.bf16.mxu0 %v2159
    %6120 = vmatpush2.bf16.xpose.msra.mxu0 %v2158
    %6121 = vmatprep.subr.bf16.mxu0 %v2155
    %6122 = vmatpush2.bf16.xpose.msra.mxu0 %v2154
    %6123 = vmatprep.subr.bf16.mxu0 %v2151
    %6124 = vmatpush2.bf16.xpose.msra.mxu0 %v2150
    %6125 = vmatprep.subr.bf16.mxu0 %v2147
    %6126 = vmatpush2.bf16.xpose.msra.mxu0 %v2146
    %6127 = vmatprep.subr.bf16.mxu0 %v2143
    %6128 = vmatpush2.bf16.xpose.msra.mxu0 %v2142
    %6129 = vmatprep.subr.bf16.mxu0 %v2139
    %6130 = vmatpush2.bf16.xpose.msra.mxu0 %v2138
    %6131 = vmatprep.mubr.bf16.mxu0 %v5647
    %6132 = vmatmul.mubr.bf16.gmra.mxu0 %v5646
    %v6133 = vpop.f32.mrf.mxu0
    %v6134 = vadd.f32 %v6093, %v6133
    %v6135 = vpop.f32.mrf.mxu0
    %v6136 = vadd.f32 %v6095, %v6135
    %v6137 = vpop.f32.mrf.mxu0
    %v6138 = vpop.f32.mrf.mxu0
    %6139 = vdwg.mxu0
    %v6140 = vadd.f32 %v5632, %v5724
    %v6141 = vadd.f32 %v5633, %v5726
    %v6142 = vadd.f32 %v5634, %v5806
    %v6143 = vadd.f32 %v5635, %v5808
    %v6144 = vxor.u32 %v6140, 2147483648
    %v6145 = vxor.u32 %v6141, 2147483648
    %v6146 = vxor.u32 %v6142, 2147483648
    %v6147 = vxor.u32 %v6143, 2147483648
    %v6148 = vmul.f32 %v6144, 1.442695
    %v6149 = vpow.pop %v6148
    %v6150 = vmul.f32 %v6145, 1.442695
    %v6151 = vpow.pop %v6150
    %v6152 = vmul.f32 %v6146, 1.442695
    %v6153 = vpow.pop %v6152
    %v6154 = vmul.f32 %v6147, 1.442695
    %v6155 = vpow.pop %v6154
    %v6156 = vadd.f32 %v6149, 1.0
    %v6157 = vadd.f32 %v6151, 1.0
    %v6158 = vadd.f32 %v6153, 1.0
    %v6159 = vadd.f32 %v6155, 1.0
    %v6160 = vrcp.pop %v6156
    %v6161 = vmul.f32 1.0, %v6160
    %v6162 = vrcp.pop %v6157
    %v6163 = vmul.f32 1.0, %v6162
    %v6164 = vrcp.pop %v6158
    %v6165 = vmul.f32 1.0, %v6164
    %v6166 = vrcp.pop %v6159
    %v6167 = vmul.f32 1.0, %v6166
    %v6168 = vadd.f32 %v5636, %v5888
    %v6169 = vadd.f32 %v5637, %v5890
    %v6170 = vadd.f32 %v5638, %v5970
    %v6171 = vadd.f32 %v5639, %v5972
    %v6172 = vxor.u32 %v6168, 2147483648
    %v6173 = vxor.u32 %v6169, 2147483648
    %v6174 = vxor.u32 %v6170, 2147483648
    %v6175 = vxor.u32 %v6171, 2147483648
    %v6176 = vmul.f32 %v6172, 1.442695
    %v6177 = vpow.pop %v6176
    %v6178 = vmul.f32 %v6173, 1.442695
    %v6179 = vpow.pop %v6178
    %v6180 = vmul.f32 %v6174, 1.442695
    %v6181 = vpow.pop %v6180
    %v6182 = vmul.f32 %v6175, 1.442695
    %v6183 = vpow.pop %v6182
    %v6184 = vadd.f32 %v6177, 1.0
    %v6185 = vadd.f32 %v6179, 1.0
    %v6186 = vadd.f32 %v6181, 1.0
    %v6187 = vadd.f32 %v6183, 1.0
    %v6188 = vrcp.pop %v6184
    %v6189 = vmul.f32 1.0, %v6188
    %v6190 = vrcp.pop %v6185
    %v6191 = vmul.f32 1.0, %v6190
    %v6192 = vrcp.pop %v6186
    %v6193 = vmul.f32 1.0, %v6192
    %v6194 = vrcp.pop %v6187
    %v6195 = vmul.f32 1.0, %v6194
    %v6196 = vadd.f32 %v6052, %v3104
    %v6197 = vadd.f32 %v6054, %v3108
    %v6198 = vadd.f32 %v6134, %v3112
    %v6199 = vadd.f32 %v6136, %v3116
    %v6200 = vmul.f32 %v6161, %v6196
    %v6201 = vmul.f32 %v6163, %v6197
    %v6202 = vmul.f32 %v6165, %v6198
    %v6203 = vmul.f32 %v6167, %v6199
    %v6204 = vadd.f32 %v5640, %v6200
    %v6205 = vadd.f32 %v5641, %v6201
    %v6206 = vadd.f32 %v5642, %v6202
    %v6207 = vadd.f32 %v5643, %v6203
    %v6208 = vtanh.pop %v6204
    %v6209 = vtanh.pop %v6205
    %v6210 = vtanh.pop %v6206
    %v6211 = vtanh.pop %v6207
    %v6212 = vsub.f32 1.0, %v6189
    %v6213 = vsub.f32 1.0, %v6191
    %v6214 = vsub.f32 1.0, %v6193
    %v6215 = vsub.f32 1.0, %v6195
    %v6216 = vmul.f32 %v6212, %v6208
    %v6217 = vmul.f32 %v6213, %v6209
    %v6218 = vmul.f32 %v6214, %v6210
    %v6219 = vmul.f32 %v6215, %v6211
    %v6220 = vmul.f32 %v6189, %v5609
    %v6221 = vmul.f32 %v6191, %v5610
    %v6222 = vmul.f32 %v6193, %v5611
    %v6223 = vmul.f32 %v6195, %v5612
    %v6224 = vadd.f32 %v6216, %v6220
    %v6225 = vadd.f32 %v6217, %v6221
    %v6226 = vadd.f32 %v6218, %v6222
    %v6227 = vadd.f32 %v6219, %v6223
    %s6228 = scalar_lea.vmem %s0, 48
    %v6229 = vld [vmem:[%s6228] sm:$0xff]
    %6231 = vset.pattern.permute.xlu0 0
    %6232 = vperm.xlu0 %6231, %v6229
    %v6233 = vpop.permute.xlu0 %6232
    %v6235 = vmul.f32 %v6233, %v489
    %v6236 = vmul.f32 %v6233, %v493
    %v6237 = vmul.f32 %v6233, %v497
    %v6238 = vmul.f32 %v6233, %v501
    %v6239 = vmul.f32 %v6233, %v505
    %v6240 = vmul.f32 %v6233, %v509
    %v6241 = vmul.f32 %v6233, %v513
    %v6242 = vmul.f32 %v6233, %v517
    %v6243 = vmul.f32 %v6233, %v521
    %v6244 = vmul.f32 %v6233, %v525
    %v6245 = vmul.f32 %v6233, %v529
    %v6246 = vmul.f32 %v6233, %v533
    %v6247 = vadd.f32 %v6235, %v563
    %v6248 = vadd.f32 %v6236, %v567
    %v6249 = vadd.f32 %v6237, %v571
    %v6250 = vadd.f32 %v6238, %v575
    %v6251 = vadd.f32 %v6239, %v579
    %v6252 = vadd.f32 %v6240, %v583
    %v6253 = vadd.f32 %v6241, %v587
    %v6254 = vadd.f32 %v6242, %v591
    %v6255 = vadd.f32 %v6243, %v595
    %v6256 = vadd.f32 %v6244, %v599
    %v6257 = vadd.f32 %v6245, %v603
    %v6258 = vadd.f32 %v6246, %v607
    %v6259 = vpack.c.bf16 %v6224, %v6224
    %v6260 = vpack.c.bf16 %v6225, %v6225
    %v6261 = vpack.c.bf16 %v6226, %v6226
    %v6262 = vpack.c.bf16 %v6227, %v6227
    %6263 = vmatprep.subr.bf16.mxu0 %v1813
    %6264 = vmatpush1.bf16.xpose.msra.mxu0 %v1812
    %6265 = vmatprep.subr.bf16.mxu0 %v1809
    %6266 = vmatpush1.bf16.xpose.msra.mxu0 %v1808
    %6267 = vmatprep.subr.bf16.mxu0 %v1805
    %6268 = vmatpush1.bf16.xpose.msra.mxu0 %v1804
    %6269 = vmatprep.subr.bf16.mxu0 %v1801
    %6270 = vmatpush1.bf16.xpose.msra.mxu0 %v1800
    %6271 = vmatprep.subr.bf16.mxu0 %v1797
    %6272 = vmatpush1.bf16.xpose.msra.mxu0 %v1796
    %6273 = vmatprep.subr.bf16.mxu0 %v1793
    %6274 = vmatpush1.bf16.xpose.msra.mxu0 %v1792
    %6275 = vmatprep.subr.bf16.mxu0 %v1789
    %6276 = vmatpush1.bf16.xpose.msra.mxu0 %v1788
    %6277 = vmatprep.subr.bf16.mxu0 %v1785
    %6278 = vmatpush1.bf16.xpose.msra.mxu0 %v1784
    %6279 = vmatprep.subr.bf16.mxu0 %v1845
    %6280 = vmatpush2.bf16.xpose.msra.mxu0 %v1844
    %6281 = vmatprep.subr.bf16.mxu0 %v1841
    %6282 = vmatpush2.bf16.xpose.msra.mxu0 %v1840
    %6283 = vmatprep.subr.bf16.mxu0 %v1837
    %6284 = vmatpush2.bf16.xpose.msra.mxu0 %v1836
    %6285 = vmatprep.subr.bf16.mxu0 %v1833
    %6286 = vmatpush2.bf16.xpose.msra.mxu0 %v1832
    %6287 = vmatprep.subr.bf16.mxu0 %v1829
    %6288 = vmatpush2.bf16.xpose.msra.mxu0 %v1828
    %6289 = vmatprep.subr.bf16.mxu0 %v1825
    %6290 = vmatpush2.bf16.xpose.msra.mxu0 %v1824
    %6291 = vmatprep.subr.bf16.mxu0 %v1821
    %6292 = vmatpush2.bf16.xpose.msra.mxu0 %v1820
    %6293 = vmatprep.subr.bf16.mxu0 %v1817
    %6294 = vmatpush2.bf16.xpose.msra.mxu0 %v1816
    %6295 = vmatprep.mubr.bf16.mxu0 %v6260
    %6296 = vmatmul.mubr.bf16.gmra.mxu0 %v6259
    %v6297 = vpop.f32.mrf.mxu0
    %v6298 = vadd.f32 0.0, %v6297
    %v6299 = vpop.f32.mrf.mxu0
    %v6300 = vadd.f32 0.0, %v6299
    %v6301 = vpop.f32.mrf.mxu0
    %v6302 = vpop.f32.mrf.mxu0
    %6303 = vdwg.mxu0
    %6304 = vmatprep.subr.bf16.mxu0 %v1815
    %6305 = vmatpush1.bf16.xpose.msra.mxu0 %v1814
    %6306 = vmatprep.subr.bf16.mxu0 %v1811
    %6307 = vmatpush1.bf16.xpose.msra.mxu0 %v1810
    %6308 = vmatprep.subr.bf16.mxu0 %v1807
    %6309 = vmatpush1.bf16.xpose.msra.mxu0 %v1806
    %6310 = vmatprep.subr.bf16.mxu0 %v1803
    %6311 = vmatpush1.bf16.xpose.msra.mxu0 %v1802
    %6312 = vmatprep.subr.bf16.mxu0 %v1799
    %6313 = vmatpush1.bf16.xpose.msra.mxu0 %v1798
    %6314 = vmatprep.subr.bf16.mxu0 %v1795
    %6315 = vmatpush1.bf16.xpose.msra.mxu0 %v1794
    %6316 = vmatprep.subr.bf16.mxu0 %v1791
    %6317 = vmatpush1.bf16.xpose.msra.mxu0 %v1790
    %6318 = vmatprep.subr.bf16.mxu0 %v1787
    %6319 = vmatpush1.bf16.xpose.msra.mxu0 %v1786
    %6320 = vmatprep.subr.bf16.mxu0 %v1847
    %6321 = vmatpush2.bf16.xpose.msra.mxu0 %v1846
    %6322 = vmatprep.subr.bf16.mxu0 %v1843
    %6323 = vmatpush2.bf16.xpose.msra.mxu0 %v1842
    %6324 = vmatprep.subr.bf16.mxu0 %v1839
    %6325 = vmatpush2.bf16.xpose.msra.mxu0 %v1838
    %6326 = vmatprep.subr.bf16.mxu0 %v1835
    %6327 = vmatpush2.bf16.xpose.msra.mxu0 %v1834
    %6328 = vmatprep.subr.bf16.mxu0 %v1831
    %6329 = vmatpush2.bf16.xpose.msra.mxu0 %v1830
    %6330 = vmatprep.subr.bf16.mxu0 %v1827
    %6331 = vmatpush2.bf16.xpose.msra.mxu0 %v1826
    %6332 = vmatprep.subr.bf16.mxu0 %v1823
    %6333 = vmatpush2.bf16.xpose.msra.mxu0 %v1822
    %6334 = vmatprep.subr.bf16.mxu0 %v1819
    %6335 = vmatpush2.bf16.xpose.msra.mxu0 %v1818
    %6336 = vmatprep.mubr.bf16.mxu0 %v6262
    %6337 = vmatmul.mubr.bf16.gmra.mxu0 %v6261
    %v6338 = vpop.f32.mrf.mxu0
    %v6339 = vadd.f32 %v6298, %v6338
    %v6340 = vpop.f32.mrf.mxu0
    %v6341 = vadd.f32 %v6300, %v6340
    %v6342 = vpop.f32.mrf.mxu0
    %v6343 = vpop.f32.mrf.mxu0
    %6344 = vdwg.mxu0
    %6345 = vmatprep.subr.bf16.mxu0 %v1877
    %6346 = vmatpush1.bf16.xpose.msra.mxu0 %v1876
    %6347 = vmatprep.subr.bf16.mxu0 %v1873
    %6348 = vmatpush1.bf16.xpose.msra.mxu0 %v1872
    %6349 = vmatprep.subr.bf16.mxu0 %v1869
    %6350 = vmatpush1.bf16.xpose.msra.mxu0 %v1868
    %6351 = vmatprep.subr.bf16.mxu0 %v1865
    %6352 = vmatpush1.bf16.xpose.msra.mxu0 %v1864
    %6353 = vmatprep.subr.bf16.mxu0 %v1861
    %6354 = vmatpush1.bf16.xpose.msra.mxu0 %v1860
    %6355 = vmatprep.subr.bf16.mxu0 %v1857
    %6356 = vmatpush1.bf16.xpose.msra.mxu0 %v1856
    %6357 = vmatprep.subr.bf16.mxu0 %v1853
    %6358 = vmatpush1.bf16.xpose.msra.mxu0 %v1852
    %6359 = vmatprep.subr.bf16.mxu0 %v1849
    %6360 = vmatpush1.bf16.xpose.msra.mxu0 %v1848
    %6361 = vmatprep.subr.bf16.mxu0 %v1909
    %6362 = vmatpush2.bf16.xpose.msra.mxu0 %v1908
    %6363 = vmatprep.subr.bf16.mxu0 %v1905
    %6364 = vmatpush2.bf16.xpose.msra.mxu0 %v1904
    %6365 = vmatprep.subr.bf16.mxu0 %v1901
    %6366 = vmatpush2.bf16.xpose.msra.mxu0 %v1900
    %6367 = vmatprep.subr.bf16.mxu0 %v1897
    %6368 = vmatpush2.bf16.xpose.msra.mxu0 %v1896
    %6369 = vmatprep.subr.bf16.mxu0 %v1893
    %6370 = vmatpush2.bf16.xpose.msra.mxu0 %v1892
    %6371 = vmatprep.subr.bf16.mxu0 %v1889
    %6372 = vmatpush2.bf16.xpose.msra.mxu0 %v1888
    %6373 = vmatprep.subr.bf16.mxu0 %v1885
    %6374 = vmatpush2.bf16.xpose.msra.mxu0 %v1884
    %6375 = vmatprep.subr.bf16.mxu0 %v1881
    %6376 = vmatpush2.bf16.xpose.msra.mxu0 %v1880
    %6377 = vmatprep.mubr.bf16.mxu0 %v6260
    %6378 = vmatmul.mubr.bf16.gmra.mxu0 %v6259
    %v6379 = vpop.f32.mrf.mxu0
    %v6380 = vadd.f32 0.0, %v6379
    %v6381 = vpop.f32.mrf.mxu0
    %v6382 = vadd.f32 0.0, %v6381
    %v6383 = vpop.f32.mrf.mxu0
    %v6384 = vpop.f32.mrf.mxu0
    %6385 = vdwg.mxu0
    %6386 = vmatprep.subr.bf16.mxu0 %v1879
    %6387 = vmatpush1.bf16.xpose.msra.mxu0 %v1878
    %6388 = vmatprep.subr.bf16.mxu0 %v1875
    %6389 = vmatpush1.bf16.xpose.msra.mxu0 %v1874
    %6390 = vmatprep.subr.bf16.mxu0 %v1871
    %6391 = vmatpush1.bf16.xpose.msra.mxu0 %v1870
    %6392 = vmatprep.subr.bf16.mxu0 %v1867
    %6393 = vmatpush1.bf16.xpose.msra.mxu0 %v1866
    %6394 = vmatprep.subr.bf16.mxu0 %v1863
    %6395 = vmatpush1.bf16.xpose.msra.mxu0 %v1862
    %6396 = vmatprep.subr.bf16.mxu0 %v1859
    %6397 = vmatpush1.bf16.xpose.msra.mxu0 %v1858
    %6398 = vmatprep.subr.bf16.mxu0 %v1855
    %6399 = vmatpush1.bf16.xpose.msra.mxu0 %v1854
    %6400 = vmatprep.subr.bf16.mxu0 %v1851
    %6401 = vmatpush1.bf16.xpose.msra.mxu0 %v1850
    %6402 = vmatprep.subr.bf16.mxu0 %v1911
    %6403 = vmatpush2.bf16.xpose.msra.mxu0 %v1910
    %6404 = vmatprep.subr.bf16.mxu0 %v1907
    %6405 = vmatpush2.bf16.xpose.msra.mxu0 %v1906
    %6406 = vmatprep.subr.bf16.mxu0 %v1903
    %6407 = vmatpush2.bf16.xpose.msra.mxu0 %v1902
    %6408 = vmatprep.subr.bf16.mxu0 %v1899
    %6409 = vmatpush2.bf16.xpose.msra.mxu0 %v1898
    %6410 = vmatprep.subr.bf16.mxu0 %v1895
    %6411 = vmatpush2.bf16.xpose.msra.mxu0 %v1894
    %6412 = vmatprep.subr.bf16.mxu0 %v1891
    %6413 = vmatpush2.bf16.xpose.msra.mxu0 %v1890
    %6414 = vmatprep.subr.bf16.mxu0 %v1887
    %6415 = vmatpush2.bf16.xpose.msra.mxu0 %v1886
    %6416 = vmatprep.subr.bf16.mxu0 %v1883
    %6417 = vmatpush2.bf16.xpose.msra.mxu0 %v1882
    %6418 = vmatprep.mubr.bf16.mxu0 %v6262
    %6419 = vmatmul.mubr.bf16.gmra.mxu0 %v6261
    %v6420 = vpop.f32.mrf.mxu0
    %v6421 = vadd.f32 %v6380, %v6420
    %v6422 = vpop.f32.mrf.mxu0
    %v6423 = vadd.f32 %v6382, %v6422
    %v6424 = vpop.f32.mrf.mxu0
    %v6425 = vpop.f32.mrf.mxu0
    %6426 = vdwg.mxu0
    %6427 = vmatprep.subr.bf16.mxu0 %v1941
    %6428 = vmatpush1.bf16.xpose.msra.mxu0 %v1940
    %6429 = vmatprep.subr.bf16.mxu0 %v1937
    %6430 = vmatpush1.bf16.xpose.msra.mxu0 %v1936
    %6431 = vmatprep.subr.bf16.mxu0 %v1933
    %6432 = vmatpush1.bf16.xpose.msra.mxu0 %v1932
    %6433 = vmatprep.subr.bf16.mxu0 %v1929
    %6434 = vmatpush1.bf16.xpose.msra.mxu0 %v1928
    %6435 = vmatprep.subr.bf16.mxu0 %v1925
    %6436 = vmatpush1.bf16.xpose.msra.mxu0 %v1924
    %6437 = vmatprep.subr.bf16.mxu0 %v1921
    %6438 = vmatpush1.bf16.xpose.msra.mxu0 %v1920
    %6439 = vmatprep.subr.bf16.mxu0 %v1917
    %6440 = vmatpush1.bf16.xpose.msra.mxu0 %v1916
    %6441 = vmatprep.subr.bf16.mxu0 %v1913
    %6442 = vmatpush1.bf16.xpose.msra.mxu0 %v1912
    %6443 = vmatprep.subr.bf16.mxu0 %v1973
    %6444 = vmatpush2.bf16.xpose.msra.mxu0 %v1972
    %6445 = vmatprep.subr.bf16.mxu0 %v1969
    %6446 = vmatpush2.bf16.xpose.msra.mxu0 %v1968
    %6447 = vmatprep.subr.bf16.mxu0 %v1965
    %6448 = vmatpush2.bf16.xpose.msra.mxu0 %v1964
    %6449 = vmatprep.subr.bf16.mxu0 %v1961
    %6450 = vmatpush2.bf16.xpose.msra.mxu0 %v1960
    %6451 = vmatprep.subr.bf16.mxu0 %v1957
    %6452 = vmatpush2.bf16.xpose.msra.mxu0 %v1956
    %6453 = vmatprep.subr.bf16.mxu0 %v1953
    %6454 = vmatpush2.bf16.xpose.msra.mxu0 %v1952
    %6455 = vmatprep.subr.bf16.mxu0 %v1949
    %6456 = vmatpush2.bf16.xpose.msra.mxu0 %v1948
    %6457 = vmatprep.subr.bf16.mxu0 %v1945
    %6458 = vmatpush2.bf16.xpose.msra.mxu0 %v1944
    %6459 = vmatprep.mubr.bf16.mxu0 %v6260
    %6460 = vmatmul.mubr.bf16.gmra.mxu0 %v6259
    %v6461 = vpop.f32.mrf.mxu0
    %v6462 = vadd.f32 0.0, %v6461
    %v6463 = vpop.f32.mrf.mxu0
    %v6464 = vadd.f32 0.0, %v6463
    %v6465 = vpop.f32.mrf.mxu0
    %v6466 = vpop.f32.mrf.mxu0
    %6467 = vdwg.mxu0
    %6468 = vmatprep.subr.bf16.mxu0 %v1943
    %6469 = vmatpush1.bf16.xpose.msra.mxu0 %v1942
    %6470 = vmatprep.subr.bf16.mxu0 %v1939
    %6471 = vmatpush1.bf16.xpose.msra.mxu0 %v1938
    %6472 = vmatprep.subr.bf16.mxu0 %v1935
    %6473 = vmatpush1.bf16.xpose.msra.mxu0 %v1934
    %6474 = vmatprep.subr.bf16.mxu0 %v1931
    %6475 = vmatpush1.bf16.xpose.msra.mxu0 %v1930
    %6476 = vmatprep.subr.bf16.mxu0 %v1927
    %6477 = vmatpush1.bf16.xpose.msra.mxu0 %v1926
    %6478 = vmatprep.subr.bf16.mxu0 %v1923
    %6479 = vmatpush1.bf16.xpose.msra.mxu0 %v1922
    %6480 = vmatprep.subr.bf16.mxu0 %v1919
    %6481 = vmatpush1.bf16.xpose.msra.mxu0 %v1918
    %6482 = vmatprep.subr.bf16.mxu0 %v1915
    %6483 = vmatpush1.bf16.xpose.msra.mxu0 %v1914
    %6484 = vmatprep.subr.bf16.mxu0 %v1975
    %6485 = vmatpush2.bf16.xpose.msra.mxu0 %v1974
    %6486 = vmatprep.subr.bf16.mxu0 %v1971
    %6487 = vmatpush2.bf16.xpose.msra.mxu0 %v1970
    %6488 = vmatprep.subr.bf16.mxu0 %v1967
    %6489 = vmatpush2.bf16.xpose.msra.mxu0 %v1966
    %6490 = vmatprep.subr.bf16.mxu0 %v1963
    %6491 = vmatpush2.bf16.xpose.msra.mxu0 %v1962
    %6492 = vmatprep.subr.bf16.mxu0 %v1959
    %6493 = vmatpush2.bf16.xpose.msra.mxu0 %v1958
    %6494 = vmatprep.subr.bf16.mxu0 %v1955
    %6495 = vmatpush2.bf16.xpose.msra.mxu0 %v1954
    %6496 = vmatprep.subr.bf16.mxu0 %v1951
    %6497 = vmatpush2.bf16.xpose.msra.mxu0 %v1950
    %6498 = vmatprep.subr.bf16.mxu0 %v1947
    %6499 = vmatpush2.bf16.xpose.msra.mxu0 %v1946
    %6500 = vmatprep.mubr.bf16.mxu0 %v6262
    %6501 = vmatmul.mubr.bf16.gmra.mxu0 %v6261
    %v6502 = vpop.f32.mrf.mxu0
    %v6503 = vadd.f32 %v6462, %v6502
    %v6504 = vpop.f32.mrf.mxu0
    %v6505 = vadd.f32 %v6464, %v6504
    %v6506 = vpop.f32.mrf.mxu0
    %v6507 = vpop.f32.mrf.mxu0
    %6508 = vdwg.mxu0
    %6509 = vmatprep.subr.bf16.mxu0 %v2005
    %6510 = vmatpush1.bf16.xpose.msra.mxu0 %v2004
    %6511 = vmatprep.subr.bf16.mxu0 %v2001
    %6512 = vmatpush1.bf16.xpose.msra.mxu0 %v2000
    %6513 = vmatprep.subr.bf16.mxu0 %v1997
    %6514 = vmatpush1.bf16.xpose.msra.mxu0 %v1996
    %6515 = vmatprep.subr.bf16.mxu0 %v1993
    %6516 = vmatpush1.bf16.xpose.msra.mxu0 %v1992
    %6517 = vmatprep.subr.bf16.mxu0 %v1989
    %6518 = vmatpush1.bf16.xpose.msra.mxu0 %v1988
    %6519 = vmatprep.subr.bf16.mxu0 %v1985
    %6520 = vmatpush1.bf16.xpose.msra.mxu0 %v1984
    %6521 = vmatprep.subr.bf16.mxu0 %v1981
    %6522 = vmatpush1.bf16.xpose.msra.mxu0 %v1980
    %6523 = vmatprep.subr.bf16.mxu0 %v1977
    %6524 = vmatpush1.bf16.xpose.msra.mxu0 %v1976
    %6525 = vmatprep.subr.bf16.mxu0 %v2037
    %6526 = vmatpush2.bf16.xpose.msra.mxu0 %v2036
    %6527 = vmatprep.subr.bf16.mxu0 %v2033
    %6528 = vmatpush2.bf16.xpose.msra.mxu0 %v2032
    %6529 = vmatprep.subr.bf16.mxu0 %v2029
    %6530 = vmatpush2.bf16.xpose.msra.mxu0 %v2028
    %6531 = vmatprep.subr.bf16.mxu0 %v2025
    %6532 = vmatpush2.bf16.xpose.msra.mxu0 %v2024
    %6533 = vmatprep.subr.bf16.mxu0 %v2021
    %6534 = vmatpush2.bf16.xpose.msra.mxu0 %v2020
    %6535 = vmatprep.subr.bf16.mxu0 %v2017
    %6536 = vmatpush2.bf16.xpose.msra.mxu0 %v2016
    %6537 = vmatprep.subr.bf16.mxu0 %v2013
    %6538 = vmatpush2.bf16.xpose.msra.mxu0 %v2012
    %6539 = vmatprep.subr.bf16.mxu0 %v2009
    %6540 = vmatpush2.bf16.xpose.msra.mxu0 %v2008
    %6541 = vmatprep.mubr.bf16.mxu0 %v6260
    %6542 = vmatmul.mubr.bf16.gmra.mxu0 %v6259
    %v6543 = vpop.f32.mrf.mxu0
    %v6544 = vadd.f32 0.0, %v6543
    %v6545 = vpop.f32.mrf.mxu0
    %v6546 = vadd.f32 0.0, %v6545
    %v6547 = vpop.f32.mrf.mxu0
    %v6548 = vpop.f32.mrf.mxu0
    %6549 = vdwg.mxu0
    %6550 = vmatprep.subr.bf16.mxu0 %v2007
    %6551 = vmatpush1.bf16.xpose.msra.mxu0 %v2006
    %6552 = vmatprep.subr.bf16.mxu0 %v2003
    %6553 = vmatpush1.bf16.xpose.msra.mxu0 %v2002
    %6554 = vmatprep.subr.bf16.mxu0 %v1999
    %6555 = vmatpush1.bf16.xpose.msra.mxu0 %v1998
    %6556 = vmatprep.subr.bf16.mxu0 %v1995
    %6557 = vmatpush1.bf16.xpose.msra.mxu0 %v1994
    %6558 = vmatprep.subr.bf16.mxu0 %v1991
    %6559 = vmatpush1.bf16.xpose.msra.mxu0 %v1990
    %6560 = vmatprep.subr.bf16.mxu0 %v1987
    %6561 = vmatpush1.bf16.xpose.msra.mxu0 %v1986
    %6562 = vmatprep.subr.bf16.mxu0 %v1983
    %6563 = vmatpush1.bf16.xpose.msra.mxu0 %v1982
    %6564 = vmatprep.subr.bf16.mxu0 %v1979
    %6565 = vmatpush1.bf16.xpose.msra.mxu0 %v1978
    %6566 = vmatprep.subr.bf16.mxu0 %v2039
    %6567 = vmatpush2.bf16.xpose.msra.mxu0 %v2038
    %6568 = vmatprep.subr.bf16.mxu0 %v2035
    %6569 = vmatpush2.bf16.xpose.msra.mxu0 %v2034
    %6570 = vmatprep.subr.bf16.mxu0 %v2031
    %6571 = vmatpush2.bf16.xpose.msra.mxu0 %v2030
    %6572 = vmatprep.subr.bf16.mxu0 %v2027
    %6573 = vmatpush2.bf16.xpose.msra.mxu0 %v2026
    %6574 = vmatprep.subr.bf16.mxu0 %v2023
    %6575 = vmatpush2.bf16.xpose.msra.mxu0 %v2022
    %6576 = vmatprep.subr.bf16.mxu0 %v2019
    %6577 = vmatpush2.bf16.xpose.msra.mxu0 %v2018
    %6578 = vmatprep.subr.bf16.mxu0 %v2015
    %6579 = vmatpush2.bf16.xpose.msra.mxu0 %v2014
    %6580 = vmatprep.subr.bf16.mxu0 %v2011
    %6581 = vmatpush2.bf16.xpose.msra.mxu0 %v2010
    %6582 = vmatprep.mubr.bf16.mxu0 %v6262
    %6583 = vmatmul.mubr.bf16.gmra.mxu0 %v6261
    %v6584 = vpop.f32.mrf.mxu0
    %v6585 = vadd.f32 %v6544, %v6584
    %v6586 = vpop.f32.mrf.mxu0
    %v6587 = vadd.f32 %v6546, %v6586
    %v6588 = vpop.f32.mrf.mxu0
    %v6589 = vpop.f32.mrf.mxu0
    %6590 = vdwg.mxu0
    %6591 = vmatprep.subr.bf16.mxu0 %v2069
    %6592 = vmatpush1.bf16.xpose.msra.mxu0 %v2068
    %6593 = vmatprep.subr.bf16.mxu0 %v2065
    %6594 = vmatpush1.bf16.xpose.msra.mxu0 %v2064
    %6595 = vmatprep.subr.bf16.mxu0 %v2061
    %6596 = vmatpush1.bf16.xpose.msra.mxu0 %v2060
    %6597 = vmatprep.subr.bf16.mxu0 %v2057
    %6598 = vmatpush1.bf16.xpose.msra.mxu0 %v2056
    %6599 = vmatprep.subr.bf16.mxu0 %v2053
    %6600 = vmatpush1.bf16.xpose.msra.mxu0 %v2052
    %6601 = vmatprep.subr.bf16.mxu0 %v2049
    %6602 = vmatpush1.bf16.xpose.msra.mxu0 %v2048
    %6603 = vmatprep.subr.bf16.mxu0 %v2045
    %6604 = vmatpush1.bf16.xpose.msra.mxu0 %v2044
    %6605 = vmatprep.subr.bf16.mxu0 %v2041
    %6606 = vmatpush1.bf16.xpose.msra.mxu0 %v2040
    %6607 = vmatprep.subr.bf16.mxu0 %v2101
    %6608 = vmatpush2.bf16.xpose.msra.mxu0 %v2100
    %6609 = vmatprep.subr.bf16.mxu0 %v2097
    %6610 = vmatpush2.bf16.xpose.msra.mxu0 %v2096
    %6611 = vmatprep.subr.bf16.mxu0 %v2093
    %6612 = vmatpush2.bf16.xpose.msra.mxu0 %v2092
    %6613 = vmatprep.subr.bf16.mxu0 %v2089
    %6614 = vmatpush2.bf16.xpose.msra.mxu0 %v2088
    %6615 = vmatprep.subr.bf16.mxu0 %v2085
    %6616 = vmatpush2.bf16.xpose.msra.mxu0 %v2084
    %6617 = vmatprep.subr.bf16.mxu0 %v2081
    %6618 = vmatpush2.bf16.xpose.msra.mxu0 %v2080
    %6619 = vmatprep.subr.bf16.mxu0 %v2077
    %6620 = vmatpush2.bf16.xpose.msra.mxu0 %v2076
    %6621 = vmatprep.subr.bf16.mxu0 %v2073
    %6622 = vmatpush2.bf16.xpose.msra.mxu0 %v2072
    %6623 = vmatprep.mubr.bf16.mxu0 %v6260
    %6624 = vmatmul.mubr.bf16.gmra.mxu0 %v6259
    %v6625 = vpop.f32.mrf.mxu0
    %v6626 = vadd.f32 0.0, %v6625
    %v6627 = vpop.f32.mrf.mxu0
    %v6628 = vadd.f32 0.0, %v6627
    %v6629 = vpop.f32.mrf.mxu0
    %v6630 = vpop.f32.mrf.mxu0
    %6631 = vdwg.mxu0
    %6632 = vmatprep.subr.bf16.mxu0 %v2071
    %6633 = vmatpush1.bf16.xpose.msra.mxu0 %v2070
    %6634 = vmatprep.subr.bf16.mxu0 %v2067
    %6635 = vmatpush1.bf16.xpose.msra.mxu0 %v2066
    %6636 = vmatprep.subr.bf16.mxu0 %v2063
    %6637 = vmatpush1.bf16.xpose.msra.mxu0 %v2062
    %6638 = vmatprep.subr.bf16.mxu0 %v2059
    %6639 = vmatpush1.bf16.xpose.msra.mxu0 %v2058
    %6640 = vmatprep.subr.bf16.mxu0 %v2055
    %6641 = vmatpush1.bf16.xpose.msra.mxu0 %v2054
    %6642 = vmatprep.subr.bf16.mxu0 %v2051
    %6643 = vmatpush1.bf16.xpose.msra.mxu0 %v2050
    %6644 = vmatprep.subr.bf16.mxu0 %v2047
    %6645 = vmatpush1.bf16.xpose.msra.mxu0 %v2046
    %6646 = vmatprep.subr.bf16.mxu0 %v2043
    %6647 = vmatpush1.bf16.xpose.msra.mxu0 %v2042
    %6648 = vmatprep.subr.bf16.mxu0 %v2103
    %6649 = vmatpush2.bf16.xpose.msra.mxu0 %v2102
    %6650 = vmatprep.subr.bf16.mxu0 %v2099
    %6651 = vmatpush2.bf16.xpose.msra.mxu0 %v2098
    %6652 = vmatprep.subr.bf16.mxu0 %v2095
    %6653 = vmatpush2.bf16.xpose.msra.mxu0 %v2094
    %6654 = vmatprep.subr.bf16.mxu0 %v2091
    %6655 = vmatpush2.bf16.xpose.msra.mxu0 %v2090
    %6656 = vmatprep.subr.bf16.mxu0 %v2087
    %6657 = vmatpush2.bf16.xpose.msra.mxu0 %v2086
    %6658 = vmatprep.subr.bf16.mxu0 %v2083
    %6659 = vmatpush2.bf16.xpose.msra.mxu0 %v2082
    %6660 = vmatprep.subr.bf16.mxu0 %v2079
    %6661 = vmatpush2.bf16.xpose.msra.mxu0 %v2078
    %6662 = vmatprep.subr.bf16.mxu0 %v2075
    %6663 = vmatpush2.bf16.xpose.msra.mxu0 %v2074
    %6664 = vmatprep.mubr.bf16.mxu0 %v6262
    %6665 = vmatmul.mubr.bf16.gmra.mxu0 %v6261
    %v6666 = vpop.f32.mrf.mxu0
    %v6667 = vadd.f32 %v6626, %v6666
    %v6668 = vpop.f32.mrf.mxu0
    %v6669 = vadd.f32 %v6628, %v6668
    %v6670 = vpop.f32.mrf.mxu0
    %v6671 = vpop.f32.mrf.mxu0
    %6672 = vdwg.mxu0
    %6673 = vmatprep.subr.bf16.mxu0 %v2133
    %6674 = vmatpush1.bf16.xpose.msra.mxu0 %v2132
    %6675 = vmatprep.subr.bf16.mxu0 %v2129
    %6676 = vmatpush1.bf16.xpose.msra.mxu0 %v2128
    %6677 = vmatprep.subr.bf16.mxu0 %v2125
    %6678 = vmatpush1.bf16.xpose.msra.mxu0 %v2124
    %6679 = vmatprep.subr.bf16.mxu0 %v2121
    %6680 = vmatpush1.bf16.xpose.msra.mxu0 %v2120
    %6681 = vmatprep.subr.bf16.mxu0 %v2117
    %6682 = vmatpush1.bf16.xpose.msra.mxu0 %v2116
    %6683 = vmatprep.subr.bf16.mxu0 %v2113
    %6684 = vmatpush1.bf16.xpose.msra.mxu0 %v2112
    %6685 = vmatprep.subr.bf16.mxu0 %v2109
    %6686 = vmatpush1.bf16.xpose.msra.mxu0 %v2108
    %6687 = vmatprep.subr.bf16.mxu0 %v2105
    %6688 = vmatpush1.bf16.xpose.msra.mxu0 %v2104
    %6689 = vmatprep.subr.bf16.mxu0 %v2165
    %6690 = vmatpush2.bf16.xpose.msra.mxu0 %v2164
    %6691 = vmatprep.subr.bf16.mxu0 %v2161
    %6692 = vmatpush2.bf16.xpose.msra.mxu0 %v2160
    %6693 = vmatprep.subr.bf16.mxu0 %v2157
    %6694 = vmatpush2.bf16.xpose.msra.mxu0 %v2156
    %6695 = vmatprep.subr.bf16.mxu0 %v2153
    %6696 = vmatpush2.bf16.xpose.msra.mxu0 %v2152
    %6697 = vmatprep.subr.bf16.mxu0 %v2149
    %6698 = vmatpush2.bf16.xpose.msra.mxu0 %v2148
    %6699 = vmatprep.subr.bf16.mxu0 %v2145
    %6700 = vmatpush2.bf16.xpose.msra.mxu0 %v2144
    %6701 = vmatprep.subr.bf16.mxu0 %v2141
    %6702 = vmatpush2.bf16.xpose.msra.mxu0 %v2140
    %6703 = vmatprep.subr.bf16.mxu0 %v2137
    %6704 = vmatpush2.bf16.xpose.msra.mxu0 %v2136
    %6705 = vmatprep.mubr.bf16.mxu0 %v6260
    %6706 = vmatmul.mubr.bf16.gmra.mxu0 %v6259
    %v6707 = vpop.f32.mrf.mxu0
    %v6708 = vadd.f32 0.0, %v6707
    %v6709 = vpop.f32.mrf.mxu0
    %v6710 = vadd.f32 0.0, %v6709
    %v6711 = vpop.f32.mrf.mxu0
    %v6712 = vpop.f32.mrf.mxu0
    %6713 = vdwg.mxu0
    %6714 = vmatprep.subr.bf16.mxu0 %v2135
    %6715 = vmatpush1.bf16.xpose.msra.mxu0 %v2134
    %6716 = vmatprep.subr.bf16.mxu0 %v2131
    %6717 = vmatpush1.bf16.xpose.msra.mxu0 %v2130
    %6718 = vmatprep.subr.bf16.mxu0 %v2127
    %6719 = vmatpush1.bf16.xpose.msra.mxu0 %v2126
    %6720 = vmatprep.subr.bf16.mxu0 %v2123
    %6721 = vmatpush1.bf16.xpose.msra.mxu0 %v2122
    %6722 = vmatprep.subr.bf16.mxu0 %v2119
    %6723 = vmatpush1.bf16.xpose.msra.mxu0 %v2118
    %6724 = vmatprep.subr.bf16.mxu0 %v2115
    %6725 = vmatpush1.bf16.xpose.msra.mxu0 %v2114
    %6726 = vmatprep.subr.bf16.mxu0 %v2111
    %6727 = vmatpush1.bf16.xpose.msra.mxu0 %v2110
    %6728 = vmatprep.subr.bf16.mxu0 %v2107
    %6729 = vmatpush1.bf16.xpose.msra.mxu0 %v2106
    %6730 = vmatprep.subr.bf16.mxu0 %v2167
    %6731 = vmatpush2.bf16.xpose.msra.mxu0 %v2166
    %6732 = vmatprep.subr.bf16.mxu0 %v2163
    %6733 = vmatpush2.bf16.xpose.msra.mxu0 %v2162
    %6734 = vmatprep.subr.bf16.mxu0 %v2159
    %6735 = vmatpush2.bf16.xpose.msra.mxu0 %v2158
    %6736 = vmatprep.subr.bf16.mxu0 %v2155
    %6737 = vmatpush2.bf16.xpose.msra.mxu0 %v2154
    %6738 = vmatprep.subr.bf16.mxu0 %v2151
    %6739 = vmatpush2.bf16.xpose.msra.mxu0 %v2150
    %6740 = vmatprep.subr.bf16.mxu0 %v2147
    %6741 = vmatpush2.bf16.xpose.msra.mxu0 %v2146
    %6742 = vmatprep.subr.bf16.mxu0 %v2143
    %6743 = vmatpush2.bf16.xpose.msra.mxu0 %v2142
    %6744 = vmatprep.subr.bf16.mxu0 %v2139
    %6745 = vmatpush2.bf16.xpose.msra.mxu0 %v2138
    %6746 = vmatprep.mubr.bf16.mxu0 %v6262
    %6747 = vmatmul.mubr.bf16.gmra.mxu0 %v6261
    %v6748 = vpop.f32.mrf.mxu0
    %v6749 = vadd.f32 %v6708, %v6748
    %v6750 = vpop.f32.mrf.mxu0
    %v6751 = vadd.f32 %v6710, %v6750
    %v6752 = vpop.f32.mrf.mxu0
    %v6753 = vpop.f32.mrf.mxu0
    %6754 = vdwg.mxu0
    %v6755 = vadd.f32 %v6247, %v6339
    %v6756 = vadd.f32 %v6248, %v6341
    %v6757 = vadd.f32 %v6249, %v6421
    %v6758 = vadd.f32 %v6250, %v6423
    %v6759 = vxor.u32 %v6755, 2147483648
    %v6760 = vxor.u32 %v6756, 2147483648
    %v6761 = vxor.u32 %v6757, 2147483648
    %v6762 = vxor.u32 %v6758, 2147483648
    %v6763 = vmul.f32 %v6759, 1.442695
    %v6764 = vpow.pop %v6763
    %v6765 = vmul.f32 %v6760, 1.442695
    %v6766 = vpow.pop %v6765
    %v6767 = vmul.f32 %v6761, 1.442695
    %v6768 = vpow.pop %v6767
    %v6769 = vmul.f32 %v6762, 1.442695
    %v6770 = vpow.pop %v6769
    %v6771 = vadd.f32 %v6764, 1.0
    %v6772 = vadd.f32 %v6766, 1.0
    %v6773 = vadd.f32 %v6768, 1.0
    %v6774 = vadd.f32 %v6770, 1.0
    %v6775 = vrcp.pop %v6771
    %v6776 = vmul.f32 1.0, %v6775
    %v6777 = vrcp.pop %v6772
    %v6778 = vmul.f32 1.0, %v6777
    %v6779 = vrcp.pop %v6773
    %v6780 = vmul.f32 1.0, %v6779
    %v6781 = vrcp.pop %v6774
    %v6782 = vmul.f32 1.0, %v6781
    %v6783 = vadd.f32 %v6251, %v6503
    %v6784 = vadd.f32 %v6252, %v6505
    %v6785 = vadd.f32 %v6253, %v6585
    %v6786 = vadd.f32 %v6254, %v6587
    %v6787 = vxor.u32 %v6783, 2147483648
    %v6788 = vxor.u32 %v6784, 2147483648
    %v6789 = vxor.u32 %v6785, 2147483648
    %v6790 = vxor.u32 %v6786, 2147483648
    %v6791 = vmul.f32 %v6787, 1.442695
    %v6792 = vpow.pop %v6791
    %v6793 = vmul.f32 %v6788, 1.442695
    %v6794 = vpow.pop %v6793
    %v6795 = vmul.f32 %v6789, 1.442695
    %v6796 = vpow.pop %v6795
    %v6797 = vmul.f32 %v6790, 1.442695
    %v6798 = vpow.pop %v6797
    %v6799 = vadd.f32 %v6792, 1.0
    %v6800 = vadd.f32 %v6794, 1.0
    %v6801 = vadd.f32 %v6796, 1.0
    %v6802 = vadd.f32 %v6798, 1.0
    %v6803 = vrcp.pop %v6799
    %v6804 = vmul.f32 1.0, %v6803
    %v6805 = vrcp.pop %v6800
    %v6806 = vmul.f32 1.0, %v6805
    %v6807 = vrcp.pop %v6801
    %v6808 = vmul.f32 1.0, %v6807
    %v6809 = vrcp.pop %v6802
    %v6810 = vmul.f32 1.0, %v6809
    %v6811 = vadd.f32 %v6667, %v3104
    %v6812 = vadd.f32 %v6669, %v3108
    %v6813 = vadd.f32 %v6749, %v3112
    %v6814 = vadd.f32 %v6751, %v3116
    %v6815 = vmul.f32 %v6776, %v6811
    %v6816 = vmul.f32 %v6778, %v6812
    %v6817 = vmul.f32 %v6780, %v6813
    %v6818 = vmul.f32 %v6782, %v6814
    %v6819 = vadd.f32 %v6255, %v6815
    %v6820 = vadd.f32 %v6256, %v6816
    %v6821 = vadd.f32 %v6257, %v6817
    %v6822 = vadd.f32 %v6258, %v6818
    %v6823 = vtanh.pop %v6819
    %v6824 = vtanh.pop %v6820
    %v6825 = vtanh.pop %v6821
    %v6826 = vtanh.pop %v6822
    %v6827 = vsub.f32 1.0, %v6804
    %v6828 = vsub.f32 1.0, %v6806
    %v6829 = vsub.f32 1.0, %v6808
    %v6830 = vsub.f32 1.0, %v6810
    %v6831 = vmul.f32 %v6827, %v6823
    %v6832 = vmul.f32 %v6828, %v6824
    %v6833 = vmul.f32 %v6829, %v6825
    %v6834 = vmul.f32 %v6830, %v6826
    %v6835 = vmul.f32 %v6804, %v6224
    %v6836 = vmul.f32 %v6806, %v6225
    %v6837 = vmul.f32 %v6808, %v6226
    %v6838 = vmul.f32 %v6810, %v6227
    %v6839 = vadd.f32 %v6831, %v6835
    %v6840 = vadd.f32 %v6832, %v6836
    %v6841 = vadd.f32 %v6833, %v6837
    %v6842 = vadd.f32 %v6834, %v6838
    %s6843 = scalar_lea.vmem %s0, 56
    %v6844 = vld [vmem:[%s6843] sm:$0xff]
    %6846 = vset.pattern.permute.xlu0 0
    %6847 = vperm.xlu0 %6846, %v6844
    %v6848 = vpop.permute.xlu0 %6847
    %v6850 = vmul.f32 %v6848, %v489
    %v6851 = vmul.f32 %v6848, %v493
    %v6852 = vmul.f32 %v6848, %v497
    %v6853 = vmul.f32 %v6848, %v501
    %v6854 = vmul.f32 %v6848, %v505
    %v6855 = vmul.f32 %v6848, %v509
    %v6856 = vmul.f32 %v6848, %v513
    %v6857 = vmul.f32 %v6848, %v517
    %v6858 = vmul.f32 %v6848, %v521
    %v6859 = vmul.f32 %v6848, %v525
    %v6860 = vmul.f32 %v6848, %v529
    %v6861 = vmul.f32 %v6848, %v533
    %v6862 = vadd.f32 %v6850, %v563
    %v6863 = vadd.f32 %v6851, %v567
    %v6864 = vadd.f32 %v6852, %v571
    %v6865 = vadd.f32 %v6853, %v575
    %v6866 = vadd.f32 %v6854, %v579
    %v6867 = vadd.f32 %v6855, %v583
    %v6868 = vadd.f32 %v6856, %v587
    %v6869 = vadd.f32 %v6857, %v591
    %v6870 = vadd.f32 %v6858, %v595
    %v6871 = vadd.f32 %v6859, %v599
    %v6872 = vadd.f32 %v6860, %v603
    %v6873 = vadd.f32 %v6861, %v607
    %v6874 = vpack.c.bf16 %v6839, %v6839
    %v6875 = vpack.c.bf16 %v6840, %v6840
    %v6876 = vpack.c.bf16 %v6841, %v6841
    %v6877 = vpack.c.bf16 %v6842, %v6842
    %6878 = vmatprep.subr.bf16.mxu0 %v1813
    %6879 = vmatpush1.bf16.xpose.msra.mxu0 %v1812
    %6880 = vmatprep.subr.bf16.mxu0 %v1809
    %6881 = vmatpush1.bf16.xpose.msra.mxu0 %v1808
    %6882 = vmatprep.subr.bf16.mxu0 %v1805
    %6883 = vmatpush1.bf16.xpose.msra.mxu0 %v1804
    %6884 = vmatprep.subr.bf16.mxu0 %v1801
    %6885 = vmatpush1.bf16.xpose.msra.mxu0 %v1800
    %6886 = vmatprep.subr.bf16.mxu0 %v1797
    %6887 = vmatpush1.bf16.xpose.msra.mxu0 %v1796
    %6888 = vmatprep.subr.bf16.mxu0 %v1793
    %6889 = vmatpush1.bf16.xpose.msra.mxu0 %v1792
    %6890 = vmatprep.subr.bf16.mxu0 %v1789
    %6891 = vmatpush1.bf16.xpose.msra.mxu0 %v1788
    %6892 = vmatprep.subr.bf16.mxu0 %v1785
    %6893 = vmatpush1.bf16.xpose.msra.mxu0 %v1784
    %6894 = vmatprep.subr.bf16.mxu0 %v1845
    %6895 = vmatpush2.bf16.xpose.msra.mxu0 %v1844
    %6896 = vmatprep.subr.bf16.mxu0 %v1841
    %6897 = vmatpush2.bf16.xpose.msra.mxu0 %v1840
    %6898 = vmatprep.subr.bf16.mxu0 %v1837
    %6899 = vmatpush2.bf16.xpose.msra.mxu0 %v1836
    %6900 = vmatprep.subr.bf16.mxu0 %v1833
    %6901 = vmatpush2.bf16.xpose.msra.mxu0 %v1832
    %6902 = vmatprep.subr.bf16.mxu0 %v1829
    %6903 = vmatpush2.bf16.xpose.msra.mxu0 %v1828
    %6904 = vmatprep.subr.bf16.mxu0 %v1825
    %6905 = vmatpush2.bf16.xpose.msra.mxu0 %v1824
    %6906 = vmatprep.subr.bf16.mxu0 %v1821
    %6907 = vmatpush2.bf16.xpose.msra.mxu0 %v1820
    %6908 = vmatprep.subr.bf16.mxu0 %v1817
    %6909 = vmatpush2.bf16.xpose.msra.mxu0 %v1816
    %6910 = vmatprep.mubr.bf16.mxu0 %v6875
    %6911 = vmatmul.mubr.bf16.gmra.mxu0 %v6874
    %v6912 = vpop.f32.mrf.mxu0
    %v6913 = vadd.f32 0.0, %v6912
    %v6914 = vpop.f32.mrf.mxu0
    %v6915 = vadd.f32 0.0, %v6914
    %v6916 = vpop.f32.mrf.mxu0
    %v6917 = vpop.f32.mrf.mxu0
    %6918 = vdwg.mxu0
    %6919 = vmatprep.subr.bf16.mxu0 %v1815
    %6920 = vmatpush1.bf16.xpose.msra.mxu0 %v1814
    %6921 = vmatprep.subr.bf16.mxu0 %v1811
    %6922 = vmatpush1.bf16.xpose.msra.mxu0 %v1810
    %6923 = vmatprep.subr.bf16.mxu0 %v1807
    %6924 = vmatpush1.bf16.xpose.msra.mxu0 %v1806
    %6925 = vmatprep.subr.bf16.mxu0 %v1803
    %6926 = vmatpush1.bf16.xpose.msra.mxu0 %v1802
    %6927 = vmatprep.subr.bf16.mxu0 %v1799
    %6928 = vmatpush1.bf16.xpose.msra.mxu0 %v1798
    %6929 = vmatprep.subr.bf16.mxu0 %v1795
    %6930 = vmatpush1.bf16.xpose.msra.mxu0 %v1794
    %6931 = vmatprep.subr.bf16.mxu0 %v1791
    %6932 = vmatpush1.bf16.xpose.msra.mxu0 %v1790
    %6933 = vmatprep.subr.bf16.mxu0 %v1787
    %6934 = vmatpush1.bf16.xpose.msra.mxu0 %v1786
    %6935 = vmatprep.subr.bf16.mxu0 %v1847
    %6936 = vmatpush2.bf16.xpose.msra.mxu0 %v1846
    %6937 = vmatprep.subr.bf16.mxu0 %v1843
    %6938 = vmatpush2.bf16.xpose.msra.mxu0 %v1842
    %6939 = vmatprep.subr.bf16.mxu0 %v1839
    %6940 = vmatpush2.bf16.xpose.msra.mxu0 %v1838
    %6941 = vmatprep.subr.bf16.mxu0 %v1835
    %6942 = vmatpush2.bf16.xpose.msra.mxu0 %v1834
    %6943 = vmatprep.subr.bf16.mxu0 %v1831
    %6944 = vmatpush2.bf16.xpose.msra.mxu0 %v1830
    %6945 = vmatprep.subr.bf16.mxu0 %v1827
    %6946 = vmatpush2.bf16.xpose.msra.mxu0 %v1826
    %6947 = vmatprep.subr.bf16.mxu0 %v1823
    %6948 = vmatpush2.bf16.xpose.msra.mxu0 %v1822
    %6949 = vmatprep.subr.bf16.mxu0 %v1819
    %6950 = vmatpush2.bf16.xpose.msra.mxu0 %v1818
    %6951 = vmatprep.mubr.bf16.mxu0 %v6877
    %6952 = vmatmul.mubr.bf16.gmra.mxu0 %v6876
    %v6953 = vpop.f32.mrf.mxu0
    %v6954 = vadd.f32 %v6913, %v6953
    %v6955 = vpop.f32.mrf.mxu0
    %v6956 = vadd.f32 %v6915, %v6955
    %v6957 = vpop.f32.mrf.mxu0
    %v6958 = vpop.f32.mrf.mxu0
    %6959 = vdwg.mxu0
    %6960 = vmatprep.subr.bf16.mxu0 %v1877
    %6961 = vmatpush1.bf16.xpose.msra.mxu0 %v1876
    %6962 = vmatprep.subr.bf16.mxu0 %v1873
    %6963 = vmatpush1.bf16.xpose.msra.mxu0 %v1872
    %6964 = vmatprep.subr.bf16.mxu0 %v1869
    %6965 = vmatpush1.bf16.xpose.msra.mxu0 %v1868
    %6966 = vmatprep.subr.bf16.mxu0 %v1865
    %6967 = vmatpush1.bf16.xpose.msra.mxu0 %v1864
    %6968 = vmatprep.subr.bf16.mxu0 %v1861
    %6969 = vmatpush1.bf16.xpose.msra.mxu0 %v1860
    %6970 = vmatprep.subr.bf16.mxu0 %v1857
    %6971 = vmatpush1.bf16.xpose.msra.mxu0 %v1856
    %6972 = vmatprep.subr.bf16.mxu0 %v1853
    %6973 = vmatpush1.bf16.xpose.msra.mxu0 %v1852
    %6974 = vmatprep.subr.bf16.mxu0 %v1849
    %6975 = vmatpush1.bf16.xpose.msra.mxu0 %v1848
    %6976 = vmatprep.subr.bf16.mxu0 %v1909
    %6977 = vmatpush2.bf16.xpose.msra.mxu0 %v1908
    %6978 = vmatprep.subr.bf16.mxu0 %v1905
    %6979 = vmatpush2.bf16.xpose.msra.mxu0 %v1904
    %6980 = vmatprep.subr.bf16.mxu0 %v1901
    %6981 = vmatpush2.bf16.xpose.msra.mxu0 %v1900
    %6982 = vmatprep.subr.bf16.mxu0 %v1897
    %6983 = vmatpush2.bf16.xpose.msra.mxu0 %v1896
    %6984 = vmatprep.subr.bf16.mxu0 %v1893
    %6985 = vmatpush2.bf16.xpose.msra.mxu0 %v1892
    %6986 = vmatprep.subr.bf16.mxu0 %v1889
    %6987 = vmatpush2.bf16.xpose.msra.mxu0 %v1888
    %6988 = vmatprep.subr.bf16.mxu0 %v1885
    %6989 = vmatpush2.bf16.xpose.msra.mxu0 %v1884
    %6990 = vmatprep.subr.bf16.mxu0 %v1881
    %6991 = vmatpush2.bf16.xpose.msra.mxu0 %v1880
    %6992 = vmatprep.mubr.bf16.mxu0 %v6875
    %6993 = vmatmul.mubr.bf16.gmra.mxu0 %v6874
    %v6994 = vpop.f32.mrf.mxu0
    %v6995 = vadd.f32 0.0, %v6994
    %v6996 = vpop.f32.mrf.mxu0
    %v6997 = vadd.f32 0.0, %v6996
    %v6998 = vpop.f32.mrf.mxu0
    %v6999 = vpop.f32.mrf.mxu0
    %7000 = vdwg.mxu0
    %7001 = vmatprep.subr.bf16.mxu0 %v1879
    %7002 = vmatpush1.bf16.xpose.msra.mxu0 %v1878
    %7003 = vmatprep.subr.bf16.mxu0 %v1875
    %7004 = vmatpush1.bf16.xpose.msra.mxu0 %v1874
    %7005 = vmatprep.subr.bf16.mxu0 %v1871
    %7006 = vmatpush1.bf16.xpose.msra.mxu0 %v1870
    %7007 = vmatprep.subr.bf16.mxu0 %v1867
    %7008 = vmatpush1.bf16.xpose.msra.mxu0 %v1866
    %7009 = vmatprep.subr.bf16.mxu0 %v1863
    %7010 = vmatpush1.bf16.xpose.msra.mxu0 %v1862
    %7011 = vmatprep.subr.bf16.mxu0 %v1859
    %7012 = vmatpush1.bf16.xpose.msra.mxu0 %v1858
    %7013 = vmatprep.subr.bf16.mxu0 %v1855
    %7014 = vmatpush1.bf16.xpose.msra.mxu0 %v1854
    %7015 = vmatprep.subr.bf16.mxu0 %v1851
    %7016 = vmatpush1.bf16.xpose.msra.mxu0 %v1850
    %7017 = vmatprep.subr.bf16.mxu0 %v1911
    %7018 = vmatpush2.bf16.xpose.msra.mxu0 %v1910
    %7019 = vmatprep.subr.bf16.mxu0 %v1907
    %7020 = vmatpush2.bf16.xpose.msra.mxu0 %v1906
    %7021 = vmatprep.subr.bf16.mxu0 %v1903
    %7022 = vmatpush2.bf16.xpose.msra.mxu0 %v1902
    %7023 = vmatprep.subr.bf16.mxu0 %v1899
    %7024 = vmatpush2.bf16.xpose.msra.mxu0 %v1898
    %7025 = vmatprep.subr.bf16.mxu0 %v1895
    %7026 = vmatpush2.bf16.xpose.msra.mxu0 %v1894
    %7027 = vmatprep.subr.bf16.mxu0 %v1891
    %7028 = vmatpush2.bf16.xpose.msra.mxu0 %v1890
    %7029 = vmatprep.subr.bf16.mxu0 %v1887
    %7030 = vmatpush2.bf16.xpose.msra.mxu0 %v1886
    %7031 = vmatprep.subr.bf16.mxu0 %v1883
    %7032 = vmatpush2.bf16.xpose.msra.mxu0 %v1882
    %7033 = vmatprep.mubr.bf16.mxu0 %v6877
    %7034 = vmatmul.mubr.bf16.gmra.mxu0 %v6876
    %v7035 = vpop.f32.mrf.mxu0
    %v7036 = vadd.f32 %v6995, %v7035
    %v7037 = vpop.f32.mrf.mxu0
    %v7038 = vadd.f32 %v6997, %v7037
    %v7039 = vpop.f32.mrf.mxu0
    %v7040 = vpop.f32.mrf.mxu0
    %7041 = vdwg.mxu0
    %7042 = vmatprep.subr.bf16.mxu0 %v1941
    %7043 = vmatpush1.bf16.xpose.msra.mxu0 %v1940
    %7044 = vmatprep.subr.bf16.mxu0 %v1937
    %7045 = vmatpush1.bf16.xpose.msra.mxu0 %v1936
    %7046 = vmatprep.subr.bf16.mxu0 %v1933
    %7047 = vmatpush1.bf16.xpose.msra.mxu0 %v1932
    %7048 = vmatprep.subr.bf16.mxu0 %v1929
    %7049 = vmatpush1.bf16.xpose.msra.mxu0 %v1928
    %7050 = vmatprep.subr.bf16.mxu0 %v1925
    %7051 = vmatpush1.bf16.xpose.msra.mxu0 %v1924
    %7052 = vmatprep.subr.bf16.mxu0 %v1921
    %7053 = vmatpush1.bf16.xpose.msra.mxu0 %v1920
    %7054 = vmatprep.subr.bf16.mxu0 %v1917
    %7055 = vmatpush1.bf16.xpose.msra.mxu0 %v1916
    %7056 = vmatprep.subr.bf16.mxu0 %v1913
    %7057 = vmatpush1.bf16.xpose.msra.mxu0 %v1912
    %7058 = vmatprep.subr.bf16.mxu0 %v1973
    %7059 = vmatpush2.bf16.xpose.msra.mxu0 %v1972
    %7060 = vmatprep.subr.bf16.mxu0 %v1969
    %7061 = vmatpush2.bf16.xpose.msra.mxu0 %v1968
    %7062 = vmatprep.subr.bf16.mxu0 %v1965
    %7063 = vmatpush2.bf16.xpose.msra.mxu0 %v1964
    %7064 = vmatprep.subr.bf16.mxu0 %v1961
    %7065 = vmatpush2.bf16.xpose.msra.mxu0 %v1960
    %7066 = vmatprep.subr.bf16.mxu0 %v1957
    %7067 = vmatpush2.bf16.xpose.msra.mxu0 %v1956
    %7068 = vmatprep.subr.bf16.mxu0 %v1953
    %7069 = vmatpush2.bf16.xpose.msra.mxu0 %v1952
    %7070 = vmatprep.subr.bf16.mxu0 %v1949
    %7071 = vmatpush2.bf16.xpose.msra.mxu0 %v1948
    %7072 = vmatprep.subr.bf16.mxu0 %v1945
    %7073 = vmatpush2.bf16.xpose.msra.mxu0 %v1944
    %7074 = vmatprep.mubr.bf16.mxu0 %v6875
    %7075 = vmatmul.mubr.bf16.gmra.mxu0 %v6874
    %v7076 = vpop.f32.mrf.mxu0
    %v7077 = vadd.f32 0.0, %v7076
    %v7078 = vpop.f32.mrf.mxu0
    %v7079 = vadd.f32 0.0, %v7078
    %v7080 = vpop.f32.mrf.mxu0
    %v7081 = vpop.f32.mrf.mxu0
    %7082 = vdwg.mxu0
    %7083 = vmatprep.subr.bf16.mxu0 %v1943
    %7084 = vmatpush1.bf16.xpose.msra.mxu0 %v1942
    %7085 = vmatprep.subr.bf16.mxu0 %v1939
    %7086 = vmatpush1.bf16.xpose.msra.mxu0 %v1938
    %7087 = vmatprep.subr.bf16.mxu0 %v1935
    %7088 = vmatpush1.bf16.xpose.msra.mxu0 %v1934
    %7089 = vmatprep.subr.bf16.mxu0 %v1931
    %7090 = vmatpush1.bf16.xpose.msra.mxu0 %v1930
    %7091 = vmatprep.subr.bf16.mxu0 %v1927
    %7092 = vmatpush1.bf16.xpose.msra.mxu0 %v1926
    %7093 = vmatprep.subr.bf16.mxu0 %v1923
    %7094 = vmatpush1.bf16.xpose.msra.mxu0 %v1922
    %7095 = vmatprep.subr.bf16.mxu0 %v1919
    %7096 = vmatpush1.bf16.xpose.msra.mxu0 %v1918
    %7097 = vmatprep.subr.bf16.mxu0 %v1915
    %7098 = vmatpush1.bf16.xpose.msra.mxu0 %v1914
    %7099 = vmatprep.subr.bf16.mxu0 %v1975
    %7100 = vmatpush2.bf16.xpose.msra.mxu0 %v1974
    %7101 = vmatprep.subr.bf16.mxu0 %v1971
    %7102 = vmatpush2.bf16.xpose.msra.mxu0 %v1970
    %7103 = vmatprep.subr.bf16.mxu0 %v1967
    %7104 = vmatpush2.bf16.xpose.msra.mxu0 %v1966
    %7105 = vmatprep.subr.bf16.mxu0 %v1963
    %7106 = vmatpush2.bf16.xpose.msra.mxu0 %v1962
    %7107 = vmatprep.subr.bf16.mxu0 %v1959
    %7108 = vmatpush2.bf16.xpose.msra.mxu0 %v1958
    %7109 = vmatprep.subr.bf16.mxu0 %v1955
    %7110 = vmatpush2.bf16.xpose.msra.mxu0 %v1954
    %7111 = vmatprep.subr.bf16.mxu0 %v1951
    %7112 = vmatpush2.bf16.xpose.msra.mxu0 %v1950
    %7113 = vmatprep.subr.bf16.mxu0 %v1947
    %7114 = vmatpush2.bf16.xpose.msra.mxu0 %v1946
    %7115 = vmatprep.mubr.bf16.mxu0 %v6877
    %7116 = vmatmul.mubr.bf16.gmra.mxu0 %v6876
    %v7117 = vpop.f32.mrf.mxu0
    %v7118 = vadd.f32 %v7077, %v7117
    %v7119 = vpop.f32.mrf.mxu0
    %v7120 = vadd.f32 %v7079, %v7119
    %v7121 = vpop.f32.mrf.mxu0
    %v7122 = vpop.f32.mrf.mxu0
    %7123 = vdwg.mxu0
    %7124 = vmatprep.subr.bf16.mxu0 %v2005
    %7125 = vmatpush1.bf16.xpose.msra.mxu0 %v2004
    %7126 = vmatprep.subr.bf16.mxu0 %v2001
    %7127 = vmatpush1.bf16.xpose.msra.mxu0 %v2000
    %7128 = vmatprep.subr.bf16.mxu0 %v1997
    %7129 = vmatpush1.bf16.xpose.msra.mxu0 %v1996
    %7130 = vmatprep.subr.bf16.mxu0 %v1993
    %7131 = vmatpush1.bf16.xpose.msra.mxu0 %v1992
    %7132 = vmatprep.subr.bf16.mxu0 %v1989
    %7133 = vmatpush1.bf16.xpose.msra.mxu0 %v1988
    %7134 = vmatprep.subr.bf16.mxu0 %v1985
    %7135 = vmatpush1.bf16.xpose.msra.mxu0 %v1984
    %7136 = vmatprep.subr.bf16.mxu0 %v1981
    %7137 = vmatpush1.bf16.xpose.msra.mxu0 %v1980
    %7138 = vmatprep.subr.bf16.mxu0 %v1977
    %7139 = vmatpush1.bf16.xpose.msra.mxu0 %v1976
    %7140 = vmatprep.subr.bf16.mxu0 %v2037
    %7141 = vmatpush2.bf16.xpose.msra.mxu0 %v2036
    %7142 = vmatprep.subr.bf16.mxu0 %v2033
    %7143 = vmatpush2.bf16.xpose.msra.mxu0 %v2032
    %7144 = vmatprep.subr.bf16.mxu0 %v2029
    %7145 = vmatpush2.bf16.xpose.msra.mxu0 %v2028
    %7146 = vmatprep.subr.bf16.mxu0 %v2025
    %7147 = vmatpush2.bf16.xpose.msra.mxu0 %v2024
    %7148 = vmatprep.subr.bf16.mxu0 %v2021
    %7149 = vmatpush2.bf16.xpose.msra.mxu0 %v2020
    %7150 = vmatprep.subr.bf16.mxu0 %v2017
    %7151 = vmatpush2.bf16.xpose.msra.mxu0 %v2016
    %7152 = vmatprep.subr.bf16.mxu0 %v2013
    %7153 = vmatpush2.bf16.xpose.msra.mxu0 %v2012
    %7154 = vmatprep.subr.bf16.mxu0 %v2009
    %7155 = vmatpush2.bf16.xpose.msra.mxu0 %v2008
    %7156 = vmatprep.mubr.bf16.mxu0 %v6875
    %7157 = vmatmul.mubr.bf16.gmra.mxu0 %v6874
    %v7158 = vpop.f32.mrf.mxu0
    %v7159 = vadd.f32 0.0, %v7158
    %v7160 = vpop.f32.mrf.mxu0
    %v7161 = vadd.f32 0.0, %v7160
    %v7162 = vpop.f32.mrf.mxu0
    %v7163 = vpop.f32.mrf.mxu0
    %7164 = vdwg.mxu0
    %7165 = vmatprep.subr.bf16.mxu0 %v2007
    %7166 = vmatpush1.bf16.xpose.msra.mxu0 %v2006
    %7167 = vmatprep.subr.bf16.mxu0 %v2003
    %7168 = vmatpush1.bf16.xpose.msra.mxu0 %v2002
    %7169 = vmatprep.subr.bf16.mxu0 %v1999
    %7170 = vmatpush1.bf16.xpose.msra.mxu0 %v1998
    %7171 = vmatprep.subr.bf16.mxu0 %v1995
    %7172 = vmatpush1.bf16.xpose.msra.mxu0 %v1994
    %7173 = vmatprep.subr.bf16.mxu0 %v1991
    %7174 = vmatpush1.bf16.xpose.msra.mxu0 %v1990
    %7175 = vmatprep.subr.bf16.mxu0 %v1987
    %7176 = vmatpush1.bf16.xpose.msra.mxu0 %v1986
    %7177 = vmatprep.subr.bf16.mxu0 %v1983
    %7178 = vmatpush1.bf16.xpose.msra.mxu0 %v1982
    %7179 = vmatprep.subr.bf16.mxu0 %v1979
    %7180 = vmatpush1.bf16.xpose.msra.mxu0 %v1978
    %7181 = vmatprep.subr.bf16.mxu0 %v2039
    %7182 = vmatpush2.bf16.xpose.msra.mxu0 %v2038
    %7183 = vmatprep.subr.bf16.mxu0 %v2035
    %7184 = vmatpush2.bf16.xpose.msra.mxu0 %v2034
    %7185 = vmatprep.subr.bf16.mxu0 %v2031
    %7186 = vmatpush2.bf16.xpose.msra.mxu0 %v2030
    %7187 = vmatprep.subr.bf16.mxu0 %v2027
    %7188 = vmatpush2.bf16.xpose.msra.mxu0 %v2026
    %7189 = vmatprep.subr.bf16.mxu0 %v2023
    %7190 = vmatpush2.bf16.xpose.msra.mxu0 %v2022
    %7191 = vmatprep.subr.bf16.mxu0 %v2019
    %7192 = vmatpush2.bf16.xpose.msra.mxu0 %v2018
    %7193 = vmatprep.subr.bf16.mxu0 %v2015
    %7194 = vmatpush2.bf16.xpose.msra.mxu0 %v2014
    %7195 = vmatprep.subr.bf16.mxu0 %v2011
    %7196 = vmatpush2.bf16.xpose.msra.mxu0 %v2010
    %7197 = vmatprep.mubr.bf16.mxu0 %v6877
    %7198 = vmatmul.mubr.bf16.gmra.mxu0 %v6876
    %v7199 = vpop.f32.mrf.mxu0
    %v7200 = vadd.f32 %v7159, %v7199
    %v7201 = vpop.f32.mrf.mxu0
    %v7202 = vadd.f32 %v7161, %v7201
    %v7203 = vpop.f32.mrf.mxu0
    %v7204 = vpop.f32.mrf.mxu0
    %7205 = vdwg.mxu0
    %7206 = vmatprep.subr.bf16.mxu0 %v2069
    %7207 = vmatpush1.bf16.xpose.msra.mxu0 %v2068
    %7208 = vmatprep.subr.bf16.mxu0 %v2065
    %7209 = vmatpush1.bf16.xpose.msra.mxu0 %v2064
    %7210 = vmatprep.subr.bf16.mxu0 %v2061
    %7211 = vmatpush1.bf16.xpose.msra.mxu0 %v2060
    %7212 = vmatprep.subr.bf16.mxu0 %v2057
    %7213 = vmatpush1.bf16.xpose.msra.mxu0 %v2056
    %7214 = vmatprep.subr.bf16.mxu0 %v2053
    %7215 = vmatpush1.bf16.xpose.msra.mxu0 %v2052
    %7216 = vmatprep.subr.bf16.mxu0 %v2049
    %7217 = vmatpush1.bf16.xpose.msra.mxu0 %v2048
    %7218 = vmatprep.subr.bf16.mxu0 %v2045
    %7219 = vmatpush1.bf16.xpose.msra.mxu0 %v2044
    %7220 = vmatprep.subr.bf16.mxu0 %v2041
    %7221 = vmatpush1.bf16.xpose.msra.mxu0 %v2040
    %7222 = vmatprep.subr.bf16.mxu0 %v2101
    %7223 = vmatpush2.bf16.xpose.msra.mxu0 %v2100
    %7224 = vmatprep.subr.bf16.mxu0 %v2097
    %7225 = vmatpush2.bf16.xpose.msra.mxu0 %v2096
    %7226 = vmatprep.subr.bf16.mxu0 %v2093
    %7227 = vmatpush2.bf16.xpose.msra.mxu0 %v2092
    %7228 = vmatprep.subr.bf16.mxu0 %v2089
    %7229 = vmatpush2.bf16.xpose.msra.mxu0 %v2088
    %7230 = vmatprep.subr.bf16.mxu0 %v2085
    %7231 = vmatpush2.bf16.xpose.msra.mxu0 %v2084
    %7232 = vmatprep.subr.bf16.mxu0 %v2081
    %7233 = vmatpush2.bf16.xpose.msra.mxu0 %v2080
    %7234 = vmatprep.subr.bf16.mxu0 %v2077
    %7235 = vmatpush2.bf16.xpose.msra.mxu0 %v2076
    %7236 = vmatprep.subr.bf16.mxu0 %v2073
    %7237 = vmatpush2.bf16.xpose.msra.mxu0 %v2072
    %7238 = vmatprep.mubr.bf16.mxu0 %v6875
    %7239 = vmatmul.mubr.bf16.gmra.mxu0 %v6874
    %v7240 = vpop.f32.mrf.mxu0
    %v7241 = vadd.f32 0.0, %v7240
    %v7242 = vpop.f32.mrf.mxu0
    %v7243 = vadd.f32 0.0, %v7242
    %v7244 = vpop.f32.mrf.mxu0
    %v7245 = vpop.f32.mrf.mxu0
    %7246 = vdwg.mxu0
    %7247 = vmatprep.subr.bf16.mxu0 %v2071
    %7248 = vmatpush1.bf16.xpose.msra.mxu0 %v2070
    %7249 = vmatprep.subr.bf16.mxu0 %v2067
    %7250 = vmatpush1.bf16.xpose.msra.mxu0 %v2066
    %7251 = vmatprep.subr.bf16.mxu0 %v2063
    %7252 = vmatpush1.bf16.xpose.msra.mxu0 %v2062
    %7253 = vmatprep.subr.bf16.mxu0 %v2059
    %7254 = vmatpush1.bf16.xpose.msra.mxu0 %v2058
    %7255 = vmatprep.subr.bf16.mxu0 %v2055
    %7256 = vmatpush1.bf16.xpose.msra.mxu0 %v2054
    %7257 = vmatprep.subr.bf16.mxu0 %v2051
    %7258 = vmatpush1.bf16.xpose.msra.mxu0 %v2050
    %7259 = vmatprep.subr.bf16.mxu0 %v2047
    %7260 = vmatpush1.bf16.xpose.msra.mxu0 %v2046
    %7261 = vmatprep.subr.bf16.mxu0 %v2043
    %7262 = vmatpush1.bf16.xpose.msra.mxu0 %v2042
    %7263 = vmatprep.subr.bf16.mxu0 %v2103
    %7264 = vmatpush2.bf16.xpose.msra.mxu0 %v2102
    %7265 = vmatprep.subr.bf16.mxu0 %v2099
    %7266 = vmatpush2.bf16.xpose.msra.mxu0 %v2098
    %7267 = vmatprep.subr.bf16.mxu0 %v2095
    %7268 = vmatpush2.bf16.xpose.msra.mxu0 %v2094
    %7269 = vmatprep.subr.bf16.mxu0 %v2091
    %7270 = vmatpush2.bf16.xpose.msra.mxu0 %v2090
    %7271 = vmatprep.subr.bf16.mxu0 %v2087
    %7272 = vmatpush2.bf16.xpose.msra.mxu0 %v2086
    %7273 = vmatprep.subr.bf16.mxu0 %v2083
    %7274 = vmatpush2.bf16.xpose.msra.mxu0 %v2082
    %7275 = vmatprep.subr.bf16.mxu0 %v2079
    %7276 = vmatpush2.bf16.xpose.msra.mxu0 %v2078
    %7277 = vmatprep.subr.bf16.mxu0 %v2075
    %7278 = vmatpush2.bf16.xpose.msra.mxu0 %v2074
    %7279 = vmatprep.mubr.bf16.mxu0 %v6877
    %7280 = vmatmul.mubr.bf16.gmra.mxu0 %v6876
    %v7281 = vpop.f32.mrf.mxu0
    %v7282 = vadd.f32 %v7241, %v7281
    %v7283 = vpop.f32.mrf.mxu0
    %v7284 = vadd.f32 %v7243, %v7283
    %v7285 = vpop.f32.mrf.mxu0
    %v7286 = vpop.f32.mrf.mxu0
    %7287 = vdwg.mxu0
    %7288 = vmatprep.subr.bf16.mxu0 %v2133
    %7289 = vmatpush1.bf16.xpose.msra.mxu0 %v2132
    %7290 = vmatprep.subr.bf16.mxu0 %v2129
    %7291 = vmatpush1.bf16.xpose.msra.mxu0 %v2128
    %7292 = vmatprep.subr.bf16.mxu0 %v2125
    %7293 = vmatpush1.bf16.xpose.msra.mxu0 %v2124
    %7294 = vmatprep.subr.bf16.mxu0 %v2121
    %7295 = vmatpush1.bf16.xpose.msra.mxu0 %v2120
    %7296 = vmatprep.subr.bf16.mxu0 %v2117
    %7297 = vmatpush1.bf16.xpose.msra.mxu0 %v2116
    %7298 = vmatprep.subr.bf16.mxu0 %v2113
    %7299 = vmatpush1.bf16.xpose.msra.mxu0 %v2112
    %7300 = vmatprep.subr.bf16.mxu0 %v2109
    %7301 = vmatpush1.bf16.xpose.msra.mxu0 %v2108
    %7302 = vmatprep.subr.bf16.mxu0 %v2105
    %7303 = vmatpush1.bf16.xpose.msra.mxu0 %v2104
    %7304 = vmatprep.subr.bf16.mxu0 %v2165
    %7305 = vmatpush2.bf16.xpose.msra.mxu0 %v2164
    %7306 = vmatprep.subr.bf16.mxu0 %v2161
    %7307 = vmatpush2.bf16.xpose.msra.mxu0 %v2160
    %7308 = vmatprep.subr.bf16.mxu0 %v2157
    %7309 = vmatpush2.bf16.xpose.msra.mxu0 %v2156
    %7310 = vmatprep.subr.bf16.mxu0 %v2153
    %7311 = vmatpush2.bf16.xpose.msra.mxu0 %v2152
    %7312 = vmatprep.subr.bf16.mxu0 %v2149
    %7313 = vmatpush2.bf16.xpose.msra.mxu0 %v2148
    %7314 = vmatprep.subr.bf16.mxu0 %v2145
    %7315 = vmatpush2.bf16.xpose.msra.mxu0 %v2144
    %7316 = vmatprep.subr.bf16.mxu0 %v2141
    %7317 = vmatpush2.bf16.xpose.msra.mxu0 %v2140
    %7318 = vmatprep.subr.bf16.mxu0 %v2137
    %7319 = vmatpush2.bf16.xpose.msra.mxu0 %v2136
    %7320 = vmatprep.mubr.bf16.mxu0 %v6875
    %7321 = vmatmul.mubr.bf16.gmra.mxu0 %v6874
    %v7322 = vpop.f32.mrf.mxu0
    %v7323 = vadd.f32 0.0, %v7322
    %v7324 = vpop.f32.mrf.mxu0
    %v7325 = vadd.f32 0.0, %v7324
    %v7326 = vpop.f32.mrf.mxu0
    %v7327 = vpop.f32.mrf.mxu0
    %7328 = vdwg.mxu0
    %7329 = vmatprep.subr.bf16.mxu0 %v2135
    %7330 = vmatpush1.bf16.xpose.msra.mxu0 %v2134
    %7331 = vmatprep.subr.bf16.mxu0 %v2131
    %7332 = vmatpush1.bf16.xpose.msra.mxu0 %v2130
    %7333 = vmatprep.subr.bf16.mxu0 %v2127
    %7334 = vmatpush1.bf16.xpose.msra.mxu0 %v2126
    %7335 = vmatprep.subr.bf16.mxu0 %v2123
    %7336 = vmatpush1.bf16.xpose.msra.mxu0 %v2122
    %7337 = vmatprep.subr.bf16.mxu0 %v2119
    %7338 = vmatpush1.bf16.xpose.msra.mxu0 %v2118
    %7339 = vmatprep.subr.bf16.mxu0 %v2115
    %7340 = vmatpush1.bf16.xpose.msra.mxu0 %v2114
    %7341 = vmatprep.subr.bf16.mxu0 %v2111
    %7342 = vmatpush1.bf16.xpose.msra.mxu0 %v2110
    %7343 = vmatprep.subr.bf16.mxu0 %v2107
    %7344 = vmatpush1.bf16.xpose.msra.mxu0 %v2106
    %7345 = vmatprep.subr.bf16.mxu0 %v2167
    %7346 = vmatpush2.bf16.xpose.msra.mxu0 %v2166
    %7347 = vmatprep.subr.bf16.mxu0 %v2163
    %7348 = vmatpush2.bf16.xpose.msra.mxu0 %v2162
    %7349 = vmatprep.subr.bf16.mxu0 %v2159
    %7350 = vmatpush2.bf16.xpose.msra.mxu0 %v2158
    %7351 = vmatprep.subr.bf16.mxu0 %v2155
    %7352 = vmatpush2.bf16.xpose.msra.mxu0 %v2154
    %7353 = vmatprep.subr.bf16.mxu0 %v2151
    %7354 = vmatpush2.bf16.xpose.msra.mxu0 %v2150
    %7355 = vmatprep.subr.bf16.mxu0 %v2147
    %7356 = vmatpush2.bf16.xpose.msra.mxu0 %v2146
    %7357 = vmatprep.subr.bf16.mxu0 %v2143
    %7358 = vmatpush2.bf16.xpose.msra.mxu0 %v2142
    %7359 = vmatprep.subr.bf16.mxu0 %v2139
    %7360 = vmatpush2.bf16.xpose.msra.mxu0 %v2138
    %7361 = vmatprep.mubr.bf16.mxu0 %v6877
    %7362 = vmatmul.mubr.bf16.gmra.mxu0 %v6876
    %v7363 = vpop.f32.mrf.mxu0
    %v7364 = vadd.f32 %v7323, %v7363
    %v7365 = vpop.f32.mrf.mxu0
    %v7366 = vadd.f32 %v7325, %v7365
    %v7367 = vpop.f32.mrf.mxu0
    %v7368 = vpop.f32.mrf.mxu0
    %7369 = vdwg.mxu0
    %v7370 = vadd.f32 %v6862, %v6954
    %v7371 = vadd.f32 %v6863, %v6956
    %v7372 = vadd.f32 %v6864, %v7036
    %v7373 = vadd.f32 %v6865, %v7038
    %v7374 = vxor.u32 %v7370, 2147483648
    %v7375 = vxor.u32 %v7371, 2147483648
    %v7376 = vxor.u32 %v7372, 2147483648
    %v7377 = vxor.u32 %v7373, 2147483648
    %v7378 = vmul.f32 %v7374, 1.442695
    %v7379 = vpow.pop %v7378
    %v7380 = vmul.f32 %v7375, 1.442695
    %v7381 = vpow.pop %v7380
    %v7382 = vmul.f32 %v7376, 1.442695
    %v7383 = vpow.pop %v7382
    %v7384 = vmul.f32 %v7377, 1.442695
    %v7385 = vpow.pop %v7384
    %v7386 = vadd.f32 %v7379, 1.0
    %v7387 = vadd.f32 %v7381, 1.0
    %v7388 = vadd.f32 %v7383, 1.0
    %v7389 = vadd.f32 %v7385, 1.0
    %v7390 = vrcp.pop %v7386
    %v7391 = vmul.f32 1.0, %v7390
    %v7392 = vrcp.pop %v7387
    %v7393 = vmul.f32 1.0, %v7392
    %v7394 = vrcp.pop %v7388
    %v7395 = vmul.f32 1.0, %v7394
    %v7396 = vrcp.pop %v7389
    %v7397 = vmul.f32 1.0, %v7396
    %v7398 = vadd.f32 %v6866, %v7118
    %v7399 = vadd.f32 %v6867, %v7120
    %v7400 = vadd.f32 %v6868, %v7200
    %v7401 = vadd.f32 %v6869, %v7202
    %v7402 = vxor.u32 %v7398, 2147483648
    %v7403 = vxor.u32 %v7399, 2147483648
    %v7404 = vxor.u32 %v7400, 2147483648
    %v7405 = vxor.u32 %v7401, 2147483648
    %v7406 = vmul.f32 %v7402, 1.442695
    %v7407 = vpow.pop %v7406
    %v7408 = vmul.f32 %v7403, 1.442695
    %v7409 = vpow.pop %v7408
    %v7410 = vmul.f32 %v7404, 1.442695
    %v7411 = vpow.pop %v7410
    %v7412 = vmul.f32 %v7405, 1.442695
    %v7413 = vpow.pop %v7412
    %v7414 = vadd.f32 %v7407, 1.0
    %v7415 = vadd.f32 %v7409, 1.0
    %v7416 = vadd.f32 %v7411, 1.0
    %v7417 = vadd.f32 %v7413, 1.0
    %v7418 = vrcp.pop %v7414
    %v7419 = vmul.f32 1.0, %v7418
    %v7420 = vrcp.pop %v7415
    %v7421 = vmul.f32 1.0, %v7420
    %v7422 = vrcp.pop %v7416
    %v7423 = vmul.f32 1.0, %v7422
    %v7424 = vrcp.pop %v7417
    %v7425 = vmul.f32 1.0, %v7424
    %v7426 = vadd.f32 %v7282, %v3104
    %v7427 = vadd.f32 %v7284, %v3108
    %v7428 = vadd.f32 %v7364, %v3112
    %v7429 = vadd.f32 %v7366, %v3116
    %v7430 = vmul.f32 %v7391, %v7426
    %v7431 = vmul.f32 %v7393, %v7427
    %v7432 = vmul.f32 %v7395, %v7428
    %v7433 = vmul.f32 %v7397, %v7429
    %v7434 = vadd.f32 %v6870, %v7430
    %v7435 = vadd.f32 %v6871, %v7431
    %v7436 = vadd.f32 %v6872, %v7432
    %v7437 = vadd.f32 %v6873, %v7433
    %v7438 = vtanh.pop %v7434
    %v7439 = vtanh.pop %v7435
    %v7440 = vtanh.pop %v7436
    %v7441 = vtanh.pop %v7437
    %v7442 = vsub.f32 1.0, %v7419
    %v7443 = vsub.f32 1.0, %v7421
    %v7444 = vsub.f32 1.0, %v7423
    %v7445 = vsub.f32 1.0, %v7425
    %v7446 = vmul.f32 %v7442, %v7438
    %v7447 = vmul.f32 %v7443, %v7439
    %v7448 = vmul.f32 %v7444, %v7440
    %v7449 = vmul.f32 %v7445, %v7441
    %v7450 = vmul.f32 %v7419, %v6839
    %v7451 = vmul.f32 %v7421, %v6840
    %v7452 = vmul.f32 %v7423, %v6841
    %v7453 = vmul.f32 %v7425, %v6842
    %v7454 = vadd.f32 %v7446, %v7450
    %v7455 = vadd.f32 %v7447, %v7451
    %v7456 = vadd.f32 %v7448, %v7452
    %v7457 = vadd.f32 %v7449, %v7453
    %v7458 = vld [vmem:[#allocation10] sm:$0xf]
    %v7460 = vlaneseq
    %v7461 = vshrl.u32 %v7460, 7
    %v7462 = vsub.s32 0, %v7461
    %v7463 = vrot.slane %v7458, %v7462
    %v7464 = vlaneseq
    %v7465 = vshrl.u32 %v7464, 7
    %v7466 = vsub.s32 1, %v7465
    %v7467 = vrot.slane %v7458, %v7466
    %v7468 = vlaneseq
    %v7469 = vshrl.u32 %v7468, 7
    %v7470 = vsub.s32 2, %v7469
    %v7471 = vrot.slane %v7458, %v7470
    %v7472 = vlaneseq
    %v7473 = vshrl.u32 %v7472, 7
    %v7474 = vsub.s32 3, %v7473
    %v7475 = vrot.slane %v7458, %v7474
    %v7480 = vmul.f32 %v7454, %v7463
    %v7481 = vmul.f32 %v7455, %v7467
    %v7482 = vmul.f32 %v7456, %v7471
    %v7483 = vmul.f32 %v7457, %v7475
    %v7484 = vadd.f32 %v7480, %v7481
    %v7485 = vadd.f32 %v7484, %v7482
    %v7486 = vadd.f32 %v7485, %v7483
    %7487 = vadd.xlane.f32.xlu0 %v7486
    %v7488 = vpop.xlane.xlu0 %7487
    %v7489 = vld [vmem:[#allocation2] sm:$0x1]
    %v7491 = vlaneseq
    %v7492 = vshrl.u32 %v7491, 7
    %v7493 = vsub.s32 0, %v7492
    %v7494 = vrot.slane %v7489, %v7493
    %v7496 = vadd.f32 %v7488, %v7494
    %vm7497 = vcmask 7168
    %7498 = vst.msk [vmem:[%s7] sm:$0xff] %vm7497, %v7496
    // Predicated region
    $region50: #{tpu_custom_call.1} parent=1 // pred_check
      _
    $region51: #{tpu_custom_call.1} parent=1 // pred_check_branch
      %7500 = sbr.rel (0) target = $region53
    $region52: #{tpu_custom_call.1} parent=1 // pred_region
      _
    $region53: #{tpu_custom_call.1} parent=1 // pred_fallthru
      _
    // Predicated region
    $region54: #{tpu_custom_call.1} parent=1 // pred_check
      _
    $region55: #{tpu_custom_call.1} parent=1 // pred_check_branch
      %7502 = sbr.rel (0) target = $region57
    $region56: #{tpu_custom_call.1} parent=1 // pred_region
      _
    $region57: #{tpu_custom_call.1} parent=1 // pred_fallthru
      _
    %7503 = vsyncpa [#allocation4], 1
    %7504 = vsyncpa [#allocation6], 1
    %7505 = vsyncpa [#allocation9], 1

</llo_original>
